<compile_context>
chip_gen: v7x
topology: tpu7x:2x2x1
jax: 0.10.0
libtpu: 0.0.40
codegen_flags: <defaults>
</compile_context>

<pallas_src>
import jax
import jax.numpy as jnp
from jax.experimental import pallas as pl
from jax.experimental.pallas import tpu as pltpu

_LANES = 128
_VMEM_LIMIT = 32 * 1024 * 1024  # <= default scoped VMEM on v6e/v7x, safe on v5e


# ----------------------------------------------------------------------------
# Fused conv3x3 + bias + ReLU + 2x2 maxpool kernel
# ----------------------------------------------------------------------------
def conv3x3_relu_pool(x_nhwc, w9, bias2d):
    """3x3 conv (stride 1, pad 1) + bias + ReLU + 2x2 max-pool, fused.

    x_nhwc : (N, H, W, Cin)  float32
    w9     : (9, Cin, Cout)  float32   (tap-major: index = 3*dh + dw)
    bias2d : (1, Cout)       float32
    returns: (N, H//2, W//2, Cout) float32
    """
    N, H, W, Cin = x_nhwc.shape
    Cout = w9.shape[-1]
    assert H % 2 == 0 and W % 2 == 0, "spatial dims must be even for 2x2 pool"
    H2, W2 = H // 2, W // 2

    # Zero-pad the spatial borders once (single cheap HBM pass).
    xp = jnp.pad(x_nhwc, ((0, 0), (1, 1), (1, 1), (0, 0)))

    def kernel(x0, x1, x2, x3, w_ref, b_ref, o_ref):
        rows = (x0, x1, x2, x3)  # each: ref of one padded input row (W+2, Cin)

        # Constant 0/1 selection matrices: even/odd column pick via the MXU.
        ri = jax.lax.broadcasted_iota(jnp.int32, (W2, W), 0)
        ci = jax.lax.broadcasted_iota(jnp.int32, (W2, W), 1)
        p_even = (ci == 2 * ri).astype(jnp.float32)
        p_odd = (ci == 2 * ri + 1).astype(jnp.float32)

        pooled_h = None
        for r in range(2):  # the two conv rows feeding one pooled row
            acc = jnp.zeros((W, Cout), jnp.float32)
            for dh in range(3):
                row_ref = rows[r + dh]
                for dw in range(3):
                    a = row_ref[dw:dw + W, :]                        # (W, Cin)
                    acc = acc + jnp.dot(a, w_ref[3 * dh + dw],
                                        preferred_element_type=jnp.float32)
            y = jnp.maximum(acc + b_ref[...], 0.0)                   # bias+ReLU
            pooled_h = y if pooled_h is None else jnp.maximum(pooled_h, y)

        # 2x2 pool along W via two selection matmuls (exact, stays on the MXU).
        pooled = jnp.maximum(
            jnp.dot(p_even, pooled_h, preferred_element_type=jnp.float32),
            jnp.dot(p_odd, pooled_h, preferred_element_type=jnp.float32))
        o_ref[...] = pooled.astype(o_ref.dtype)

    def row_spec(r):
        # block of 1 along the padded-H axis => block index == element row.
        return pl.BlockSpec((None, None, W + 2, Cin),
                            lambda n, h: (n, 2 * h + r, 0, 0))

    flops = N * H2 * (2 * 9 * 2 * W * Cin * Cout + 2 * 2 * W2 * W * Cout)
    bytes_accessed = 4 * (2 * N * (H + 2) * (W + 2) * Cin
                          + 9 * Cin * Cout + Cout + N * H2 * W2 * Cout)

    return pl.pallas_call(
        kernel,
        out_shape=jax.ShapeDtypeStruct((N, H2, W2, Cout), jnp.float32),
        grid=(N, H2),
        in_specs=[row_spec(0), row_spec(1), row_spec(2), row_spec(3),
                  pl.BlockSpec((9, Cin, Cout), lambda n, h: (0, 0, 0)),
                  pl.BlockSpec((1, Cout), lambda n, h: (0, 0))],
        out_specs=pl.BlockSpec((None, None, W2, Cout),
                               lambda n, h: (n, h, 0, 0)),
        compiler_params=pltpu.CompilerParams(
            dimension_semantics=("parallel", "parallel"),
            vmem_limit_bytes=_VMEM_LIMIT),
        cost_estimate=pl.CostEstimate(flops=flops, transcendentals=0,
                                      bytes_accessed=bytes_accessed),
    )(xp, xp, xp, xp, w9, bias2d)


# ----------------------------------------------------------------------------
# Tiled matmul + bias (+ ReLU / + fused L2 normalize) kernel
# ----------------------------------------------------------------------------
def _pick_tile(dim, target, quantum):
    """Largest divisor of `dim` that is <= target and a multiple of `quantum`,
    falling back to the full dimension (full-extent blocks are always legal)."""
    if dim <= target:
        return dim
    for t in range(target, 0, -1):
        if dim % t == 0 and t % quantum == 0:
            return t
    return dim


def matmul_bias_act(a, b, bias, *, relu=False, l2norm=False,
                    tm_target=512, tk_target=2048):
    """Fused (a @ b + bias) with optional ReLU / L2-normalize epilogue.

    a: (M, K), b: (K, N), bias: (N,).  Grid = (M tiles "parallel",
    K tiles "arbitrary"), f32 VMEM accumulator, epilogue on the last K step.
    """
    M, K = a.shape
    K2, N = b.shape
    assert K == K2
    bias2d = bias.reshape(1, N)
    TM = _pick_tile(M, tm_target, 8)
    TK = _pick_tile(K, tk_target, 128)

    def kernel(a_ref, b_ref, bias_ref, o_ref, acc_ref):
        k = pl.program_id(1)

        @pl.when(k == 0)
        def _init():
            acc_ref[...] = jnp.zeros_like(acc_ref)

        acc_ref[...] += jnp.dot(a_ref[...], b_ref[...],
                                preferred_element_type=jnp.float32)

        @pl.when(k == pl.num_programs(1) - 1)
        def _epilogue():
            y = acc_ref[...] + bias_ref[...]
            if relu:
                y = jnp.maximum(y, 0.0)
            if l2norm:
                ss = jnp.sum(y * y, axis=-1, keepdims=True)
                # == x / max(||x||_2, 1e-12)  (F.normalize semantics)
                y = y * jax.lax.rsqrt(jnp.maximum(ss, 1e-24))
            o_ref[...] = y.astype(o_ref.dtype)

    return pl.pallas_call(
        kernel,
        out_shape=jax.ShapeDtypeStruct((M, N), jnp.float32),
        grid=(M // TM, K // TK),
        in_specs=[pl.BlockSpec((TM, TK), lambda i, k: (i, k)),
                  pl.BlockSpec((TK, N), lambda i, k: (k, 0)),
                  pl.BlockSpec((1, N), lambda i, k: (0, 0))],
        out_specs=pl.BlockSpec((TM, N), lambda i, k: (i, 0)),
        scratch_shapes=[pltpu.VMEM((TM, N), jnp.float32)],
        compiler_params=pltpu.CompilerParams(
            dimension_semantics=("parallel", "arbitrary"),
            vmem_limit_bytes=_VMEM_LIMIT),
        cost_estimate=pl.CostEstimate(
            flops=2 * M * N * K,
            transcendentals=M if l2norm else 0,
            bytes_accessed=4 * (M * K + K * N + M * N + N)),
    )(a, b, bias2d)


# ----------------------------------------------------------------------------
# Parameters (PyTorch layout) + one-time kernel-friendly preparation
# ----------------------------------------------------------------------------
def init_params(key, input_channels, input_height, input_width, embedding_dim=64):
    """PyTorch-layout parameters (Conv2d OIHW, Linear (out, in))."""
    flat = 128 * (input_height // 8) * (input_width // 8)
    ks = jax.random.split(key, 10)
    mk = lambda k, shape, fan_in: (
        jax.random.normal(k, shape, jnp.float32) * (1.0 / jnp.sqrt(fan_in)))
    return {
        "conv1_w": mk(ks[0], (32, input_channels, 3, 3), 9 * input_channels),
        "conv1_b": mk(ks[1], (32,), 9 * input_channels),
        "conv2_w": mk(ks[2], (64, 32, 3, 3), 9 * 32),
        "conv2_b": mk(ks[3], (64,), 9 * 32),
        "conv3_w": mk(ks[4], (128, 64, 3, 3), 9 * 64),
        "conv3_b": mk(ks[5], (128,), 9 * 64),
        "fc1_w": mk(ks[6], (256, flat), flat),
        "fc1_b": mk(ks[7], (256,), flat),
        "fc2_w": mk(ks[8], (embedding_dim, 256), 256),
        "fc2_b": mk(ks[9], (embedding_dim,), 256),
    }


def prepare_params(params, input_height, input_width):
    """One-time transform into kernel-friendly layouts (done outside the jit).

    * conv weights -> (9, Cin, Cout) tap-major, Cout zero-padded to 128 lanes
      and Cin zero-padded to match the previous stage's padded output.
    * fc1 weight rows permuted from NCHW-flatten to NHWC-flatten order and
      pre-transposed; fc2 weight pre-transposed.
    """
    def prep_conv(w, b, cin_to, cout_to):
        cout, cin, kh, kw = w.shape
        w9 = jnp.transpose(w, (2, 3, 1, 0)).reshape(kh * kw, cin, cout)
        if cin_to > cin:
            w9 = jnp.pad(w9, ((0, 0), (0, cin_to - cin), (0, 0)))
        if cout_to > cout:
            w9 = jnp.pad(w9, ((0, 0), (0, 0), (0, cout_to - cout)))
            b = jnp.pad(b, (0, cout_to - cout))
        return w9, b.reshape(1, -1)

    cin1 = params["conv1_w"].shape[1]
    c1w, c1b = prep_conv(params["conv1_w"], params["conv1_b"], cin1, _LANES)
    c2w, c2b = prep_conv(params["conv2_w"], params["conv2_b"], _LANES, _LANES)
    c3w, c3b = prep_conv(params["conv3_w"], params["conv3_b"], _LANES, _LANES)

    H8, W8 = input_height // 8, input_width // 8
    n_fc1 = params["fc1_w"].shape[0]
    fc1_w = (params["fc1_w"].reshape(n_fc1, 128, H8, W8)
             .transpose(0, 2, 3, 1).reshape(n_fc1, -1).T)      # (flat_nhwc, 256)
    fc2_w = params["fc2_w"].T                                  # (256, emb)

    return {"conv1_w": c1w, "conv1_b": c1b,
            "conv2_w": c2w, "conv2_b": c2b,
            "conv3_w": c3w, "conv3_b": c3b,
            "fc1_w": fc1_w, "fc1_b": params["fc1_b"],
            "fc2_w": fc2_w, "fc2_b": params["fc2_b"]}


# ----------------------------------------------------------------------------
# Forward pass (equivalent of ConvNetEmbedder.forward)
# ----------------------------------------------------------------------------
def convnet_embedder_forward(prepared, x_nchw):
    """Input: (N, C, H, W) float32.  Output: (N, embedding_dim), L2-normalized."""
    x = jnp.transpose(x_nchw, (0, 2, 3, 1))                    # NCHW -> NHWC once
    x = conv3x3_relu_pool(x, prepared["conv1_w"], prepared["conv1_b"])
    x = conv3x3_relu_pool(x, prepared["conv2_w"], prepared["conv2_b"])
    x = conv3x3_relu_pool(x, prepared["conv3_w"], prepared["conv3_b"])
    x = x.reshape(x.shape[0], -1)          # NHWC flatten (fc1_w pre-permuted)
    x = matmul_bias_act(x, prepared["fc1_w"], prepared["fc1_b"], relu=True)
    x = matmul_bias_act(x, prepared["fc2_w"], prepared["fc2_b"],
                        relu=False, l2norm=True)
    return x


def reference_forward(params, x_nchw):
    """Pure-JAX (XLA) reference with PyTorch semantics, for verification."""
    def conv(x, w, b):
        y = jax.lax.conv_general_dilated(
            x, w, window_strides=(1, 1), padding=((1, 1), (1, 1)),
            dimension_numbers=("NCHW", "OIHW", "NCHW"))
        return jax.nn.relu(y + b[None, :, None, None])

    def pool(x):
        return jax.lax.reduce_window(x, -jnp.inf, jax.lax.max,
                                     (1, 1, 2, 2), (1, 1, 2, 2), "VALID")

    x = pool(conv(x_nchw, params["conv1_w"], params["conv1_b"]))
    x = pool(conv(x, params["conv2_w"], params["conv2_b"]))
    x = pool(conv(x, params["conv3_w"], params["conv3_b"]))
    x = x.reshape(x.shape[0], -1)
    x = jax.nn.relu(x @ params["fc1_w"].T + params["fc1_b"])
    x = x @ params["fc2_w"].T + params["fc2_b"]
    n = jnp.sqrt(jnp.sum(x * x, axis=-1, keepdims=True))
    return x / jnp.maximum(n, 1e-12)


if __name__ == "__main__":
    batch, in_ch, H, W, emb = 2, 4, 16, 16, 64
    key = jax.random.PRNGKey(0)
    k_params, k_x = jax.random.split(key)
    params = init_params(k_params, in_ch, H, W, emb)
    prepared = prepare_params(params, H, W)
    x = jax.random.normal(k_x, (batch, in_ch, H, W), jnp.float32)

    out = jax.jit(convnet_embedder_forward)(prepared, x)
    out = jax.block_until_ready(out)
    assert out.shape == (batch, emb)

    # sanity: output rows are L2-normalized
    norms = jnp.linalg.norm(out, axis=-1)
    assert bool(jnp.all(jnp.abs(norms - 1.0) < 1e-4)), "output not normalized"

    # numerics: match the pure-XLA reference built from the same parameters
    ref = reference_forward(params, x)
    max_err = float(jnp.max(jnp.abs(out - ref)))
    assert max_err < 2e-3, f"mismatch vs reference: {max_err}"

    print("KERNEL_OK")
</pallas_src>

<mosaic_0001>
module attributes {stable_mosaic.version = 11 : i64} {
  func.func @kernel(%arg0: i32, %arg1: i32, %arg2: memref<1x1x18x4xf32, #tpu.memory_space<vmem>>, %arg3: memref<1x1x18x4xf32, #tpu.memory_space<vmem>>, %arg4: memref<1x1x18x4xf32, #tpu.memory_space<vmem>>, %arg5: memref<1x1x18x4xf32, #tpu.memory_space<vmem>>, %arg6: memref<9x4x128xf32, #tpu.memory_space<vmem>>, %arg7: memref<1x128xf32, #tpu.memory_space<vmem>>, %arg8: memref<1x1x8x128xf32, #tpu.memory_space<vmem>>) attributes {dimension_semantics = [#tpu.dimension_semantics<parallel>, #tpu.dimension_semantics<parallel>], iteration_bounds = array<i64: 2, 8>, scalar_prefetch = 0 : i64, scratch_operands = 0 : i64, tpu.core_type = #tpu.core_type<tc>, window_params = [{transform_indices = @transform_0, window_bounds = array<i64: 1, 1, 18, 4>}, {transform_indices = @transform_1, window_bounds = array<i64: 1, 1, 18, 4>}, {transform_indices = @transform_2, window_bounds = array<i64: 1, 1, 18, 4>}, {transform_indices = @transform_3, window_bounds = array<i64: 1, 1, 18, 4>}, {pipeline_mode = #tpu.pipeline_mode<synchronous>, transform_indices = @transform_4, window_bounds = array<i64: 9, 4, 128>}, {pipeline_mode = #tpu.pipeline_mode<synchronous>, transform_indices = @transform_5, window_bounds = array<i64: 1, 128>}, {transform_indices = @transform_6, window_bounds = array<i64: 1, 1, 8, 128>}]} {
    %0 = tpu.iota {dimensions = array<i32: 0>} : vector<8x16xi32>
    %1 = tpu.iota {dimensions = array<i32: 1>} : vector<8x16xi32>
    %c2_i32 = arith.constant 2 : i32
    %2 = vector.broadcast %c2_i32 : i32 to vector<8x16xi32>
    %3 = arith.muli %2, %0 : vector<8x16xi32>
    %4 = arith.cmpi eq, %1, %3 : vector<8x16xi32>
    %5 = arith.extui %4 : vector<8x16xi1> to vector<8x16xi32>
    %6 = arith.sitofp %5 : vector<8x16xi32> to vector<8x16xf32>
    %c2_i32_0 = arith.constant 2 : i32
    %7 = vector.broadcast %c2_i32_0 : i32 to vector<8x16xi32>
    %8 = arith.muli %7, %0 : vector<8x16xi32>
    %c1_i32 = arith.constant 1 : i32
    %9 = vector.broadcast %c1_i32 : i32 to vector<8x16xi32>
    %10 = arith.addi %8, %9 : vector<8x16xi32>
    %11 = arith.cmpi eq, %1, %10 : vector<8x16xi32>
    %12 = arith.extui %11 : vector<8x16xi1> to vector<8x16xi32>
    %13 = arith.sitofp %12 : vector<8x16xi32> to vector<8x16xf32>
    %cst = arith.constant 0.000000e+00 : f32
    %14 = vector.broadcast %cst : f32 to vector<16x128xf32>
    %c0 = arith.constant 0 : index
    %c0_1 = arith.constant 0 : index
    %c0_2 = arith.constant 0 : index
    %c0_3 = arith.constant 0 : index
    %15 = vector.load %arg2[%c0, %c0_1, %c0_2, %c0_3] : memref<1x1x18x4xf32, #tpu.memory_space<vmem>>, vector<1x1x16x4xf32>
    %16 = vector.shape_cast %15 : vector<1x1x16x4xf32> to vector<16x4xf32>
    %c0_4 = arith.constant 0 : index
    %c0_5 = arith.constant 0 : index
    %c0_6 = arith.constant 0 : index
    %17 = vector.load %arg6[%c0_4, %c0_5, %c0_6] : memref<9x4x128xf32, #tpu.memory_space<vmem>>, vector<1x4x128xf32>
    %18 = vector.shape_cast %17 : vector<1x4x128xf32> to vector<4x128xf32>
    %cst_7 = arith.constant dense<0.000000e+00> : vector<16x128xf32>
    %19 = tpu.matmul %16, %18, %cst_7 {dimension_numbers = #tpu.dot_dimension_numbers<[1], [0], [0], [1], [0, 0, 1, 1], [], []>} : vector<16x4xf32>, vector<4x128xf32>, vector<16x128xf32> -> vector<16x128xf32>
    %20 = arith.addf %14, %19 : vector<16x128xf32>
    %c0_8 = arith.constant 0 : index
    %c0_9 = arith.constant 0 : index
    %c1 = arith.constant 1 : index
    %c0_10 = arith.constant 0 : index
    %21 = vector.load %arg2[%c0_8, %c0_9, %c1, %c0_10] : memref<1x1x18x4xf32, #tpu.memory_space<vmem>>, vector<1x1x16x4xf32>
    %22 = vector.shape_cast %21 : vector<1x1x16x4xf32> to vector<16x4xf32>
    %c1_11 = arith.constant 1 : index
    %c0_12 = arith.constant 0 : index
    %c0_13 = arith.constant 0 : index
    %23 = vector.load %arg6[%c1_11, %c0_12, %c0_13] : memref<9x4x128xf32, #tpu.memory_space<vmem>>, vector<1x4x128xf32>
    %24 = vector.shape_cast %23 : vector<1x4x128xf32> to vector<4x128xf32>
    %cst_14 = arith.constant dense<0.000000e+00> : vector<16x128xf32>
    %25 = tpu.matmul %22, %24, %cst_14 {dimension_numbers = #tpu.dot_dimension_numbers<[1], [0], [0], [1], [0, 0, 1, 1], [], []>} : vector<16x4xf32>, vector<4x128xf32>, vector<16x128xf32> -> vector<16x128xf32>
    %26 = arith.addf %20, %25 : vector<16x128xf32>
    %c0_15 = arith.constant 0 : index
    %c0_16 = arith.constant 0 : index
    %c2 = arith.constant 2 : index
    %c0_17 = arith.constant 0 : index
    %27 = vector.load %arg2[%c0_15, %c0_16, %c2, %c0_17] : memref<1x1x18x4xf32, #tpu.memory_space<vmem>>, vector<1x1x16x4xf32>
    %28 = vector.shape_cast %27 : vector<1x1x16x4xf32> to vector<16x4xf32>
    %c2_18 = arith.constant 2 : index
    %c0_19 = arith.constant 0 : index
    %c0_20 = arith.constant 0 : index
    %29 = vector.load %arg6[%c2_18, %c0_19, %c0_20] : memref<9x4x128xf32, #tpu.memory_space<vmem>>, vector<1x4x128xf32>
    %30 = vector.shape_cast %29 : vector<1x4x128xf32> to vector<4x128xf32>
    %cst_21 = arith.constant dense<0.000000e+00> : vector<16x128xf32>
    %31 = tpu.matmul %28, %30, %cst_21 {dimension_numbers = #tpu.dot_dimension_numbers<[1], [0], [0], [1], [0, 0, 1, 1], [], []>} : vector<16x4xf32>, vector<4x128xf32>, vector<16x128xf32> -> vector<16x128xf32>
    %32 = arith.addf %26, %31 : vector<16x128xf32>
    %c0_22 = arith.constant 0 : index
    %c0_23 = arith.constant 0 : index
    %c0_24 = arith.constant 0 : index
    %c0_25 = arith.constant 0 : index
    %33 = vector.load %arg3[%c0_22, %c0_23, %c0_24, %c0_25] : memref<1x1x18x4xf32, #tpu.memory_space<vmem>>, vector<1x1x16x4xf32>
    %34 = vector.shape_cast %33 : vector<1x1x16x4xf32> to vector<16x4xf32>
    %c3 = arith.constant 3 : index
    %c0_26 = arith.constant 0 : index
    %c0_27 = arith.constant 0 : index
    %35 = vector.load %arg6[%c3, %c0_26, %c0_27] : memref<9x4x128xf32, #tpu.memory_space<vmem>>, vector<1x4x128xf32>
    %36 = vector.shape_cast %35 : vector<1x4x128xf32> to vector<4x128xf32>
    %cst_28 = arith.constant dense<0.000000e+00> : vector<16x128xf32>
    %37 = tpu.matmul %34, %36, %cst_28 {dimension_numbers = #tpu.dot_dimension_numbers<[1], [0], [0], [1], [0, 0, 1, 1], [], []>} : vector<16x4xf32>, vector<4x128xf32>, vector<16x128xf32> -> vector<16x128xf32>
    %38 = arith.addf %32, %37 : vector<16x128xf32>
    %c0_29 = arith.constant 0 : index
    %c0_30 = arith.constant 0 : index
    %c1_31 = arith.constant 1 : index
    %c0_32 = arith.constant 0 : index
    %39 = vector.load %arg3[%c0_29, %c0_30, %c1_31, %c0_32] : memref<1x1x18x4xf32, #tpu.memory_space<vmem>>, vector<1x1x16x4xf32>
    %40 = vector.shape_cast %39 : vector<1x1x16x4xf32> to vector<16x4xf32>
    %c4 = arith.constant 4 : index
    %c0_33 = arith.constant 0 : index
    %c0_34 = arith.constant 0 : index
    %41 = vector.load %arg6[%c4, %c0_33, %c0_34] : memref<9x4x128xf32, #tpu.memory_space<vmem>>, vector<1x4x128xf32>
    %42 = vector.shape_cast %41 : vector<1x4x128xf32> to vector<4x128xf32>
    %cst_35 = arith.constant dense<0.000000e+00> : vector<16x128xf32>
    %43 = tpu.matmul %40, %42, %cst_35 {dimension_numbers = #tpu.dot_dimension_numbers<[1], [0], [0], [1], [0, 0, 1, 1], [], []>} : vector<16x4xf32>, vector<4x128xf32>, vector<16x128xf32> -> vector<16x128xf32>
    %44 = arith.addf %38, %43 : vector<16x128xf32>
    %c0_36 = arith.constant 0 : index
    %c0_37 = arith.constant 0 : index
    %c2_38 = arith.constant 2 : index
    %c0_39 = arith.constant 0 : index
    %45 = vector.load %arg3[%c0_36, %c0_37, %c2_38, %c0_39] : memref<1x1x18x4xf32, #tpu.memory_space<vmem>>, vector<1x1x16x4xf32>
    %46 = vector.shape_cast %45 : vector<1x1x16x4xf32> to vector<16x4xf32>
    %c5 = arith.constant 5 : index
    %c0_40 = arith.constant 0 : index
    %c0_41 = arith.constant 0 : index
    %47 = vector.load %arg6[%c5, %c0_40, %c0_41] : memref<9x4x128xf32, #tpu.memory_space<vmem>>, vector<1x4x128xf32>
    %48 = vector.shape_cast %47 : vector<1x4x128xf32> to vector<4x128xf32>
    %cst_42 = arith.constant dense<0.000000e+00> : vector<16x128xf32>
    %49 = tpu.matmul %46, %48, %cst_42 {dimension_numbers = #tpu.dot_dimension_numbers<[1], [0], [0], [1], [0, 0, 1, 1], [], []>} : vector<16x4xf32>, vector<4x128xf32>, vector<16x128xf32> -> vector<16x128xf32>
    %50 = arith.addf %44, %49 : vector<16x128xf32>
    %c0_43 = arith.constant 0 : index
    %c0_44 = arith.constant 0 : index
    %c0_45 = arith.constant 0 : index
    %c0_46 = arith.constant 0 : index
    %51 = vector.load %arg4[%c0_43, %c0_44, %c0_45, %c0_46] : memref<1x1x18x4xf32, #tpu.memory_space<vmem>>, vector<1x1x16x4xf32>
    %52 = vector.shape_cast %51 : vector<1x1x16x4xf32> to vector<16x4xf32>
    %c6 = arith.constant 6 : index
    %c0_47 = arith.constant 0 : index
    %c0_48 = arith.constant 0 : index
    %53 = vector.load %arg6[%c6, %c0_47, %c0_48] : memref<9x4x128xf32, #tpu.memory_space<vmem>>, vector<1x4x128xf32>
    %54 = vector.shape_cast %53 : vector<1x4x128xf32> to vector<4x128xf32>
    %cst_49 = arith.constant dense<0.000000e+00> : vector<16x128xf32>
    %55 = tpu.matmul %52, %54, %cst_49 {dimension_numbers = #tpu.dot_dimension_numbers<[1], [0], [0], [1], [0, 0, 1, 1], [], []>} : vector<16x4xf32>, vector<4x128xf32>, vector<16x128xf32> -> vector<16x128xf32>
    %56 = arith.addf %50, %55 : vector<16x128xf32>
    %c0_50 = arith.constant 0 : index
    %c0_51 = arith.constant 0 : index
    %c1_52 = arith.constant 1 : index
    %c0_53 = arith.constant 0 : index
    %57 = vector.load %arg4[%c0_50, %c0_51, %c1_52, %c0_53] : memref<1x1x18x4xf32, #tpu.memory_space<vmem>>, vector<1x1x16x4xf32>
    %58 = vector.shape_cast %57 : vector<1x1x16x4xf32> to vector<16x4xf32>
    %c7 = arith.constant 7 : index
    %c0_54 = arith.constant 0 : index
    %c0_55 = arith.constant 0 : index
    %59 = vector.load %arg6[%c7, %c0_54, %c0_55] : memref<9x4x128xf32, #tpu.memory_space<vmem>>, vector<1x4x128xf32>
    %60 = vector.shape_cast %59 : vector<1x4x128xf32> to vector<4x128xf32>
    %cst_56 = arith.constant dense<0.000000e+00> : vector<16x128xf32>
    %61 = tpu.matmul %58, %60, %cst_56 {dimension_numbers = #tpu.dot_dimension_numbers<[1], [0], [0], [1], [0, 0, 1, 1], [], []>} : vector<16x4xf32>, vector<4x128xf32>, vector<16x128xf32> -> vector<16x128xf32>
    %62 = arith.addf %56, %61 : vector<16x128xf32>
    %c0_57 = arith.constant 0 : index
    %c0_58 = arith.constant 0 : index
    %c2_59 = arith.constant 2 : index
    %c0_60 = arith.constant 0 : index
    %63 = vector.load %arg4[%c0_57, %c0_58, %c2_59, %c0_60] : memref<1x1x18x4xf32, #tpu.memory_space<vmem>>, vector<1x1x16x4xf32>
    %64 = vector.shape_cast %63 : vector<1x1x16x4xf32> to vector<16x4xf32>
    %c8 = arith.constant 8 : index
    %c0_61 = arith.constant 0 : index
    %c0_62 = arith.constant 0 : index
    %65 = vector.load %arg6[%c8, %c0_61, %c0_62] : memref<9x4x128xf32, #tpu.memory_space<vmem>>, vector<1x4x128xf32>
    %66 = vector.shape_cast %65 : vector<1x4x128xf32> to vector<4x128xf32>
    %cst_63 = arith.constant dense<0.000000e+00> : vector<16x128xf32>
    %67 = tpu.matmul %64, %66, %cst_63 {dimension_numbers = #tpu.dot_dimension_numbers<[1], [0], [0], [1], [0, 0, 1, 1], [], []>} : vector<16x4xf32>, vector<4x128xf32>, vector<16x128xf32> -> vector<16x128xf32>
    %68 = arith.addf %62, %67 : vector<16x128xf32>
    %c0_64 = arith.constant 0 : index
    %c0_65 = arith.constant 0 : index
    %69 = vector.load %arg7[%c0_64, %c0_65] : memref<1x128xf32, #tpu.memory_space<vmem>>, vector<1x128xf32>
    %70 = vector.broadcast %69 : vector<1x128xf32> to vector<16x128xf32>
    %71 = arith.addf %68, %70 : vector<16x128xf32>
    %cst_66 = arith.constant 0.000000e+00 : f32
    %72 = vector.broadcast %cst_66 : f32 to vector<16x128xf32>
    %73 = arith.maximumf %71, %72 : vector<16x128xf32>
    %cst_67 = arith.constant 0.000000e+00 : f32
    %74 = vector.broadcast %cst_67 : f32 to vector<16x128xf32>
    %c0_68 = arith.constant 0 : index
    %c0_69 = arith.constant 0 : index
    %c0_70 = arith.constant 0 : index
    %c0_71 = arith.constant 0 : index
    %75 = vector.load %arg3[%c0_68, %c0_69, %c0_70, %c0_71] : memref<1x1x18x4xf32, #tpu.memory_space<vmem>>, vector<1x1x16x4xf32>
    %76 = vector.shape_cast %75 : vector<1x1x16x4xf32> to vector<16x4xf32>
    %c0_72 = arith.constant 0 : index
    %c0_73 = arith.constant 0 : index
    %c0_74 = arith.constant 0 : index
    %77 = vector.load %arg6[%c0_72, %c0_73, %c0_74] : memref<9x4x128xf32, #tpu.memory_space<vmem>>, vector<1x4x128xf32>
    %78 = vector.shape_cast %77 : vector<1x4x128xf32> to vector<4x128xf32>
    %cst_75 = arith.constant dense<0.000000e+00> : vector<16x128xf32>
    %79 = tpu.matmul %76, %78, %cst_75 {dimension_numbers = #tpu.dot_dimension_numbers<[1], [0], [0], [1], [0, 0, 1, 1], [], []>} : vector<16x4xf32>, vector<4x128xf32>, vector<16x128xf32> -> vector<16x128xf32>
    %80 = arith.addf %74, %79 : vector<16x128xf32>
    %c0_76 = arith.constant 0 : index
    %c0_77 = arith.constant 0 : index
    %c1_78 = arith.constant 1 : index
    %c0_79 = arith.constant 0 : index
    %81 = vector.load %arg3[%c0_76, %c0_77, %c1_78, %c0_79] : memref<1x1x18x4xf32, #tpu.memory_space<vmem>>, vector<1x1x16x4xf32>
    %82 = vector.shape_cast %81 : vector<1x1x16x4xf32> to vector<16x4xf32>
    %c1_80 = arith.constant 1 : index
    %c0_81 = arith.constant 0 : index
    %c0_82 = arith.constant 0 : index
    %83 = vector.load %arg6[%c1_80, %c0_81, %c0_82] : memref<9x4x128xf32, #tpu.memory_space<vmem>>, vector<1x4x128xf32>
    %84 = vector.shape_cast %83 : vector<1x4x128xf32> to vector<4x128xf32>
    %cst_83 = arith.constant dense<0.000000e+00> : vector<16x128xf32>
    %85 = tpu.matmul %82, %84, %cst_83 {dimension_numbers = #tpu.dot_dimension_numbers<[1], [0], [0], [1], [0, 0, 1, 1], [], []>} : vector<16x4xf32>, vector<4x128xf32>, vector<16x128xf32> -> vector<16x128xf32>
    %86 = arith.addf %80, %85 : vector<16x128xf32>
    %c0_84 = arith.constant 0 : index
    %c0_85 = arith.constant 0 : index
    %c2_86 = arith.constant 2 : index
    %c0_87 = arith.constant 0 : index
    %87 = vector.load %arg3[%c0_84, %c0_85, %c2_86, %c0_87] : memref<1x1x18x4xf32, #tpu.memory_space<vmem>>, vector<1x1x16x4xf32>
    %88 = vector.shape_cast %87 : vector<1x1x16x4xf32> to vector<16x4xf32>
    %c2_88 = arith.constant 2 : index
    %c0_89 = arith.constant 0 : index
    %c0_90 = arith.constant 0 : index
    %89 = vector.load %arg6[%c2_88, %c0_89, %c0_90] : memref<9x4x128xf32, #tpu.memory_space<vmem>>, vector<1x4x128xf32>
    %90 = vector.shape_cast %89 : vector<1x4x128xf32> to vector<4x128xf32>
    %cst_91 = arith.constant dense<0.000000e+00> : vector<16x128xf32>
    %91 = tpu.matmul %88, %90, %cst_91 {dimension_numbers = #tpu.dot_dimension_numbers<[1], [0], [0], [1], [0, 0, 1, 1], [], []>} : vector<16x4xf32>, vector<4x128xf32>, vector<16x128xf32> -> vector<16x128xf32>
    %92 = arith.addf %86, %91 : vector<16x128xf32>
    %c0_92 = arith.constant 0 : index
    %c0_93 = arith.constant 0 : index
    %c0_94 = arith.constant 0 : index
    %c0_95 = arith.constant 0 : index
    %93 = vector.load %arg4[%c0_92, %c0_93, %c0_94, %c0_95] : memref<1x1x18x4xf32, #tpu.memory_space<vmem>>, vector<1x1x16x4xf32>
    %94 = vector.shape_cast %93 : vector<1x1x16x4xf32> to vector<16x4xf32>
    %c3_96 = arith.constant 3 : index
    %c0_97 = arith.constant 0 : index
    %c0_98 = arith.constant 0 : index
    %95 = vector.load %arg6[%c3_96, %c0_97, %c0_98] : memref<9x4x128xf32, #tpu.memory_space<vmem>>, vector<1x4x128xf32>
    %96 = vector.shape_cast %95 : vector<1x4x128xf32> to vector<4x128xf32>
    %cst_99 = arith.constant dense<0.000000e+00> : vector<16x128xf32>
    %97 = tpu.matmul %94, %96, %cst_99 {dimension_numbers = #tpu.dot_dimension_numbers<[1], [0], [0], [1], [0, 0, 1, 1], [], []>} : vector<16x4xf32>, vector<4x128xf32>, vector<16x128xf32> -> vector<16x128xf32>
    %98 = arith.addf %92, %97 : vector<16x128xf32>
    %c0_100 = arith.constant 0 : index
    %c0_101 = arith.constant 0 : index
    %c1_102 = arith.constant 1 : index
    %c0_103 = arith.constant 0 : index
    %99 = vector.load %arg4[%c0_100, %c0_101, %c1_102, %c0_103] : memref<1x1x18x4xf32, #tpu.memory_space<vmem>>, vector<1x1x16x4xf32>
    %100 = vector.shape_cast %99 : vector<1x1x16x4xf32> to vector<16x4xf32>
    %c4_104 = arith.constant 4 : index
    %c0_105 = arith.constant 0 : index
    %c0_106 = arith.constant 0 : index
    %101 = vector.load %arg6[%c4_104, %c0_105, %c0_106] : memref<9x4x128xf32, #tpu.memory_space<vmem>>, vector<1x4x128xf32>
    %102 = vector.shape_cast %101 : vector<1x4x128xf32> to vector<4x128xf32>
    %cst_107 = arith.constant dense<0.000000e+00> : vector<16x128xf32>
    %103 = tpu.matmul %100, %102, %cst_107 {dimension_numbers = #tpu.dot_dimension_numbers<[1], [0], [0], [1], [0, 0, 1, 1], [], []>} : vector<16x4xf32>, vector<4x128xf32>, vector<16x128xf32> -> vector<16x128xf32>
    %104 = arith.addf %98, %103 : vector<16x128xf32>
    %c0_108 = arith.constant 0 : index
    %c0_109 = arith.constant 0 : index
    %c2_110 = arith.constant 2 : index
    %c0_111 = arith.constant 0 : index
    %105 = vector.load %arg4[%c0_108, %c0_109, %c2_110, %c0_111] : memref<1x1x18x4xf32, #tpu.memory_space<vmem>>, vector<1x1x16x4xf32>
    %106 = vector.shape_cast %105 : vector<1x1x16x4xf32> to vector<16x4xf32>
    %c5_112 = arith.constant 5 : index
    %c0_113 = arith.constant 0 : index
    %c0_114 = arith.constant 0 : index
    %107 = vector.load %arg6[%c5_112, %c0_113, %c0_114] : memref<9x4x128xf32, #tpu.memory_space<vmem>>, vector<1x4x128xf32>
    %108 = vector.shape_cast %107 : vector<1x4x128xf32> to vector<4x128xf32>
    %cst_115 = arith.constant dense<0.000000e+00> : vector<16x128xf32>
    %109 = tpu.matmul %106, %108, %cst_115 {dimension_numbers = #tpu.dot_dimension_numbers<[1], [0], [0], [1], [0, 0, 1, 1], [], []>} : vector<16x4xf32>, vector<4x128xf32>, vector<16x128xf32> -> vector<16x128xf32>
    %110 = arith.addf %104, %109 : vector<16x128xf32>
    %c0_116 = arith.constant 0 : index
    %c0_117 = arith.constant 0 : index
    %c0_118 = arith.constant 0 : index
    %c0_119 = arith.constant 0 : index
    %111 = vector.load %arg5[%c0_116, %c0_117, %c0_118, %c0_119] : memref<1x1x18x4xf32, #tpu.memory_space<vmem>>, vector<1x1x16x4xf32>
    %112 = vector.shape_cast %111 : vector<1x1x16x4xf32> to vector<16x4xf32>
    %c6_120 = arith.constant 6 : index
    %c0_121 = arith.constant 0 : index
    %c0_122 = arith.constant 0 : index
    %113 = vector.load %arg6[%c6_120, %c0_121, %c0_122] : memref<9x4x128xf32, #tpu.memory_space<vmem>>, vector<1x4x128xf32>
    %114 = vector.shape_cast %113 : vector<1x4x128xf32> to vector<4x128xf32>
    %cst_123 = arith.constant dense<0.000000e+00> : vector<16x128xf32>
    %115 = tpu.matmul %112, %114, %cst_123 {dimension_numbers = #tpu.dot_dimension_numbers<[1], [0], [0], [1], [0, 0, 1, 1], [], []>} : vector<16x4xf32>, vector<4x128xf32>, vector<16x128xf32> -> vector<16x128xf32>
    %116 = arith.addf %110, %115 : vector<16x128xf32>
    %c0_124 = arith.constant 0 : index
    %c0_125 = arith.constant 0 : index
    %c1_126 = arith.constant 1 : index
    %c0_127 = arith.constant 0 : index
    %117 = vector.load %arg5[%c0_124, %c0_125, %c1_126, %c0_127] : memref<1x1x18x4xf32, #tpu.memory_space<vmem>>, vector<1x1x16x4xf32>
    %118 = vector.shape_cast %117 : vector<1x1x16x4xf32> to vector<16x4xf32>
    %c7_128 = arith.constant 7 : index
    %c0_129 = arith.constant 0 : index
    %c0_130 = arith.constant 0 : index
    %119 = vector.load %arg6[%c7_128, %c0_129, %c0_130] : memref<9x4x128xf32, #tpu.memory_space<vmem>>, vector<1x4x128xf32>
    %120 = vector.shape_cast %119 : vector<1x4x128xf32> to vector<4x128xf32>
    %cst_131 = arith.constant dense<0.000000e+00> : vector<16x128xf32>
    %121 = tpu.matmul %118, %120, %cst_131 {dimension_numbers = #tpu.dot_dimension_numbers<[1], [0], [0], [1], [0, 0, 1, 1], [], []>} : vector<16x4xf32>, vector<4x128xf32>, vector<16x128xf32> -> vector<16x128xf32>
    %122 = arith.addf %116, %121 : vector<16x128xf32>
    %c0_132 = arith.constant 0 : index
    %c0_133 = arith.constant 0 : index
    %c2_134 = arith.constant 2 : index
    %c0_135 = arith.constant 0 : index
    %123 = vector.load %arg5[%c0_132, %c0_133, %c2_134, %c0_135] : memref<1x1x18x4xf32, #tpu.memory_space<vmem>>, vector<1x1x16x4xf32>
    %124 = vector.shape_cast %123 : vector<1x1x16x4xf32> to vector<16x4xf32>
    %c8_136 = arith.constant 8 : index
    %c0_137 = arith.constant 0 : index
    %c0_138 = arith.constant 0 : index
    %125 = vector.load %arg6[%c8_136, %c0_137, %c0_138] : memref<9x4x128xf32, #tpu.memory_space<vmem>>, vector<1x4x128xf32>
    %126 = vector.shape_cast %125 : vector<1x4x128xf32> to vector<4x128xf32>
    %cst_139 = arith.constant dense<0.000000e+00> : vector<16x128xf32>
    %127 = tpu.matmul %124, %126, %cst_139 {dimension_numbers = #tpu.dot_dimension_numbers<[1], [0], [0], [1], [0, 0, 1, 1], [], []>} : vector<16x4xf32>, vector<4x128xf32>, vector<16x128xf32> -> vector<16x128xf32>
    %128 = arith.addf %122, %127 : vector<16x128xf32>
    %c0_140 = arith.constant 0 : index
    %c0_141 = arith.constant 0 : index
    %129 = vector.load %arg7[%c0_140, %c0_141] : memref<1x128xf32, #tpu.memory_space<vmem>>, vector<1x128xf32>
    %130 = vector.broadcast %129 : vector<1x128xf32> to vector<16x128xf32>
    %131 = arith.addf %128, %130 : vector<16x128xf32>
    %cst_142 = arith.constant 0.000000e+00 : f32
    %132 = vector.broadcast %cst_142 : f32 to vector<16x128xf32>
    %133 = arith.maximumf %131, %132 : vector<16x128xf32>
    %134 = arith.maximumf %73, %133 : vector<16x128xf32>
    %cst_143 = arith.constant dense<0.000000e+00> : vector<8x128xf32>
    %135 = tpu.matmul %6, %134, %cst_143 {dimension_numbers = #tpu.dot_dimension_numbers<[1], [0], [0], [1], [0, 0, 1, 1], [], []>} : vector<8x16xf32>, vector<16x128xf32>, vector<8x128xf32> -> vector<8x128xf32>
    %cst_144 = arith.constant dense<0.000000e+00> : vector<8x128xf32>
    %136 = tpu.matmul %13, %134, %cst_144 {dimension_numbers = #tpu.dot_dimension_numbers<[1], [0], [0], [1], [0, 0, 1, 1], [], []>} : vector<8x16xf32>, vector<16x128xf32>, vector<8x128xf32> -> vector<8x128xf32>
    %137 = arith.maximumf %135, %136 : vector<8x128xf32>
    %c0_145 = arith.constant 0 : index
    %c0_146 = arith.constant 0 : index
    %c0_147 = arith.constant 0 : index
    %c0_148 = arith.constant 0 : index
    %138 = vector.load %arg8[%c0_145, %c0_146, %c0_147, %c0_148] : memref<1x1x8x128xf32, #tpu.memory_space<vmem>>, vector<1x1x8x128xf32>
    %139 = vector.shape_cast %138 : vector<1x1x8x128xf32> to vector<8x128xf32>
    %140 = vector.shape_cast %137 : vector<8x128xf32> to vector<1x1x8x128xf32>
    tpu.vector_store %arg8[%c0_145, %c0_146, %c0_147, %c0_148], %140 {strides = array<i32>} : memref<1x1x8x128xf32, #tpu.memory_space<vmem>>, vector<1x1x8x128xf32>,
    return
  }
  func.func @transform_0(%arg0: i32, %arg1: i32) -> (i32, i32, i32, i32) {
    %c2_i32 = arith.constant 2 : i32
    %0 = arith.muli %c2_i32, %arg1 : i32
    %c0_i32 = arith.constant 0 : i32
    %1 = arith.addi %0, %c0_i32 : i32
    %c0_i32_0 = arith.constant 0 : i32
    %c0_i32_1 = arith.constant 0 : i32
    %c0_i32_2 = arith.constant 0 : i32
    return %arg0, %1, %c0_i32_0, %c0_i32_1 : i32, i32, i32, i32
  }
  func.func @transform_1(%arg0: i32, %arg1: i32) -> (i32, i32, i32, i32) {
    %c2_i32 = arith.constant 2 : i32
    %0 = arith.muli %c2_i32, %arg1 : i32
    %c1_i32 = arith.constant 1 : i32
    %1 = arith.addi %0, %c1_i32 : i32
    %c0_i32 = arith.constant 0 : i32
    %c0_i32_0 = arith.constant 0 : i32
    %c0_i32_1 = arith.constant 0 : i32
    return %arg0, %1, %c0_i32, %c0_i32_0 : i32, i32, i32, i32
  }
  func.func @transform_2(%arg0: i32, %arg1: i32) -> (i32, i32, i32, i32) {
    %c2_i32 = arith.constant 2 : i32
    %0 = arith.muli %c2_i32, %arg1 : i32
    %c2_i32_0 = arith.constant 2 : i32
    %1 = arith.addi %0, %c2_i32_0 : i32
    %c0_i32 = arith.constant 0 : i32
    %c0_i32_1 = arith.constant 0 : i32
    %c0_i32_2 = arith.constant 0 : i32
    return %arg0, %1, %c0_i32, %c0_i32_1 : i32, i32, i32, i32
  }
  func.func @transform_3(%arg0: i32, %arg1: i32) -> (i32, i32, i32, i32) {
    %c2_i32 = arith.constant 2 : i32
    %0 = arith.muli %c2_i32, %arg1 : i32
    %c3_i32 = arith.constant 3 : i32
    %1 = arith.addi %0, %c3_i32 : i32
    %c0_i32 = arith.constant 0 : i32
    %c0_i32_0 = arith.constant 0 : i32
    %c0_i32_1 = arith.constant 0 : i32
    return %arg0, %1, %c0_i32, %c0_i32_0 : i32, i32, i32, i32
  }
  func.func @transform_4(%arg0: i32, %arg1: i32) -> (i32, i32, i32) {
    %c0_i32 = arith.constant 0 : i32
    %c0_i32_0 = arith.constant 0 : i32
    %c0_i32_1 = arith.constant 0 : i32
    %c0_i32_2 = arith.constant 0 : i32
    return %c0_i32, %c0_i32_0, %c0_i32_1 : i32, i32, i32
  }
  func.func @transform_5(%arg0: i32, %arg1: i32) -> (i32, i32) {
    %c0_i32 = arith.constant 0 : i32
    %c0_i32_0 = arith.constant 0 : i32
    %c0_i32_1 = arith.constant 0 : i32
    return %c0_i32, %c0_i32_0 : i32, i32
  }
  func.func @transform_6(%arg0: i32, %arg1: i32) -> (i32, i32, i32, i32) {
    %c0_i32 = arith.constant 0 : i32
    %c0_i32_0 = arith.constant 0 : i32
    %c0_i32_1 = arith.constant 0 : i32
    return %arg0, %arg1, %c0_i32, %c0_i32_0 : i32, i32, i32, i32
  }
}

module attributes {stable_mosaic.version = 11 : i64} {
  func.func @kernel(%arg0: i32, %arg1: i32, %arg2: memref<1x1x10x128xf32, #tpu.memory_space<vmem>>, %arg3: memref<1x1x10x128xf32, #tpu.memory_space<vmem>>, %arg4: memref<1x1x10x128xf32, #tpu.memory_space<vmem>>, %arg5: memref<1x1x10x128xf32, #tpu.memory_space<vmem>>, %arg6: memref<9x128x128xf32, #tpu.memory_space<vmem>>, %arg7: memref<1x128xf32, #tpu.memory_space<vmem>>, %arg8: memref<1x1x4x128xf32, #tpu.memory_space<vmem>>) attributes {dimension_semantics = [#tpu.dimension_semantics<parallel>, #tpu.dimension_semantics<parallel>], iteration_bounds = array<i64: 2, 4>, scalar_prefetch = 0 : i64, scratch_operands = 0 : i64, tpu.core_type = #tpu.core_type<tc>, window_params = [{transform_indices = @transform_0, window_bounds = array<i64: 1, 1, 10, 128>}, {transform_indices = @transform_1, window_bounds = array<i64: 1, 1, 10, 128>}, {transform_indices = @transform_2, window_bounds = array<i64: 1, 1, 10, 128>}, {transform_indices = @transform_3, window_bounds = array<i64: 1, 1, 10, 128>}, {pipeline_mode = #tpu.pipeline_mode<synchronous>, transform_indices = @transform_4, window_bounds = array<i64: 9, 128, 128>}, {pipeline_mode = #tpu.pipeline_mode<synchronous>, transform_indices = @transform_5, window_bounds = array<i64: 1, 128>}, {transform_indices = @transform_6, window_bounds = array<i64: 1, 1, 4, 128>}]} {
    %0 = tpu.iota {dimensions = array<i32: 0>} : vector<4x8xi32>
    %1 = tpu.iota {dimensions = array<i32: 1>} : vector<4x8xi32>
    %c2_i32 = arith.constant 2 : i32
    %2 = vector.broadcast %c2_i32 : i32 to vector<4x8xi32>
    %3 = arith.muli %2, %0 : vector<4x8xi32>
    %4 = arith.cmpi eq, %1, %3 : vector<4x8xi32>
    %5 = arith.extui %4 : vector<4x8xi1> to vector<4x8xi32>
    %6 = arith.sitofp %5 : vector<4x8xi32> to vector<4x8xf32>
    %c2_i32_0 = arith.constant 2 : i32
    %7 = vector.broadcast %c2_i32_0 : i32 to vector<4x8xi32>
    %8 = arith.muli %7, %0 : vector<4x8xi32>
    %c1_i32 = arith.constant 1 : i32
    %9 = vector.broadcast %c1_i32 : i32 to vector<4x8xi32>
    %10 = arith.addi %8, %9 : vector<4x8xi32>
    %11 = arith.cmpi eq, %1, %10 : vector<4x8xi32>
    %12 = arith.extui %11 : vector<4x8xi1> to vector<4x8xi32>
    %13 = arith.sitofp %12 : vector<4x8xi32> to vector<4x8xf32>
    %cst = arith.constant 0.000000e+00 : f32
    %14 = vector.broadcast %cst : f32 to vector<8x128xf32>
    %c0 = arith.constant 0 : index
    %c0_1 = arith.constant 0 : index
    %c0_2 = arith.constant 0 : index
    %c0_3 = arith.constant 0 : index
    %15 = vector.load %arg2[%c0, %c0_1, %c0_2, %c0_3] : memref<1x1x10x128xf32, #tpu.memory_space<vmem>>, vector<1x1x8x128xf32>
    %16 = vector.shape_cast %15 : vector<1x1x8x128xf32> to vector<8x128xf32>
    %c0_4 = arith.constant 0 : index
    %c0_5 = arith.constant 0 : index
    %c0_6 = arith.constant 0 : index
    %17 = vector.load %arg6[%c0_4, %c0_5, %c0_6] : memref<9x128x128xf32, #tpu.memory_space<vmem>>, vector<1x128x128xf32>
    %18 = vector.shape_cast %17 : vector<1x128x128xf32> to vector<128x128xf32>
    %cst_7 = arith.constant dense<0.000000e+00> : vector<8x128xf32>
    %19 = tpu.matmul %16, %18, %cst_7 {dimension_numbers = #tpu.dot_dimension_numbers<[1], [0], [0], [1], [0, 0, 1, 1], [], []>} : vector<8x128xf32>, vector<128x128xf32>, vector<8x128xf32> -> vector<8x128xf32>
    %20 = arith.addf %14, %19 : vector<8x128xf32>
    %c0_8 = arith.constant 0 : index
    %c0_9 = arith.constant 0 : index
    %c1 = arith.constant 1 : index
    %c0_10 = arith.constant 0 : index
    %21 = vector.load %arg2[%c0_8, %c0_9, %c1, %c0_10] : memref<1x1x10x128xf32, #tpu.memory_space<vmem>>, vector<1x1x8x128xf32>
    %22 = vector.shape_cast %21 : vector<1x1x8x128xf32> to vector<8x128xf32>
    %c1_11 = arith.constant 1 : index
    %c0_12 = arith.constant 0 : index
    %c0_13 = arith.constant 0 : index
    %23 = vector.load %arg6[%c1_11, %c0_12, %c0_13] : memref<9x128x128xf32, #tpu.memory_space<vmem>>, vector<1x128x128xf32>
    %24 = vector.shape_cast %23 : vector<1x128x128xf32> to vector<128x128xf32>
    %cst_14 = arith.constant dense<0.000000e+00> : vector<8x128xf32>
    %25 = tpu.matmul %22, %24, %cst_14 {dimension_numbers = #tpu.dot_dimension_numbers<[1], [0], [0], [1], [0, 0, 1, 1], [], []>} : vector<8x128xf32>, vector<128x128xf32>, vector<8x128xf32> -> vector<8x128xf32>
    %26 = arith.addf %20, %25 : vector<8x128xf32>
    %c0_15 = arith.constant 0 : index
    %c0_16 = arith.constant 0 : index
    %c2 = arith.constant 2 : index
    %c0_17 = arith.constant 0 : index
    %27 = vector.load %arg2[%c0_15, %c0_16, %c2, %c0_17] : memref<1x1x10x128xf32, #tpu.memory_space<vmem>>, vector<1x1x8x128xf32>
    %28 = vector.shape_cast %27 : vector<1x1x8x128xf32> to vector<8x128xf32>
    %c2_18 = arith.constant 2 : index
    %c0_19 = arith.constant 0 : index
    %c0_20 = arith.constant 0 : index
    %29 = vector.load %arg6[%c2_18, %c0_19, %c0_20] : memref<9x128x128xf32, #tpu.memory_space<vmem>>, vector<1x128x128xf32>
    %30 = vector.shape_cast %29 : vector<1x128x128xf32> to vector<128x128xf32>
    %cst_21 = arith.constant dense<0.000000e+00> : vector<8x128xf32>
    %31 = tpu.matmul %28, %30, %cst_21 {dimension_numbers = #tpu.dot_dimension_numbers<[1], [0], [0], [1], [0, 0, 1, 1], [], []>} : vector<8x128xf32>, vector<128x128xf32>, vector<8x128xf32> -> vector<8x128xf32>
    %32 = arith.addf %26, %31 : vector<8x128xf32>
    %c0_22 = arith.constant 0 : index
    %c0_23 = arith.constant 0 : index
    %c0_24 = arith.constant 0 : index
    %c0_25 = arith.constant 0 : index
    %33 = vector.load %arg3[%c0_22, %c0_23, %c0_24, %c0_25] : memref<1x1x10x128xf32, #tpu.memory_space<vmem>>, vector<1x1x8x128xf32>
    %34 = vector.shape_cast %33 : vector<1x1x8x128xf32> to vector<8x128xf32>
    %c3 = arith.constant 3 : index
    %c0_26 = arith.constant 0 : index
    %c0_27 = arith.constant 0 : index
    %35 = vector.load %arg6[%c3, %c0_26, %c0_27] : memref<9x128x128xf32, #tpu.memory_space<vmem>>, vector<1x128x128xf32>
    %36 = vector.shape_cast %35 : vector<1x128x128xf32> to vector<128x128xf32>
    %cst_28 = arith.constant dense<0.000000e+00> : vector<8x128xf32>
    %37 = tpu.matmul %34, %36, %cst_28 {dimension_numbers = #tpu.dot_dimension_numbers<[1], [0], [0], [1], [0, 0, 1, 1], [], []>} : vector<8x128xf32>, vector<128x128xf32>, vector<8x128xf32> -> vector<8x128xf32>
    %38 = arith.addf %32, %37 : vector<8x128xf32>
    %c0_29 = arith.constant 0 : index
    %c0_30 = arith.constant 0 : index
    %c1_31 = arith.constant 1 : index
    %c0_32 = arith.constant 0 : index
    %39 = vector.load %arg3[%c0_29, %c0_30, %c1_31, %c0_32] : memref<1x1x10x128xf32, #tpu.memory_space<vmem>>, vector<1x1x8x128xf32>
    %40 = vector.shape_cast %39 : vector<1x1x8x128xf32> to vector<8x128xf32>
    %c4 = arith.constant 4 : index
    %c0_33 = arith.constant 0 : index
    %c0_34 = arith.constant 0 : index
    %41 = vector.load %arg6[%c4, %c0_33, %c0_34] : memref<9x128x128xf32, #tpu.memory_space<vmem>>, vector<1x128x128xf32>
    %42 = vector.shape_cast %41 : vector<1x128x128xf32> to vector<128x128xf32>
    %cst_35 = arith.constant dense<0.000000e+00> : vector<8x128xf32>
    %43 = tpu.matmul %40, %42, %cst_35 {dimension_numbers = #tpu.dot_dimension_numbers<[1], [0], [0], [1], [0, 0, 1, 1], [], []>} : vector<8x128xf32>, vector<128x128xf32>, vector<8x128xf32> -> vector<8x128xf32>
    %44 = arith.addf %38, %43 : vector<8x128xf32>
    %c0_36 = arith.constant 0 : index
    %c0_37 = arith.constant 0 : index
    %c2_38 = arith.constant 2 : index
    %c0_39 = arith.constant 0 : index
    %45 = vector.load %arg3[%c0_36, %c0_37, %c2_38, %c0_39] : memref<1x1x10x128xf32, #tpu.memory_space<vmem>>, vector<1x1x8x128xf32>
    %46 = vector.shape_cast %45 : vector<1x1x8x128xf32> to vector<8x128xf32>
    %c5 = arith.constant 5 : index
    %c0_40 = arith.constant 0 : index
    %c0_41 = arith.constant 0 : index
    %47 = vector.load %arg6[%c5, %c0_40, %c0_41] : memref<9x128x128xf32, #tpu.memory_space<vmem>>, vector<1x128x128xf32>
    %48 = vector.shape_cast %47 : vector<1x128x128xf32> to vector<128x128xf32>
    %cst_42 = arith.constant dense<0.000000e+00> : vector<8x128xf32>
    %49 = tpu.matmul %46, %48, %cst_42 {dimension_numbers = #tpu.dot_dimension_numbers<[1], [0], [0], [1], [0, 0, 1, 1], [], []>} : vector<8x128xf32>, vector<128x128xf32>, vector<8x128xf32> -> vector<8x128xf32>
    %50 = arith.addf %44, %49 : vector<8x128xf32>
    %c0_43 = arith.constant 0 : index
    %c0_44 = arith.constant 0 : index
    %c0_45 = arith.constant 0 : index
    %c0_46 = arith.constant 0 : index
    %51 = vector.load %arg4[%c0_43, %c0_44, %c0_45, %c0_46] : memref<1x1x10x128xf32, #tpu.memory_space<vmem>>, vector<1x1x8x128xf32>
    %52 = vector.shape_cast %51 : vector<1x1x8x128xf32> to vector<8x128xf32>
    %c6 = arith.constant 6 : index
    %c0_47 = arith.constant 0 : index
    %c0_48 = arith.constant 0 : index
    %53 = vector.load %arg6[%c6, %c0_47, %c0_48] : memref<9x128x128xf32, #tpu.memory_space<vmem>>, vector<1x128x128xf32>
    %54 = vector.shape_cast %53 : vector<1x128x128xf32> to vector<128x128xf32>
    %cst_49 = arith.constant dense<0.000000e+00> : vector<8x128xf32>
    %55 = tpu.matmul %52, %54, %cst_49 {dimension_numbers = #tpu.dot_dimension_numbers<[1], [0], [0], [1], [0, 0, 1, 1], [], []>} : vector<8x128xf32>, vector<128x128xf32>, vector<8x128xf32> -> vector<8x128xf32>
    %56 = arith.addf %50, %55 : vector<8x128xf32>
    %c0_50 = arith.constant 0 : index
    %c0_51 = arith.constant 0 : index
    %c1_52 = arith.constant 1 : index
    %c0_53 = arith.constant 0 : index
    %57 = vector.load %arg4[%c0_50, %c0_51, %c1_52, %c0_53] : memref<1x1x10x128xf32, #tpu.memory_space<vmem>>, vector<1x1x8x128xf32>
    %58 = vector.shape_cast %57 : vector<1x1x8x128xf32> to vector<8x128xf32>
    %c7 = arith.constant 7 : index
    %c0_54 = arith.constant 0 : index
    %c0_55 = arith.constant 0 : index
    %59 = vector.load %arg6[%c7, %c0_54, %c0_55] : memref<9x128x128xf32, #tpu.memory_space<vmem>>, vector<1x128x128xf32>
    %60 = vector.shape_cast %59 : vector<1x128x128xf32> to vector<128x128xf32>
    %cst_56 = arith.constant dense<0.000000e+00> : vector<8x128xf32>
    %61 = tpu.matmul %58, %60, %cst_56 {dimension_numbers = #tpu.dot_dimension_numbers<[1], [0], [0], [1], [0, 0, 1, 1], [], []>} : vector<8x128xf32>, vector<128x128xf32>, vector<8x128xf32> -> vector<8x128xf32>
    %62 = arith.addf %56, %61 : vector<8x128xf32>
    %c0_57 = arith.constant 0 : index
    %c0_58 = arith.constant 0 : index
    %c2_59 = arith.constant 2 : index
    %c0_60 = arith.constant 0 : index
    %63 = vector.load %arg4[%c0_57, %c0_58, %c2_59, %c0_60] : memref<1x1x10x128xf32, #tpu.memory_space<vmem>>, vector<1x1x8x128xf32>
    %64 = vector.shape_cast %63 : vector<1x1x8x128xf32> to vector<8x128xf32>
    %c8 = arith.constant 8 : index
    %c0_61 = arith.constant 0 : index
    %c0_62 = arith.constant 0 : index
    %65 = vector.load %arg6[%c8, %c0_61, %c0_62] : memref<9x128x128xf32, #tpu.memory_space<vmem>>, vector<1x128x128xf32>
    %66 = vector.shape_cast %65 : vector<1x128x128xf32> to vector<128x128xf32>
    %cst_63 = arith.constant dense<0.000000e+00> : vector<8x128xf32>
    %67 = tpu.matmul %64, %66, %cst_63 {dimension_numbers = #tpu.dot_dimension_numbers<[1], [0], [0], [1], [0, 0, 1, 1], [], []>} : vector<8x128xf32>, vector<128x128xf32>, vector<8x128xf32> -> vector<8x128xf32>
    %68 = arith.addf %62, %67 : vector<8x128xf32>
    %c0_64 = arith.constant 0 : index
    %c0_65 = arith.constant 0 : index
    %69 = vector.load %arg7[%c0_64, %c0_65] : memref<1x128xf32, #tpu.memory_space<vmem>>, vector<1x128xf32>
    %70 = vector.broadcast %69 : vector<1x128xf32> to vector<8x128xf32>
    %71 = arith.addf %68, %70 : vector<8x128xf32>
    %cst_66 = arith.constant 0.000000e+00 : f32
    %72 = vector.broadcast %cst_66 : f32 to vector<8x128xf32>
    %73 = arith.maximumf %71, %72 : vector<8x128xf32>
    %cst_67 = arith.constant 0.000000e+00 : f32
    %74 = vector.broadcast %cst_67 : f32 to vector<8x128xf32>
    %c0_68 = arith.constant 0 : index
    %c0_69 = arith.constant 0 : index
    %c0_70 = arith.constant 0 : index
    %c0_71 = arith.constant 0 : index
    %75 = vector.load %arg3[%c0_68, %c0_69, %c0_70, %c0_71] : memref<1x1x10x128xf32, #tpu.memory_space<vmem>>, vector<1x1x8x128xf32>
    %76 = vector.shape_cast %75 : vector<1x1x8x128xf32> to vector<8x128xf32>
    %c0_72 = arith.constant 0 : index
    %c0_73 = arith.constant 0 : index
    %c0_74 = arith.constant 0 : index
    %77 = vector.load %arg6[%c0_72, %c0_73, %c0_74] : memref<9x128x128xf32, #tpu.memory_space<vmem>>, vector<1x128x128xf32>
    %78 = vector.shape_cast %77 : vector<1x128x128xf32> to vector<128x128xf32>
    %cst_75 = arith.constant dense<0.000000e+00> : vector<8x128xf32>
    %79 = tpu.matmul %76, %78, %cst_75 {dimension_numbers = #tpu.dot_dimension_numbers<[1], [0], [0], [1], [0, 0, 1, 1], [], []>} : vector<8x128xf32>, vector<128x128xf32>, vector<8x128xf32> -> vector<8x128xf32>
    %80 = arith.addf %74, %79 : vector<8x128xf32>
    %c0_76 = arith.constant 0 : index
    %c0_77 = arith.constant 0 : index
    %c1_78 = arith.constant 1 : index
    %c0_79 = arith.constant 0 : index
    %81 = vector.load %arg3[%c0_76, %c0_77, %c1_78, %c0_79] : memref<1x1x10x128xf32, #tpu.memory_space<vmem>>, vector<1x1x8x128xf32>
    %82 = vector.shape_cast %81 : vector<1x1x8x128xf32> to vector<8x128xf32>
    %c1_80 = arith.constant 1 : index
    %c0_81 = arith.constant 0 : index
    %c0_82 = arith.constant 0 : index
    %83 = vector.load %arg6[%c1_80, %c0_81, %c0_82] : memref<9x128x128xf32, #tpu.memory_space<vmem>>, vector<1x128x128xf32>
    %84 = vector.shape_cast %83 : vector<1x128x128xf32> to vector<128x128xf32>
    %cst_83 = arith.constant dense<0.000000e+00> : vector<8x128xf32>
    %85 = tpu.matmul %82, %84, %cst_83 {dimension_numbers = #tpu.dot_dimension_numbers<[1], [0], [0], [1], [0, 0, 1, 1], [], []>} : vector<8x128xf32>, vector<128x128xf32>, vector<8x128xf32> -> vector<8x128xf32>
    %86 = arith.addf %80, %85 : vector<8x128xf32>
    %c0_84 = arith.constant 0 : index
    %c0_85 = arith.constant 0 : index
    %c2_86 = arith.constant 2 : index
    %c0_87 = arith.constant 0 : index
    %87 = vector.load %arg3[%c0_84, %c0_85, %c2_86, %c0_87] : memref<1x1x10x128xf32, #tpu.memory_space<vmem>>, vector<1x1x8x128xf32>
    %88 = vector.shape_cast %87 : vector<1x1x8x128xf32> to vector<8x128xf32>
    %c2_88 = arith.constant 2 : index
    %c0_89 = arith.constant 0 : index
    %c0_90 = arith.constant 0 : index
    %89 = vector.load %arg6[%c2_88, %c0_89, %c0_90] : memref<9x128x128xf32, #tpu.memory_space<vmem>>, vector<1x128x128xf32>
    %90 = vector.shape_cast %89 : vector<1x128x128xf32> to vector<128x128xf32>
    %cst_91 = arith.constant dense<0.000000e+00> : vector<8x128xf32>
    %91 = tpu.matmul %88, %90, %cst_91 {dimension_numbers = #tpu.dot_dimension_numbers<[1], [0], [0], [1], [0, 0, 1, 1], [], []>} : vector<8x128xf32>, vector<128x128xf32>, vector<8x128xf32> -> vector<8x128xf32>
    %92 = arith.addf %86, %91 : vector<8x128xf32>
    %c0_92 = arith.constant 0 : index
    %c0_93 = arith.constant 0 : index
    %c0_94 = arith.constant 0 : index
    %c0_95 = arith.constant 0 : index
    %93 = vector.load %arg4[%c0_92, %c0_93, %c0_94, %c0_95] : memref<1x1x10x128xf32, #tpu.memory_space<vmem>>, vector<1x1x8x128xf32>
    %94 = vector.shape_cast %93 : vector<1x1x8x128xf32> to vector<8x128xf32>
    %c3_96 = arith.constant 3 : index
    %c0_97 = arith.constant 0 : index
    %c0_98 = arith.constant 0 : index
    %95 = vector.load %arg6[%c3_96, %c0_97, %c0_98] : memref<9x128x128xf32, #tpu.memory_space<vmem>>, vector<1x128x128xf32>
    %96 = vector.shape_cast %95 : vector<1x128x128xf32> to vector<128x128xf32>
    %cst_99 = arith.constant dense<0.000000e+00> : vector<8x128xf32>
    %97 = tpu.matmul %94, %96, %cst_99 {dimension_numbers = #tpu.dot_dimension_numbers<[1], [0], [0], [1], [0, 0, 1, 1], [], []>} : vector<8x128xf32>, vector<128x128xf32>, vector<8x128xf32> -> vector<8x128xf32>
    %98 = arith.addf %92, %97 : vector<8x128xf32>
    %c0_100 = arith.constant 0 : index
    %c0_101 = arith.constant 0 : index
    %c1_102 = arith.constant 1 : index
    %c0_103 = arith.constant 0 : index
    %99 = vector.load %arg4[%c0_100, %c0_101, %c1_102, %c0_103] : memref<1x1x10x128xf32, #tpu.memory_space<vmem>>, vector<1x1x8x128xf32>
    %100 = vector.shape_cast %99 : vector<1x1x8x128xf32> to vector<8x128xf32>
    %c4_104 = arith.constant 4 : index
    %c0_105 = arith.constant 0 : index
    %c0_106 = arith.constant 0 : index
    %101 = vector.load %arg6[%c4_104, %c0_105, %c0_106] : memref<9x128x128xf32, #tpu.memory_space<vmem>>, vector<1x128x128xf32>
    %102 = vector.shape_cast %101 : vector<1x128x128xf32> to vector<128x128xf32>
    %cst_107 = arith.constant dense<0.000000e+00> : vector<8x128xf32>
    %103 = tpu.matmul %100, %102, %cst_107 {dimension_numbers = #tpu.dot_dimension_numbers<[1], [0], [0], [1], [0, 0, 1, 1], [], []>} : vector<8x128xf32>, vector<128x128xf32>, vector<8x128xf32> -> vector<8x128xf32>
    %104 = arith.addf %98, %103 : vector<8x128xf32>
    %c0_108 = arith.constant 0 : index
    %c0_109 = arith.constant 0 : index
    %c2_110 = arith.constant 2 : index
    %c0_111 = arith.constant 0 : index
    %105 = vector.load %arg4[%c0_108, %c0_109, %c2_110, %c0_111] : memref<1x1x10x128xf32, #tpu.memory_space<vmem>>, vector<1x1x8x128xf32>
    %106 = vector.shape_cast %105 : vector<1x1x8x128xf32> to vector<8x128xf32>
    %c5_112 = arith.constant 5 : index
    %c0_113 = arith.constant 0 : index
    %c0_114 = arith.constant 0 : index
    %107 = vector.load %arg6[%c5_112, %c0_113, %c0_114] : memref<9x128x128xf32, #tpu.memory_space<vmem>>, vector<1x128x128xf32>
    %108 = vector.shape_cast %107 : vector<1x128x128xf32> to vector<128x128xf32>
    %cst_115 = arith.constant dense<0.000000e+00> : vector<8x128xf32>
    %109 = tpu.matmul %106, %108, %cst_115 {dimension_numbers = #tpu.dot_dimension_numbers<[1], [0], [0], [1], [0, 0, 1, 1], [], []>} : vector<8x128xf32>, vector<128x128xf32>, vector<8x128xf32> -> vector<8x128xf32>
    %110 = arith.addf %104, %109 : vector<8x128xf32>
    %c0_116 = arith.constant 0 : index
    %c0_117 = arith.constant 0 : index
    %c0_118 = arith.constant 0 : index
    %c0_119 = arith.constant 0 : index
    %111 = vector.load %arg5[%c0_116, %c0_117, %c0_118, %c0_119] : memref<1x1x10x128xf32, #tpu.memory_space<vmem>>, vector<1x1x8x128xf32>
    %112 = vector.shape_cast %111 : vector<1x1x8x128xf32> to vector<8x128xf32>
    %c6_120 = arith.constant 6 : index
    %c0_121 = arith.constant 0 : index
    %c0_122 = arith.constant 0 : index
    %113 = vector.load %arg6[%c6_120, %c0_121, %c0_122] : memref<9x128x128xf32, #tpu.memory_space<vmem>>, vector<1x128x128xf32>
    %114 = vector.shape_cast %113 : vector<1x128x128xf32> to vector<128x128xf32>
    %cst_123 = arith.constant dense<0.000000e+00> : vector<8x128xf32>
    %115 = tpu.matmul %112, %114, %cst_123 {dimension_numbers = #tpu.dot_dimension_numbers<[1], [0], [0], [1], [0, 0, 1, 1], [], []>} : vector<8x128xf32>, vector<128x128xf32>, vector<8x128xf32> -> vector<8x128xf32>
    %116 = arith.addf %110, %115 : vector<8x128xf32>
    %c0_124 = arith.constant 0 : index
    %c0_125 = arith.constant 0 : index
    %c1_126 = arith.constant 1 : index
    %c0_127 = arith.constant 0 : index
    %117 = vector.load %arg5[%c0_124, %c0_125, %c1_126, %c0_127] : memref<1x1x10x128xf32, #tpu.memory_space<vmem>>, vector<1x1x8x128xf32>
    %118 = vector.shape_cast %117 : vector<1x1x8x128xf32> to vector<8x128xf32>
    %c7_128 = arith.constant 7 : index
    %c0_129 = arith.constant 0 : index
    %c0_130 = arith.constant 0 : index
    %119 = vector.load %arg6[%c7_128, %c0_129, %c0_130] : memref<9x128x128xf32, #tpu.memory_space<vmem>>, vector<1x128x128xf32>
    %120 = vector.shape_cast %119 : vector<1x128x128xf32> to vector<128x128xf32>
    %cst_131 = arith.constant dense<0.000000e+00> : vector<8x128xf32>
    %121 = tpu.matmul %118, %120, %cst_131 {dimension_numbers = #tpu.dot_dimension_numbers<[1], [0], [0], [1], [0, 0, 1, 1], [], []>} : vector<8x128xf32>, vector<128x128xf32>, vector<8x128xf32> -> vector<8x128xf32>
    %122 = arith.addf %116, %121 : vector<8x128xf32>
    %c0_132 = arith.constant 0 : index
    %c0_133 = arith.constant 0 : index
    %c2_134 = arith.constant 2 : index
    %c0_135 = arith.constant 0 : index
    %123 = vector.load %arg5[%c0_132, %c0_133, %c2_134, %c0_135] : memref<1x1x10x128xf32, #tpu.memory_space<vmem>>, vector<1x1x8x128xf32>
    %124 = vector.shape_cast %123 : vector<1x1x8x128xf32> to vector<8x128xf32>
    %c8_136 = arith.constant 8 : index
    %c0_137 = arith.constant 0 : index
    %c0_138 = arith.constant 0 : index
    %125 = vector.load %arg6[%c8_136, %c0_137, %c0_138] : memref<9x128x128xf32, #tpu.memory_space<vmem>>, vector<1x128x128xf32>
    %126 = vector.shape_cast %125 : vector<1x128x128xf32> to vector<128x128xf32>
    %cst_139 = arith.constant dense<0.000000e+00> : vector<8x128xf32>
    %127 = tpu.matmul %124, %126, %cst_139 {dimension_numbers = #tpu.dot_dimension_numbers<[1], [0], [0], [1], [0, 0, 1, 1], [], []>} : vector<8x128xf32>, vector<128x128xf32>, vector<8x128xf32> -> vector<8x128xf32>
    %128 = arith.addf %122, %127 : vector<8x128xf32>
    %c0_140 = arith.constant 0 : index
    %c0_141 = arith.constant 0 : index
    %129 = vector.load %arg7[%c0_140, %c0_141] : memref<1x128xf32, #tpu.memory_space<vmem>>, vector<1x128xf32>
    %130 = vector.broadcast %129 : vector<1x128xf32> to vector<8x128xf32>
    %131 = arith.addf %128, %130 : vector<8x128xf32>
    %cst_142 = arith.constant 0.000000e+00 : f32
    %132 = vector.broadcast %cst_142 : f32 to vector<8x128xf32>
    %133 = arith.maximumf %131, %132 : vector<8x128xf32>
    %134 = arith.maximumf %73, %133 : vector<8x128xf32>
    %cst_143 = arith.constant dense<0.000000e+00> : vector<4x128xf32>
    %135 = tpu.matmul %6, %134, %cst_143 {dimension_numbers = #tpu.dot_dimension_numbers<[1], [0], [0], [1], [0, 0, 1, 1], [], []>} : vector<4x8xf32>, vector<8x128xf32>, vector<4x128xf32> -> vector<4x128xf32>
    %cst_144 = arith.constant dense<0.000000e+00> : vector<4x128xf32>
    %136 = tpu.matmul %13, %134, %cst_144 {dimension_numbers = #tpu.dot_dimension_numbers<[1], [0], [0], [1], [0, 0, 1, 1], [], []>} : vector<4x8xf32>, vector<8x128xf32>, vector<4x128xf32> -> vector<4x128xf32>
    %137 = arith.maximumf %135, %136 : vector<4x128xf32>
    %c0_145 = arith.constant 0 : index
    %c0_146 = arith.constant 0 : index
    %c0_147 = arith.constant 0 : index
    %c0_148 = arith.constant 0 : index
    %138 = vector.load %arg8[%c0_145, %c0_146, %c0_147, %c0_148] : memref<1x1x4x128xf32, #tpu.memory_space<vmem>>, vector<1x1x4x128xf32>
    %139 = vector.shape_cast %138 : vector<1x1x4x128xf32> to vector<4x128xf32>
    %140 = vector.shape_cast %137 : vector<4x128xf32> to vector<1x1x4x128xf32>
    tpu.vector_store %arg8[%c0_145, %c0_146, %c0_147, %c0_148], %140 {strides = array<i32>} : memref<1x1x4x128xf32, #tpu.memory_space<vmem>>, vector<1x1x4x128xf32>,
    return
  }
  func.func @transform_0(%arg0: i32, %arg1: i32) -> (i32, i32, i32, i32) {
    %c2_i32 = arith.constant 2 : i32
    %0 = arith.muli %c2_i32, %arg1 : i32
    %c0_i32 = arith.constant 0 : i32
    %1 = arith.addi %0, %c0_i32 : i32
    %c0_i32_0 = arith.constant 0 : i32
    %c0_i32_1 = arith.constant 0 : i32
    %c0_i32_2 = arith.constant 0 : i32
    return %arg0, %1, %c0_i32_0, %c0_i32_1 : i32, i32, i32, i32
  }
  func.func @transform_1(%arg0: i32, %arg1: i32) -> (i32, i32, i32, i32) {
    %c2_i32 = arith.constant 2 : i32
    %0 = arith.muli %c2_i32, %arg1 : i32
    %c1_i32 = arith.constant 1 : i32
    %1 = arith.addi %0, %c1_i32 : i32
    %c0_i32 = arith.constant 0 : i32
    %c0_i32_0 = arith.constant 0 : i32
    %c0_i32_1 = arith.constant 0 : i32
    return %arg0, %1, %c0_i32, %c0_i32_0 : i32, i32, i32, i32
  }
  func.func @transform_2(%arg0: i32, %arg1: i32) -> (i32, i32, i32, i32) {
    %c2_i32 = arith.constant 2 : i32
    %0 = arith.muli %c2_i32, %arg1 : i32
    %c2_i32_0 = arith.constant 2 : i32
    %1 = arith.addi %0, %c2_i32_0 : i32
    %c0_i32 = arith.constant 0 : i32
    %c0_i32_1 = arith.constant 0 : i32
    %c0_i32_2 = arith.constant 0 : i32
    return %arg0, %1, %c0_i32, %c0_i32_1 : i32, i32, i32, i32
  }
  func.func @transform_3(%arg0: i32, %arg1: i32) -> (i32, i32, i32, i32) {
    %c2_i32 = arith.constant 2 : i32
    %0 = arith.muli %c2_i32, %arg1 : i32
    %c3_i32 = arith.constant 3 : i32
    %1 = arith.addi %0, %c3_i32 : i32
    %c0_i32 = arith.constant 0 : i32
    %c0_i32_0 = arith.constant 0 : i32
    %c0_i32_1 = arith.constant 0 : i32
    return %arg0, %1, %c0_i32, %c0_i32_0 : i32, i32, i32, i32
  }
  func.func @transform_4(%arg0: i32, %arg1: i32) -> (i32, i32, i32) {
    %c0_i32 = arith.constant 0 : i32
    %c0_i32_0 = arith.constant 0 : i32
    %c0_i32_1 = arith.constant 0 : i32
    %c0_i32_2 = arith.constant 0 : i32
    return %c0_i32, %c0_i32_0, %c0_i32_1 : i32, i32, i32
  }
  func.func @transform_5(%arg0: i32, %arg1: i32) -> (i32, i32) {
    %c0_i32 = arith.constant 0 : i32
    %c0_i32_0 = arith.constant 0 : i32
    %c0_i32_1 = arith.constant 0 : i32
    return %c0_i32, %c0_i32_0 : i32, i32
  }
  func.func @transform_6(%arg0: i32, %arg1: i32) -> (i32, i32, i32, i32) {
    %c0_i32 = arith.constant 0 : i32
    %c0_i32_0 = arith.constant 0 : i32
    %c0_i32_1 = arith.constant 0 : i32
    return %arg0, %arg1, %c0_i32, %c0_i32_0 : i32, i32, i32, i32
  }
}

module attributes {stable_mosaic.version = 11 : i64} {
  func.func @kernel(%arg0: i32, %arg1: i32, %arg2: memref<1x1x6x128xf32, #tpu.memory_space<vmem>>, %arg3: memref<1x1x6x128xf32, #tpu.memory_space<vmem>>, %arg4: memref<1x1x6x128xf32, #tpu.memory_space<vmem>>, %arg5: memref<1x1x6x128xf32, #tpu.memory_space<vmem>>, %arg6: memref<9x128x128xf32, #tpu.memory_space<vmem>>, %arg7: memref<1x128xf32, #tpu.memory_space<vmem>>, %arg8: memref<1x1x2x128xf32, #tpu.memory_space<vmem>>) attributes {dimension_semantics = [#tpu.dimension_semantics<parallel>, #tpu.dimension_semantics<parallel>], iteration_bounds = array<i64: 2, 2>, scalar_prefetch = 0 : i64, scratch_operands = 0 : i64, tpu.core_type = #tpu.core_type<tc>, window_params = [{transform_indices = @transform_0, window_bounds = array<i64: 1, 1, 6, 128>}, {transform_indices = @transform_1, window_bounds = array<i64: 1, 1, 6, 128>}, {transform_indices = @transform_2, window_bounds = array<i64: 1, 1, 6, 128>}, {transform_indices = @transform_3, window_bounds = array<i64: 1, 1, 6, 128>}, {pipeline_mode = #tpu.pipeline_mode<synchronous>, transform_indices = @transform_4, window_bounds = array<i64: 9, 128, 128>}, {pipeline_mode = #tpu.pipeline_mode<synchronous>, transform_indices = @transform_5, window_bounds = array<i64: 1, 128>}, {transform_indices = @transform_6, window_bounds = array<i64: 1, 1, 2, 128>}]} {
    %0 = tpu.iota {dimensions = array<i32: 0>} : vector<2x4xi32>
    %1 = tpu.iota {dimensions = array<i32: 1>} : vector<2x4xi32>
    %c2_i32 = arith.constant 2 : i32
    %2 = vector.broadcast %c2_i32 : i32 to vector<2x4xi32>
    %3 = arith.muli %2, %0 : vector<2x4xi32>
    %4 = arith.cmpi eq, %1, %3 : vector<2x4xi32>
    %5 = arith.extui %4 : vector<2x4xi1> to vector<2x4xi32>
    %6 = arith.sitofp %5 : vector<2x4xi32> to vector<2x4xf32>
    %c2_i32_0 = arith.constant 2 : i32
    %7 = vector.broadcast %c2_i32_0 : i32 to vector<2x4xi32>
    %8 = arith.muli %7, %0 : vector<2x4xi32>
    %c1_i32 = arith.constant 1 : i32
    %9 = vector.broadcast %c1_i32 : i32 to vector<2x4xi32>
    %10 = arith.addi %8, %9 : vector<2x4xi32>
    %11 = arith.cmpi eq, %1, %10 : vector<2x4xi32>
    %12 = arith.extui %11 : vector<2x4xi1> to vector<2x4xi32>
    %13 = arith.sitofp %12 : vector<2x4xi32> to vector<2x4xf32>
    %cst = arith.constant 0.000000e+00 : f32
    %14 = vector.broadcast %cst : f32 to vector<4x128xf32>
    %c0 = arith.constant 0 : index
    %c0_1 = arith.constant 0 : index
    %c0_2 = arith.constant 0 : index
    %c0_3 = arith.constant 0 : index
    %15 = vector.load %arg2[%c0, %c0_1, %c0_2, %c0_3] : memref<1x1x6x128xf32, #tpu.memory_space<vmem>>, vector<1x1x4x128xf32>
    %16 = vector.shape_cast %15 : vector<1x1x4x128xf32> to vector<4x128xf32>
    %c0_4 = arith.constant 0 : index
    %c0_5 = arith.constant 0 : index
    %c0_6 = arith.constant 0 : index
    %17 = vector.load %arg6[%c0_4, %c0_5, %c0_6] : memref<9x128x128xf32, #tpu.memory_space<vmem>>, vector<1x128x128xf32>
    %18 = vector.shape_cast %17 : vector<1x128x128xf32> to vector<128x128xf32>
    %cst_7 = arith.constant dense<0.000000e+00> : vector<4x128xf32>
    %19 = tpu.matmul %16, %18, %cst_7 {dimension_numbers = #tpu.dot_dimension_numbers<[1], [0], [0], [1], [0, 0, 1, 1], [], []>} : vector<4x128xf32>, vector<128x128xf32>, vector<4x128xf32> -> vector<4x128xf32>
    %20 = arith.addf %14, %19 : vector<4x128xf32>
    %c0_8 = arith.constant 0 : index
    %c0_9 = arith.constant 0 : index
    %c1 = arith.constant 1 : index
    %c0_10 = arith.constant 0 : index
    %21 = vector.load %arg2[%c0_8, %c0_9, %c1, %c0_10] : memref<1x1x6x128xf32, #tpu.memory_space<vmem>>, vector<1x1x4x128xf32>
    %22 = vector.shape_cast %21 : vector<1x1x4x128xf32> to vector<4x128xf32>
    %c1_11 = arith.constant 1 : index
    %c0_12 = arith.constant 0 : index
    %c0_13 = arith.constant 0 : index
    %23 = vector.load %arg6[%c1_11, %c0_12, %c0_13] : memref<9x128x128xf32, #tpu.memory_space<vmem>>, vector<1x128x128xf32>
    %24 = vector.shape_cast %23 : vector<1x128x128xf32> to vector<128x128xf32>
    %cst_14 = arith.constant dense<0.000000e+00> : vector<4x128xf32>
    %25 = tpu.matmul %22, %24, %cst_14 {dimension_numbers = #tpu.dot_dimension_numbers<[1], [0], [0], [1], [0, 0, 1, 1], [], []>} : vector<4x128xf32>, vector<128x128xf32>, vector<4x128xf32> -> vector<4x128xf32>
    %26 = arith.addf %20, %25 : vector<4x128xf32>
    %c0_15 = arith.constant 0 : index
    %c0_16 = arith.constant 0 : index
    %c2 = arith.constant 2 : index
    %c0_17 = arith.constant 0 : index
    %27 = vector.load %arg2[%c0_15, %c0_16, %c2, %c0_17] : memref<1x1x6x128xf32, #tpu.memory_space<vmem>>, vector<1x1x4x128xf32>
    %28 = vector.shape_cast %27 : vector<1x1x4x128xf32> to vector<4x128xf32>
    %c2_18 = arith.constant 2 : index
    %c0_19 = arith.constant 0 : index
    %c0_20 = arith.constant 0 : index
    %29 = vector.load %arg6[%c2_18, %c0_19, %c0_20] : memref<9x128x128xf32, #tpu.memory_space<vmem>>, vector<1x128x128xf32>
    %30 = vector.shape_cast %29 : vector<1x128x128xf32> to vector<128x128xf32>
    %cst_21 = arith.constant dense<0.000000e+00> : vector<4x128xf32>
    %31 = tpu.matmul %28, %30, %cst_21 {dimension_numbers = #tpu.dot_dimension_numbers<[1], [0], [0], [1], [0, 0, 1, 1], [], []>} : vector<4x128xf32>, vector<128x128xf32>, vector<4x128xf32> -> vector<4x128xf32>
    %32 = arith.addf %26, %31 : vector<4x128xf32>
    %c0_22 = arith.constant 0 : index
    %c0_23 = arith.constant 0 : index
    %c0_24 = arith.constant 0 : index
    %c0_25 = arith.constant 0 : index
    %33 = vector.load %arg3[%c0_22, %c0_23, %c0_24, %c0_25] : memref<1x1x6x128xf32, #tpu.memory_space<vmem>>, vector<1x1x4x128xf32>
    %34 = vector.shape_cast %33 : vector<1x1x4x128xf32> to vector<4x128xf32>
    %c3 = arith.constant 3 : index
    %c0_26 = arith.constant 0 : index
    %c0_27 = arith.constant 0 : index
    %35 = vector.load %arg6[%c3, %c0_26, %c0_27] : memref<9x128x128xf32, #tpu.memory_space<vmem>>, vector<1x128x128xf32>
    %36 = vector.shape_cast %35 : vector<1x128x128xf32> to vector<128x128xf32>
    %cst_28 = arith.constant dense<0.000000e+00> : vector<4x128xf32>
    %37 = tpu.matmul %34, %36, %cst_28 {dimension_numbers = #tpu.dot_dimension_numbers<[1], [0], [0], [1], [0, 0, 1, 1], [], []>} : vector<4x128xf32>, vector<128x128xf32>, vector<4x128xf32> -> vector<4x128xf32>
    %38 = arith.addf %32, %37 : vector<4x128xf32>
    %c0_29 = arith.constant 0 : index
    %c0_30 = arith.constant 0 : index
    %c1_31 = arith.constant 1 : index
    %c0_32 = arith.constant 0 : index
    %39 = vector.load %arg3[%c0_29, %c0_30, %c1_31, %c0_32] : memref<1x1x6x128xf32, #tpu.memory_space<vmem>>, vector<1x1x4x128xf32>
    %40 = vector.shape_cast %39 : vector<1x1x4x128xf32> to vector<4x128xf32>
    %c4 = arith.constant 4 : index
    %c0_33 = arith.constant 0 : index
    %c0_34 = arith.constant 0 : index
    %41 = vector.load %arg6[%c4, %c0_33, %c0_34] : memref<9x128x128xf32, #tpu.memory_space<vmem>>, vector<1x128x128xf32>
    %42 = vector.shape_cast %41 : vector<1x128x128xf32> to vector<128x128xf32>
    %cst_35 = arith.constant dense<0.000000e+00> : vector<4x128xf32>
    %43 = tpu.matmul %40, %42, %cst_35 {dimension_numbers = #tpu.dot_dimension_numbers<[1], [0], [0], [1], [0, 0, 1, 1], [], []>} : vector<4x128xf32>, vector<128x128xf32>, vector<4x128xf32> -> vector<4x128xf32>
    %44 = arith.addf %38, %43 : vector<4x128xf32>
    %c0_36 = arith.constant 0 : index
    %c0_37 = arith.constant 0 : index
    %c2_38 = arith.constant 2 : index
    %c0_39 = arith.constant 0 : index
    %45 = vector.load %arg3[%c0_36, %c0_37, %c2_38, %c0_39] : memref<1x1x6x128xf32, #tpu.memory_space<vmem>>, vector<1x1x4x128xf32>
    %46 = vector.shape_cast %45 : vector<1x1x4x128xf32> to vector<4x128xf32>
    %c5 = arith.constant 5 : index
    %c0_40 = arith.constant 0 : index
    %c0_41 = arith.constant 0 : index
    %47 = vector.load %arg6[%c5, %c0_40, %c0_41] : memref<9x128x128xf32, #tpu.memory_space<vmem>>, vector<1x128x128xf32>
    %48 = vector.shape_cast %47 : vector<1x128x128xf32> to vector<128x128xf32>
    %cst_42 = arith.constant dense<0.000000e+00> : vector<4x128xf32>
    %49 = tpu.matmul %46, %48, %cst_42 {dimension_numbers = #tpu.dot_dimension_numbers<[1], [0], [0], [1], [0, 0, 1, 1], [], []>} : vector<4x128xf32>, vector<128x128xf32>, vector<4x128xf32> -> vector<4x128xf32>
    %50 = arith.addf %44, %49 : vector<4x128xf32>
    %c0_43 = arith.constant 0 : index
    %c0_44 = arith.constant 0 : index
    %c0_45 = arith.constant 0 : index
    %c0_46 = arith.constant 0 : index
    %51 = vector.load %arg4[%c0_43, %c0_44, %c0_45, %c0_46] : memref<1x1x6x128xf32, #tpu.memory_space<vmem>>, vector<1x1x4x128xf32>
    %52 = vector.shape_cast %51 : vector<1x1x4x128xf32> to vector<4x128xf32>
    %c6 = arith.constant 6 : index
    %c0_47 = arith.constant 0 : index
    %c0_48 = arith.constant 0 : index
    %53 = vector.load %arg6[%c6, %c0_47, %c0_48] : memref<9x128x128xf32, #tpu.memory_space<vmem>>, vector<1x128x128xf32>
    %54 = vector.shape_cast %53 : vector<1x128x128xf32> to vector<128x128xf32>
    %cst_49 = arith.constant dense<0.000000e+00> : vector<4x128xf32>
    %55 = tpu.matmul %52, %54, %cst_49 {dimension_numbers = #tpu.dot_dimension_numbers<[1], [0], [0], [1], [0, 0, 1, 1], [], []>} : vector<4x128xf32>, vector<128x128xf32>, vector<4x128xf32> -> vector<4x128xf32>
    %56 = arith.addf %50, %55 : vector<4x128xf32>
    %c0_50 = arith.constant 0 : index
    %c0_51 = arith.constant 0 : index
    %c1_52 = arith.constant 1 : index
    %c0_53 = arith.constant 0 : index
    %57 = vector.load %arg4[%c0_50, %c0_51, %c1_52, %c0_53] : memref<1x1x6x128xf32, #tpu.memory_space<vmem>>, vector<1x1x4x128xf32>
    %58 = vector.shape_cast %57 : vector<1x1x4x128xf32> to vector<4x128xf32>
    %c7 = arith.constant 7 : index
    %c0_54 = arith.constant 0 : index
    %c0_55 = arith.constant 0 : index
    %59 = vector.load %arg6[%c7, %c0_54, %c0_55] : memref<9x128x128xf32, #tpu.memory_space<vmem>>, vector<1x128x128xf32>
    %60 = vector.shape_cast %59 : vector<1x128x128xf32> to vector<128x128xf32>
    %cst_56 = arith.constant dense<0.000000e+00> : vector<4x128xf32>
    %61 = tpu.matmul %58, %60, %cst_56 {dimension_numbers = #tpu.dot_dimension_numbers<[1], [0], [0], [1], [0, 0, 1, 1], [], []>} : vector<4x128xf32>, vector<128x128xf32>, vector<4x128xf32> -> vector<4x128xf32>
    %62 = arith.addf %56, %61 : vector<4x128xf32>
    %c0_57 = arith.constant 0 : index
    %c0_58 = arith.constant 0 : index
    %c2_59 = arith.constant 2 : index
    %c0_60 = arith.constant 0 : index
    %63 = vector.load %arg4[%c0_57, %c0_58, %c2_59, %c0_60] : memref<1x1x6x128xf32, #tpu.memory_space<vmem>>, vector<1x1x4x128xf32>
    %64 = vector.shape_cast %63 : vector<1x1x4x128xf32> to vector<4x128xf32>
    %c8 = arith.constant 8 : index
    %c0_61 = arith.constant 0 : index
    %c0_62 = arith.constant 0 : index
    %65 = vector.load %arg6[%c8, %c0_61, %c0_62] : memref<9x128x128xf32, #tpu.memory_space<vmem>>, vector<1x128x128xf32>
    %66 = vector.shape_cast %65 : vector<1x128x128xf32> to vector<128x128xf32>
    %cst_63 = arith.constant dense<0.000000e+00> : vector<4x128xf32>
    %67 = tpu.matmul %64, %66, %cst_63 {dimension_numbers = #tpu.dot_dimension_numbers<[1], [0], [0], [1], [0, 0, 1, 1], [], []>} : vector<4x128xf32>, vector<128x128xf32>, vector<4x128xf32> -> vector<4x128xf32>
    %68 = arith.addf %62, %67 : vector<4x128xf32>
    %c0_64 = arith.constant 0 : index
    %c0_65 = arith.constant 0 : index
    %69 = vector.load %arg7[%c0_64, %c0_65] : memref<1x128xf32, #tpu.memory_space<vmem>>, vector<1x128xf32>
    %70 = vector.broadcast %69 : vector<1x128xf32> to vector<4x128xf32>
    %71 = arith.addf %68, %70 : vector<4x128xf32>
    %cst_66 = arith.constant 0.000000e+00 : f32
    %72 = vector.broadcast %cst_66 : f32 to vector<4x128xf32>
    %73 = arith.maximumf %71, %72 : vector<4x128xf32>
    %cst_67 = arith.constant 0.000000e+00 : f32
    %74 = vector.broadcast %cst_67 : f32 to vector<4x128xf32>
    %c0_68 = arith.constant 0 : index
    %c0_69 = arith.constant 0 : index
    %c0_70 = arith.constant 0 : index
    %c0_71 = arith.constant 0 : index
    %75 = vector.load %arg3[%c0_68, %c0_69, %c0_70, %c0_71] : memref<1x1x6x128xf32, #tpu.memory_space<vmem>>, vector<1x1x4x128xf32>
    %76 = vector.shape_cast %75 : vector<1x1x4x128xf32> to vector<4x128xf32>
    %c0_72 = arith.constant 0 : index
    %c0_73 = arith.constant 0 : index
    %c0_74 = arith.constant 0 : index
    %77 = vector.load %arg6[%c0_72, %c0_73, %c0_74] : memref<9x128x128xf32, #tpu.memory_space<vmem>>, vector<1x128x128xf32>
    %78 = vector.shape_cast %77 : vector<1x128x128xf32> to vector<128x128xf32>
    %cst_75 = arith.constant dense<0.000000e+00> : vector<4x128xf32>
    %79 = tpu.matmul %76, %78, %cst_75 {dimension_numbers = #tpu.dot_dimension_numbers<[1], [0], [0], [1], [0, 0, 1, 1], [], []>} : vector<4x128xf32>, vector<128x128xf32>, vector<4x128xf32> -> vector<4x128xf32>
    %80 = arith.addf %74, %79 : vector<4x128xf32>
    %c0_76 = arith.constant 0 : index
    %c0_77 = arith.constant 0 : index
    %c1_78 = arith.constant 1 : index
    %c0_79 = arith.constant 0 : index
    %81 = vector.load %arg3[%c0_76, %c0_77, %c1_78, %c0_79] : memref<1x1x6x128xf32, #tpu.memory_space<vmem>>, vector<1x1x4x128xf32>
    %82 = vector.shape_cast %81 : vector<1x1x4x128xf32> to vector<4x128xf32>
    %c1_80 = arith.constant 1 : index
    %c0_81 = arith.constant 0 : index
    %c0_82 = arith.constant 0 : index
    %83 = vector.load %arg6[%c1_80, %c0_81, %c0_82] : memref<9x128x128xf32, #tpu.memory_space<vmem>>, vector<1x128x128xf32>
    %84 = vector.shape_cast %83 : vector<1x128x128xf32> to vector<128x128xf32>
    %cst_83 = arith.constant dense<0.000000e+00> : vector<4x128xf32>
    %85 = tpu.matmul %82, %84, %cst_83 {dimension_numbers = #tpu.dot_dimension_numbers<[1], [0], [0], [1], [0, 0, 1, 1], [], []>} : vector<4x128xf32>, vector<128x128xf32>, vector<4x128xf32> -> vector<4x128xf32>
    %86 = arith.addf %80, %85 : vector<4x128xf32>
    %c0_84 = arith.constant 0 : index
    %c0_85 = arith.constant 0 : index
    %c2_86 = arith.constant 2 : index
    %c0_87 = arith.constant 0 : index
    %87 = vector.load %arg3[%c0_84, %c0_85, %c2_86, %c0_87] : memref<1x1x6x128xf32, #tpu.memory_space<vmem>>, vector<1x1x4x128xf32>
    %88 = vector.shape_cast %87 : vector<1x1x4x128xf32> to vector<4x128xf32>
    %c2_88 = arith.constant 2 : index
    %c0_89 = arith.constant 0 : index
    %c0_90 = arith.constant 0 : index
    %89 = vector.load %arg6[%c2_88, %c0_89, %c0_90] : memref<9x128x128xf32, #tpu.memory_space<vmem>>, vector<1x128x128xf32>
    %90 = vector.shape_cast %89 : vector<1x128x128xf32> to vector<128x128xf32>
    %cst_91 = arith.constant dense<0.000000e+00> : vector<4x128xf32>
    %91 = tpu.matmul %88, %90, %cst_91 {dimension_numbers = #tpu.dot_dimension_numbers<[1], [0], [0], [1], [0, 0, 1, 1], [], []>} : vector<4x128xf32>, vector<128x128xf32>, vector<4x128xf32> -> vector<4x128xf32>
    %92 = arith.addf %86, %91 : vector<4x128xf32>
    %c0_92 = arith.constant 0 : index
    %c0_93 = arith.constant 0 : index
    %c0_94 = arith.constant 0 : index
    %c0_95 = arith.constant 0 : index
    %93 = vector.load %arg4[%c0_92, %c0_93, %c0_94, %c0_95] : memref<1x1x6x128xf32, #tpu.memory_space<vmem>>, vector<1x1x4x128xf32>
    %94 = vector.shape_cast %93 : vector<1x1x4x128xf32> to vector<4x128xf32>
    %c3_96 = arith.constant 3 : index
    %c0_97 = arith.constant 0 : index
    %c0_98 = arith.constant 0 : index
    %95 = vector.load %arg6[%c3_96, %c0_97, %c0_98] : memref<9x128x128xf32, #tpu.memory_space<vmem>>, vector<1x128x128xf32>
    %96 = vector.shape_cast %95 : vector<1x128x128xf32> to vector<128x128xf32>
    %cst_99 = arith.constant dense<0.000000e+00> : vector<4x128xf32>
    %97 = tpu.matmul %94, %96, %cst_99 {dimension_numbers = #tpu.dot_dimension_numbers<[1], [0], [0], [1], [0, 0, 1, 1], [], []>} : vector<4x128xf32>, vector<128x128xf32>, vector<4x128xf32> -> vector<4x128xf32>
    %98 = arith.addf %92, %97 : vector<4x128xf32>
    %c0_100 = arith.constant 0 : index
    %c0_101 = arith.constant 0 : index
    %c1_102 = arith.constant 1 : index
    %c0_103 = arith.constant 0 : index
    %99 = vector.load %arg4[%c0_100, %c0_101, %c1_102, %c0_103] : memref<1x1x6x128xf32, #tpu.memory_space<vmem>>, vector<1x1x4x128xf32>
    %100 = vector.shape_cast %99 : vector<1x1x4x128xf32> to vector<4x128xf32>
    %c4_104 = arith.constant 4 : index
    %c0_105 = arith.constant 0 : index
    %c0_106 = arith.constant 0 : index
    %101 = vector.load %arg6[%c4_104, %c0_105, %c0_106] : memref<9x128x128xf32, #tpu.memory_space<vmem>>, vector<1x128x128xf32>
    %102 = vector.shape_cast %101 : vector<1x128x128xf32> to vector<128x128xf32>
    %cst_107 = arith.constant dense<0.000000e+00> : vector<4x128xf32>
    %103 = tpu.matmul %100, %102, %cst_107 {dimension_numbers = #tpu.dot_dimension_numbers<[1], [0], [0], [1], [0, 0, 1, 1], [], []>} : vector<4x128xf32>, vector<128x128xf32>, vector<4x128xf32> -> vector<4x128xf32>
    %104 = arith.addf %98, %103 : vector<4x128xf32>
    %c0_108 = arith.constant 0 : index
    %c0_109 = arith.constant 0 : index
    %c2_110 = arith.constant 2 : index
    %c0_111 = arith.constant 0 : index
    %105 = vector.load %arg4[%c0_108, %c0_109, %c2_110, %c0_111] : memref<1x1x6x128xf32, #tpu.memory_space<vmem>>, vector<1x1x4x128xf32>
    %106 = vector.shape_cast %105 : vector<1x1x4x128xf32> to vector<4x128xf32>
    %c5_112 = arith.constant 5 : index
    %c0_113 = arith.constant 0 : index
    %c0_114 = arith.constant 0 : index
    %107 = vector.load %arg6[%c5_112, %c0_113, %c0_114] : memref<9x128x128xf32, #tpu.memory_space<vmem>>, vector<1x128x128xf32>
    %108 = vector.shape_cast %107 : vector<1x128x128xf32> to vector<128x128xf32>
    %cst_115 = arith.constant dense<0.000000e+00> : vector<4x128xf32>
    %109 = tpu.matmul %106, %108, %cst_115 {dimension_numbers = #tpu.dot_dimension_numbers<[1], [0], [0], [1], [0, 0, 1, 1], [], []>} : vector<4x128xf32>, vector<128x128xf32>, vector<4x128xf32> -> vector<4x128xf32>
    %110 = arith.addf %104, %109 : vector<4x128xf32>
    %c0_116 = arith.constant 0 : index
    %c0_117 = arith.constant 0 : index
    %c0_118 = arith.constant 0 : index
    %c0_119 = arith.constant 0 : index
    %111 = vector.load %arg5[%c0_116, %c0_117, %c0_118, %c0_119] : memref<1x1x6x128xf32, #tpu.memory_space<vmem>>, vector<1x1x4x128xf32>
    %112 = vector.shape_cast %111 : vector<1x1x4x128xf32> to vector<4x128xf32>
    %c6_120 = arith.constant 6 : index
    %c0_121 = arith.constant 0 : index
    %c0_122 = arith.constant 0 : index
    %113 = vector.load %arg6[%c6_120, %c0_121, %c0_122] : memref<9x128x128xf32, #tpu.memory_space<vmem>>, vector<1x128x128xf32>
    %114 = vector.shape_cast %113 : vector<1x128x128xf32> to vector<128x128xf32>
    %cst_123 = arith.constant dense<0.000000e+00> : vector<4x128xf32>
    %115 = tpu.matmul %112, %114, %cst_123 {dimension_numbers = #tpu.dot_dimension_numbers<[1], [0], [0], [1], [0, 0, 1, 1], [], []>} : vector<4x128xf32>, vector<128x128xf32>, vector<4x128xf32> -> vector<4x128xf32>
    %116 = arith.addf %110, %115 : vector<4x128xf32>
    %c0_124 = arith.constant 0 : index
    %c0_125 = arith.constant 0 : index
    %c1_126 = arith.constant 1 : index
    %c0_127 = arith.constant 0 : index
    %117 = vector.load %arg5[%c0_124, %c0_125, %c1_126, %c0_127] : memref<1x1x6x128xf32, #tpu.memory_space<vmem>>, vector<1x1x4x128xf32>
    %118 = vector.shape_cast %117 : vector<1x1x4x128xf32> to vector<4x128xf32>
    %c7_128 = arith.constant 7 : index
    %c0_129 = arith.constant 0 : index
    %c0_130 = arith.constant 0 : index
    %119 = vector.load %arg6[%c7_128, %c0_129, %c0_130] : memref<9x128x128xf32, #tpu.memory_space<vmem>>, vector<1x128x128xf32>
    %120 = vector.shape_cast %119 : vector<1x128x128xf32> to vector<128x128xf32>
    %cst_131 = arith.constant dense<0.000000e+00> : vector<4x128xf32>
    %121 = tpu.matmul %118, %120, %cst_131 {dimension_numbers = #tpu.dot_dimension_numbers<[1], [0], [0], [1], [0, 0, 1, 1], [], []>} : vector<4x128xf32>, vector<128x128xf32>, vector<4x128xf32> -> vector<4x128xf32>
    %122 = arith.addf %116, %121 : vector<4x128xf32>
    %c0_132 = arith.constant 0 : index
    %c0_133 = arith.constant 0 : index
    %c2_134 = arith.constant 2 : index
    %c0_135 = arith.constant 0 : index
    %123 = vector.load %arg5[%c0_132, %c0_133, %c2_134, %c0_135] : memref<1x1x6x128xf32, #tpu.memory_space<vmem>>, vector<1x1x4x128xf32>
    %124 = vector.shape_cast %123 : vector<1x1x4x128xf32> to vector<4x128xf32>
    %c8_136 = arith.constant 8 : index
    %c0_137 = arith.constant 0 : index
    %c0_138 = arith.constant 0 : index
    %125 = vector.load %arg6[%c8_136, %c0_137, %c0_138] : memref<9x128x128xf32, #tpu.memory_space<vmem>>, vector<1x128x128xf32>
    %126 = vector.shape_cast %125 : vector<1x128x128xf32> to vector<128x128xf32>
    %cst_139 = arith.constant dense<0.000000e+00> : vector<4x128xf32>
    %127 = tpu.matmul %124, %126, %cst_139 {dimension_numbers = #tpu.dot_dimension_numbers<[1], [0], [0], [1], [0, 0, 1, 1], [], []>} : vector<4x128xf32>, vector<128x128xf32>, vector<4x128xf32> -> vector<4x128xf32>
    %128 = arith.addf %122, %127 : vector<4x128xf32>
    %c0_140 = arith.constant 0 : index
    %c0_141 = arith.constant 0 : index
    %129 = vector.load %arg7[%c0_140, %c0_141] : memref<1x128xf32, #tpu.memory_space<vmem>>, vector<1x128xf32>
    %130 = vector.broadcast %129 : vector<1x128xf32> to vector<4x128xf32>
    %131 = arith.addf %128, %130 : vector<4x128xf32>
    %cst_142 = arith.constant 0.000000e+00 : f32
    %132 = vector.broadcast %cst_142 : f32 to vector<4x128xf32>
    %133 = arith.maximumf %131, %132 : vector<4x128xf32>
    %134 = arith.maximumf %73, %133 : vector<4x128xf32>
    %cst_143 = arith.constant dense<0.000000e+00> : vector<2x128xf32>
    %135 = tpu.matmul %6, %134, %cst_143 {dimension_numbers = #tpu.dot_dimension_numbers<[1], [0], [0], [1], [0, 0, 1, 1], [], []>} : vector<2x4xf32>, vector<4x128xf32>, vector<2x128xf32> -> vector<2x128xf32>
    %cst_144 = arith.constant dense<0.000000e+00> : vector<2x128xf32>
    %136 = tpu.matmul %13, %134, %cst_144 {dimension_numbers = #tpu.dot_dimension_numbers<[1], [0], [0], [1], [0, 0, 1, 1], [], []>} : vector<2x4xf32>, vector<4x128xf32>, vector<2x128xf32> -> vector<2x128xf32>
    %137 = arith.maximumf %135, %136 : vector<2x128xf32>
    %c0_145 = arith.constant 0 : index
    %c0_146 = arith.constant 0 : index
    %c0_147 = arith.constant 0 : index
    %c0_148 = arith.constant 0 : index
    %138 = vector.load %arg8[%c0_145, %c0_146, %c0_147, %c0_148] : memref<1x1x2x128xf32, #tpu.memory_space<vmem>>, vector<1x1x2x128xf32>
    %139 = vector.shape_cast %138 : vector<1x1x2x128xf32> to vector<2x128xf32>
    %140 = vector.shape_cast %137 : vector<2x128xf32> to vector<1x1x2x128xf32>
    tpu.vector_store %arg8[%c0_145, %c0_146, %c0_147, %c0_148], %140 {strides = array<i32>} : memref<1x1x2x128xf32, #tpu.memory_space<vmem>>, vector<1x1x2x128xf32>,
    return
  }
  func.func @transform_0(%arg0: i32, %arg1: i32) -> (i32, i32, i32, i32) {
    %c2_i32 = arith.constant 2 : i32
    %0 = arith.muli %c2_i32, %arg1 : i32
    %c0_i32 = arith.constant 0 : i32
    %1 = arith.addi %0, %c0_i32 : i32
    %c0_i32_0 = arith.constant 0 : i32
    %c0_i32_1 = arith.constant 0 : i32
    %c0_i32_2 = arith.constant 0 : i32
    return %arg0, %1, %c0_i32_0, %c0_i32_1 : i32, i32, i32, i32
  }
  func.func @transform_1(%arg0: i32, %arg1: i32) -> (i32, i32, i32, i32) {
    %c2_i32 = arith.constant 2 : i32
    %0 = arith.muli %c2_i32, %arg1 : i32
    %c1_i32 = arith.constant 1 : i32
    %1 = arith.addi %0, %c1_i32 : i32
    %c0_i32 = arith.constant 0 : i32
    %c0_i32_0 = arith.constant 0 : i32
    %c0_i32_1 = arith.constant 0 : i32
    return %arg0, %1, %c0_i32, %c0_i32_0 : i32, i32, i32, i32
  }
  func.func @transform_2(%arg0: i32, %arg1: i32) -> (i32, i32, i32, i32) {
    %c2_i32 = arith.constant 2 : i32
    %0 = arith.muli %c2_i32, %arg1 : i32
    %c2_i32_0 = arith.constant 2 : i32
    %1 = arith.addi %0, %c2_i32_0 : i32
    %c0_i32 = arith.constant 0 : i32
    %c0_i32_1 = arith.constant 0 : i32
    %c0_i32_2 = arith.constant 0 : i32
    return %arg0, %1, %c0_i32, %c0_i32_1 : i32, i32, i32, i32
  }
  func.func @transform_3(%arg0: i32, %arg1: i32) -> (i32, i32, i32, i32) {
    %c2_i32 = arith.constant 2 : i32
    %0 = arith.muli %c2_i32, %arg1 : i32
    %c3_i32 = arith.constant 3 : i32
    %1 = arith.addi %0, %c3_i32 : i32
    %c0_i32 = arith.constant 0 : i32
    %c0_i32_0 = arith.constant 0 : i32
    %c0_i32_1 = arith.constant 0 : i32
    return %arg0, %1, %c0_i32, %c0_i32_0 : i32, i32, i32, i32
  }
  func.func @transform_4(%arg0: i32, %arg1: i32) -> (i32, i32, i32) {
    %c0_i32 = arith.constant 0 : i32
    %c0_i32_0 = arith.constant 0 : i32
    %c0_i32_1 = arith.constant 0 : i32
    %c0_i32_2 = arith.constant 0 : i32
    return %c0_i32, %c0_i32_0, %c0_i32_1 : i32, i32, i32
  }
  func.func @transform_5(%arg0: i32, %arg1: i32) -> (i32, i32) {
    %c0_i32 = arith.constant 0 : i32
    %c0_i32_0 = arith.constant 0 : i32
    %c0_i32_1 = arith.constant 0 : i32
    return %c0_i32, %c0_i32_0 : i32, i32
  }
  func.func @transform_6(%arg0: i32, %arg1: i32) -> (i32, i32, i32, i32) {
    %c0_i32 = arith.constant 0 : i32
    %c0_i32_0 = arith.constant 0 : i32
    %c0_i32_1 = arith.constant 0 : i32
    return %arg0, %arg1, %c0_i32, %c0_i32_0 : i32, i32, i32, i32
  }
}

module attributes {stable_mosaic.version = 11 : i64} {
  func.func @kernel(%arg0: i32, %arg1: i32, %arg2: memref<2x512xf32, #tpu.memory_space<vmem>>, %arg3: memref<512x256xf32, #tpu.memory_space<vmem>>, %arg4: memref<1x256xf32, #tpu.memory_space<vmem>>, %arg5: memref<2x256xf32, #tpu.memory_space<vmem>>, %arg6: memref<2x256xf32, #tpu.memory_space<vmem>>) attributes {dimension_semantics = [#tpu.dimension_semantics<parallel>, #tpu.dimension_semantics<arbitrary>], iteration_bounds = array<i64: 1, 1>, scalar_prefetch = 0 : i64, scratch_operands = 1 : i64, tpu.core_type = #tpu.core_type<tc>, window_params = [{transform_indices = @transform_0, window_bounds = array<i64: 2, 512>}, {transform_indices = @transform_1, window_bounds = array<i64: 512, 256>}, {pipeline_mode = #tpu.pipeline_mode<synchronous>, transform_indices = @transform_2, window_bounds = array<i64: 1, 256>}, {transform_indices = @transform_3, window_bounds = array<i64: 2, 256>}]} {
    %c0_i32 = arith.constant 0 : i32
    %0 = arith.cmpi eq, %arg1, %c0_i32 : i32
    %1 = arith.extui %0 : i1 to i32
    %c0_i32_0 = arith.constant 0 : i32
    %2 = arith.cmpi ne, %1, %c0_i32_0 : i32
    scf.if %2 {
      %cst_10 = arith.constant 0.000000e+00 : f32
      %12 = vector.broadcast %cst_10 : f32 to vector<2x256xf32>
      %c0_11 = arith.constant 0 : index
      %c0_12 = arith.constant 0 : index
      %13 = vector.load %arg6[%c0_11, %c0_12] : memref<2x256xf32, #tpu.memory_space<vmem>>, vector<2x256xf32>
      tpu.vector_store %arg6[%c0_11, %c0_12], %12 {strides = array<i32>} : memref<2x256xf32, #tpu.memory_space<vmem>>, vector<2x256xf32>,
    } else {
    }
    %c0 = arith.constant 0 : index
    %c0_1 = arith.constant 0 : index
    %3 = vector.load %arg6[%c0, %c0_1] : memref<2x256xf32, #tpu.memory_space<vmem>>, vector<2x256xf32>
    %c0_2 = arith.constant 0 : index
    %c0_3 = arith.constant 0 : index
    %4 = vector.load %arg2[%c0_2, %c0_3] : memref<2x512xf32, #tpu.memory_space<vmem>>, vector<2x512xf32>
    %c0_4 = arith.constant 0 : index
    %c0_5 = arith.constant 0 : index
    %5 = vector.load %arg3[%c0_4, %c0_5] : memref<512x256xf32, #tpu.memory_space<vmem>>, vector<512x256xf32>
    %cst = arith.constant dense<0.000000e+00> : vector<2x256xf32>
    %6 = tpu.matmul %4, %5, %cst {dimension_numbers = #tpu.dot_dimension_numbers<[1], [0], [0], [1], [0, 0, 1, 1], [], []>} : vector<2x512xf32>, vector<512x256xf32>, vector<2x256xf32> -> vector<2x256xf32>
    %7 = arith.addf %3, %6 : vector<2x256xf32>
    %c0_6 = arith.constant 0 : index
    %c0_7 = arith.constant 0 : index
    %8 = vector.load %arg6[%c0_6, %c0_7] : memref<2x256xf32, #tpu.memory_space<vmem>>, vector<2x256xf32>
    tpu.vector_store %arg6[%c0_6, %c0_7], %7 {strides = array<i32>} : memref<2x256xf32, #tpu.memory_space<vmem>>, vector<2x256xf32>,
    %c0_i32_8 = arith.constant 0 : i32
    %9 = arith.cmpi eq, %arg1, %c0_i32_8 : i32
    %10 = arith.extui %9 : i1 to i32
    %c0_i32_9 = arith.constant 0 : i32
    %11 = arith.cmpi ne, %10, %c0_i32_9 : i32
    scf.if %11 {
      %c0_10 = arith.constant 0 : index
      %c0_11 = arith.constant 0 : index
      %12 = vector.load %arg6[%c0_10, %c0_11] : memref<2x256xf32, #tpu.memory_space<vmem>>, vector<2x256xf32>
      %c0_12 = arith.constant 0 : index
      %c0_13 = arith.constant 0 : index
      %13 = vector.load %arg4[%c0_12, %c0_13] : memref<1x256xf32, #tpu.memory_space<vmem>>, vector<1x256xf32>
      %14 = vector.broadcast %13 : vector<1x256xf32> to vector<2x256xf32>
      %15 = arith.addf %12, %14 : vector<2x256xf32>
      %cst_14 = arith.constant 0.000000e+00 : f32
      %16 = vector.broadcast %cst_14 : f32 to vector<2x256xf32>
      %17 = arith.maximumf %15, %16 : vector<2x256xf32>
      %c0_15 = arith.constant 0 : index
      %c0_16 = arith.constant 0 : index
      %18 = vector.load %arg5[%c0_15, %c0_16] : memref<2x256xf32, #tpu.memory_space<vmem>>, vector<2x256xf32>
      tpu.vector_store %arg5[%c0_15, %c0_16], %17 {strides = array<i32>} : memref<2x256xf32, #tpu.memory_space<vmem>>, vector<2x256xf32>,
    } else {
    }
    return
  }
  func.func @transform_0(%arg0: i32, %arg1: i32) -> (i32, i32) {
    %c0_i32 = arith.constant 0 : i32
    return %arg0, %arg1 : i32, i32
  }
  func.func @transform_1(%arg0: i32, %arg1: i32) -> (i32, i32) {
    %c0_i32 = arith.constant 0 : i32
    %c0_i32_0 = arith.constant 0 : i32
    return %arg1, %c0_i32 : i32, i32
  }
  func.func @transform_2(%arg0: i32, %arg1: i32) -> (i32, i32) {
    %c0_i32 = arith.constant 0 : i32
    %c0_i32_0 = arith.constant 0 : i32
    %c0_i32_1 = arith.constant 0 : i32
    return %c0_i32, %c0_i32_0 : i32, i32
  }
  func.func @transform_3(%arg0: i32, %arg1: i32) -> (i32, i32) {
    %c0_i32 = arith.constant 0 : i32
    %c0_i32_0 = arith.constant 0 : i32
    return %arg0, %c0_i32 : i32, i32
  }
}

module attributes {stable_mosaic.version = 11 : i64} {
  func.func @kernel(%arg0: i32, %arg1: i32, %arg2: memref<2x256xf32, #tpu.memory_space<vmem>>, %arg3: memref<256x64xf32, #tpu.memory_space<vmem>>, %arg4: memref<1x64xf32, #tpu.memory_space<vmem>>, %arg5: memref<2x64xf32, #tpu.memory_space<vmem>>, %arg6: memref<2x64xf32, #tpu.memory_space<vmem>>) attributes {dimension_semantics = [#tpu.dimension_semantics<parallel>, #tpu.dimension_semantics<arbitrary>], iteration_bounds = array<i64: 1, 1>, scalar_prefetch = 0 : i64, scratch_operands = 1 : i64, tpu.core_type = #tpu.core_type<tc>, window_params = [{transform_indices = @transform_0, window_bounds = array<i64: 2, 256>}, {transform_indices = @transform_1, window_bounds = array<i64: 256, 64>}, {pipeline_mode = #tpu.pipeline_mode<synchronous>, transform_indices = @transform_2, window_bounds = array<i64: 1, 64>}, {transform_indices = @transform_3, window_bounds = array<i64: 2, 64>}]} {
    %c0_i32 = arith.constant 0 : i32
    %0 = arith.cmpi eq, %arg1, %c0_i32 : i32
    %1 = arith.extui %0 : i1 to i32
    %c0_i32_0 = arith.constant 0 : i32
    %2 = arith.cmpi ne, %1, %c0_i32_0 : i32
    scf.if %2 {
      %cst_10 = arith.constant 0.000000e+00 : f32
      %12 = vector.broadcast %cst_10 : f32 to vector<2x64xf32>
      %c0_11 = arith.constant 0 : index
      %c0_12 = arith.constant 0 : index
      %13 = vector.load %arg6[%c0_11, %c0_12] : memref<2x64xf32, #tpu.memory_space<vmem>>, vector<2x64xf32>
      tpu.vector_store %arg6[%c0_11, %c0_12], %12 {strides = array<i32>} : memref<2x64xf32, #tpu.memory_space<vmem>>, vector<2x64xf32>,
    } else {
    }
    %c0 = arith.constant 0 : index
    %c0_1 = arith.constant 0 : index
    %3 = vector.load %arg6[%c0, %c0_1] : memref<2x64xf32, #tpu.memory_space<vmem>>, vector<2x64xf32>
    %c0_2 = arith.constant 0 : index
    %c0_3 = arith.constant 0 : index
    %4 = vector.load %arg2[%c0_2, %c0_3] : memref<2x256xf32, #tpu.memory_space<vmem>>, vector<2x256xf32>
    %c0_4 = arith.constant 0 : index
    %c0_5 = arith.constant 0 : index
    %5 = vector.load %arg3[%c0_4, %c0_5] : memref<256x64xf32, #tpu.memory_space<vmem>>, vector<256x64xf32>
    %cst = arith.constant dense<0.000000e+00> : vector<2x64xf32>
    %6 = tpu.matmul %4, %5, %cst {dimension_numbers = #tpu.dot_dimension_numbers<[1], [0], [0], [1], [0, 0, 1, 1], [], []>} : vector<2x256xf32>, vector<256x64xf32>, vector<2x64xf32> -> vector<2x64xf32>
    %7 = arith.addf %3, %6 : vector<2x64xf32>
    %c0_6 = arith.constant 0 : index
    %c0_7 = arith.constant 0 : index
    %8 = vector.load %arg6[%c0_6, %c0_7] : memref<2x64xf32, #tpu.memory_space<vmem>>, vector<2x64xf32>
    tpu.vector_store %arg6[%c0_6, %c0_7], %7 {strides = array<i32>} : memref<2x64xf32, #tpu.memory_space<vmem>>, vector<2x64xf32>,
    %c0_i32_8 = arith.constant 0 : i32
    %9 = arith.cmpi eq, %arg1, %c0_i32_8 : i32
    %10 = arith.extui %9 : i1 to i32
    %c0_i32_9 = arith.constant 0 : i32
    %11 = arith.cmpi ne, %10, %c0_i32_9 : i32
    scf.if %11 {
      %c0_10 = arith.constant 0 : index
      %c0_11 = arith.constant 0 : index
      %12 = vector.load %arg6[%c0_10, %c0_11] : memref<2x64xf32, #tpu.memory_space<vmem>>, vector<2x64xf32>
      %c0_12 = arith.constant 0 : index
      %c0_13 = arith.constant 0 : index
      %13 = vector.load %arg4[%c0_12, %c0_13] : memref<1x64xf32, #tpu.memory_space<vmem>>, vector<1x64xf32>
      %14 = vector.broadcast %13 : vector<1x64xf32> to vector<2x64xf32>
      %15 = arith.addf %12, %14 : vector<2x64xf32>
      %16 = arith.mulf %15, %15 : vector<2x64xf32>
      %cst_14 = arith.constant dense<0.000000e+00> : vector<2xf32>
      %17 = vector.multi_reduction <add>, %16, %cst_14 [1] : vector<2x64xf32> to vector<2xf32>
      %18 = vector.shape_cast %17 : vector<2xf32> to vector<2x1xf32>
      %cst_15 = arith.constant 1.000000e-24 : f32
      %19 = vector.broadcast %cst_15 : f32 to vector<2x1xf32>
      %20 = arith.maximumf %18, %19 : vector<2x1xf32>
      %21 = math.rsqrt %20 : vector<2x1xf32>
      %22 = vector.broadcast %21 : vector<2x1xf32> to vector<2x64xf32>
      %23 = arith.mulf %15, %22 : vector<2x64xf32>
      %c0_16 = arith.constant 0 : index
      %c0_17 = arith.constant 0 : index
      %24 = vector.load %arg5[%c0_16, %c0_17] : memref<2x64xf32, #tpu.memory_space<vmem>>, vector<2x64xf32>
      tpu.vector_store %arg5[%c0_16, %c0_17], %23 {strides = array<i32>} : memref<2x64xf32, #tpu.memory_space<vmem>>, vector<2x64xf32>,
    } else {
    }
    return
  }
  func.func @transform_0(%arg0: i32, %arg1: i32) -> (i32, i32) {
    %c0_i32 = arith.constant 0 : i32
    return %arg0, %arg1 : i32, i32
  }
  func.func @transform_1(%arg0: i32, %arg1: i32) -> (i32, i32) {
    %c0_i32 = arith.constant 0 : i32
    %c0_i32_0 = arith.constant 0 : i32
    return %arg1, %c0_i32 : i32, i32
  }
  func.func @transform_2(%arg0: i32, %arg1: i32) -> (i32, i32) {
    %c0_i32 = arith.constant 0 : i32
    %c0_i32_0 = arith.constant 0 : i32
    %c0_i32_1 = arith.constant 0 : i32
    return %c0_i32, %c0_i32_0 : i32, i32
  }
  func.func @transform_3(%arg0: i32, %arg1: i32) -> (i32, i32) {
    %c0_i32 = arith.constant 0 : i32
    %c0_i32_0 = arith.constant 0 : i32
    return %arg0, %c0_i32 : i32, i32
  }
}

</mosaic_0001>

<llo_original>
// kernel: convnet_embedder_forward.8
$region0: #{convnet_embedder_forward.8}
  #allocation0 [shape = 'u32[]', space=smem, size = 0x4, offset = 0x4, fixed_abs, tag = 'smem constant byte address 0x4 - core index']
  #allocation1 [shape = 'u32[144,128]{1,0:T(1,128)}', space=vmem, size = 0x12000, scoped, tag = 'internal scratch']
  #allocation2 [shape = 'f32[2,256]{1,0:T(2,128)}', space=vmem, size = 0x800, scoped, tag = 'scratch operand']
  %s0 = inlined_call_operand.vmem [shape: f32[2,512], index: 0, kind: input, shape index: {}]
  %s1 = inlined_call_operand.vmem [shape: f32[512,256], index: 1, kind: input, shape index: {}]
  %s2 = inlined_call_operand.vmem [shape: f32[1,256], index: 2, kind: input, shape index: {}]
  %s3 = inlined_call_operand.vmem [shape: f32[2,256], index: 3, kind: output, shape index: {}]
  %s4 = sld [smem:[#allocation0]]
  $region30: #{convnet_embedder_forward.8} parent=0
    _
  %s6 = ssub.s32 1, %s4
  %s7 = scalar_select 0, %s6, %s4
  // Predicated region
  $region2: #{convnet_embedder_forward.8} parent=0 // pred_check
    _
  $region3: #{convnet_embedder_forward.8} parent=0 // pred_check_branch
    %9 = sbr.rel (0) target = $region5
  $region4: #{convnet_embedder_forward.8} parent=0 // pred_region
    _
  $region5: #{convnet_embedder_forward.8} parent=0 // pred_fallthru
    _
  // Predicated region
  $region6: #{convnet_embedder_forward.8} parent=0 // pred_check
    _
  $region7: #{convnet_embedder_forward.8} parent=0 // pred_check_branch
    %11 = sbr.rel (0) target = $region9
  $region8: #{convnet_embedder_forward.8} parent=0 // pred_region
    _
  $region9: #{convnet_embedder_forward.8} parent=0 // pred_fallthru
    _
  // Predicated region
  $region10: #{convnet_embedder_forward.8} parent=0 // pred_check
    _
  $region11: #{convnet_embedder_forward.8} parent=0 // pred_check_branch
    %13 = sbr.rel (0) target = $region13
  $region12: #{convnet_embedder_forward.8} parent=0 // pred_region
    _
  $region13: #{convnet_embedder_forward.8} parent=0 // pred_fallthru
    _
  %p14 = scmp.eq.s32.totalorder 0, 0
  // Predicated region
  $region14: #{convnet_embedder_forward.8} parent=0 // pred_check
    %p15 = pneg %p14
  $region15: #{convnet_embedder_forward.8} parent=0 // pred_check_branch
    %17 = sbr.rel (%p15) target = $region17
  $region16: #{convnet_embedder_forward.8} parent=0 // pred_region
    %18 = vst [vmem:[#allocation2] sm:$0xf] 0.0
  $region17: #{convnet_embedder_forward.8} parent=0 // pred_fallthru
    _
  %v19 = vld [vmem:[#allocation2] sm:$0xf]
  %v20 = vld [vmem:[%s0] sm:$0xff]
  %v21 = vld [vmem:[%s1] sm:$0xff]
  %v22 = vld [vmem:[%s1 + $0x8] sm:$0xff]
  %v23 = vld [vmem:[%s1 + $0x10] sm:$0xff]
  %v24 = vld [vmem:[%s1 + $0x18] sm:$0xff]
  %v25 = vld [vmem:[%s1 + $0x20] sm:$0xff]
  %v26 = vld [vmem:[%s1 + $0x28] sm:$0xff]
  %v27 = vld [vmem:[%s1 + $0x30] sm:$0xff]
  %v28 = vld [vmem:[%s1 + $0x38] sm:$0xff]
  %v29 = vld [vmem:[%s1 + $0x40] sm:$0xff]
  %v30 = vld [vmem:[%s1 + $0x48] sm:$0xff]
  %v31 = vld [vmem:[%s1 + $0x50] sm:$0xff]
  %v32 = vld [vmem:[%s1 + $0x58] sm:$0xff]
  %v33 = vld [vmem:[%s1 + $0x60] sm:$0xff]
  %v34 = vld [vmem:[%s1 + $0x68] sm:$0xff]
  %v35 = vld [vmem:[%s1 + $0x70] sm:$0xff]
  %v36 = vld [vmem:[%s1 + $0x78] sm:$0xff]
  %v37 = vld [vmem:[%s1 + $0x80] sm:$0xff]
  %v38 = vld [vmem:[%s1 + $0x88] sm:$0xff]
  %v39 = vld [vmem:[%s1 + $0x90] sm:$0xff]
  %v40 = vld [vmem:[%s1 + $0x98] sm:$0xff]
  %v41 = vld [vmem:[%s1 + $0xa0] sm:$0xff]
  %v42 = vld [vmem:[%s1 + $0xa8] sm:$0xff]
  %v43 = vld [vmem:[%s1 + $0xb0] sm:$0xff]
  %v44 = vld [vmem:[%s1 + $0xb8] sm:$0xff]
  %v45 = vld [vmem:[%s1 + $0xc0] sm:$0xff]
  %v46 = vld [vmem:[%s1 + $0xc8] sm:$0xff]
  %v47 = vld [vmem:[%s1 + $0xd0] sm:$0xff]
  %v48 = vld [vmem:[%s1 + $0xd8] sm:$0xff]
  %v49 = vld [vmem:[%s1 + $0xe0] sm:$0xff]
  %v50 = vld [vmem:[%s1 + $0xe8] sm:$0xff]
  %v51 = vld [vmem:[%s1 + $0xf0] sm:$0xff]
  %v52 = vld [vmem:[%s1 + $0xf8] sm:$0xff]
  %v53 = vld [vmem:[%s1 + $0x100] sm:$0xff]
  %v54 = vld [vmem:[%s1 + $0x108] sm:$0xff]
  %v55 = vld [vmem:[%s1 + $0x110] sm:$0xff]
  %v56 = vld [vmem:[%s1 + $0x118] sm:$0xff]
  %v57 = vld [vmem:[%s1 + $0x120] sm:$0xff]
  %v58 = vld [vmem:[%s1 + $0x128] sm:$0xff]
  %v59 = vld [vmem:[%s1 + $0x130] sm:$0xff]
  %v60 = vld [vmem:[%s1 + $0x138] sm:$0xff]
  %v61 = vld [vmem:[%s1 + $0x140] sm:$0xff]
  %v62 = vld [vmem:[%s1 + $0x148] sm:$0xff]
  %v63 = vld [vmem:[%s1 + $0x150] sm:$0xff]
  %v64 = vld [vmem:[%s1 + $0x158] sm:$0xff]
  %v65 = vld [vmem:[%s1 + $0x160] sm:$0xff]
  %v66 = vld [vmem:[%s1 + $0x168] sm:$0xff]
  %v67 = vld [vmem:[%s1 + $0x170] sm:$0xff]
  %v68 = vld [vmem:[%s1 + $0x178] sm:$0xff]
  %v69 = vld [vmem:[%s1 + $0x180] sm:$0xff]
  %v70 = vld [vmem:[%s1 + $0x188] sm:$0xff]
  %v71 = vld [vmem:[%s1 + $0x190] sm:$0xff]
  %v72 = vld [vmem:[%s1 + $0x198] sm:$0xff]
  %v73 = vld [vmem:[%s1 + $0x1a0] sm:$0xff]
  %v74 = vld [vmem:[%s1 + $0x1a8] sm:$0xff]
  %v75 = vld [vmem:[%s1 + $0x1b0] sm:$0xff]
  %v76 = vld [vmem:[%s1 + $0x1b8] sm:$0xff]
  %v77 = vld [vmem:[%s1 + $0x1c0] sm:$0xff]
  %v78 = vld [vmem:[%s1 + $0x1c8] sm:$0xff]
  %v79 = vld [vmem:[%s1 + $0x1d0] sm:$0xff]
  %v80 = vld [vmem:[%s1 + $0x1d8] sm:$0xff]
  %v81 = vld [vmem:[%s1 + $0x1e0] sm:$0xff]
  %v82 = vld [vmem:[%s1 + $0x1e8] sm:$0xff]
  %v83 = vld [vmem:[%s1 + $0x1f0] sm:$0xff]
  %v84 = vld [vmem:[%s1 + $0x1f8] sm:$0xff]
  %v85 = vld [vmem:[%s1 + $0x200] sm:$0xff]
  %v86 = vld [vmem:[%s1 + $0x208] sm:$0xff]
  %v87 = vld [vmem:[%s1 + $0x210] sm:$0xff]
  %v88 = vld [vmem:[%s1 + $0x218] sm:$0xff]
  %v89 = vld [vmem:[%s1 + $0x220] sm:$0xff]
  %v90 = vld [vmem:[%s1 + $0x228] sm:$0xff]
  %v91 = vld [vmem:[%s1 + $0x230] sm:$0xff]
  %v92 = vld [vmem:[%s1 + $0x238] sm:$0xff]
  %v93 = vld [vmem:[%s1 + $0x240] sm:$0xff]
  %v94 = vld [vmem:[%s1 + $0x248] sm:$0xff]
  %v95 = vld [vmem:[%s1 + $0x250] sm:$0xff]
  %v96 = vld [vmem:[%s1 + $0x258] sm:$0xff]
  %v97 = vld [vmem:[%s1 + $0x260] sm:$0xff]
  %v98 = vld [vmem:[%s1 + $0x268] sm:$0xff]
  %v99 = vld [vmem:[%s1 + $0x270] sm:$0xff]
  %v100 = vld [vmem:[%s1 + $0x278] sm:$0xff]
  %v101 = vld [vmem:[%s1 + $0x280] sm:$0xff]
  %v102 = vld [vmem:[%s1 + $0x288] sm:$0xff]
  %v103 = vld [vmem:[%s1 + $0x290] sm:$0xff]
  %v104 = vld [vmem:[%s1 + $0x298] sm:$0xff]
  %v105 = vld [vmem:[%s1 + $0x2a0] sm:$0xff]
  %v106 = vld [vmem:[%s1 + $0x2a8] sm:$0xff]
  %v107 = vld [vmem:[%s1 + $0x2b0] sm:$0xff]
  %v108 = vld [vmem:[%s1 + $0x2b8] sm:$0xff]
  %v109 = vld [vmem:[%s1 + $0x2c0] sm:$0xff]
  %v110 = vld [vmem:[%s1 + $0x2c8] sm:$0xff]
  %v111 = vld [vmem:[%s1 + $0x2d0] sm:$0xff]
  %v112 = vld [vmem:[%s1 + $0x2d8] sm:$0xff]
  %v113 = vld [vmem:[%s1 + $0x2e0] sm:$0xff]
  %v114 = vld [vmem:[%s1 + $0x2e8] sm:$0xff]
  %v115 = vld [vmem:[%s1 + $0x2f0] sm:$0xff]
  %v116 = vld [vmem:[%s1 + $0x2f8] sm:$0xff]
  %v117 = vld [vmem:[%s1 + $0x300] sm:$0xff]
  %v118 = vld [vmem:[%s1 + $0x308] sm:$0xff]
  %v119 = vld [vmem:[%s1 + $0x310] sm:$0xff]
  %v120 = vld [vmem:[%s1 + $0x318] sm:$0xff]
  %v121 = vld [vmem:[%s1 + $0x320] sm:$0xff]
  %v122 = vld [vmem:[%s1 + $0x328] sm:$0xff]
  %v123 = vld [vmem:[%s1 + $0x330] sm:$0xff]
  %v124 = vld [vmem:[%s1 + $0x338] sm:$0xff]
  %v125 = vld [vmem:[%s1 + $0x340] sm:$0xff]
  %v126 = vld [vmem:[%s1 + $0x348] sm:$0xff]
  %v127 = vld [vmem:[%s1 + $0x350] sm:$0xff]
  %v128 = vld [vmem:[%s1 + $0x358] sm:$0xff]
  %v129 = vld [vmem:[%s1 + $0x360] sm:$0xff]
  %v130 = vld [vmem:[%s1 + $0x368] sm:$0xff]
  %v131 = vld [vmem:[%s1 + $0x370] sm:$0xff]
  %v132 = vld [vmem:[%s1 + $0x378] sm:$0xff]
  %v133 = vld [vmem:[%s1 + $0x380] sm:$0xff]
  %v134 = vld [vmem:[%s1 + $0x388] sm:$0xff]
  %v135 = vld [vmem:[%s1 + $0x390] sm:$0xff]
  %v136 = vld [vmem:[%s1 + $0x398] sm:$0xff]
  %v137 = vld [vmem:[%s1 + $0x3a0] sm:$0xff]
  %v138 = vld [vmem:[%s1 + $0x3a8] sm:$0xff]
  %v139 = vld [vmem:[%s1 + $0x3b0] sm:$0xff]
  %v140 = vld [vmem:[%s1 + $0x3b8] sm:$0xff]
  %v141 = vld [vmem:[%s1 + $0x3c0] sm:$0xff]
  %v142 = vld [vmem:[%s1 + $0x3c8] sm:$0xff]
  %v143 = vld [vmem:[%s1 + $0x3d0] sm:$0xff]
  %v144 = vld [vmem:[%s1 + $0x3d8] sm:$0xff]
  %v145 = vld [vmem:[%s1 + $0x3e0] sm:$0xff]
  %v146 = vld [vmem:[%s1 + $0x3e8] sm:$0xff]
  %v147 = vld [vmem:[%s1 + $0x3f0] sm:$0xff]
  %v148 = vld [vmem:[%s1 + $0x3f8] sm:$0xff]
  %v150 = vcombine.high %v20, %v20
  %v152 = vunpack.c.l.s4 1983009808
  %v153 = vunpack.c.0.s8 %v152
  %v154 = vlaneseq
  %v155 = vshrl.u32 %v154, 7
  %v156 = vsub.s32 %v153, %v155
  %v157 = vrot.slane %v20, %v156
  %v159 = vunpack.c.l.s4 1983009808
  %v160 = vunpack.c.0.s8 %v159
  %v161 = vlaneseq
  %v162 = vshrl.u32 %v161, 7
  %v163 = vsub.s32 %v160, %v162
  %v164 = vrot.slane %v150, %v163
  %v165 = vcombine.high %v157, %v157
  %v166 = vcombine.high %v164, %v164
  %171 = vmatprep.subr.mxu0 %v22
  %172 = vmatpush1.msra.mxu0 %v21
  %173 = vmatprep.subr.mxu0 %v24
  %174 = vmatpush1.msra.mxu0 %v23
  %175 = vmatprep.subr.mxu0 %v26
  %176 = vmatpush1.msra.mxu0 %v25
  %177 = vmatprep.subr.mxu0 %v28
  %178 = vmatpush1.msra.mxu0 %v27
  %179 = vmatprep.subr.mxu0 %v30
  %180 = vmatpush1.msra.mxu0 %v29
  %181 = vmatprep.subr.mxu0 %v32
  %182 = vmatpush1.msra.mxu0 %v31
  %183 = vmatprep.subr.mxu0 %v34
  %184 = vmatpush1.msra.mxu0 %v33
  %185 = vmatprep.subr.mxu0 %v36
  %186 = vmatpush1.msra.mxu0 %v35
  %187 = vmatprep.subr.mxu0 %v38
  %188 = vmatpush1.msra.mxu0 %v37
  %189 = vmatprep.subr.mxu0 %v40
  %190 = vmatpush1.msra.mxu0 %v39
  %191 = vmatprep.subr.mxu0 %v42
  %192 = vmatpush1.msra.mxu0 %v41
  %193 = vmatprep.subr.mxu0 %v44
  %194 = vmatpush1.msra.mxu0 %v43
  %195 = vmatprep.subr.mxu0 %v46
  %196 = vmatpush1.msra.mxu0 %v45
  %197 = vmatprep.subr.mxu0 %v48
  %198 = vmatpush1.msra.mxu0 %v47
  %199 = vmatprep.subr.mxu0 %v50
  %200 = vmatpush1.msra.mxu0 %v49
  %201 = vmatprep.subr.mxu0 %v52
  %202 = vmatpush1.msra.mxu0 %v51
  %203 = vmatprep.subr.mxu0 %v54
  %204 = vmatpush1.msra.mxu0 %v53
  %205 = vmatprep.subr.mxu0 %v56
  %206 = vmatpush1.msra.mxu0 %v55
  %207 = vmatprep.subr.mxu0 %v58
  %208 = vmatpush1.msra.mxu0 %v57
  %209 = vmatprep.subr.mxu0 %v60
  %210 = vmatpush1.msra.mxu0 %v59
  %211 = vmatprep.subr.mxu0 %v62
  %212 = vmatpush1.msra.mxu0 %v61
  %213 = vmatprep.subr.mxu0 %v64
  %214 = vmatpush1.msra.mxu0 %v63
  %215 = vmatprep.subr.mxu0 %v66
  %216 = vmatpush1.msra.mxu0 %v65
  %217 = vmatprep.subr.mxu0 %v68
  %218 = vmatpush1.msra.mxu0 %v67
  %219 = vmatprep.subr.mxu0 %v70
  %220 = vmatpush1.msra.mxu0 %v69
  %221 = vmatprep.subr.mxu0 %v72
  %222 = vmatpush1.msra.mxu0 %v71
  %223 = vmatprep.subr.mxu0 %v74
  %224 = vmatpush1.msra.mxu0 %v73
  %225 = vmatprep.subr.mxu0 %v76
  %226 = vmatpush1.msra.mxu0 %v75
  %227 = vmatprep.subr.mxu0 %v78
  %228 = vmatpush1.msra.mxu0 %v77
  %229 = vmatprep.subr.mxu0 %v80
  %230 = vmatpush1.msra.mxu0 %v79
  %231 = vmatprep.subr.mxu0 %v82
  %232 = vmatpush1.msra.mxu0 %v81
  %233 = vmatprep.subr.mxu0 %v84
  %234 = vmatpush1.msra.mxu0 %v83
  %235 = vmatprep.mubr.f32.mxu0 %v165
  %236 = vmatmul.mubr.f32.gmra.mrb[0].mxu0 %v157
  %v237 = vpop.f32.mrb[0].mxu0
  %v238 = vadd.f32 0.0, %v237
  %v239 = vpop.f32.mrb[0].mxu0
  %v240 = vadd.f32 0.0, %v239
  %241 = vdwg.mxu0
  %242 = vmatprep.subr.mxu0 %v86
  %243 = vmatpush1.msra.mxu0 %v85
  %244 = vmatprep.subr.mxu0 %v88
  %245 = vmatpush1.msra.mxu0 %v87
  %246 = vmatprep.subr.mxu0 %v90
  %247 = vmatpush1.msra.mxu0 %v89
  %248 = vmatprep.subr.mxu0 %v92
  %249 = vmatpush1.msra.mxu0 %v91
  %250 = vmatprep.subr.mxu0 %v94
  %251 = vmatpush1.msra.mxu0 %v93
  %252 = vmatprep.subr.mxu0 %v96
  %253 = vmatpush1.msra.mxu0 %v95
  %254 = vmatprep.subr.mxu0 %v98
  %255 = vmatpush1.msra.mxu0 %v97
  %256 = vmatprep.subr.mxu0 %v100
  %257 = vmatpush1.msra.mxu0 %v99
  %258 = vmatprep.subr.mxu0 %v102
  %259 = vmatpush1.msra.mxu0 %v101
  %260 = vmatprep.subr.mxu0 %v104
  %261 = vmatpush1.msra.mxu0 %v103
  %262 = vmatprep.subr.mxu0 %v106
  %263 = vmatpush1.msra.mxu0 %v105
  %264 = vmatprep.subr.mxu0 %v108
  %265 = vmatpush1.msra.mxu0 %v107
  %266 = vmatprep.subr.mxu0 %v110
  %267 = vmatpush1.msra.mxu0 %v109
  %268 = vmatprep.subr.mxu0 %v112
  %269 = vmatpush1.msra.mxu0 %v111
  %270 = vmatprep.subr.mxu0 %v114
  %271 = vmatpush1.msra.mxu0 %v113
  %272 = vmatprep.subr.mxu0 %v116
  %273 = vmatpush1.msra.mxu0 %v115
  %274 = vmatprep.subr.mxu0 %v118
  %275 = vmatpush1.msra.mxu0 %v117
  %276 = vmatprep.subr.mxu0 %v120
  %277 = vmatpush1.msra.mxu0 %v119
  %278 = vmatprep.subr.mxu0 %v122
  %279 = vmatpush1.msra.mxu0 %v121
  %280 = vmatprep.subr.mxu0 %v124
  %281 = vmatpush1.msra.mxu0 %v123
  %282 = vmatprep.subr.mxu0 %v126
  %283 = vmatpush1.msra.mxu0 %v125
  %284 = vmatprep.subr.mxu0 %v128
  %285 = vmatpush1.msra.mxu0 %v127
  %286 = vmatprep.subr.mxu0 %v130
  %287 = vmatpush1.msra.mxu0 %v129
  %288 = vmatprep.subr.mxu0 %v132
  %289 = vmatpush1.msra.mxu0 %v131
  %290 = vmatprep.subr.mxu0 %v134
  %291 = vmatpush1.msra.mxu0 %v133
  %292 = vmatprep.subr.mxu0 %v136
  %293 = vmatpush1.msra.mxu0 %v135
  %294 = vmatprep.subr.mxu0 %v138
  %295 = vmatpush1.msra.mxu0 %v137
  %296 = vmatprep.subr.mxu0 %v140
  %297 = vmatpush1.msra.mxu0 %v139
  %298 = vmatprep.subr.mxu0 %v142
  %299 = vmatpush1.msra.mxu0 %v141
  %300 = vmatprep.subr.mxu0 %v144
  %301 = vmatpush1.msra.mxu0 %v143
  %302 = vmatprep.subr.mxu0 %v146
  %303 = vmatpush1.msra.mxu0 %v145
  %304 = vmatprep.subr.mxu0 %v148
  %305 = vmatpush1.msra.mxu0 %v147
  %306 = vmatprep.mubr.f32.mxu0 %v166
  %307 = vmatmul.mubr.f32.gmra.mrb[0].mxu0 %v164
  %v308 = vpop.f32.mrb[0].mxu0
  %v309 = vadd.f32 %v238, %v308
  %v310 = vpop.f32.mrb[0].mxu0
  %v311 = vadd.f32 %v240, %v310
  %312 = vdwg.mxu0
  %v315 = vcombine.low %v309, %v311
  %v317 = vunpack.c.l.s4 1983009808
  %v318 = vunpack.c.0.s8 %v317
  %v319 = vlaneseq
  %v320 = vshrl.u32 %v319, 7
  %v321 = vsub.s32 %v318, %v320
  %v322 = vrot.slane %v315, %v321
  %v324 = vadd.f32 %v19, %v322
  %325 = vst [vmem:[#allocation2] sm:$0xf] %v324
  // Predicated region
  $region18: #{convnet_embedder_forward.8} parent=0 // pred_check
    %p326 = pneg %p14
  $region19: #{convnet_embedder_forward.8} parent=0 // pred_check_branch
    %328 = sbr.rel (%p326) target = $region21
  $region20: #{convnet_embedder_forward.8} parent=0 // pred_region
    %v329 = vld [vmem:[#allocation2] sm:$0xf]
    %v330 = vld [vmem:[%s2] sm:$0x3]
    %v332 = vlaneseq
    %v333 = vshrl.u32 %v332, 7
    %v334 = vsub.s32 0, %v333
    %v335 = vrot.slane %v330, %v334
    %v336 = vlaneseq
    %v337 = vshrl.u32 %v336, 7
    %v338 = vsub.s32 1, %v337
    %v339 = vrot.slane %v330, %v338
    %v340 = vcombine.low %v335, %v339
    %v342 = vunpack.c.l.s4 1983009808
    %v343 = vunpack.c.0.s8 %v342
    %v344 = vlaneseq
    %v345 = vshrl.u32 %v344, 7
    %v346 = vsub.s32 %v343, %v345
    %v347 = vrot.slane %v340, %v346
    %v349 = vadd.f32 %v329, %v347
    %v350 = vmax.f32 %v349, 0.0
    %351 = vst [vmem:[%s3] sm:$0xf] %v350
  $region21: #{convnet_embedder_forward.8} parent=0 // pred_fallthru
    _
  // Predicated region
  $region22: #{convnet_embedder_forward.8} parent=0 // pred_check
    _
  $region23: #{convnet_embedder_forward.8} parent=0 // pred_check_branch
    %353 = sbr.rel (0) target = $region25
  $region24: #{convnet_embedder_forward.8} parent=0 // pred_region
    _
  $region25: #{convnet_embedder_forward.8} parent=0 // pred_fallthru
    _
  // Predicated region
  $region26: #{convnet_embedder_forward.8} parent=0 // pred_check
    _
  $region27: #{convnet_embedder_forward.8} parent=0 // pred_check_branch
    %355 = sbr.rel (0) target = $region29
  $region28: #{convnet_embedder_forward.8} parent=0 // pred_region
    _
  $region29: #{convnet_embedder_forward.8} parent=0 // pred_fallthru
    _

// kernel: convnet_embedder_forward.6
$region0: #{convnet_embedder_forward.6}
  #allocation0 [shape = 'u32[]', space=smem, size = 0x4, offset = 0x4, fixed_abs, tag = 'smem constant byte address 0x4 - core index']
  #allocation1 [shape = 'u32[144,128]{1,0:T(1,128)}', space=vmem, size = 0x12000, scoped, tag = 'internal scratch']
  %s0 = inlined_call_operand.vmem [shape: f32[2,10,10,128], index: 0, kind: input, shape index: {}, may-alias: {0,1,2,3}]
  %s1 = inlined_call_operand.vmem [shape: f32[2,10,10,128], index: 1, kind: input, shape index: {}, may-alias: {0,1,2,3}]
  %s2 = inlined_call_operand.vmem [shape: f32[2,10,10,128], index: 2, kind: input, shape index: {}, may-alias: {0,1,2,3}]
  %s3 = inlined_call_operand.vmem [shape: f32[2,10,10,128], index: 3, kind: input, shape index: {}, may-alias: {0,1,2,3}]
  %s4 = inlined_call_operand.vmem [shape: f32[9,128,128], index: 4, kind: input, shape index: {}]
  %s5 = inlined_call_operand.vmem [shape: f32[1,128], index: 5, kind: input, shape index: {}]
  %s6 = inlined_call_operand.vmem [shape: f32[2,4,4,128], index: 6, kind: output, shape index: {}]
  %s7 = sld [smem:[#allocation0]]
  $region57: #{convnet_embedder_forward.6} parent=0
    _
  %s9 = ssub.s32 1, %s7
  %s10 = scalar_select 0, %s9, %s7
  loop: start=0, step=1, limit=10
  $region2: #{convnet_embedder_forward.6} parent=0 // loop_pre_header
    _
  $region3: #{convnet_embedder_forward.6} parent=0 // loop_header
    %s12 = sphi 0, %s16
    %p13 = scmp.ge.s32.totalorder %s12, 10
    %s19 = sphi 0, %s31
    %s20 = sphi 0, %s27
    %s21 = sphi 0, %s19
    %s22 = sphi 0, %s20
    %s23 = sphi 0, %s21
    %s24 = sphi 0, %s22
    %s38 = sphi 0, %s40
    %s41 = sphi 0, %s38
    %s42 = sphi 0, %s41
    %s58 = sphi 0, %s42
    %s70 = sphi 0, %s72
    %s73 = sphi 0, %s70
    %s74 = sphi 0, %s73
    %s90 = sphi 0, %s74
    %s102 = sphi 0, %s104
    %s105 = sphi 0, %s102
    %s106 = sphi 0, %s105
    %s122 = sphi 0, %s106
    %s134 = sphi 0, %s136
    %s137 = sphi 0, %s134
    %s138 = sphi 0, %s137
    %s154 = sphi 0, %s138
    %s158 = sphi 0, %s158
    %s160 = sphi 0, %s158
    %s161 = sphi 0, %s160
    %s175 = sphi 0, %s161
    %s179 = sphi 0, %s179
    %s181 = sphi 0, %s179
    %s182 = sphi 0, %s181
    %s196 = sphi 0, %s182
    %s204 = sphi 0, %s206
    %s207 = sphi 0, %s204
    %s208 = sphi 0, %s207
    %s224 = sphi 0, %s208
  $region4: #{convnet_embedder_forward.6} parent=0 // loop_header_branch
    %15 = sbr.rel (%p13) target = $region8
  $region5: #{convnet_embedder_forward.6} parent=0 // loop_body
    %s17 = ssub.s32 %s12, 1
    %s18 = ssub.s32 %s12, 2
    %s25 = sadd.s32 1, %s20
    %p26 = scmp.ge.s32.totalorder %s25, 4
    %s27 = scalar_select %p26, 0, %s25
    %s28 = sadd.s32 1, %s19
    %s29 = scalar_select %p26, %s28, %s19
    %p30 = scmp.ge.s32.totalorder %s29, 2
    %s31 = scalar_select %p30, 0, %s29
    %s32 = smul.u32 %s20, 2
    %s33 = smul.u32 %s27, 2
    %s34 = ssub.s32 %s19, %s31
    %s35 = ssub.s32 %s32, %s33
    %s36 = sor.u32 %s34, %s35
    %p37 = scmp.eq.s32.totalorder %s36, 0
    %s39 = sadd.s32 %s38, 1
    %s40 = scalar_select %p37, %s38, %s39
    %p43 = pneg %p37
    %p44 = scmp.eq.s32.totalorder %s12, 7
    %p45 = por %p43, %p44
    %p46 = scmp.ne.s32.totalorder %s38, %s41
    %p47 = scmp.eq.s32.totalorder %s12, 0
    %p48 = por %p46, %p47
    %p49 = scmp.ne.s32.totalorder %s38, %s41
    %p50 = scmp.eq.s32.totalorder %s17, 7
    %p51 = por %p49, %p50
    %p52 = scmp.ne.s32.totalorder %s41, %s42
    %p53 = scmp.eq.s32.totalorder %s17, 0
    %p54 = por %p52, %p53
    %p55 = scmp.ne.s32.totalorder %s41, %s42
    %p56 = scmp.eq.s32.totalorder %s18, 7
    %p57 = por %p55, %p56
    %p59 = scmp.ne.s32.totalorder %s42, %s58
    %p60 = scmp.eq.s32.totalorder %s18, 0
    %p61 = por %p59, %p60
    %s62 = smul.u32 %s20, 2
    %s63 = sadd.s32 %s62, 1
    %s64 = smul.u32 %s27, 2
    %s65 = sadd.s32 %s64, 1
    %s66 = ssub.s32 %s19, %s31
    %s67 = ssub.s32 %s63, %s65
    %s68 = sor.u32 %s66, %s67
    %p69 = scmp.eq.s32.totalorder %s68, 0
    %s71 = sadd.s32 %s70, 1
    %s72 = scalar_select %p69, %s70, %s71
    %p75 = pneg %p69
    %p76 = scmp.eq.s32.totalorder %s12, 7
    %p77 = por %p75, %p76
    %p78 = scmp.ne.s32.totalorder %s70, %s73
    %p79 = scmp.eq.s32.totalorder %s12, 0
    %p80 = por %p78, %p79
    %p81 = scmp.ne.s32.totalorder %s70, %s73
    %p82 = scmp.eq.s32.totalorder %s17, 7
    %p83 = por %p81, %p82
    %p84 = scmp.ne.s32.totalorder %s73, %s74
    %p85 = scmp.eq.s32.totalorder %s17, 0
    %p86 = por %p84, %p85
    %p87 = scmp.ne.s32.totalorder %s73, %s74
    %p88 = scmp.eq.s32.totalorder %s18, 7
    %p89 = por %p87, %p88
    %p91 = scmp.ne.s32.totalorder %s74, %s90
    %p92 = scmp.eq.s32.totalorder %s18, 0
    %p93 = por %p91, %p92
    %s94 = smul.u32 %s20, 2
    %s95 = sadd.s32 %s94, 2
    %s96 = smul.u32 %s27, 2
    %s97 = sadd.s32 %s96, 2
    %s98 = ssub.s32 %s19, %s31
    %s99 = ssub.s32 %s95, %s97
    %s100 = sor.u32 %s98, %s99
    %p101 = scmp.eq.s32.totalorder %s100, 0
    %s103 = sadd.s32 %s102, 1
    %s104 = scalar_select %p101, %s102, %s103
    %p107 = pneg %p101
    %p108 = scmp.eq.s32.totalorder %s12, 7
    %p109 = por %p107, %p108
    %p110 = scmp.ne.s32.totalorder %s102, %s105
    %p111 = scmp.eq.s32.totalorder %s12, 0
    %p112 = por %p110, %p111
    %p113 = scmp.ne.s32.totalorder %s102, %s105
    %p114 = scmp.eq.s32.totalorder %s17, 7
    %p115 = por %p113, %p114
    %p116 = scmp.ne.s32.totalorder %s105, %s106
    %p117 = scmp.eq.s32.totalorder %s17, 0
    %p118 = por %p116, %p117
    %p119 = scmp.ne.s32.totalorder %s105, %s106
    %p120 = scmp.eq.s32.totalorder %s18, 7
    %p121 = por %p119, %p120
    %p123 = scmp.ne.s32.totalorder %s106, %s122
    %p124 = scmp.eq.s32.totalorder %s18, 0
    %p125 = por %p123, %p124
    %s126 = smul.u32 %s20, 2
    %s127 = sadd.s32 %s126, 3
    %s128 = smul.u32 %s27, 2
    %s129 = sadd.s32 %s128, 3
    %s130 = ssub.s32 %s19, %s31
    %s131 = ssub.s32 %s127, %s129
    %s132 = sor.u32 %s130, %s131
    %p133 = scmp.eq.s32.totalorder %s132, 0
    %s135 = sadd.s32 %s134, 1
    %s136 = scalar_select %p133, %s134, %s135
    %p139 = pneg %p133
    %p140 = scmp.eq.s32.totalorder %s12, 7
    %p141 = por %p139, %p140
    %p142 = scmp.ne.s32.totalorder %s134, %s137
    %p143 = scmp.eq.s32.totalorder %s12, 0
    %p144 = por %p142, %p143
    %p145 = scmp.ne.s32.totalorder %s134, %s137
    %p146 = scmp.eq.s32.totalorder %s17, 7
    %p147 = por %p145, %p146
    %p148 = scmp.ne.s32.totalorder %s137, %s138
    %p149 = scmp.eq.s32.totalorder %s17, 0
    %p150 = por %p148, %p149
    %p151 = scmp.ne.s32.totalorder %s137, %s138
    %p152 = scmp.eq.s32.totalorder %s18, 7
    %p153 = por %p151, %p152
    %p155 = scmp.ne.s32.totalorder %s138, %s154
    %p156 = scmp.eq.s32.totalorder %s18, 0
    %p157 = por %p155, %p156
    %s159 = sadd.s32 %s158, 1
    %p162 = scmp.eq.s32.totalorder %s12, 7
    %p163 = scmp.ne.s32.totalorder %s158, %s160
    %p164 = scmp.eq.s32.totalorder %s12, 0
    %p165 = por %p163, %p164
    %p166 = scmp.ne.s32.totalorder %s158, %s160
    %p167 = scmp.eq.s32.totalorder %s17, 7
    %p168 = por %p166, %p167
    %p169 = scmp.ne.s32.totalorder %s160, %s161
    %p170 = scmp.eq.s32.totalorder %s17, 0
    %p171 = por %p169, %p170
    %p172 = scmp.ne.s32.totalorder %s160, %s161
    %p173 = scmp.eq.s32.totalorder %s18, 7
    %p174 = por %p172, %p173
    %p176 = scmp.ne.s32.totalorder %s161, %s175
    %p177 = scmp.eq.s32.totalorder %s18, 0
    %p178 = por %p176, %p177
    %s180 = sadd.s32 %s179, 1
    %p183 = scmp.eq.s32.totalorder %s12, 7
    %p184 = scmp.ne.s32.totalorder %s179, %s181
    %p185 = scmp.eq.s32.totalorder %s12, 0
    %p186 = por %p184, %p185
    %p187 = scmp.ne.s32.totalorder %s179, %s181
    %p188 = scmp.eq.s32.totalorder %s17, 7
    %p189 = por %p187, %p188
    %p190 = scmp.ne.s32.totalorder %s181, %s182
    %p191 = scmp.eq.s32.totalorder %s17, 0
    %p192 = por %p190, %p191
    %p193 = scmp.ne.s32.totalorder %s181, %s182
    %p194 = scmp.eq.s32.totalorder %s18, 7
    %p195 = por %p193, %p194
    %p197 = scmp.ne.s32.totalorder %s182, %s196
    %p198 = scmp.eq.s32.totalorder %s18, 0
    %p199 = por %p197, %p198
    %s200 = ssub.s32 %s19, %s31
    %s201 = ssub.s32 %s20, %s27
    %s202 = sor.u32 %s200, %s201
    %p203 = scmp.eq.s32.totalorder %s202, 0
    %s205 = sadd.s32 %s204, 1
    %s206 = scalar_select %p203, %s204, %s205
    %p209 = pneg %p203
    %p210 = scmp.eq.s32.totalorder %s12, 7
    %p211 = por %p209, %p210
    %p212 = scmp.ne.s32.totalorder %s204, %s207
    %p213 = scmp.eq.s32.totalorder %s12, 0
    %p214 = por %p212, %p213
    %p215 = scmp.ne.s32.totalorder %s204, %s207
    %p216 = scmp.eq.s32.totalorder %s17, 7
    %p217 = por %p215, %p216
    %p218 = scmp.ne.s32.totalorder %s207, %s208
    %p219 = scmp.eq.s32.totalorder %s17, 0
    %p220 = por %p218, %p219
    %p221 = scmp.ne.s32.totalorder %s207, %s208
    %p222 = scmp.eq.s32.totalorder %s18, 7
    %p223 = por %p221, %p222
    %p225 = scmp.ne.s32.totalorder %s208, %s224
    %p226 = scmp.eq.s32.totalorder %s18, 0
    %p227 = por %p225, %p226
    %p228 = scmp.le.s32.totalorder 1, %s12
    %p229 = scmp.lt.s32.totalorder %s12, 9
    %p230 = pnand %p228, %p229
    %p231 = pneg %p230
    // Predicated region
    $region9: #{convnet_embedder_forward.6} parent=5 // pred_check
      _
    $region10: #{convnet_embedder_forward.6} parent=5 // pred_check_branch
      %233 = sbr.rel (%p230) target = $region12
    $region11: #{convnet_embedder_forward.6} parent=5 // pred_region
      %s234 = ssub.s32 %s12, 1
      // Predicated region
      $region13: #{convnet_embedder_forward.6} parent=11 // pred_check
        %p235 = pneg %p171
      $region14: #{convnet_embedder_forward.6} parent=11 // pred_check_branch
        %237 = sbr.rel (%p235) target = $region16
      $region15: #{convnet_embedder_forward.6} parent=11 // pred_region
        _
      $region16: #{convnet_embedder_forward.6} parent=11 // pred_fallthru
        _
      // Predicated region
      $region17: #{convnet_embedder_forward.6} parent=11 // pred_check
        %p238 = pneg %p192
      $region18: #{convnet_embedder_forward.6} parent=11 // pred_check_branch
        %240 = sbr.rel (%p238) target = $region20
      $region19: #{convnet_embedder_forward.6} parent=11 // pred_region
        _
      $region20: #{convnet_embedder_forward.6} parent=11 // pred_fallthru
        _
    $region12: #{convnet_embedder_forward.6} parent=5 // pred_fallthru
      _
    %p241 = scmp.lt.s32.totalorder %s12, 8
    // Predicated region
    $region21: #{convnet_embedder_forward.6} parent=5 // pred_check
      %p242 = pneg %p241
    $region22: #{convnet_embedder_forward.6} parent=5 // pred_check_branch
      %244 = sbr.rel (%p242) target = $region24
    $region23: #{convnet_embedder_forward.6} parent=5 // pred_region
      // Predicated region
      $region25: #{convnet_embedder_forward.6} parent=23 // pred_check
        %p245 = pneg %p48
      $region26: #{convnet_embedder_forward.6} parent=23 // pred_check_branch
        %247 = sbr.rel (%p245) target = $region28
      $region27: #{convnet_embedder_forward.6} parent=23 // pred_region
        %s248 = smul.u32 %s20, 2
        %p249 = scmp.lt.s32.totalorder %s19, 1
        %s250 = scalar_select %p249, %s19, 1
        %p251 = scmp.lt.s32.totalorder %s248, 9
        %s252 = scalar_select %p251, %s248, 9
        %s253 = smul.addr %s252, 2
        %s254 = smul.addr %s250, 20
        %s255 = sadd.s32 %s253, %s254
        %s256 = smul.addr %s255, 8
        %s257 = scalar_lea.vmem %s0, %s256
        %s258 = smul.u32 %s20, 2
      $region28: #{convnet_embedder_forward.6} parent=23 // pred_fallthru
        _
      // Predicated region
      $region29: #{convnet_embedder_forward.6} parent=23 // pred_check
        %p259 = pneg %p80
      $region30: #{convnet_embedder_forward.6} parent=23 // pred_check_branch
        %261 = sbr.rel (%p259) target = $region32
      $region31: #{convnet_embedder_forward.6} parent=23 // pred_region
        %s262 = smul.u32 %s20, 2
        %s263 = sadd.s32 %s262, 1
        %p264 = scmp.lt.s32.totalorder %s19, 1
        %s265 = scalar_select %p264, %s19, 1
        %p266 = scmp.lt.s32.totalorder %s263, 9
        %s267 = scalar_select %p266, %s263, 9
        %s268 = smul.addr %s267, 2
        %s269 = smul.addr %s265, 20
        %s270 = sadd.s32 %s268, %s269
        %s271 = smul.addr %s270, 8
        %s272 = scalar_lea.vmem %s1, %s271
        %s273 = smul.u32 %s20, 2
        %s274 = sadd.s32 %s273, 1
      $region32: #{convnet_embedder_forward.6} parent=23 // pred_fallthru
        _
      // Predicated region
      $region33: #{convnet_embedder_forward.6} parent=23 // pred_check
        %p275 = pneg %p112
      $region34: #{convnet_embedder_forward.6} parent=23 // pred_check_branch
        %277 = sbr.rel (%p275) target = $region36
      $region35: #{convnet_embedder_forward.6} parent=23 // pred_region
        %s278 = smul.u32 %s20, 2
        %s279 = sadd.s32 %s278, 2
        %p280 = scmp.lt.s32.totalorder %s19, 1
        %s281 = scalar_select %p280, %s19, 1
        %p282 = scmp.lt.s32.totalorder %s279, 9
        %s283 = scalar_select %p282, %s279, 9
        %s284 = smul.addr %s283, 2
        %s285 = smul.addr %s281, 20
        %s286 = sadd.s32 %s284, %s285
        %s287 = smul.addr %s286, 8
        %s288 = scalar_lea.vmem %s2, %s287
        %s289 = smul.u32 %s20, 2
        %s290 = sadd.s32 %s289, 2
      $region36: #{convnet_embedder_forward.6} parent=23 // pred_fallthru
        _
      // Predicated region
      $region37: #{convnet_embedder_forward.6} parent=23 // pred_check
        %p291 = pneg %p144
      $region38: #{convnet_embedder_forward.6} parent=23 // pred_check_branch
        %293 = sbr.rel (%p291) target = $region40
      $region39: #{convnet_embedder_forward.6} parent=23 // pred_region
        %s294 = smul.u32 %s20, 2
        %s295 = sadd.s32 %s294, 3
        %p296 = scmp.lt.s32.totalorder %s19, 1
        %s297 = scalar_select %p296, %s19, 1
        %p298 = scmp.lt.s32.totalorder %s295, 9
        %s299 = scalar_select %p298, %s295, 9
        %s300 = smul.addr %s299, 2
        %s301 = smul.addr %s297, 20
        %s302 = sadd.s32 %s300, %s301
        %s303 = smul.addr %s302, 8
        %s304 = scalar_lea.vmem %s3, %s303
        %s305 = smul.u32 %s20, 2
        %s306 = sadd.s32 %s305, 3
      $region40: #{convnet_embedder_forward.6} parent=23 // pred_fallthru
        _
    $region24: #{convnet_embedder_forward.6} parent=5 // pred_fallthru
      _
    %p307 = scmp.le.s32.totalorder 1, %s12
    %p308 = scmp.lt.s32.totalorder %s12, 9
    %p309 = pnand %p307, %p308
    %p310 = pneg %p309
    // Predicated region
    $region41: #{convnet_embedder_forward.6} parent=5 // pred_check
      _
    $region42: #{convnet_embedder_forward.6} parent=5 // pred_check_branch
      %312 = sbr.rel (%p309) target = $region44
    $region43: #{convnet_embedder_forward.6} parent=5 // pred_region
      %s313 = ssub.s32 %s12, 1
      %s314 = smul.u32 %s22, 2
      %p315 = scmp.lt.s32.totalorder %s21, 1
      %s316 = scalar_select %p315, %s21, 1
      %p317 = scmp.lt.s32.totalorder %s314, 9
      %s318 = scalar_select %p317, %s314, 9
      %s319 = smul.addr %s318, 2
      %s320 = smul.addr %s316, 20
      %s321 = sadd.s32 %s319, %s320
      %s322 = smul.addr %s321, 8
      %s323 = scalar_lea.vmem %s0, %s322
      %p324 = pneg %p54
      %p325 = pneg %p51
      %s326 = smul.u32 %s22, 2
      %s327 = sadd.s32 %s326, 1
      %p328 = scmp.lt.s32.totalorder %s21, 1
      %s329 = scalar_select %p328, %s21, 1
      %p330 = scmp.lt.s32.totalorder %s327, 9
      %s331 = scalar_select %p330, %s327, 9
      %s332 = smul.addr %s331, 2
      %s333 = smul.addr %s329, 20
      %s334 = sadd.s32 %s332, %s333
      %s335 = smul.addr %s334, 8
      %s336 = scalar_lea.vmem %s1, %s335
      %p337 = pneg %p86
      %p338 = pneg %p83
      %s339 = smul.u32 %s22, 2
      %s340 = sadd.s32 %s339, 2
      %p341 = scmp.lt.s32.totalorder %s21, 1
      %s342 = scalar_select %p341, %s21, 1
      %p343 = scmp.lt.s32.totalorder %s340, 9
      %s344 = scalar_select %p343, %s340, 9
      %s345 = smul.addr %s344, 2
      %s346 = smul.addr %s342, 20
      %s347 = sadd.s32 %s345, %s346
      %s348 = smul.addr %s347, 8
      %s349 = scalar_lea.vmem %s2, %s348
      %p350 = pneg %p118
      %p351 = pneg %p115
      %s352 = smul.u32 %s22, 2
      %s353 = sadd.s32 %s352, 3
      %p354 = scmp.lt.s32.totalorder %s21, 1
      %s355 = scalar_select %p354, %s21, 1
      %p356 = scmp.lt.s32.totalorder %s353, 9
      %s357 = scalar_select %p356, %s353, 9
      %s358 = smul.addr %s357, 2
      %s359 = smul.addr %s355, 20
      %s360 = sadd.s32 %s358, %s359
      %s361 = smul.addr %s360, 8
      %s362 = scalar_lea.vmem %s3, %s361
      %p363 = pneg %p150
      %p364 = pneg %p147
      %p365 = pneg %p171
      %p366 = pneg %p168
      %p367 = pneg %p192
      %p368 = pneg %p189
      %p369 = pneg %p220
      %p370 = pneg %p217
      %p371 = scmp.lt.s32.totalorder %s21, 1
      %s372 = scalar_select %p371, %s21, 1
      %p373 = scmp.lt.s32.totalorder %s22, 3
      %s374 = scalar_select %p373, %s22, 3
      %s375 = smul.addr %s372, 4
      %s376 = sadd.s32 %s374, %s375
      %s377 = smul.addr %s376, 4
      %s378 = scalar_lea.vmem %s6, %s377
      %s379 = smul.u32 %s22, 2
      %p380 = scmp.lt.s32.totalorder %s21, 1
      %s381 = scalar_select %p380, %s21, 1
      %p382 = scmp.lt.s32.totalorder %s379, 9
      %s383 = scalar_select %p382, %s379, 9
      %s384 = smul.addr %s383, 2
      %s385 = smul.addr %s381, 20
      %s386 = sadd.s32 %s384, %s385
      %s387 = smul.addr %s386, 8
      %s388 = scalar_lea.vmem %s0, %s387
      %s389 = smul.u32 %s22, 2
      %s390 = smul.u32 %s22, 2
      %s391 = sadd.s32 %s390, 1
      %p392 = scmp.lt.s32.totalorder %s21, 1
      %s393 = scalar_select %p392, %s21, 1
      %p394 = scmp.lt.s32.totalorder %s391, 9
      %s395 = scalar_select %p394, %s391, 9
      %s396 = smul.addr %s395, 2
      %s397 = smul.addr %s393, 20
      %s398 = sadd.s32 %s396, %s397
      %s399 = smul.addr %s398, 8
      %s400 = scalar_lea.vmem %s1, %s399
      %s401 = smul.u32 %s22, 2
      %s402 = sadd.s32 %s401, 1
      %s403 = smul.u32 %s22, 2
      %s404 = sadd.s32 %s403, 2
      %p405 = scmp.lt.s32.totalorder %s21, 1
      %s406 = scalar_select %p405, %s21, 1
      %p407 = scmp.lt.s32.totalorder %s404, 9
      %s408 = scalar_select %p407, %s404, 9
      %s409 = smul.addr %s408, 2
      %s410 = smul.addr %s406, 20
      %s411 = sadd.s32 %s409, %s410
      %s412 = smul.addr %s411, 8
      %s413 = scalar_lea.vmem %s2, %s412
      %s414 = smul.u32 %s22, 2
      %s415 = sadd.s32 %s414, 2
      %s416 = smul.u32 %s22, 2
      %s417 = sadd.s32 %s416, 3
      %p418 = scmp.lt.s32.totalorder %s21, 1
      %s419 = scalar_select %p418, %s21, 1
      %p420 = scmp.lt.s32.totalorder %s417, 9
      %s421 = scalar_select %p420, %s417, 9
      %s422 = smul.addr %s421, 2
      %s423 = smul.addr %s419, 20
      %s424 = sadd.s32 %s422, %s423
      %s425 = smul.addr %s424, 8
      %s426 = scalar_lea.vmem %s3, %s425
      %s427 = smul.u32 %s22, 2
      %s428 = sadd.s32 %s427, 3
      %p429 = scmp.lt.s32.totalorder %s21, 1
      %s430 = scalar_select %p429, %s21, 1
      %p431 = scmp.lt.s32.totalorder %s22, 3
      %s432 = scalar_select %p431, %s22, 3
      %s433 = smul.addr %s430, 4
      %s434 = sadd.s32 %s432, %s433
      %s435 = smul.addr %s434, 4
      %s436 = scalar_lea.vmem %s6, %s435
      %v437 = vlaneseq
      %v438 = vshrl.u32 %v437, 7
      %v439 = vlaneseq
      %v440 = vand.u32 %v439, 127
      %v441 = vmul.u32 %v438, 2
      %vm442 = vcmp.eq.s32.totalorder %v440, %v441
      %v443 = vsel %vm442, 1, 0
      %v444 = vcvt.s32.f32 %v443
      %v445 = vadd.s32 %v441, 1
      %vm446 = vcmp.eq.s32.totalorder %v440, %v445
      %v447 = vsel %vm446, 1, 0
      %v448 = vcvt.s32.f32 %v447
      %v449 = vld [vmem:[%s388] sm:$0xff]
      %v450 = vld [vmem:[%s4] sm:$0xff]
      %v451 = vld [vmem:[%s4 + $0x8] sm:$0xff]
      %v452 = vld [vmem:[%s4 + $0x10] sm:$0xff]
      %v453 = vld [vmem:[%s4 + $0x18] sm:$0xff]
      %v454 = vld [vmem:[%s4 + $0x20] sm:$0xff]
      %v455 = vld [vmem:[%s4 + $0x28] sm:$0xff]
      %v456 = vld [vmem:[%s4 + $0x30] sm:$0xff]
      %v457 = vld [vmem:[%s4 + $0x38] sm:$0xff]
      %v458 = vld [vmem:[%s4 + $0x40] sm:$0xff]
      %v459 = vld [vmem:[%s4 + $0x48] sm:$0xff]
      %v460 = vld [vmem:[%s4 + $0x50] sm:$0xff]
      %v461 = vld [vmem:[%s4 + $0x58] sm:$0xff]
      %v462 = vld [vmem:[%s4 + $0x60] sm:$0xff]
      %v463 = vld [vmem:[%s4 + $0x68] sm:$0xff]
      %v464 = vld [vmem:[%s4 + $0x70] sm:$0xff]
      %v465 = vld [vmem:[%s4 + $0x78] sm:$0xff]
      %v466 = vld [vmem:[%s388 + $0x1] sm:$0xff]
      %s467 = scalar_lea.vmem %s4, 128
      %v468 = vld [vmem:[%s467] sm:$0xff]
      %v469 = vld [vmem:[%s467 + $0x8] sm:$0xff]
      %v470 = vld [vmem:[%s467 + $0x10] sm:$0xff]
      %v471 = vld [vmem:[%s467 + $0x18] sm:$0xff]
      %v472 = vld [vmem:[%s467 + $0x20] sm:$0xff]
      %v473 = vld [vmem:[%s467 + $0x28] sm:$0xff]
      %v474 = vld [vmem:[%s467 + $0x30] sm:$0xff]
      %v475 = vld [vmem:[%s467 + $0x38] sm:$0xff]
      %v476 = vld [vmem:[%s467 + $0x40] sm:$0xff]
      %v477 = vld [vmem:[%s467 + $0x48] sm:$0xff]
      %v478 = vld [vmem:[%s467 + $0x50] sm:$0xff]
      %v479 = vld [vmem:[%s467 + $0x58] sm:$0xff]
      %v480 = vld [vmem:[%s467 + $0x60] sm:$0xff]
      %v481 = vld [vmem:[%s467 + $0x68] sm:$0xff]
      %v482 = vld [vmem:[%s467 + $0x70] sm:$0xff]
      %v483 = vld [vmem:[%s467 + $0x78] sm:$0xff]
      %484 = vmatprep.subr.mxu0 0.0
      %485 = vmatpush1.msra.mxu0 %v468
      %486 = vmatprep.subr.mxu0 0.0
      %487 = vmatpush1.msra.mxu0 %v469
      %488 = vmatprep.subr.mxu0 0.0
      %489 = vmatpush1.msra.mxu0 %v470
      %490 = vmatprep.subr.mxu0 0.0
      %491 = vmatpush1.msra.mxu0 %v471
      %492 = vmatprep.subr.mxu0 0.0
      %493 = vmatpush1.msra.mxu0 %v472
      %494 = vmatprep.subr.mxu0 0.0
      %495 = vmatpush1.msra.mxu0 %v473
      %496 = vmatprep.subr.mxu0 0.0
      %497 = vmatpush1.msra.mxu0 %v474
      %498 = vmatprep.subr.mxu0 0.0
      %499 = vmatpush1.msra.mxu0 %v475
      %500 = vmatprep.subr.mxu0 0.0
      %501 = vmatpush1.msra.mxu0 %v476
      %502 = vmatprep.subr.mxu0 0.0
      %503 = vmatpush1.msra.mxu0 %v477
      %504 = vmatprep.subr.mxu0 0.0
      %505 = vmatpush1.msra.mxu0 %v478
      %506 = vmatprep.subr.mxu0 0.0
      %507 = vmatpush1.msra.mxu0 %v479
      %508 = vmatprep.subr.mxu0 0.0
      %509 = vmatpush1.msra.mxu0 %v480
      %510 = vmatprep.subr.mxu0 0.0
      %511 = vmatpush1.msra.mxu0 %v481
      %512 = vmatprep.subr.mxu0 0.0
      %513 = vmatpush1.msra.mxu0 %v482
      %514 = vmatprep.subr.mxu0 0.0
      %515 = vmatpush1.msra.mxu0 %v483
      %516 = vmatprep.subr.mxu0 0.0
      %517 = vmatpush1.msra.mxu0 0.0
      %518 = vmatprep.subr.mxu0 0.0
      %519 = vmatpush1.msra.mxu0 0.0
      %520 = vmatprep.subr.mxu0 0.0
      %521 = vmatpush1.msra.mxu0 0.0
      %522 = vmatprep.subr.mxu0 0.0
      %523 = vmatpush1.msra.mxu0 0.0
      %524 = vmatprep.subr.mxu0 0.0
      %525 = vmatpush1.msra.mxu0 0.0
      %526 = vmatprep.subr.mxu0 0.0
      %527 = vmatpush1.msra.mxu0 0.0
      %528 = vmatprep.subr.mxu0 0.0
      %529 = vmatpush1.msra.mxu0 0.0
      %530 = vmatprep.subr.mxu0 0.0
      %531 = vmatpush1.msra.mxu0 0.0
      %532 = vmatprep.subr.mxu0 0.0
      %533 = vmatpush1.msra.mxu0 0.0
      %534 = vmatprep.subr.mxu0 0.0
      %535 = vmatpush1.msra.mxu0 0.0
      %536 = vmatprep.subr.mxu0 0.0
      %537 = vmatpush1.msra.mxu0 0.0
      %538 = vmatprep.subr.mxu0 0.0
      %539 = vmatpush1.msra.mxu0 0.0
      %540 = vmatprep.subr.mxu0 0.0
      %541 = vmatpush1.msra.mxu0 0.0
      %542 = vmatprep.subr.mxu0 0.0
      %543 = vmatpush1.msra.mxu0 0.0
      %544 = vmatprep.subr.mxu0 0.0
      %545 = vmatpush1.msra.mxu0 0.0
      %546 = vmatprep.subr.mxu0 0.0
      %547 = vmatpush1.msra.mxu0 0.0
      %548 = vmatprep.mubr.f32.mxu0 0.0
      %549 = vmatmul.mubr.f32.gmra.mrb[0].mxu0 %v466
      %v550 = vpop.f32.mrb[0].mxu0
      %v551 = vadd.f32 0.0, %v550
      %v552 = vpop.f32.mrb[0].mxu0
      %553 = vdwg.mxu0
      %554 = vmatprep.subr.mxu0 0.0
      %555 = vmatpush1.msra.mxu0 %v450
      %556 = vmatprep.subr.mxu0 0.0
      %557 = vmatpush1.msra.mxu0 %v451
      %558 = vmatprep.subr.mxu0 0.0
      %559 = vmatpush1.msra.mxu0 %v452
      %560 = vmatprep.subr.mxu0 0.0
      %561 = vmatpush1.msra.mxu0 %v453
      %562 = vmatprep.subr.mxu0 0.0
      %563 = vmatpush1.msra.mxu0 %v454
      %564 = vmatprep.subr.mxu0 0.0
      %565 = vmatpush1.msra.mxu0 %v455
      %566 = vmatprep.subr.mxu0 0.0
      %567 = vmatpush1.msra.mxu0 %v456
      %568 = vmatprep.subr.mxu0 0.0
      %569 = vmatpush1.msra.mxu0 %v457
      %570 = vmatprep.subr.mxu0 0.0
      %571 = vmatpush1.msra.mxu0 %v458
      %572 = vmatprep.subr.mxu0 0.0
      %573 = vmatpush1.msra.mxu0 %v459
      %574 = vmatprep.subr.mxu0 0.0
      %575 = vmatpush1.msra.mxu0 %v460
      %576 = vmatprep.subr.mxu0 0.0
      %577 = vmatpush1.msra.mxu0 %v461
      %578 = vmatprep.subr.mxu0 0.0
      %579 = vmatpush1.msra.mxu0 %v462
      %580 = vmatprep.subr.mxu0 0.0
      %581 = vmatpush1.msra.mxu0 %v463
      %582 = vmatprep.subr.mxu0 0.0
      %583 = vmatpush1.msra.mxu0 %v464
      %584 = vmatprep.subr.mxu0 0.0
      %585 = vmatpush1.msra.mxu0 %v465
      %586 = vmatprep.subr.mxu0 0.0
      %587 = vmatpush1.msra.mxu0 0.0
      %588 = vmatprep.subr.mxu0 0.0
      %589 = vmatpush1.msra.mxu0 0.0
      %590 = vmatprep.subr.mxu0 0.0
      %591 = vmatpush1.msra.mxu0 0.0
      %592 = vmatprep.subr.mxu0 0.0
      %593 = vmatpush1.msra.mxu0 0.0
      %594 = vmatprep.subr.mxu0 0.0
      %595 = vmatpush1.msra.mxu0 0.0
      %596 = vmatprep.subr.mxu0 0.0
      %597 = vmatpush1.msra.mxu0 0.0
      %598 = vmatprep.subr.mxu0 0.0
      %599 = vmatpush1.msra.mxu0 0.0
      %600 = vmatprep.subr.mxu0 0.0
      %601 = vmatpush1.msra.mxu0 0.0
      %602 = vmatprep.subr.mxu0 0.0
      %603 = vmatpush1.msra.mxu0 0.0
      %604 = vmatprep.subr.mxu0 0.0
      %605 = vmatpush1.msra.mxu0 0.0
      %606 = vmatprep.subr.mxu0 0.0
      %607 = vmatpush1.msra.mxu0 0.0
      %608 = vmatprep.subr.mxu0 0.0
      %609 = vmatpush1.msra.mxu0 0.0
      %610 = vmatprep.subr.mxu0 0.0
      %611 = vmatpush1.msra.mxu0 0.0
      %612 = vmatprep.subr.mxu0 0.0
      %613 = vmatpush1.msra.mxu0 0.0
      %614 = vmatprep.subr.mxu0 0.0
      %615 = vmatpush1.msra.mxu0 0.0
      %616 = vmatprep.subr.mxu0 0.0
      %617 = vmatpush1.msra.mxu0 0.0
      %618 = vmatprep.mubr.f32.mxu0 0.0
      %619 = vmatmul.mubr.f32.gmra.mrb[0].mxu0 %v449
      %v620 = vpop.f32.mrb[0].mxu0
      %v621 = vadd.f32 %v551, %v620
      %v622 = vpop.f32.mrb[0].mxu0
      %623 = vdwg.mxu0
      %v624 = vld [vmem:[%s388 + $0x2] sm:$0xff]
      %s625 = scalar_lea.vmem %s4, 256
      %v626 = vld [vmem:[%s625] sm:$0xff]
      %v627 = vld [vmem:[%s625 + $0x8] sm:$0xff]
      %v628 = vld [vmem:[%s625 + $0x10] sm:$0xff]
      %v629 = vld [vmem:[%s625 + $0x18] sm:$0xff]
      %v630 = vld [vmem:[%s625 + $0x20] sm:$0xff]
      %v631 = vld [vmem:[%s625 + $0x28] sm:$0xff]
      %v632 = vld [vmem:[%s625 + $0x30] sm:$0xff]
      %v633 = vld [vmem:[%s625 + $0x38] sm:$0xff]
      %v634 = vld [vmem:[%s625 + $0x40] sm:$0xff]
      %v635 = vld [vmem:[%s625 + $0x48] sm:$0xff]
      %v636 = vld [vmem:[%s625 + $0x50] sm:$0xff]
      %v637 = vld [vmem:[%s625 + $0x58] sm:$0xff]
      %v638 = vld [vmem:[%s625 + $0x60] sm:$0xff]
      %v639 = vld [vmem:[%s625 + $0x68] sm:$0xff]
      %v640 = vld [vmem:[%s625 + $0x70] sm:$0xff]
      %v641 = vld [vmem:[%s625 + $0x78] sm:$0xff]
      %642 = vmatprep.subr.mxu0 0.0
      %643 = vmatpush1.msra.mxu0 %v626
      %644 = vmatprep.subr.mxu0 0.0
      %645 = vmatpush1.msra.mxu0 %v627
      %646 = vmatprep.subr.mxu0 0.0
      %647 = vmatpush1.msra.mxu0 %v628
      %648 = vmatprep.subr.mxu0 0.0
      %649 = vmatpush1.msra.mxu0 %v629
      %650 = vmatprep.subr.mxu0 0.0
      %651 = vmatpush1.msra.mxu0 %v630
      %652 = vmatprep.subr.mxu0 0.0
      %653 = vmatpush1.msra.mxu0 %v631
      %654 = vmatprep.subr.mxu0 0.0
      %655 = vmatpush1.msra.mxu0 %v632
      %656 = vmatprep.subr.mxu0 0.0
      %657 = vmatpush1.msra.mxu0 %v633
      %658 = vmatprep.subr.mxu0 0.0
      %659 = vmatpush1.msra.mxu0 %v634
      %660 = vmatprep.subr.mxu0 0.0
      %661 = vmatpush1.msra.mxu0 %v635
      %662 = vmatprep.subr.mxu0 0.0
      %663 = vmatpush1.msra.mxu0 %v636
      %664 = vmatprep.subr.mxu0 0.0
      %665 = vmatpush1.msra.mxu0 %v637
      %666 = vmatprep.subr.mxu0 0.0
      %667 = vmatpush1.msra.mxu0 %v638
      %668 = vmatprep.subr.mxu0 0.0
      %669 = vmatpush1.msra.mxu0 %v639
      %670 = vmatprep.subr.mxu0 0.0
      %671 = vmatpush1.msra.mxu0 %v640
      %672 = vmatprep.subr.mxu0 0.0
      %673 = vmatpush1.msra.mxu0 %v641
      %674 = vmatprep.subr.mxu0 0.0
      %675 = vmatpush1.msra.mxu0 0.0
      %676 = vmatprep.subr.mxu0 0.0
      %677 = vmatpush1.msra.mxu0 0.0
      %678 = vmatprep.subr.mxu0 0.0
      %679 = vmatpush1.msra.mxu0 0.0
      %680 = vmatprep.subr.mxu0 0.0
      %681 = vmatpush1.msra.mxu0 0.0
      %682 = vmatprep.subr.mxu0 0.0
      %683 = vmatpush1.msra.mxu0 0.0
      %684 = vmatprep.subr.mxu0 0.0
      %685 = vmatpush1.msra.mxu0 0.0
      %686 = vmatprep.subr.mxu0 0.0
      %687 = vmatpush1.msra.mxu0 0.0
      %688 = vmatprep.subr.mxu0 0.0
      %689 = vmatpush1.msra.mxu0 0.0
      %690 = vmatprep.subr.mxu0 0.0
      %691 = vmatpush1.msra.mxu0 0.0
      %692 = vmatprep.subr.mxu0 0.0
      %693 = vmatpush1.msra.mxu0 0.0
      %694 = vmatprep.subr.mxu0 0.0
      %695 = vmatpush1.msra.mxu0 0.0
      %696 = vmatprep.subr.mxu0 0.0
      %697 = vmatpush1.msra.mxu0 0.0
      %698 = vmatprep.subr.mxu0 0.0
      %699 = vmatpush1.msra.mxu0 0.0
      %700 = vmatprep.subr.mxu0 0.0
      %701 = vmatpush1.msra.mxu0 0.0
      %702 = vmatprep.subr.mxu0 0.0
      %703 = vmatpush1.msra.mxu0 0.0
      %704 = vmatprep.subr.mxu0 0.0
      %705 = vmatpush1.msra.mxu0 0.0
      %706 = vmatprep.mubr.f32.mxu0 0.0
      %707 = vmatmul.mubr.f32.gmra.mrb[0].mxu0 %v624
      %v708 = vpop.f32.mrb[0].mxu0
      %v709 = vadd.f32 0.0, %v708
      %v710 = vpop.f32.mrb[0].mxu0
      %711 = vdwg.mxu0
      %v712 = vadd.f32 %v621, %v709
      %v713 = vld [vmem:[%s400] sm:$0xff]
      %s714 = scalar_lea.vmem %s4, 384
      %v715 = vld [vmem:[%s714] sm:$0xff]
      %v716 = vld [vmem:[%s714 + $0x8] sm:$0xff]
      %v717 = vld [vmem:[%s714 + $0x10] sm:$0xff]
      %v718 = vld [vmem:[%s714 + $0x18] sm:$0xff]
      %v719 = vld [vmem:[%s714 + $0x20] sm:$0xff]
      %v720 = vld [vmem:[%s714 + $0x28] sm:$0xff]
      %v721 = vld [vmem:[%s714 + $0x30] sm:$0xff]
      %v722 = vld [vmem:[%s714 + $0x38] sm:$0xff]
      %v723 = vld [vmem:[%s714 + $0x40] sm:$0xff]
      %v724 = vld [vmem:[%s714 + $0x48] sm:$0xff]
      %v725 = vld [vmem:[%s714 + $0x50] sm:$0xff]
      %v726 = vld [vmem:[%s714 + $0x58] sm:$0xff]
      %v727 = vld [vmem:[%s714 + $0x60] sm:$0xff]
      %v728 = vld [vmem:[%s714 + $0x68] sm:$0xff]
      %v729 = vld [vmem:[%s714 + $0x70] sm:$0xff]
      %v730 = vld [vmem:[%s714 + $0x78] sm:$0xff]
      %731 = vmatprep.subr.mxu0 0.0
      %732 = vmatpush1.msra.mxu0 %v715
      %733 = vmatprep.subr.mxu0 0.0
      %734 = vmatpush1.msra.mxu0 %v716
      %735 = vmatprep.subr.mxu0 0.0
      %736 = vmatpush1.msra.mxu0 %v717
      %737 = vmatprep.subr.mxu0 0.0
      %738 = vmatpush1.msra.mxu0 %v718
      %739 = vmatprep.subr.mxu0 0.0
      %740 = vmatpush1.msra.mxu0 %v719
      %741 = vmatprep.subr.mxu0 0.0
      %742 = vmatpush1.msra.mxu0 %v720
      %743 = vmatprep.subr.mxu0 0.0
      %744 = vmatpush1.msra.mxu0 %v721
      %745 = vmatprep.subr.mxu0 0.0
      %746 = vmatpush1.msra.mxu0 %v722
      %747 = vmatprep.subr.mxu0 0.0
      %748 = vmatpush1.msra.mxu0 %v723
      %749 = vmatprep.subr.mxu0 0.0
      %750 = vmatpush1.msra.mxu0 %v724
      %751 = vmatprep.subr.mxu0 0.0
      %752 = vmatpush1.msra.mxu0 %v725
      %753 = vmatprep.subr.mxu0 0.0
      %754 = vmatpush1.msra.mxu0 %v726
      %755 = vmatprep.subr.mxu0 0.0
      %756 = vmatpush1.msra.mxu0 %v727
      %757 = vmatprep.subr.mxu0 0.0
      %758 = vmatpush1.msra.mxu0 %v728
      %759 = vmatprep.subr.mxu0 0.0
      %760 = vmatpush1.msra.mxu0 %v729
      %761 = vmatprep.subr.mxu0 0.0
      %762 = vmatpush1.msra.mxu0 %v730
      %763 = vmatprep.subr.mxu0 0.0
      %764 = vmatpush1.msra.mxu0 0.0
      %765 = vmatprep.subr.mxu0 0.0
      %766 = vmatpush1.msra.mxu0 0.0
      %767 = vmatprep.subr.mxu0 0.0
      %768 = vmatpush1.msra.mxu0 0.0
      %769 = vmatprep.subr.mxu0 0.0
      %770 = vmatpush1.msra.mxu0 0.0
      %771 = vmatprep.subr.mxu0 0.0
      %772 = vmatpush1.msra.mxu0 0.0
      %773 = vmatprep.subr.mxu0 0.0
      %774 = vmatpush1.msra.mxu0 0.0
      %775 = vmatprep.subr.mxu0 0.0
      %776 = vmatpush1.msra.mxu0 0.0
      %777 = vmatprep.subr.mxu0 0.0
      %778 = vmatpush1.msra.mxu0 0.0
      %779 = vmatprep.subr.mxu0 0.0
      %780 = vmatpush1.msra.mxu0 0.0
      %781 = vmatprep.subr.mxu0 0.0
      %782 = vmatpush1.msra.mxu0 0.0
      %783 = vmatprep.subr.mxu0 0.0
      %784 = vmatpush1.msra.mxu0 0.0
      %785 = vmatprep.subr.mxu0 0.0
      %786 = vmatpush1.msra.mxu0 0.0
      %787 = vmatprep.subr.mxu0 0.0
      %788 = vmatpush1.msra.mxu0 0.0
      %789 = vmatprep.subr.mxu0 0.0
      %790 = vmatpush1.msra.mxu0 0.0
      %791 = vmatprep.subr.mxu0 0.0
      %792 = vmatpush1.msra.mxu0 0.0
      %793 = vmatprep.subr.mxu0 0.0
      %794 = vmatpush1.msra.mxu0 0.0
      %795 = vmatprep.mubr.f32.mxu0 0.0
      %796 = vmatmul.mubr.f32.gmra.mrb[0].mxu0 %v713
      %v797 = vpop.f32.mrb[0].mxu0
      %v798 = vadd.f32 0.0, %v797
      %v799 = vpop.f32.mrb[0].mxu0
      %800 = vdwg.mxu0
      %v801 = vadd.f32 %v712, %v798
      %v802 = vld [vmem:[%s400 + $0x1] sm:$0xff]
      %s803 = scalar_lea.vmem %s4, 512
      %v804 = vld [vmem:[%s803] sm:$0xff]
      %v805 = vld [vmem:[%s803 + $0x8] sm:$0xff]
      %v806 = vld [vmem:[%s803 + $0x10] sm:$0xff]
      %v807 = vld [vmem:[%s803 + $0x18] sm:$0xff]
      %v808 = vld [vmem:[%s803 + $0x20] sm:$0xff]
      %v809 = vld [vmem:[%s803 + $0x28] sm:$0xff]
      %v810 = vld [vmem:[%s803 + $0x30] sm:$0xff]
      %v811 = vld [vmem:[%s803 + $0x38] sm:$0xff]
      %v812 = vld [vmem:[%s803 + $0x40] sm:$0xff]
      %v813 = vld [vmem:[%s803 + $0x48] sm:$0xff]
      %v814 = vld [vmem:[%s803 + $0x50] sm:$0xff]
      %v815 = vld [vmem:[%s803 + $0x58] sm:$0xff]
      %v816 = vld [vmem:[%s803 + $0x60] sm:$0xff]
      %v817 = vld [vmem:[%s803 + $0x68] sm:$0xff]
      %v818 = vld [vmem:[%s803 + $0x70] sm:$0xff]
      %v819 = vld [vmem:[%s803 + $0x78] sm:$0xff]
      %820 = vmatprep.subr.mxu0 0.0
      %821 = vmatpush1.msra.mxu0 %v804
      %822 = vmatprep.subr.mxu0 0.0
      %823 = vmatpush1.msra.mxu0 %v805
      %824 = vmatprep.subr.mxu0 0.0
      %825 = vmatpush1.msra.mxu0 %v806
      %826 = vmatprep.subr.mxu0 0.0
      %827 = vmatpush1.msra.mxu0 %v807
      %828 = vmatprep.subr.mxu0 0.0
      %829 = vmatpush1.msra.mxu0 %v808
      %830 = vmatprep.subr.mxu0 0.0
      %831 = vmatpush1.msra.mxu0 %v809
      %832 = vmatprep.subr.mxu0 0.0
      %833 = vmatpush1.msra.mxu0 %v810
      %834 = vmatprep.subr.mxu0 0.0
      %835 = vmatpush1.msra.mxu0 %v811
      %836 = vmatprep.subr.mxu0 0.0
      %837 = vmatpush1.msra.mxu0 %v812
      %838 = vmatprep.subr.mxu0 0.0
      %839 = vmatpush1.msra.mxu0 %v813
      %840 = vmatprep.subr.mxu0 0.0
      %841 = vmatpush1.msra.mxu0 %v814
      %842 = vmatprep.subr.mxu0 0.0
      %843 = vmatpush1.msra.mxu0 %v815
      %844 = vmatprep.subr.mxu0 0.0
      %845 = vmatpush1.msra.mxu0 %v816
      %846 = vmatprep.subr.mxu0 0.0
      %847 = vmatpush1.msra.mxu0 %v817
      %848 = vmatprep.subr.mxu0 0.0
      %849 = vmatpush1.msra.mxu0 %v818
      %850 = vmatprep.subr.mxu0 0.0
      %851 = vmatpush1.msra.mxu0 %v819
      %852 = vmatprep.subr.mxu0 0.0
      %853 = vmatpush1.msra.mxu0 0.0
      %854 = vmatprep.subr.mxu0 0.0
      %855 = vmatpush1.msra.mxu0 0.0
      %856 = vmatprep.subr.mxu0 0.0
      %857 = vmatpush1.msra.mxu0 0.0
      %858 = vmatprep.subr.mxu0 0.0
      %859 = vmatpush1.msra.mxu0 0.0
      %860 = vmatprep.subr.mxu0 0.0
      %861 = vmatpush1.msra.mxu0 0.0
      %862 = vmatprep.subr.mxu0 0.0
      %863 = vmatpush1.msra.mxu0 0.0
      %864 = vmatprep.subr.mxu0 0.0
      %865 = vmatpush1.msra.mxu0 0.0
      %866 = vmatprep.subr.mxu0 0.0
      %867 = vmatpush1.msra.mxu0 0.0
      %868 = vmatprep.subr.mxu0 0.0
      %869 = vmatpush1.msra.mxu0 0.0
      %870 = vmatprep.subr.mxu0 0.0
      %871 = vmatpush1.msra.mxu0 0.0
      %872 = vmatprep.subr.mxu0 0.0
      %873 = vmatpush1.msra.mxu0 0.0
      %874 = vmatprep.subr.mxu0 0.0
      %875 = vmatpush1.msra.mxu0 0.0
      %876 = vmatprep.subr.mxu0 0.0
      %877 = vmatpush1.msra.mxu0 0.0
      %878 = vmatprep.subr.mxu0 0.0
      %879 = vmatpush1.msra.mxu0 0.0
      %880 = vmatprep.subr.mxu0 0.0
      %881 = vmatpush1.msra.mxu0 0.0
      %882 = vmatprep.subr.mxu0 0.0
      %883 = vmatpush1.msra.mxu0 0.0
      %884 = vmatprep.mubr.f32.mxu0 0.0
      %885 = vmatmul.mubr.f32.gmra.mrb[0].mxu0 %v802
      %v886 = vpop.f32.mrb[0].mxu0
      %v887 = vadd.f32 0.0, %v886
      %v888 = vpop.f32.mrb[0].mxu0
      %889 = vdwg.mxu0
      %v890 = vadd.f32 %v801, %v887
      %v891 = vld [vmem:[%s400 + $0x2] sm:$0xff]
      %s892 = scalar_lea.vmem %s4, 640
      %v893 = vld [vmem:[%s892] sm:$0xff]
      %v894 = vld [vmem:[%s892 + $0x8] sm:$0xff]
      %v895 = vld [vmem:[%s892 + $0x10] sm:$0xff]
      %v896 = vld [vmem:[%s892 + $0x18] sm:$0xff]
      %v897 = vld [vmem:[%s892 + $0x20] sm:$0xff]
      %v898 = vld [vmem:[%s892 + $0x28] sm:$0xff]
      %v899 = vld [vmem:[%s892 + $0x30] sm:$0xff]
      %v900 = vld [vmem:[%s892 + $0x38] sm:$0xff]
      %v901 = vld [vmem:[%s892 + $0x40] sm:$0xff]
      %v902 = vld [vmem:[%s892 + $0x48] sm:$0xff]
      %v903 = vld [vmem:[%s892 + $0x50] sm:$0xff]
      %v904 = vld [vmem:[%s892 + $0x58] sm:$0xff]
      %v905 = vld [vmem:[%s892 + $0x60] sm:$0xff]
      %v906 = vld [vmem:[%s892 + $0x68] sm:$0xff]
      %v907 = vld [vmem:[%s892 + $0x70] sm:$0xff]
      %v908 = vld [vmem:[%s892 + $0x78] sm:$0xff]
      %909 = vmatprep.subr.mxu0 0.0
      %910 = vmatpush1.msra.mxu0 %v893
      %911 = vmatprep.subr.mxu0 0.0
      %912 = vmatpush1.msra.mxu0 %v894
      %913 = vmatprep.subr.mxu0 0.0
      %914 = vmatpush1.msra.mxu0 %v895
      %915 = vmatprep.subr.mxu0 0.0
      %916 = vmatpush1.msra.mxu0 %v896
      %917 = vmatprep.subr.mxu0 0.0
      %918 = vmatpush1.msra.mxu0 %v897
      %919 = vmatprep.subr.mxu0 0.0
      %920 = vmatpush1.msra.mxu0 %v898
      %921 = vmatprep.subr.mxu0 0.0
      %922 = vmatpush1.msra.mxu0 %v899
      %923 = vmatprep.subr.mxu0 0.0
      %924 = vmatpush1.msra.mxu0 %v900
      %925 = vmatprep.subr.mxu0 0.0
      %926 = vmatpush1.msra.mxu0 %v901
      %927 = vmatprep.subr.mxu0 0.0
      %928 = vmatpush1.msra.mxu0 %v902
      %929 = vmatprep.subr.mxu0 0.0
      %930 = vmatpush1.msra.mxu0 %v903
      %931 = vmatprep.subr.mxu0 0.0
      %932 = vmatpush1.msra.mxu0 %v904
      %933 = vmatprep.subr.mxu0 0.0
      %934 = vmatpush1.msra.mxu0 %v905
      %935 = vmatprep.subr.mxu0 0.0
      %936 = vmatpush1.msra.mxu0 %v906
      %937 = vmatprep.subr.mxu0 0.0
      %938 = vmatpush1.msra.mxu0 %v907
      %939 = vmatprep.subr.mxu0 0.0
      %940 = vmatpush1.msra.mxu0 %v908
      %941 = vmatprep.subr.mxu0 0.0
      %942 = vmatpush1.msra.mxu0 0.0
      %943 = vmatprep.subr.mxu0 0.0
      %944 = vmatpush1.msra.mxu0 0.0
      %945 = vmatprep.subr.mxu0 0.0
      %946 = vmatpush1.msra.mxu0 0.0
      %947 = vmatprep.subr.mxu0 0.0
      %948 = vmatpush1.msra.mxu0 0.0
      %949 = vmatprep.subr.mxu0 0.0
      %950 = vmatpush1.msra.mxu0 0.0
      %951 = vmatprep.subr.mxu0 0.0
      %952 = vmatpush1.msra.mxu0 0.0
      %953 = vmatprep.subr.mxu0 0.0
      %954 = vmatpush1.msra.mxu0 0.0
      %955 = vmatprep.subr.mxu0 0.0
      %956 = vmatpush1.msra.mxu0 0.0
      %957 = vmatprep.subr.mxu0 0.0
      %958 = vmatpush1.msra.mxu0 0.0
      %959 = vmatprep.subr.mxu0 0.0
      %960 = vmatpush1.msra.mxu0 0.0
      %961 = vmatprep.subr.mxu0 0.0
      %962 = vmatpush1.msra.mxu0 0.0
      %963 = vmatprep.subr.mxu0 0.0
      %964 = vmatpush1.msra.mxu0 0.0
      %965 = vmatprep.subr.mxu0 0.0
      %966 = vmatpush1.msra.mxu0 0.0
      %967 = vmatprep.subr.mxu0 0.0
      %968 = vmatpush1.msra.mxu0 0.0
      %969 = vmatprep.subr.mxu0 0.0
      %970 = vmatpush1.msra.mxu0 0.0
      %971 = vmatprep.subr.mxu0 0.0
      %972 = vmatpush1.msra.mxu0 0.0
      %973 = vmatprep.mubr.f32.mxu0 0.0
      %974 = vmatmul.mubr.f32.gmra.mrb[0].mxu0 %v891
      %v975 = vpop.f32.mrb[0].mxu0
      %v976 = vadd.f32 0.0, %v975
      %v977 = vpop.f32.mrb[0].mxu0
      %978 = vdwg.mxu0
      %v979 = vadd.f32 %v890, %v976
      %v980 = vld [vmem:[%s413] sm:$0xff]
      %s981 = scalar_lea.vmem %s4, 768
      %v982 = vld [vmem:[%s981] sm:$0xff]
      %v983 = vld [vmem:[%s981 + $0x8] sm:$0xff]
      %v984 = vld [vmem:[%s981 + $0x10] sm:$0xff]
      %v985 = vld [vmem:[%s981 + $0x18] sm:$0xff]
      %v986 = vld [vmem:[%s981 + $0x20] sm:$0xff]
      %v987 = vld [vmem:[%s981 + $0x28] sm:$0xff]
      %v988 = vld [vmem:[%s981 + $0x30] sm:$0xff]
      %v989 = vld [vmem:[%s981 + $0x38] sm:$0xff]
      %v990 = vld [vmem:[%s981 + $0x40] sm:$0xff]
      %v991 = vld [vmem:[%s981 + $0x48] sm:$0xff]
      %v992 = vld [vmem:[%s981 + $0x50] sm:$0xff]
      %v993 = vld [vmem:[%s981 + $0x58] sm:$0xff]
      %v994 = vld [vmem:[%s981 + $0x60] sm:$0xff]
      %v995 = vld [vmem:[%s981 + $0x68] sm:$0xff]
      %v996 = vld [vmem:[%s981 + $0x70] sm:$0xff]
      %v997 = vld [vmem:[%s981 + $0x78] sm:$0xff]
      %998 = vmatprep.subr.mxu0 0.0
      %999 = vmatpush1.msra.mxu0 %v982
      %1000 = vmatprep.subr.mxu0 0.0
      %1001 = vmatpush1.msra.mxu0 %v983
      %1002 = vmatprep.subr.mxu0 0.0
      %1003 = vmatpush1.msra.mxu0 %v984
      %1004 = vmatprep.subr.mxu0 0.0
      %1005 = vmatpush1.msra.mxu0 %v985
      %1006 = vmatprep.subr.mxu0 0.0
      %1007 = vmatpush1.msra.mxu0 %v986
      %1008 = vmatprep.subr.mxu0 0.0
      %1009 = vmatpush1.msra.mxu0 %v987
      %1010 = vmatprep.subr.mxu0 0.0
      %1011 = vmatpush1.msra.mxu0 %v988
      %1012 = vmatprep.subr.mxu0 0.0
      %1013 = vmatpush1.msra.mxu0 %v989
      %1014 = vmatprep.subr.mxu0 0.0
      %1015 = vmatpush1.msra.mxu0 %v990
      %1016 = vmatprep.subr.mxu0 0.0
      %1017 = vmatpush1.msra.mxu0 %v991
      %1018 = vmatprep.subr.mxu0 0.0
      %1019 = vmatpush1.msra.mxu0 %v992
      %1020 = vmatprep.subr.mxu0 0.0
      %1021 = vmatpush1.msra.mxu0 %v993
      %1022 = vmatprep.subr.mxu0 0.0
      %1023 = vmatpush1.msra.mxu0 %v994
      %1024 = vmatprep.subr.mxu0 0.0
      %1025 = vmatpush1.msra.mxu0 %v995
      %1026 = vmatprep.subr.mxu0 0.0
      %1027 = vmatpush1.msra.mxu0 %v996
      %1028 = vmatprep.subr.mxu0 0.0
      %1029 = vmatpush1.msra.mxu0 %v997
      %1030 = vmatprep.subr.mxu0 0.0
      %1031 = vmatpush1.msra.mxu0 0.0
      %1032 = vmatprep.subr.mxu0 0.0
      %1033 = vmatpush1.msra.mxu0 0.0
      %1034 = vmatprep.subr.mxu0 0.0
      %1035 = vmatpush1.msra.mxu0 0.0
      %1036 = vmatprep.subr.mxu0 0.0
      %1037 = vmatpush1.msra.mxu0 0.0
      %1038 = vmatprep.subr.mxu0 0.0
      %1039 = vmatpush1.msra.mxu0 0.0
      %1040 = vmatprep.subr.mxu0 0.0
      %1041 = vmatpush1.msra.mxu0 0.0
      %1042 = vmatprep.subr.mxu0 0.0
      %1043 = vmatpush1.msra.mxu0 0.0
      %1044 = vmatprep.subr.mxu0 0.0
      %1045 = vmatpush1.msra.mxu0 0.0
      %1046 = vmatprep.subr.mxu0 0.0
      %1047 = vmatpush1.msra.mxu0 0.0
      %1048 = vmatprep.subr.mxu0 0.0
      %1049 = vmatpush1.msra.mxu0 0.0
      %1050 = vmatprep.subr.mxu0 0.0
      %1051 = vmatpush1.msra.mxu0 0.0
      %1052 = vmatprep.subr.mxu0 0.0
      %1053 = vmatpush1.msra.mxu0 0.0
      %1054 = vmatprep.subr.mxu0 0.0
      %1055 = vmatpush1.msra.mxu0 0.0
      %1056 = vmatprep.subr.mxu0 0.0
      %1057 = vmatpush1.msra.mxu0 0.0
      %1058 = vmatprep.subr.mxu0 0.0
      %1059 = vmatpush1.msra.mxu0 0.0
      %1060 = vmatprep.subr.mxu0 0.0
      %1061 = vmatpush1.msra.mxu0 0.0
      %1062 = vmatprep.mubr.f32.mxu0 0.0
      %1063 = vmatmul.mubr.f32.gmra.mrb[0].mxu0 %v980
      %v1064 = vpop.f32.mrb[0].mxu0
      %v1065 = vadd.f32 0.0, %v1064
      %v1066 = vpop.f32.mrb[0].mxu0
      %1067 = vdwg.mxu0
      %v1068 = vadd.f32 %v979, %v1065
      %v1069 = vld [vmem:[%s413 + $0x1] sm:$0xff]
      %s1070 = scalar_lea.vmem %s4, 896
      %v1071 = vld [vmem:[%s1070] sm:$0xff]
      %v1072 = vld [vmem:[%s1070 + $0x8] sm:$0xff]
      %v1073 = vld [vmem:[%s1070 + $0x10] sm:$0xff]
      %v1074 = vld [vmem:[%s1070 + $0x18] sm:$0xff]
      %v1075 = vld [vmem:[%s1070 + $0x20] sm:$0xff]
      %v1076 = vld [vmem:[%s1070 + $0x28] sm:$0xff]
      %v1077 = vld [vmem:[%s1070 + $0x30] sm:$0xff]
      %v1078 = vld [vmem:[%s1070 + $0x38] sm:$0xff]
      %v1079 = vld [vmem:[%s1070 + $0x40] sm:$0xff]
      %v1080 = vld [vmem:[%s1070 + $0x48] sm:$0xff]
      %v1081 = vld [vmem:[%s1070 + $0x50] sm:$0xff]
      %v1082 = vld [vmem:[%s1070 + $0x58] sm:$0xff]
      %v1083 = vld [vmem:[%s1070 + $0x60] sm:$0xff]
      %v1084 = vld [vmem:[%s1070 + $0x68] sm:$0xff]
      %v1085 = vld [vmem:[%s1070 + $0x70] sm:$0xff]
      %v1086 = vld [vmem:[%s1070 + $0x78] sm:$0xff]
      %1087 = vmatprep.subr.mxu0 0.0
      %1088 = vmatpush1.msra.mxu0 %v1071
      %1089 = vmatprep.subr.mxu0 0.0
      %1090 = vmatpush1.msra.mxu0 %v1072
      %1091 = vmatprep.subr.mxu0 0.0
      %1092 = vmatpush1.msra.mxu0 %v1073
      %1093 = vmatprep.subr.mxu0 0.0
      %1094 = vmatpush1.msra.mxu0 %v1074
      %1095 = vmatprep.subr.mxu0 0.0
      %1096 = vmatpush1.msra.mxu0 %v1075
      %1097 = vmatprep.subr.mxu0 0.0
      %1098 = vmatpush1.msra.mxu0 %v1076
      %1099 = vmatprep.subr.mxu0 0.0
      %1100 = vmatpush1.msra.mxu0 %v1077
      %1101 = vmatprep.subr.mxu0 0.0
      %1102 = vmatpush1.msra.mxu0 %v1078
      %1103 = vmatprep.subr.mxu0 0.0
      %1104 = vmatpush1.msra.mxu0 %v1079
      %1105 = vmatprep.subr.mxu0 0.0
      %1106 = vmatpush1.msra.mxu0 %v1080
      %1107 = vmatprep.subr.mxu0 0.0
      %1108 = vmatpush1.msra.mxu0 %v1081
      %1109 = vmatprep.subr.mxu0 0.0
      %1110 = vmatpush1.msra.mxu0 %v1082
      %1111 = vmatprep.subr.mxu0 0.0
      %1112 = vmatpush1.msra.mxu0 %v1083
      %1113 = vmatprep.subr.mxu0 0.0
      %1114 = vmatpush1.msra.mxu0 %v1084
      %1115 = vmatprep.subr.mxu0 0.0
      %1116 = vmatpush1.msra.mxu0 %v1085
      %1117 = vmatprep.subr.mxu0 0.0
      %1118 = vmatpush1.msra.mxu0 %v1086
      %1119 = vmatprep.subr.mxu0 0.0
      %1120 = vmatpush1.msra.mxu0 0.0
      %1121 = vmatprep.subr.mxu0 0.0
      %1122 = vmatpush1.msra.mxu0 0.0
      %1123 = vmatprep.subr.mxu0 0.0
      %1124 = vmatpush1.msra.mxu0 0.0
      %1125 = vmatprep.subr.mxu0 0.0
      %1126 = vmatpush1.msra.mxu0 0.0
      %1127 = vmatprep.subr.mxu0 0.0
      %1128 = vmatpush1.msra.mxu0 0.0
      %1129 = vmatprep.subr.mxu0 0.0
      %1130 = vmatpush1.msra.mxu0 0.0
      %1131 = vmatprep.subr.mxu0 0.0
      %1132 = vmatpush1.msra.mxu0 0.0
      %1133 = vmatprep.subr.mxu0 0.0
      %1134 = vmatpush1.msra.mxu0 0.0
      %1135 = vmatprep.subr.mxu0 0.0
      %1136 = vmatpush1.msra.mxu0 0.0
      %1137 = vmatprep.subr.mxu0 0.0
      %1138 = vmatpush1.msra.mxu0 0.0
      %1139 = vmatprep.subr.mxu0 0.0
      %1140 = vmatpush1.msra.mxu0 0.0
      %1141 = vmatprep.subr.mxu0 0.0
      %1142 = vmatpush1.msra.mxu0 0.0
      %1143 = vmatprep.subr.mxu0 0.0
      %1144 = vmatpush1.msra.mxu0 0.0
      %1145 = vmatprep.subr.mxu0 0.0
      %1146 = vmatpush1.msra.mxu0 0.0
      %1147 = vmatprep.subr.mxu0 0.0
      %1148 = vmatpush1.msra.mxu0 0.0
      %1149 = vmatprep.subr.mxu0 0.0
      %1150 = vmatpush1.msra.mxu0 0.0
      %1151 = vmatprep.mubr.f32.mxu0 0.0
      %1152 = vmatmul.mubr.f32.gmra.mrb[0].mxu0 %v1069
      %v1153 = vpop.f32.mrb[0].mxu0
      %v1154 = vadd.f32 0.0, %v1153
      %v1155 = vpop.f32.mrb[0].mxu0
      %1156 = vdwg.mxu0
      %v1157 = vadd.f32 %v1068, %v1154
      %v1158 = vld [vmem:[%s413 + $0x2] sm:$0xff]
      %s1159 = scalar_lea.vmem %s4, 1024
      %v1160 = vld [vmem:[%s1159] sm:$0xff]
      %v1161 = vld [vmem:[%s1159 + $0x8] sm:$0xff]
      %v1162 = vld [vmem:[%s1159 + $0x10] sm:$0xff]
      %v1163 = vld [vmem:[%s1159 + $0x18] sm:$0xff]
      %v1164 = vld [vmem:[%s1159 + $0x20] sm:$0xff]
      %v1165 = vld [vmem:[%s1159 + $0x28] sm:$0xff]
      %v1166 = vld [vmem:[%s1159 + $0x30] sm:$0xff]
      %v1167 = vld [vmem:[%s1159 + $0x38] sm:$0xff]
      %v1168 = vld [vmem:[%s1159 + $0x40] sm:$0xff]
      %v1169 = vld [vmem:[%s1159 + $0x48] sm:$0xff]
      %v1170 = vld [vmem:[%s1159 + $0x50] sm:$0xff]
      %v1171 = vld [vmem:[%s1159 + $0x58] sm:$0xff]
      %v1172 = vld [vmem:[%s1159 + $0x60] sm:$0xff]
      %v1173 = vld [vmem:[%s1159 + $0x68] sm:$0xff]
      %v1174 = vld [vmem:[%s1159 + $0x70] sm:$0xff]
      %v1175 = vld [vmem:[%s1159 + $0x78] sm:$0xff]
      %1176 = vmatprep.subr.mxu0 0.0
      %1177 = vmatpush1.msra.mxu0 %v1160
      %1178 = vmatprep.subr.mxu0 0.0
      %1179 = vmatpush1.msra.mxu0 %v1161
      %1180 = vmatprep.subr.mxu0 0.0
      %1181 = vmatpush1.msra.mxu0 %v1162
      %1182 = vmatprep.subr.mxu0 0.0
      %1183 = vmatpush1.msra.mxu0 %v1163
      %1184 = vmatprep.subr.mxu0 0.0
      %1185 = vmatpush1.msra.mxu0 %v1164
      %1186 = vmatprep.subr.mxu0 0.0
      %1187 = vmatpush1.msra.mxu0 %v1165
      %1188 = vmatprep.subr.mxu0 0.0
      %1189 = vmatpush1.msra.mxu0 %v1166
      %1190 = vmatprep.subr.mxu0 0.0
      %1191 = vmatpush1.msra.mxu0 %v1167
      %1192 = vmatprep.subr.mxu0 0.0
      %1193 = vmatpush1.msra.mxu0 %v1168
      %1194 = vmatprep.subr.mxu0 0.0
      %1195 = vmatpush1.msra.mxu0 %v1169
      %1196 = vmatprep.subr.mxu0 0.0
      %1197 = vmatpush1.msra.mxu0 %v1170
      %1198 = vmatprep.subr.mxu0 0.0
      %1199 = vmatpush1.msra.mxu0 %v1171
      %1200 = vmatprep.subr.mxu0 0.0
      %1201 = vmatpush1.msra.mxu0 %v1172
      %1202 = vmatprep.subr.mxu0 0.0
      %1203 = vmatpush1.msra.mxu0 %v1173
      %1204 = vmatprep.subr.mxu0 0.0
      %1205 = vmatpush1.msra.mxu0 %v1174
      %1206 = vmatprep.subr.mxu0 0.0
      %1207 = vmatpush1.msra.mxu0 %v1175
      %1208 = vmatprep.subr.mxu0 0.0
      %1209 = vmatpush1.msra.mxu0 0.0
      %1210 = vmatprep.subr.mxu0 0.0
      %1211 = vmatpush1.msra.mxu0 0.0
      %1212 = vmatprep.subr.mxu0 0.0
      %1213 = vmatpush1.msra.mxu0 0.0
      %1214 = vmatprep.subr.mxu0 0.0
      %1215 = vmatpush1.msra.mxu0 0.0
      %1216 = vmatprep.subr.mxu0 0.0
      %1217 = vmatpush1.msra.mxu0 0.0
      %1218 = vmatprep.subr.mxu0 0.0
      %1219 = vmatpush1.msra.mxu0 0.0
      %1220 = vmatprep.subr.mxu0 0.0
      %1221 = vmatpush1.msra.mxu0 0.0
      %1222 = vmatprep.subr.mxu0 0.0
      %1223 = vmatpush1.msra.mxu0 0.0
      %1224 = vmatprep.subr.mxu0 0.0
      %1225 = vmatpush1.msra.mxu0 0.0
      %1226 = vmatprep.subr.mxu0 0.0
      %1227 = vmatpush1.msra.mxu0 0.0
      %1228 = vmatprep.subr.mxu0 0.0
      %1229 = vmatpush1.msra.mxu0 0.0
      %1230 = vmatprep.subr.mxu0 0.0
      %1231 = vmatpush1.msra.mxu0 0.0
      %1232 = vmatprep.subr.mxu0 0.0
      %1233 = vmatpush1.msra.mxu0 0.0
      %1234 = vmatprep.subr.mxu0 0.0
      %1235 = vmatpush1.msra.mxu0 0.0
      %1236 = vmatprep.subr.mxu0 0.0
      %1237 = vmatpush1.msra.mxu0 0.0
      %1238 = vmatprep.subr.mxu0 0.0
      %1239 = vmatpush1.msra.mxu0 0.0
      %1240 = vmatprep.mubr.f32.mxu0 0.0
      %1241 = vmatmul.mubr.f32.gmra.mrb[0].mxu0 %v1158
      %v1242 = vpop.f32.mrb[0].mxu0
      %v1243 = vadd.f32 0.0, %v1242
      %v1244 = vpop.f32.mrb[0].mxu0
      %1245 = vdwg.mxu0
      %v1246 = vadd.f32 %v1157, %v1243
      %v1247 = vld [vmem:[%s5] sm:$0x1]
      %v1249 = vlaneseq
      %v1250 = vshrl.u32 %v1249, 7
      %v1251 = vsub.s32 0, %v1250
      %v1252 = vrot.slane %v1247, %v1251
      %v1254 = vadd.f32 %v1246, %v1252
      %v1255 = vmax.f32 %v1254, 0.0
      %1256 = vmatprep.subr.mxu0 0.0
      %1257 = vmatpush1.msra.mxu0 %v468
      %1258 = vmatprep.subr.mxu0 0.0
      %1259 = vmatpush1.msra.mxu0 %v469
      %1260 = vmatprep.subr.mxu0 0.0
      %1261 = vmatpush1.msra.mxu0 %v470
      %1262 = vmatprep.subr.mxu0 0.0
      %1263 = vmatpush1.msra.mxu0 %v471
      %1264 = vmatprep.subr.mxu0 0.0
      %1265 = vmatpush1.msra.mxu0 %v472
      %1266 = vmatprep.subr.mxu0 0.0
      %1267 = vmatpush1.msra.mxu0 %v473
      %1268 = vmatprep.subr.mxu0 0.0
      %1269 = vmatpush1.msra.mxu0 %v474
      %1270 = vmatprep.subr.mxu0 0.0
      %1271 = vmatpush1.msra.mxu0 %v475
      %1272 = vmatprep.subr.mxu0 0.0
      %1273 = vmatpush1.msra.mxu0 %v476
      %1274 = vmatprep.subr.mxu0 0.0
      %1275 = vmatpush1.msra.mxu0 %v477
      %1276 = vmatprep.subr.mxu0 0.0
      %1277 = vmatpush1.msra.mxu0 %v478
      %1278 = vmatprep.subr.mxu0 0.0
      %1279 = vmatpush1.msra.mxu0 %v479
      %1280 = vmatprep.subr.mxu0 0.0
      %1281 = vmatpush1.msra.mxu0 %v480
      %1282 = vmatprep.subr.mxu0 0.0
      %1283 = vmatpush1.msra.mxu0 %v481
      %1284 = vmatprep.subr.mxu0 0.0
      %1285 = vmatpush1.msra.mxu0 %v482
      %1286 = vmatprep.subr.mxu0 0.0
      %1287 = vmatpush1.msra.mxu0 %v483
      %1288 = vmatprep.subr.mxu0 0.0
      %1289 = vmatpush1.msra.mxu0 0.0
      %1290 = vmatprep.subr.mxu0 0.0
      %1291 = vmatpush1.msra.mxu0 0.0
      %1292 = vmatprep.subr.mxu0 0.0
      %1293 = vmatpush1.msra.mxu0 0.0
      %1294 = vmatprep.subr.mxu0 0.0
      %1295 = vmatpush1.msra.mxu0 0.0
      %1296 = vmatprep.subr.mxu0 0.0
      %1297 = vmatpush1.msra.mxu0 0.0
      %1298 = vmatprep.subr.mxu0 0.0
      %1299 = vmatpush1.msra.mxu0 0.0
      %1300 = vmatprep.subr.mxu0 0.0
      %1301 = vmatpush1.msra.mxu0 0.0
      %1302 = vmatprep.subr.mxu0 0.0
      %1303 = vmatpush1.msra.mxu0 0.0
      %1304 = vmatprep.subr.mxu0 0.0
      %1305 = vmatpush1.msra.mxu0 0.0
      %1306 = vmatprep.subr.mxu0 0.0
      %1307 = vmatpush1.msra.mxu0 0.0
      %1308 = vmatprep.subr.mxu0 0.0
      %1309 = vmatpush1.msra.mxu0 0.0
      %1310 = vmatprep.subr.mxu0 0.0
      %1311 = vmatpush1.msra.mxu0 0.0
      %1312 = vmatprep.subr.mxu0 0.0
      %1313 = vmatpush1.msra.mxu0 0.0
      %1314 = vmatprep.subr.mxu0 0.0
      %1315 = vmatpush1.msra.mxu0 0.0
      %1316 = vmatprep.subr.mxu0 0.0
      %1317 = vmatpush1.msra.mxu0 0.0
      %1318 = vmatprep.subr.mxu0 0.0
      %1319 = vmatpush1.msra.mxu0 0.0
      %1320 = vmatprep.mubr.f32.mxu0 0.0
      %1321 = vmatmul.mubr.f32.gmra.mrb[0].mxu0 %v802
      %v1322 = vpop.f32.mrb[0].mxu0
      %v1323 = vadd.f32 0.0, %v1322
      %v1324 = vpop.f32.mrb[0].mxu0
      %1325 = vdwg.mxu0
      %1326 = vmatprep.subr.mxu0 0.0
      %1327 = vmatpush1.msra.mxu0 %v450
      %1328 = vmatprep.subr.mxu0 0.0
      %1329 = vmatpush1.msra.mxu0 %v451
      %1330 = vmatprep.subr.mxu0 0.0
      %1331 = vmatpush1.msra.mxu0 %v452
      %1332 = vmatprep.subr.mxu0 0.0
      %1333 = vmatpush1.msra.mxu0 %v453
      %1334 = vmatprep.subr.mxu0 0.0
      %1335 = vmatpush1.msra.mxu0 %v454
      %1336 = vmatprep.subr.mxu0 0.0
      %1337 = vmatpush1.msra.mxu0 %v455
      %1338 = vmatprep.subr.mxu0 0.0
      %1339 = vmatpush1.msra.mxu0 %v456
      %1340 = vmatprep.subr.mxu0 0.0
      %1341 = vmatpush1.msra.mxu0 %v457
      %1342 = vmatprep.subr.mxu0 0.0
      %1343 = vmatpush1.msra.mxu0 %v458
      %1344 = vmatprep.subr.mxu0 0.0
      %1345 = vmatpush1.msra.mxu0 %v459
      %1346 = vmatprep.subr.mxu0 0.0
      %1347 = vmatpush1.msra.mxu0 %v460
      %1348 = vmatprep.subr.mxu0 0.0
      %1349 = vmatpush1.msra.mxu0 %v461
      %1350 = vmatprep.subr.mxu0 0.0
      %1351 = vmatpush1.msra.mxu0 %v462
      %1352 = vmatprep.subr.mxu0 0.0
      %1353 = vmatpush1.msra.mxu0 %v463
      %1354 = vmatprep.subr.mxu0 0.0
      %1355 = vmatpush1.msra.mxu0 %v464
      %1356 = vmatprep.subr.mxu0 0.0
      %1357 = vmatpush1.msra.mxu0 %v465
      %1358 = vmatprep.subr.mxu0 0.0
      %1359 = vmatpush1.msra.mxu0 0.0
      %1360 = vmatprep.subr.mxu0 0.0
      %1361 = vmatpush1.msra.mxu0 0.0
      %1362 = vmatprep.subr.mxu0 0.0
      %1363 = vmatpush1.msra.mxu0 0.0
      %1364 = vmatprep.subr.mxu0 0.0
      %1365 = vmatpush1.msra.mxu0 0.0
      %1366 = vmatprep.subr.mxu0 0.0
      %1367 = vmatpush1.msra.mxu0 0.0
      %1368 = vmatprep.subr.mxu0 0.0
      %1369 = vmatpush1.msra.mxu0 0.0
      %1370 = vmatprep.subr.mxu0 0.0
      %1371 = vmatpush1.msra.mxu0 0.0
      %1372 = vmatprep.subr.mxu0 0.0
      %1373 = vmatpush1.msra.mxu0 0.0
      %1374 = vmatprep.subr.mxu0 0.0
      %1375 = vmatpush1.msra.mxu0 0.0
      %1376 = vmatprep.subr.mxu0 0.0
      %1377 = vmatpush1.msra.mxu0 0.0
      %1378 = vmatprep.subr.mxu0 0.0
      %1379 = vmatpush1.msra.mxu0 0.0
      %1380 = vmatprep.subr.mxu0 0.0
      %1381 = vmatpush1.msra.mxu0 0.0
      %1382 = vmatprep.subr.mxu0 0.0
      %1383 = vmatpush1.msra.mxu0 0.0
      %1384 = vmatprep.subr.mxu0 0.0
      %1385 = vmatpush1.msra.mxu0 0.0
      %1386 = vmatprep.subr.mxu0 0.0
      %1387 = vmatpush1.msra.mxu0 0.0
      %1388 = vmatprep.subr.mxu0 0.0
      %1389 = vmatpush1.msra.mxu0 0.0
      %1390 = vmatprep.mubr.f32.mxu0 0.0
      %1391 = vmatmul.mubr.f32.gmra.mrb[0].mxu0 %v713
      %v1392 = vpop.f32.mrb[0].mxu0
      %v1393 = vadd.f32 %v1323, %v1392
      %v1394 = vpop.f32.mrb[0].mxu0
      %1395 = vdwg.mxu0
      %1396 = vmatprep.subr.mxu0 0.0
      %1397 = vmatpush1.msra.mxu0 %v626
      %1398 = vmatprep.subr.mxu0 0.0
      %1399 = vmatpush1.msra.mxu0 %v627
      %1400 = vmatprep.subr.mxu0 0.0
      %1401 = vmatpush1.msra.mxu0 %v628
      %1402 = vmatprep.subr.mxu0 0.0
      %1403 = vmatpush1.msra.mxu0 %v629
      %1404 = vmatprep.subr.mxu0 0.0
      %1405 = vmatpush1.msra.mxu0 %v630
      %1406 = vmatprep.subr.mxu0 0.0
      %1407 = vmatpush1.msra.mxu0 %v631
      %1408 = vmatprep.subr.mxu0 0.0
      %1409 = vmatpush1.msra.mxu0 %v632
      %1410 = vmatprep.subr.mxu0 0.0
      %1411 = vmatpush1.msra.mxu0 %v633
      %1412 = vmatprep.subr.mxu0 0.0
      %1413 = vmatpush1.msra.mxu0 %v634
      %1414 = vmatprep.subr.mxu0 0.0
      %1415 = vmatpush1.msra.mxu0 %v635
      %1416 = vmatprep.subr.mxu0 0.0
      %1417 = vmatpush1.msra.mxu0 %v636
      %1418 = vmatprep.subr.mxu0 0.0
      %1419 = vmatpush1.msra.mxu0 %v637
      %1420 = vmatprep.subr.mxu0 0.0
      %1421 = vmatpush1.msra.mxu0 %v638
      %1422 = vmatprep.subr.mxu0 0.0
      %1423 = vmatpush1.msra.mxu0 %v639
      %1424 = vmatprep.subr.mxu0 0.0
      %1425 = vmatpush1.msra.mxu0 %v640
      %1426 = vmatprep.subr.mxu0 0.0
      %1427 = vmatpush1.msra.mxu0 %v641
      %1428 = vmatprep.subr.mxu0 0.0
      %1429 = vmatpush1.msra.mxu0 0.0
      %1430 = vmatprep.subr.mxu0 0.0
      %1431 = vmatpush1.msra.mxu0 0.0
      %1432 = vmatprep.subr.mxu0 0.0
      %1433 = vmatpush1.msra.mxu0 0.0
      %1434 = vmatprep.subr.mxu0 0.0
      %1435 = vmatpush1.msra.mxu0 0.0
      %1436 = vmatprep.subr.mxu0 0.0
      %1437 = vmatpush1.msra.mxu0 0.0
      %1438 = vmatprep.subr.mxu0 0.0
      %1439 = vmatpush1.msra.mxu0 0.0
      %1440 = vmatprep.subr.mxu0 0.0
      %1441 = vmatpush1.msra.mxu0 0.0
      %1442 = vmatprep.subr.mxu0 0.0
      %1443 = vmatpush1.msra.mxu0 0.0
      %1444 = vmatprep.subr.mxu0 0.0
      %1445 = vmatpush1.msra.mxu0 0.0
      %1446 = vmatprep.subr.mxu0 0.0
      %1447 = vmatpush1.msra.mxu0 0.0
      %1448 = vmatprep.subr.mxu0 0.0
      %1449 = vmatpush1.msra.mxu0 0.0
      %1450 = vmatprep.subr.mxu0 0.0
      %1451 = vmatpush1.msra.mxu0 0.0
      %1452 = vmatprep.subr.mxu0 0.0
      %1453 = vmatpush1.msra.mxu0 0.0
      %1454 = vmatprep.subr.mxu0 0.0
      %1455 = vmatpush1.msra.mxu0 0.0
      %1456 = vmatprep.subr.mxu0 0.0
      %1457 = vmatpush1.msra.mxu0 0.0
      %1458 = vmatprep.subr.mxu0 0.0
      %1459 = vmatpush1.msra.mxu0 0.0
      %1460 = vmatprep.mubr.f32.mxu0 0.0
      %1461 = vmatmul.mubr.f32.gmra.mrb[0].mxu0 %v891
      %v1462 = vpop.f32.mrb[0].mxu0
      %v1463 = vadd.f32 0.0, %v1462
      %v1464 = vpop.f32.mrb[0].mxu0
      %1465 = vdwg.mxu0
      %v1466 = vadd.f32 %v1393, %v1463
      %1467 = vmatprep.subr.mxu0 0.0
      %1468 = vmatpush1.msra.mxu0 %v715
      %1469 = vmatprep.subr.mxu0 0.0
      %1470 = vmatpush1.msra.mxu0 %v716
      %1471 = vmatprep.subr.mxu0 0.0
      %1472 = vmatpush1.msra.mxu0 %v717
      %1473 = vmatprep.subr.mxu0 0.0
      %1474 = vmatpush1.msra.mxu0 %v718
      %1475 = vmatprep.subr.mxu0 0.0
      %1476 = vmatpush1.msra.mxu0 %v719
      %1477 = vmatprep.subr.mxu0 0.0
      %1478 = vmatpush1.msra.mxu0 %v720
      %1479 = vmatprep.subr.mxu0 0.0
      %1480 = vmatpush1.msra.mxu0 %v721
      %1481 = vmatprep.subr.mxu0 0.0
      %1482 = vmatpush1.msra.mxu0 %v722
      %1483 = vmatprep.subr.mxu0 0.0
      %1484 = vmatpush1.msra.mxu0 %v723
      %1485 = vmatprep.subr.mxu0 0.0
      %1486 = vmatpush1.msra.mxu0 %v724
      %1487 = vmatprep.subr.mxu0 0.0
      %1488 = vmatpush1.msra.mxu0 %v725
      %1489 = vmatprep.subr.mxu0 0.0
      %1490 = vmatpush1.msra.mxu0 %v726
      %1491 = vmatprep.subr.mxu0 0.0
      %1492 = vmatpush1.msra.mxu0 %v727
      %1493 = vmatprep.subr.mxu0 0.0
      %1494 = vmatpush1.msra.mxu0 %v728
      %1495 = vmatprep.subr.mxu0 0.0
      %1496 = vmatpush1.msra.mxu0 %v729
      %1497 = vmatprep.subr.mxu0 0.0
      %1498 = vmatpush1.msra.mxu0 %v730
      %1499 = vmatprep.subr.mxu0 0.0
      %1500 = vmatpush1.msra.mxu0 0.0
      %1501 = vmatprep.subr.mxu0 0.0
      %1502 = vmatpush1.msra.mxu0 0.0
      %1503 = vmatprep.subr.mxu0 0.0
      %1504 = vmatpush1.msra.mxu0 0.0
      %1505 = vmatprep.subr.mxu0 0.0
      %1506 = vmatpush1.msra.mxu0 0.0
      %1507 = vmatprep.subr.mxu0 0.0
      %1508 = vmatpush1.msra.mxu0 0.0
      %1509 = vmatprep.subr.mxu0 0.0
      %1510 = vmatpush1.msra.mxu0 0.0
      %1511 = vmatprep.subr.mxu0 0.0
      %1512 = vmatpush1.msra.mxu0 0.0
      %1513 = vmatprep.subr.mxu0 0.0
      %1514 = vmatpush1.msra.mxu0 0.0
      %1515 = vmatprep.subr.mxu0 0.0
      %1516 = vmatpush1.msra.mxu0 0.0
      %1517 = vmatprep.subr.mxu0 0.0
      %1518 = vmatpush1.msra.mxu0 0.0
      %1519 = vmatprep.subr.mxu0 0.0
      %1520 = vmatpush1.msra.mxu0 0.0
      %1521 = vmatprep.subr.mxu0 0.0
      %1522 = vmatpush1.msra.mxu0 0.0
      %1523 = vmatprep.subr.mxu0 0.0
      %1524 = vmatpush1.msra.mxu0 0.0
      %1525 = vmatprep.subr.mxu0 0.0
      %1526 = vmatpush1.msra.mxu0 0.0
      %1527 = vmatprep.subr.mxu0 0.0
      %1528 = vmatpush1.msra.mxu0 0.0
      %1529 = vmatprep.subr.mxu0 0.0
      %1530 = vmatpush1.msra.mxu0 0.0
      %1531 = vmatprep.mubr.f32.mxu0 0.0
      %1532 = vmatmul.mubr.f32.gmra.mrb[0].mxu0 %v980
      %v1533 = vpop.f32.mrb[0].mxu0
      %v1534 = vadd.f32 0.0, %v1533
      %v1535 = vpop.f32.mrb[0].mxu0
      %1536 = vdwg.mxu0
      %v1537 = vadd.f32 %v1466, %v1534
      %1538 = vmatprep.subr.mxu0 0.0
      %1539 = vmatpush1.msra.mxu0 %v804
      %1540 = vmatprep.subr.mxu0 0.0
      %1541 = vmatpush1.msra.mxu0 %v805
      %1542 = vmatprep.subr.mxu0 0.0
      %1543 = vmatpush1.msra.mxu0 %v806
      %1544 = vmatprep.subr.mxu0 0.0
      %1545 = vmatpush1.msra.mxu0 %v807
      %1546 = vmatprep.subr.mxu0 0.0
      %1547 = vmatpush1.msra.mxu0 %v808
      %1548 = vmatprep.subr.mxu0 0.0
      %1549 = vmatpush1.msra.mxu0 %v809
      %1550 = vmatprep.subr.mxu0 0.0
      %1551 = vmatpush1.msra.mxu0 %v810
      %1552 = vmatprep.subr.mxu0 0.0
      %1553 = vmatpush1.msra.mxu0 %v811
      %1554 = vmatprep.subr.mxu0 0.0
      %1555 = vmatpush1.msra.mxu0 %v812
      %1556 = vmatprep.subr.mxu0 0.0
      %1557 = vmatpush1.msra.mxu0 %v813
      %1558 = vmatprep.subr.mxu0 0.0
      %1559 = vmatpush1.msra.mxu0 %v814
      %1560 = vmatprep.subr.mxu0 0.0
      %1561 = vmatpush1.msra.mxu0 %v815
      %1562 = vmatprep.subr.mxu0 0.0
      %1563 = vmatpush1.msra.mxu0 %v816
      %1564 = vmatprep.subr.mxu0 0.0
      %1565 = vmatpush1.msra.mxu0 %v817
      %1566 = vmatprep.subr.mxu0 0.0
      %1567 = vmatpush1.msra.mxu0 %v818
      %1568 = vmatprep.subr.mxu0 0.0
      %1569 = vmatpush1.msra.mxu0 %v819
      %1570 = vmatprep.subr.mxu0 0.0
      %1571 = vmatpush1.msra.mxu0 0.0
      %1572 = vmatprep.subr.mxu0 0.0
      %1573 = vmatpush1.msra.mxu0 0.0
      %1574 = vmatprep.subr.mxu0 0.0
      %1575 = vmatpush1.msra.mxu0 0.0
      %1576 = vmatprep.subr.mxu0 0.0
      %1577 = vmatpush1.msra.mxu0 0.0
      %1578 = vmatprep.subr.mxu0 0.0
      %1579 = vmatpush1.msra.mxu0 0.0
      %1580 = vmatprep.subr.mxu0 0.0
      %1581 = vmatpush1.msra.mxu0 0.0
      %1582 = vmatprep.subr.mxu0 0.0
      %1583 = vmatpush1.msra.mxu0 0.0
      %1584 = vmatprep.subr.mxu0 0.0
      %1585 = vmatpush1.msra.mxu0 0.0
      %1586 = vmatprep.subr.mxu0 0.0
      %1587 = vmatpush1.msra.mxu0 0.0
      %1588 = vmatprep.subr.mxu0 0.0
      %1589 = vmatpush1.msra.mxu0 0.0
      %1590 = vmatprep.subr.mxu0 0.0
      %1591 = vmatpush1.msra.mxu0 0.0
      %1592 = vmatprep.subr.mxu0 0.0
      %1593 = vmatpush1.msra.mxu0 0.0
      %1594 = vmatprep.subr.mxu0 0.0
      %1595 = vmatpush1.msra.mxu0 0.0
      %1596 = vmatprep.subr.mxu0 0.0
      %1597 = vmatpush1.msra.mxu0 0.0
      %1598 = vmatprep.subr.mxu0 0.0
      %1599 = vmatpush1.msra.mxu0 0.0
      %1600 = vmatprep.subr.mxu0 0.0
      %1601 = vmatpush1.msra.mxu0 0.0
      %1602 = vmatprep.mubr.f32.mxu0 0.0
      %1603 = vmatmul.mubr.f32.gmra.mrb[0].mxu0 %v1069
      %v1604 = vpop.f32.mrb[0].mxu0
      %v1605 = vadd.f32 0.0, %v1604
      %v1606 = vpop.f32.mrb[0].mxu0
      %1607 = vdwg.mxu0
      %v1608 = vadd.f32 %v1537, %v1605
      %1609 = vmatprep.subr.mxu0 0.0
      %1610 = vmatpush1.msra.mxu0 %v893
      %1611 = vmatprep.subr.mxu0 0.0
      %1612 = vmatpush1.msra.mxu0 %v894
      %1613 = vmatprep.subr.mxu0 0.0
      %1614 = vmatpush1.msra.mxu0 %v895
      %1615 = vmatprep.subr.mxu0 0.0
      %1616 = vmatpush1.msra.mxu0 %v896
      %1617 = vmatprep.subr.mxu0 0.0
      %1618 = vmatpush1.msra.mxu0 %v897
      %1619 = vmatprep.subr.mxu0 0.0
      %1620 = vmatpush1.msra.mxu0 %v898
      %1621 = vmatprep.subr.mxu0 0.0
      %1622 = vmatpush1.msra.mxu0 %v899
      %1623 = vmatprep.subr.mxu0 0.0
      %1624 = vmatpush1.msra.mxu0 %v900
      %1625 = vmatprep.subr.mxu0 0.0
      %1626 = vmatpush1.msra.mxu0 %v901
      %1627 = vmatprep.subr.mxu0 0.0
      %1628 = vmatpush1.msra.mxu0 %v902
      %1629 = vmatprep.subr.mxu0 0.0
      %1630 = vmatpush1.msra.mxu0 %v903
      %1631 = vmatprep.subr.mxu0 0.0
      %1632 = vmatpush1.msra.mxu0 %v904
      %1633 = vmatprep.subr.mxu0 0.0
      %1634 = vmatpush1.msra.mxu0 %v905
      %1635 = vmatprep.subr.mxu0 0.0
      %1636 = vmatpush1.msra.mxu0 %v906
      %1637 = vmatprep.subr.mxu0 0.0
      %1638 = vmatpush1.msra.mxu0 %v907
      %1639 = vmatprep.subr.mxu0 0.0
      %1640 = vmatpush1.msra.mxu0 %v908
      %1641 = vmatprep.subr.mxu0 0.0
      %1642 = vmatpush1.msra.mxu0 0.0
      %1643 = vmatprep.subr.mxu0 0.0
      %1644 = vmatpush1.msra.mxu0 0.0
      %1645 = vmatprep.subr.mxu0 0.0
      %1646 = vmatpush1.msra.mxu0 0.0
      %1647 = vmatprep.subr.mxu0 0.0
      %1648 = vmatpush1.msra.mxu0 0.0
      %1649 = vmatprep.subr.mxu0 0.0
      %1650 = vmatpush1.msra.mxu0 0.0
      %1651 = vmatprep.subr.mxu0 0.0
      %1652 = vmatpush1.msra.mxu0 0.0
      %1653 = vmatprep.subr.mxu0 0.0
      %1654 = vmatpush1.msra.mxu0 0.0
      %1655 = vmatprep.subr.mxu0 0.0
      %1656 = vmatpush1.msra.mxu0 0.0
      %1657 = vmatprep.subr.mxu0 0.0
      %1658 = vmatpush1.msra.mxu0 0.0
      %1659 = vmatprep.subr.mxu0 0.0
      %1660 = vmatpush1.msra.mxu0 0.0
      %1661 = vmatprep.subr.mxu0 0.0
      %1662 = vmatpush1.msra.mxu0 0.0
      %1663 = vmatprep.subr.mxu0 0.0
      %1664 = vmatpush1.msra.mxu0 0.0
      %1665 = vmatprep.subr.mxu0 0.0
      %1666 = vmatpush1.msra.mxu0 0.0
      %1667 = vmatprep.subr.mxu0 0.0
      %1668 = vmatpush1.msra.mxu0 0.0
      %1669 = vmatprep.subr.mxu0 0.0
      %1670 = vmatpush1.msra.mxu0 0.0
      %1671 = vmatprep.subr.mxu0 0.0
      %1672 = vmatpush1.msra.mxu0 0.0
      %1673 = vmatprep.mubr.f32.mxu0 0.0
      %1674 = vmatmul.mubr.f32.gmra.mrb[0].mxu0 %v1158
      %v1675 = vpop.f32.mrb[0].mxu0
      %v1676 = vadd.f32 0.0, %v1675
      %v1677 = vpop.f32.mrb[0].mxu0
      %1678 = vdwg.mxu0
      %v1679 = vadd.f32 %v1608, %v1676
      %v1680 = vld [vmem:[%s426] sm:$0xff]
      %1681 = vmatprep.subr.mxu0 0.0
      %1682 = vmatpush1.msra.mxu0 %v982
      %1683 = vmatprep.subr.mxu0 0.0
      %1684 = vmatpush1.msra.mxu0 %v983
      %1685 = vmatprep.subr.mxu0 0.0
      %1686 = vmatpush1.msra.mxu0 %v984
      %1687 = vmatprep.subr.mxu0 0.0
      %1688 = vmatpush1.msra.mxu0 %v985
      %1689 = vmatprep.subr.mxu0 0.0
      %1690 = vmatpush1.msra.mxu0 %v986
      %1691 = vmatprep.subr.mxu0 0.0
      %1692 = vmatpush1.msra.mxu0 %v987
      %1693 = vmatprep.subr.mxu0 0.0
      %1694 = vmatpush1.msra.mxu0 %v988
      %1695 = vmatprep.subr.mxu0 0.0
      %1696 = vmatpush1.msra.mxu0 %v989
      %1697 = vmatprep.subr.mxu0 0.0
      %1698 = vmatpush1.msra.mxu0 %v990
      %1699 = vmatprep.subr.mxu0 0.0
      %1700 = vmatpush1.msra.mxu0 %v991
      %1701 = vmatprep.subr.mxu0 0.0
      %1702 = vmatpush1.msra.mxu0 %v992
      %1703 = vmatprep.subr.mxu0 0.0
      %1704 = vmatpush1.msra.mxu0 %v993
      %1705 = vmatprep.subr.mxu0 0.0
      %1706 = vmatpush1.msra.mxu0 %v994
      %1707 = vmatprep.subr.mxu0 0.0
      %1708 = vmatpush1.msra.mxu0 %v995
      %1709 = vmatprep.subr.mxu0 0.0
      %1710 = vmatpush1.msra.mxu0 %v996
      %1711 = vmatprep.subr.mxu0 0.0
      %1712 = vmatpush1.msra.mxu0 %v997
      %1713 = vmatprep.subr.mxu0 0.0
      %1714 = vmatpush1.msra.mxu0 0.0
      %1715 = vmatprep.subr.mxu0 0.0
      %1716 = vmatpush1.msra.mxu0 0.0
      %1717 = vmatprep.subr.mxu0 0.0
      %1718 = vmatpush1.msra.mxu0 0.0
      %1719 = vmatprep.subr.mxu0 0.0
      %1720 = vmatpush1.msra.mxu0 0.0
      %1721 = vmatprep.subr.mxu0 0.0
      %1722 = vmatpush1.msra.mxu0 0.0
      %1723 = vmatprep.subr.mxu0 0.0
      %1724 = vmatpush1.msra.mxu0 0.0
      %1725 = vmatprep.subr.mxu0 0.0
      %1726 = vmatpush1.msra.mxu0 0.0
      %1727 = vmatprep.subr.mxu0 0.0
      %1728 = vmatpush1.msra.mxu0 0.0
      %1729 = vmatprep.subr.mxu0 0.0
      %1730 = vmatpush1.msra.mxu0 0.0
      %1731 = vmatprep.subr.mxu0 0.0
      %1732 = vmatpush1.msra.mxu0 0.0
      %1733 = vmatprep.subr.mxu0 0.0
      %1734 = vmatpush1.msra.mxu0 0.0
      %1735 = vmatprep.subr.mxu0 0.0
      %1736 = vmatpush1.msra.mxu0 0.0
      %1737 = vmatprep.subr.mxu0 0.0
      %1738 = vmatpush1.msra.mxu0 0.0
      %1739 = vmatprep.subr.mxu0 0.0
      %1740 = vmatpush1.msra.mxu0 0.0
      %1741 = vmatprep.subr.mxu0 0.0
      %1742 = vmatpush1.msra.mxu0 0.0
      %1743 = vmatprep.subr.mxu0 0.0
      %1744 = vmatpush1.msra.mxu0 0.0
      %1745 = vmatprep.mubr.f32.mxu0 0.0
      %1746 = vmatmul.mubr.f32.gmra.mrb[0].mxu0 %v1680
      %v1747 = vpop.f32.mrb[0].mxu0
      %v1748 = vadd.f32 0.0, %v1747
      %v1749 = vpop.f32.mrb[0].mxu0
      %1750 = vdwg.mxu0
      %v1751 = vadd.f32 %v1679, %v1748
      %v1752 = vld [vmem:[%s426 + $0x1] sm:$0xff]
      %1753 = vmatprep.subr.mxu0 0.0
      %1754 = vmatpush1.msra.mxu0 %v1071
      %1755 = vmatprep.subr.mxu0 0.0
      %1756 = vmatpush1.msra.mxu0 %v1072
      %1757 = vmatprep.subr.mxu0 0.0
      %1758 = vmatpush1.msra.mxu0 %v1073
      %1759 = vmatprep.subr.mxu0 0.0
      %1760 = vmatpush1.msra.mxu0 %v1074
      %1761 = vmatprep.subr.mxu0 0.0
      %1762 = vmatpush1.msra.mxu0 %v1075
      %1763 = vmatprep.subr.mxu0 0.0
      %1764 = vmatpush1.msra.mxu0 %v1076
      %1765 = vmatprep.subr.mxu0 0.0
      %1766 = vmatpush1.msra.mxu0 %v1077
      %1767 = vmatprep.subr.mxu0 0.0
      %1768 = vmatpush1.msra.mxu0 %v1078
      %1769 = vmatprep.subr.mxu0 0.0
      %1770 = vmatpush1.msra.mxu0 %v1079
      %1771 = vmatprep.subr.mxu0 0.0
      %1772 = vmatpush1.msra.mxu0 %v1080
      %1773 = vmatprep.subr.mxu0 0.0
      %1774 = vmatpush1.msra.mxu0 %v1081
      %1775 = vmatprep.subr.mxu0 0.0
      %1776 = vmatpush1.msra.mxu0 %v1082
      %1777 = vmatprep.subr.mxu0 0.0
      %1778 = vmatpush1.msra.mxu0 %v1083
      %1779 = vmatprep.subr.mxu0 0.0
      %1780 = vmatpush1.msra.mxu0 %v1084
      %1781 = vmatprep.subr.mxu0 0.0
      %1782 = vmatpush1.msra.mxu0 %v1085
      %1783 = vmatprep.subr.mxu0 0.0
      %1784 = vmatpush1.msra.mxu0 %v1086
      %1785 = vmatprep.subr.mxu0 0.0
      %1786 = vmatpush1.msra.mxu0 0.0
      %1787 = vmatprep.subr.mxu0 0.0
      %1788 = vmatpush1.msra.mxu0 0.0
      %1789 = vmatprep.subr.mxu0 0.0
      %1790 = vmatpush1.msra.mxu0 0.0
      %1791 = vmatprep.subr.mxu0 0.0
      %1792 = vmatpush1.msra.mxu0 0.0
      %1793 = vmatprep.subr.mxu0 0.0
      %1794 = vmatpush1.msra.mxu0 0.0
      %1795 = vmatprep.subr.mxu0 0.0
      %1796 = vmatpush1.msra.mxu0 0.0
      %1797 = vmatprep.subr.mxu0 0.0
      %1798 = vmatpush1.msra.mxu0 0.0
      %1799 = vmatprep.subr.mxu0 0.0
      %1800 = vmatpush1.msra.mxu0 0.0
      %1801 = vmatprep.subr.mxu0 0.0
      %1802 = vmatpush1.msra.mxu0 0.0
      %1803 = vmatprep.subr.mxu0 0.0
      %1804 = vmatpush1.msra.mxu0 0.0
      %1805 = vmatprep.subr.mxu0 0.0
      %1806 = vmatpush1.msra.mxu0 0.0
      %1807 = vmatprep.subr.mxu0 0.0
      %1808 = vmatpush1.msra.mxu0 0.0
      %1809 = vmatprep.subr.mxu0 0.0
      %1810 = vmatpush1.msra.mxu0 0.0
      %1811 = vmatprep.subr.mxu0 0.0
      %1812 = vmatpush1.msra.mxu0 0.0
      %1813 = vmatprep.subr.mxu0 0.0
      %1814 = vmatpush1.msra.mxu0 0.0
      %1815 = vmatprep.subr.mxu0 0.0
      %1816 = vmatpush1.msra.mxu0 0.0
      %1817 = vmatprep.mubr.f32.mxu0 0.0
      %1818 = vmatmul.mubr.f32.gmra.mrb[0].mxu0 %v1752
      %v1819 = vpop.f32.mrb[0].mxu0
      %v1820 = vadd.f32 0.0, %v1819
      %v1821 = vpop.f32.mrb[0].mxu0
      %1822 = vdwg.mxu0
      %v1823 = vadd.f32 %v1751, %v1820
      %v1824 = vld [vmem:[%s426 + $0x2] sm:$0xff]
      %1825 = vmatprep.subr.mxu0 0.0
      %1826 = vmatpush1.msra.mxu0 %v1160
      %1827 = vmatprep.subr.mxu0 0.0
      %1828 = vmatpush1.msra.mxu0 %v1161
      %1829 = vmatprep.subr.mxu0 0.0
      %1830 = vmatpush1.msra.mxu0 %v1162
      %1831 = vmatprep.subr.mxu0 0.0
      %1832 = vmatpush1.msra.mxu0 %v1163
      %1833 = vmatprep.subr.mxu0 0.0
      %1834 = vmatpush1.msra.mxu0 %v1164
      %1835 = vmatprep.subr.mxu0 0.0
      %1836 = vmatpush1.msra.mxu0 %v1165
      %1837 = vmatprep.subr.mxu0 0.0
      %1838 = vmatpush1.msra.mxu0 %v1166
      %1839 = vmatprep.subr.mxu0 0.0
      %1840 = vmatpush1.msra.mxu0 %v1167
      %1841 = vmatprep.subr.mxu0 0.0
      %1842 = vmatpush1.msra.mxu0 %v1168
      %1843 = vmatprep.subr.mxu0 0.0
      %1844 = vmatpush1.msra.mxu0 %v1169
      %1845 = vmatprep.subr.mxu0 0.0
      %1846 = vmatpush1.msra.mxu0 %v1170
      %1847 = vmatprep.subr.mxu0 0.0
      %1848 = vmatpush1.msra.mxu0 %v1171
      %1849 = vmatprep.subr.mxu0 0.0
      %1850 = vmatpush1.msra.mxu0 %v1172
      %1851 = vmatprep.subr.mxu0 0.0
      %1852 = vmatpush1.msra.mxu0 %v1173
      %1853 = vmatprep.subr.mxu0 0.0
      %1854 = vmatpush1.msra.mxu0 %v1174
      %1855 = vmatprep.subr.mxu0 0.0
      %1856 = vmatpush1.msra.mxu0 %v1175
      %1857 = vmatprep.subr.mxu0 0.0
      %1858 = vmatpush1.msra.mxu0 0.0
      %1859 = vmatprep.subr.mxu0 0.0
      %1860 = vmatpush1.msra.mxu0 0.0
      %1861 = vmatprep.subr.mxu0 0.0
      %1862 = vmatpush1.msra.mxu0 0.0
      %1863 = vmatprep.subr.mxu0 0.0
      %1864 = vmatpush1.msra.mxu0 0.0
      %1865 = vmatprep.subr.mxu0 0.0
      %1866 = vmatpush1.msra.mxu0 0.0
      %1867 = vmatprep.subr.mxu0 0.0
      %1868 = vmatpush1.msra.mxu0 0.0
      %1869 = vmatprep.subr.mxu0 0.0
      %1870 = vmatpush1.msra.mxu0 0.0
      %1871 = vmatprep.subr.mxu0 0.0
      %1872 = vmatpush1.msra.mxu0 0.0
      %1873 = vmatprep.subr.mxu0 0.0
      %1874 = vmatpush1.msra.mxu0 0.0
      %1875 = vmatprep.subr.mxu0 0.0
      %1876 = vmatpush1.msra.mxu0 0.0
      %1877 = vmatprep.subr.mxu0 0.0
      %1878 = vmatpush1.msra.mxu0 0.0
      %1879 = vmatprep.subr.mxu0 0.0
      %1880 = vmatpush1.msra.mxu0 0.0
      %1881 = vmatprep.subr.mxu0 0.0
      %1882 = vmatpush1.msra.mxu0 0.0
      %1883 = vmatprep.subr.mxu0 0.0
      %1884 = vmatpush1.msra.mxu0 0.0
      %1885 = vmatprep.subr.mxu0 0.0
      %1886 = vmatpush1.msra.mxu0 0.0
      %1887 = vmatprep.subr.mxu0 0.0
      %1888 = vmatpush1.msra.mxu0 0.0
      %1889 = vmatprep.mubr.f32.mxu0 0.0
      %1890 = vmatmul.mubr.f32.gmra.mrb[0].mxu0 %v1824
      %v1891 = vpop.f32.mrb[0].mxu0
      %v1892 = vadd.f32 0.0, %v1891
      %v1893 = vpop.f32.mrb[0].mxu0
      %1894 = vdwg.mxu0
      %v1895 = vadd.f32 %v1823, %v1892
      %v1896 = vadd.f32 %v1895, %v1252
      %v1897 = vmax.f32 %v1896, 0.0
      %v1898 = vmax.f32 %v1255, %v1897
      %vm1899 = vcmask 64512
      %v1901 = vsel %vm1899, %v444, 0
      %1903 = vmatprep.subr.mxu0 0.0
      %1904 = vmatpush1.msra.mxu0 %v1898
      %1905 = vmatprep.subr.mxu0 0.0
      %1906 = vmatpush1.msra.mxu0 0.0
      %1907 = vmatprep.subr.mxu0 0.0
      %1908 = vmatpush1.msra.mxu0 0.0
      %1909 = vmatprep.subr.mxu0 0.0
      %1910 = vmatpush1.msra.mxu0 0.0
      %1911 = vmatprep.subr.mxu0 0.0
      %1912 = vmatpush1.msra.mxu0 0.0
      %1913 = vmatprep.subr.mxu0 0.0
      %1914 = vmatpush1.msra.mxu0 0.0
      %1915 = vmatprep.subr.mxu0 0.0
      %1916 = vmatpush1.msra.mxu0 0.0
      %1917 = vmatprep.subr.mxu0 0.0
      %1918 = vmatpush1.msra.mxu0 0.0
      %1919 = vmatprep.subr.mxu0 0.0
      %1920 = vmatpush1.msra.mxu0 0.0
      %1921 = vmatprep.subr.mxu0 0.0
      %1922 = vmatpush1.msra.mxu0 0.0
      %1923 = vmatprep.subr.mxu0 0.0
      %1924 = vmatpush1.msra.mxu0 0.0
      %1925 = vmatprep.subr.mxu0 0.0
      %1926 = vmatpush1.msra.mxu0 0.0
      %1927 = vmatprep.subr.mxu0 0.0
      %1928 = vmatpush1.msra.mxu0 0.0
      %1929 = vmatprep.subr.mxu0 0.0
      %1930 = vmatpush1.msra.mxu0 0.0
      %1931 = vmatprep.subr.mxu0 0.0
      %1932 = vmatpush1.msra.mxu0 0.0
      %1933 = vmatprep.subr.mxu0 0.0
      %1934 = vmatpush1.msra.mxu0 0.0
      %1935 = vmatprep.subr.mxu0 0.0
      %1936 = vmatpush1.msra.mxu0 0.0
      %1937 = vmatprep.subr.mxu0 0.0
      %1938 = vmatpush1.msra.mxu0 0.0
      %1939 = vmatprep.subr.mxu0 0.0
      %1940 = vmatpush1.msra.mxu0 0.0
      %1941 = vmatprep.subr.mxu0 0.0
      %1942 = vmatpush1.msra.mxu0 0.0
      %1943 = vmatprep.subr.mxu0 0.0
      %1944 = vmatpush1.msra.mxu0 0.0
      %1945 = vmatprep.subr.mxu0 0.0
      %1946 = vmatpush1.msra.mxu0 0.0
      %1947 = vmatprep.subr.mxu0 0.0
      %1948 = vmatpush1.msra.mxu0 0.0
      %1949 = vmatprep.subr.mxu0 0.0
      %1950 = vmatpush1.msra.mxu0 0.0
      %1951 = vmatprep.subr.mxu0 0.0
      %1952 = vmatpush1.msra.mxu0 0.0
      %1953 = vmatprep.subr.mxu0 0.0
      %1954 = vmatpush1.msra.mxu0 0.0
      %1955 = vmatprep.subr.mxu0 0.0
      %1956 = vmatpush1.msra.mxu0 0.0
      %1957 = vmatprep.subr.mxu0 0.0
      %1958 = vmatpush1.msra.mxu0 0.0
      %1959 = vmatprep.subr.mxu0 0.0
      %1960 = vmatpush1.msra.mxu0 0.0
      %1961 = vmatprep.subr.mxu0 0.0
      %1962 = vmatpush1.msra.mxu0 0.0
      %1963 = vmatprep.subr.mxu0 0.0
      %1964 = vmatpush1.msra.mxu0 0.0
      %1965 = vmatprep.subr.mxu0 0.0
      %1966 = vmatpush1.msra.mxu0 0.0
      %1967 = vmatprep.mubr.f32.mxu0 0.0
      %1968 = vmatmul.mubr.f32.gmra.mrb[0].mxu0 %v1901
      %v1969 = vpop.f32.mrb[0].mxu0
      %v1970 = vadd.f32 0.0, %v1969
      %v1971 = vpop.f32.mrb[0].mxu0
      %1972 = vdwg.mxu0
      %v1974 = vsel %vm1899, %v448, 0
      %1976 = vmatprep.subr.mxu0 0.0
      %1977 = vmatpush1.msra.mxu0 %v1898
      %1978 = vmatprep.subr.mxu0 0.0
      %1979 = vmatpush1.msra.mxu0 0.0
      %1980 = vmatprep.subr.mxu0 0.0
      %1981 = vmatpush1.msra.mxu0 0.0
      %1982 = vmatprep.subr.mxu0 0.0
      %1983 = vmatpush1.msra.mxu0 0.0
      %1984 = vmatprep.subr.mxu0 0.0
      %1985 = vmatpush1.msra.mxu0 0.0
      %1986 = vmatprep.subr.mxu0 0.0
      %1987 = vmatpush1.msra.mxu0 0.0
      %1988 = vmatprep.subr.mxu0 0.0
      %1989 = vmatpush1.msra.mxu0 0.0
      %1990 = vmatprep.subr.mxu0 0.0
      %1991 = vmatpush1.msra.mxu0 0.0
      %1992 = vmatprep.subr.mxu0 0.0
      %1993 = vmatpush1.msra.mxu0 0.0
      %1994 = vmatprep.subr.mxu0 0.0
      %1995 = vmatpush1.msra.mxu0 0.0
      %1996 = vmatprep.subr.mxu0 0.0
      %1997 = vmatpush1.msra.mxu0 0.0
      %1998 = vmatprep.subr.mxu0 0.0
      %1999 = vmatpush1.msra.mxu0 0.0
      %2000 = vmatprep.subr.mxu0 0.0
      %2001 = vmatpush1.msra.mxu0 0.0
      %2002 = vmatprep.subr.mxu0 0.0
      %2003 = vmatpush1.msra.mxu0 0.0
      %2004 = vmatprep.subr.mxu0 0.0
      %2005 = vmatpush1.msra.mxu0 0.0
      %2006 = vmatprep.subr.mxu0 0.0
      %2007 = vmatpush1.msra.mxu0 0.0
      %2008 = vmatprep.subr.mxu0 0.0
      %2009 = vmatpush1.msra.mxu0 0.0
      %2010 = vmatprep.subr.mxu0 0.0
      %2011 = vmatpush1.msra.mxu0 0.0
      %2012 = vmatprep.subr.mxu0 0.0
      %2013 = vmatpush1.msra.mxu0 0.0
      %2014 = vmatprep.subr.mxu0 0.0
      %2015 = vmatpush1.msra.mxu0 0.0
      %2016 = vmatprep.subr.mxu0 0.0
      %2017 = vmatpush1.msra.mxu0 0.0
      %2018 = vmatprep.subr.mxu0 0.0
      %2019 = vmatpush1.msra.mxu0 0.0
      %2020 = vmatprep.subr.mxu0 0.0
      %2021 = vmatpush1.msra.mxu0 0.0
      %2022 = vmatprep.subr.mxu0 0.0
      %2023 = vmatpush1.msra.mxu0 0.0
      %2024 = vmatprep.subr.mxu0 0.0
      %2025 = vmatpush1.msra.mxu0 0.0
      %2026 = vmatprep.subr.mxu0 0.0
      %2027 = vmatpush1.msra.mxu0 0.0
      %2028 = vmatprep.subr.mxu0 0.0
      %2029 = vmatpush1.msra.mxu0 0.0
      %2030 = vmatprep.subr.mxu0 0.0
      %2031 = vmatpush1.msra.mxu0 0.0
      %2032 = vmatprep.subr.mxu0 0.0
      %2033 = vmatpush1.msra.mxu0 0.0
      %2034 = vmatprep.subr.mxu0 0.0
      %2035 = vmatpush1.msra.mxu0 0.0
      %2036 = vmatprep.subr.mxu0 0.0
      %2037 = vmatpush1.msra.mxu0 0.0
      %2038 = vmatprep.subr.mxu0 0.0
      %2039 = vmatpush1.msra.mxu0 0.0
      %2040 = vmatprep.mubr.f32.mxu0 0.0
      %2041 = vmatmul.mubr.f32.gmra.mrb[0].mxu0 %v1974
      %v2042 = vpop.f32.mrb[0].mxu0
      %v2043 = vadd.f32 0.0, %v2042
      %v2044 = vpop.f32.mrb[0].mxu0
      %2045 = vdwg.mxu0
      %v2046 = vmax.f32 %v1970, %v2043
      %2047 = vst [vmem:[%s436] sm:$0xf] %v2046
      %p2048 = scmp.lt.s32.totalorder %s21, 1
      %s2049 = scalar_select %p2048, %s21, 1
      %p2050 = scmp.lt.s32.totalorder %s22, 3
      %s2051 = scalar_select %p2050, %s22, 3
      %s2052 = smul.addr %s2049, 4
      %s2053 = sadd.s32 %s2051, %s2052
      %s2054 = smul.addr %s2053, 4
      %s2055 = scalar_lea.vmem %s6, %s2054
      // Predicated region
      $region45: #{convnet_embedder_forward.6} parent=43 // pred_check
        %p2056 = pneg %p217
      $region46: #{convnet_embedder_forward.6} parent=43 // pred_check_branch
        %2058 = sbr.rel (%p2056) target = $region48
      $region47: #{convnet_embedder_forward.6} parent=43 // pred_region
        _
      $region48: #{convnet_embedder_forward.6} parent=43 // pred_fallthru
        _
    $region44: #{convnet_embedder_forward.6} parent=5 // pred_fallthru
      _
    %p2059 = scmp.le.s32.totalorder 2, %s12
    // Predicated region
    $region49: #{convnet_embedder_forward.6} parent=5 // pred_check
      %p2060 = pneg %p2059
    $region50: #{convnet_embedder_forward.6} parent=5 // pred_check_branch
      %2062 = sbr.rel (%p2060) target = $region52
    $region51: #{convnet_embedder_forward.6} parent=5 // pred_region
      %s2063 = ssub.s32 %s12, 2
      // Predicated region
      $region53: #{convnet_embedder_forward.6} parent=51 // pred_check
        %p2064 = pneg %p223
      $region54: #{convnet_embedder_forward.6} parent=51 // pred_check_branch
        %2066 = sbr.rel (%p2064) target = $region56
      $region55: #{convnet_embedder_forward.6} parent=51 // pred_region
        %p2067 = scmp.lt.s32.totalorder %s23, 1
        %s2068 = scalar_select %p2067, %s23, 1
        %p2069 = scmp.lt.s32.totalorder %s24, 3
        %s2070 = scalar_select %p2069, %s24, 3
        %s2071 = smul.addr %s2068, 4
        %s2072 = sadd.s32 %s2070, %s2071
        %s2073 = smul.addr %s2072, 4
        %s2074 = scalar_lea.vmem %s6, %s2073
      $region56: #{convnet_embedder_forward.6} parent=51 // pred_fallthru
        _
    $region52: #{convnet_embedder_forward.6} parent=5 // pred_fallthru
      _
  $region6: #{convnet_embedder_forward.6} parent=0 // loop_footer
    %s16 = sadd.s32 1, %s12
  $region7: #{convnet_embedder_forward.6} parent=0 // loop_footer_branch
    %11 = sbr.rel target = $region3
  $region8: #{convnet_embedder_forward.6} parent=0 // loop_exit
    _

// kernel: convnet_embedder_forward.7
$region0: #{convnet_embedder_forward.7}
  #allocation0 [shape = 'u32[]', space=smem, size = 0x4, offset = 0x4, fixed_abs, tag = 'smem constant byte address 0x4 - core index']
  #allocation1 [shape = 'u32[144,128]{1,0:T(1,128)}', space=vmem, size = 0x12000, scoped, tag = 'internal scratch']
  %s0 = inlined_call_operand.vmem [shape: f32[2,6,6,128], index: 0, kind: input, shape index: {}, may-alias: {0,1,2,3}]
  %s1 = inlined_call_operand.vmem [shape: f32[2,6,6,128], index: 1, kind: input, shape index: {}, may-alias: {0,1,2,3}]
  %s2 = inlined_call_operand.vmem [shape: f32[2,6,6,128], index: 2, kind: input, shape index: {}, may-alias: {0,1,2,3}]
  %s3 = inlined_call_operand.vmem [shape: f32[2,6,6,128], index: 3, kind: input, shape index: {}, may-alias: {0,1,2,3}]
  %s4 = inlined_call_operand.vmem [shape: f32[9,128,128], index: 4, kind: input, shape index: {}]
  %s5 = inlined_call_operand.vmem [shape: f32[1,128], index: 5, kind: input, shape index: {}]
  %s6 = inlined_call_operand.vmem [shape: f32[2,2,2,128], index: 6, kind: output, shape index: {}]
  %s7 = sld [smem:[#allocation0]]
  $region57: #{convnet_embedder_forward.7} parent=0
    _
  %s9 = ssub.s32 1, %s7
  %s10 = scalar_select 0, %s9, %s7
  loop: start=0, step=1, limit=6
  $region2: #{convnet_embedder_forward.7} parent=0 // loop_pre_header
    _
  $region3: #{convnet_embedder_forward.7} parent=0 // loop_header
    %s12 = sphi 0, %s16
    %p13 = scmp.ge.s32.totalorder %s12, 6
    %s19 = sphi 0, %s31
    %s20 = sphi 0, %s27
    %s21 = sphi 0, %s19
    %s22 = sphi 0, %s20
    %s23 = sphi 0, %s21
    %s24 = sphi 0, %s22
    %s38 = sphi 0, %s40
    %s41 = sphi 0, %s38
    %s42 = sphi 0, %s41
    %s58 = sphi 0, %s42
    %s70 = sphi 0, %s72
    %s73 = sphi 0, %s70
    %s74 = sphi 0, %s73
    %s90 = sphi 0, %s74
    %s102 = sphi 0, %s104
    %s105 = sphi 0, %s102
    %s106 = sphi 0, %s105
    %s122 = sphi 0, %s106
    %s134 = sphi 0, %s136
    %s137 = sphi 0, %s134
    %s138 = sphi 0, %s137
    %s154 = sphi 0, %s138
    %s158 = sphi 0, %s158
    %s160 = sphi 0, %s158
    %s161 = sphi 0, %s160
    %s175 = sphi 0, %s161
    %s179 = sphi 0, %s179
    %s181 = sphi 0, %s179
    %s182 = sphi 0, %s181
    %s196 = sphi 0, %s182
    %s204 = sphi 0, %s206
    %s207 = sphi 0, %s204
    %s208 = sphi 0, %s207
    %s224 = sphi 0, %s208
  $region4: #{convnet_embedder_forward.7} parent=0 // loop_header_branch
    %15 = sbr.rel (%p13) target = $region8
  $region5: #{convnet_embedder_forward.7} parent=0 // loop_body
    %s17 = ssub.s32 %s12, 1
    %s18 = ssub.s32 %s12, 2
    %s25 = sadd.s32 1, %s20
    %p26 = scmp.ge.s32.totalorder %s25, 2
    %s27 = scalar_select %p26, 0, %s25
    %s28 = sadd.s32 1, %s19
    %s29 = scalar_select %p26, %s28, %s19
    %p30 = scmp.ge.s32.totalorder %s29, 2
    %s31 = scalar_select %p30, 0, %s29
    %s32 = smul.u32 %s20, 2
    %s33 = smul.u32 %s27, 2
    %s34 = ssub.s32 %s19, %s31
    %s35 = ssub.s32 %s32, %s33
    %s36 = sor.u32 %s34, %s35
    %p37 = scmp.eq.s32.totalorder %s36, 0
    %s39 = sadd.s32 %s38, 1
    %s40 = scalar_select %p37, %s38, %s39
    %p43 = pneg %p37
    %p44 = scmp.eq.s32.totalorder %s12, 3
    %p45 = por %p43, %p44
    %p46 = scmp.ne.s32.totalorder %s38, %s41
    %p47 = scmp.eq.s32.totalorder %s12, 0
    %p48 = por %p46, %p47
    %p49 = scmp.ne.s32.totalorder %s38, %s41
    %p50 = scmp.eq.s32.totalorder %s17, 3
    %p51 = por %p49, %p50
    %p52 = scmp.ne.s32.totalorder %s41, %s42
    %p53 = scmp.eq.s32.totalorder %s17, 0
    %p54 = por %p52, %p53
    %p55 = scmp.ne.s32.totalorder %s41, %s42
    %p56 = scmp.eq.s32.totalorder %s18, 3
    %p57 = por %p55, %p56
    %p59 = scmp.ne.s32.totalorder %s42, %s58
    %p60 = scmp.eq.s32.totalorder %s18, 0
    %p61 = por %p59, %p60
    %s62 = smul.u32 %s20, 2
    %s63 = sadd.s32 %s62, 1
    %s64 = smul.u32 %s27, 2
    %s65 = sadd.s32 %s64, 1
    %s66 = ssub.s32 %s19, %s31
    %s67 = ssub.s32 %s63, %s65
    %s68 = sor.u32 %s66, %s67
    %p69 = scmp.eq.s32.totalorder %s68, 0
    %s71 = sadd.s32 %s70, 1
    %s72 = scalar_select %p69, %s70, %s71
    %p75 = pneg %p69
    %p76 = scmp.eq.s32.totalorder %s12, 3
    %p77 = por %p75, %p76
    %p78 = scmp.ne.s32.totalorder %s70, %s73
    %p79 = scmp.eq.s32.totalorder %s12, 0
    %p80 = por %p78, %p79
    %p81 = scmp.ne.s32.totalorder %s70, %s73
    %p82 = scmp.eq.s32.totalorder %s17, 3
    %p83 = por %p81, %p82
    %p84 = scmp.ne.s32.totalorder %s73, %s74
    %p85 = scmp.eq.s32.totalorder %s17, 0
    %p86 = por %p84, %p85
    %p87 = scmp.ne.s32.totalorder %s73, %s74
    %p88 = scmp.eq.s32.totalorder %s18, 3
    %p89 = por %p87, %p88
    %p91 = scmp.ne.s32.totalorder %s74, %s90
    %p92 = scmp.eq.s32.totalorder %s18, 0
    %p93 = por %p91, %p92
    %s94 = smul.u32 %s20, 2
    %s95 = sadd.s32 %s94, 2
    %s96 = smul.u32 %s27, 2
    %s97 = sadd.s32 %s96, 2
    %s98 = ssub.s32 %s19, %s31
    %s99 = ssub.s32 %s95, %s97
    %s100 = sor.u32 %s98, %s99
    %p101 = scmp.eq.s32.totalorder %s100, 0
    %s103 = sadd.s32 %s102, 1
    %s104 = scalar_select %p101, %s102, %s103
    %p107 = pneg %p101
    %p108 = scmp.eq.s32.totalorder %s12, 3
    %p109 = por %p107, %p108
    %p110 = scmp.ne.s32.totalorder %s102, %s105
    %p111 = scmp.eq.s32.totalorder %s12, 0
    %p112 = por %p110, %p111
    %p113 = scmp.ne.s32.totalorder %s102, %s105
    %p114 = scmp.eq.s32.totalorder %s17, 3
    %p115 = por %p113, %p114
    %p116 = scmp.ne.s32.totalorder %s105, %s106
    %p117 = scmp.eq.s32.totalorder %s17, 0
    %p118 = por %p116, %p117
    %p119 = scmp.ne.s32.totalorder %s105, %s106
    %p120 = scmp.eq.s32.totalorder %s18, 3
    %p121 = por %p119, %p120
    %p123 = scmp.ne.s32.totalorder %s106, %s122
    %p124 = scmp.eq.s32.totalorder %s18, 0
    %p125 = por %p123, %p124
    %s126 = smul.u32 %s20, 2
    %s127 = sadd.s32 %s126, 3
    %s128 = smul.u32 %s27, 2
    %s129 = sadd.s32 %s128, 3
    %s130 = ssub.s32 %s19, %s31
    %s131 = ssub.s32 %s127, %s129
    %s132 = sor.u32 %s130, %s131
    %p133 = scmp.eq.s32.totalorder %s132, 0
    %s135 = sadd.s32 %s134, 1
    %s136 = scalar_select %p133, %s134, %s135
    %p139 = pneg %p133
    %p140 = scmp.eq.s32.totalorder %s12, 3
    %p141 = por %p139, %p140
    %p142 = scmp.ne.s32.totalorder %s134, %s137
    %p143 = scmp.eq.s32.totalorder %s12, 0
    %p144 = por %p142, %p143
    %p145 = scmp.ne.s32.totalorder %s134, %s137
    %p146 = scmp.eq.s32.totalorder %s17, 3
    %p147 = por %p145, %p146
    %p148 = scmp.ne.s32.totalorder %s137, %s138
    %p149 = scmp.eq.s32.totalorder %s17, 0
    %p150 = por %p148, %p149
    %p151 = scmp.ne.s32.totalorder %s137, %s138
    %p152 = scmp.eq.s32.totalorder %s18, 3
    %p153 = por %p151, %p152
    %p155 = scmp.ne.s32.totalorder %s138, %s154
    %p156 = scmp.eq.s32.totalorder %s18, 0
    %p157 = por %p155, %p156
    %s159 = sadd.s32 %s158, 1
    %p162 = scmp.eq.s32.totalorder %s12, 3
    %p163 = scmp.ne.s32.totalorder %s158, %s160
    %p164 = scmp.eq.s32.totalorder %s12, 0
    %p165 = por %p163, %p164
    %p166 = scmp.ne.s32.totalorder %s158, %s160
    %p167 = scmp.eq.s32.totalorder %s17, 3
    %p168 = por %p166, %p167
    %p169 = scmp.ne.s32.totalorder %s160, %s161
    %p170 = scmp.eq.s32.totalorder %s17, 0
    %p171 = por %p169, %p170
    %p172 = scmp.ne.s32.totalorder %s160, %s161
    %p173 = scmp.eq.s32.totalorder %s18, 3
    %p174 = por %p172, %p173
    %p176 = scmp.ne.s32.totalorder %s161, %s175
    %p177 = scmp.eq.s32.totalorder %s18, 0
    %p178 = por %p176, %p177
    %s180 = sadd.s32 %s179, 1
    %p183 = scmp.eq.s32.totalorder %s12, 3
    %p184 = scmp.ne.s32.totalorder %s179, %s181
    %p185 = scmp.eq.s32.totalorder %s12, 0
    %p186 = por %p184, %p185
    %p187 = scmp.ne.s32.totalorder %s179, %s181
    %p188 = scmp.eq.s32.totalorder %s17, 3
    %p189 = por %p187, %p188
    %p190 = scmp.ne.s32.totalorder %s181, %s182
    %p191 = scmp.eq.s32.totalorder %s17, 0
    %p192 = por %p190, %p191
    %p193 = scmp.ne.s32.totalorder %s181, %s182
    %p194 = scmp.eq.s32.totalorder %s18, 3
    %p195 = por %p193, %p194
    %p197 = scmp.ne.s32.totalorder %s182, %s196
    %p198 = scmp.eq.s32.totalorder %s18, 0
    %p199 = por %p197, %p198
    %s200 = ssub.s32 %s19, %s31
    %s201 = ssub.s32 %s20, %s27
    %s202 = sor.u32 %s200, %s201
    %p203 = scmp.eq.s32.totalorder %s202, 0
    %s205 = sadd.s32 %s204, 1
    %s206 = scalar_select %p203, %s204, %s205
    %p209 = pneg %p203
    %p210 = scmp.eq.s32.totalorder %s12, 3
    %p211 = por %p209, %p210
    %p212 = scmp.ne.s32.totalorder %s204, %s207
    %p213 = scmp.eq.s32.totalorder %s12, 0
    %p214 = por %p212, %p213
    %p215 = scmp.ne.s32.totalorder %s204, %s207
    %p216 = scmp.eq.s32.totalorder %s17, 3
    %p217 = por %p215, %p216
    %p218 = scmp.ne.s32.totalorder %s207, %s208
    %p219 = scmp.eq.s32.totalorder %s17, 0
    %p220 = por %p218, %p219
    %p221 = scmp.ne.s32.totalorder %s207, %s208
    %p222 = scmp.eq.s32.totalorder %s18, 3
    %p223 = por %p221, %p222
    %p225 = scmp.ne.s32.totalorder %s208, %s224
    %p226 = scmp.eq.s32.totalorder %s18, 0
    %p227 = por %p225, %p226
    %p228 = scmp.le.s32.totalorder 1, %s12
    %p229 = scmp.lt.s32.totalorder %s12, 5
    %p230 = pnand %p228, %p229
    %p231 = pneg %p230
    // Predicated region
    $region9: #{convnet_embedder_forward.7} parent=5 // pred_check
      _
    $region10: #{convnet_embedder_forward.7} parent=5 // pred_check_branch
      %233 = sbr.rel (%p230) target = $region12
    $region11: #{convnet_embedder_forward.7} parent=5 // pred_region
      %s234 = ssub.s32 %s12, 1
      // Predicated region
      $region13: #{convnet_embedder_forward.7} parent=11 // pred_check
        %p235 = pneg %p171
      $region14: #{convnet_embedder_forward.7} parent=11 // pred_check_branch
        %237 = sbr.rel (%p235) target = $region16
      $region15: #{convnet_embedder_forward.7} parent=11 // pred_region
        _
      $region16: #{convnet_embedder_forward.7} parent=11 // pred_fallthru
        _
      // Predicated region
      $region17: #{convnet_embedder_forward.7} parent=11 // pred_check
        %p238 = pneg %p192
      $region18: #{convnet_embedder_forward.7} parent=11 // pred_check_branch
        %240 = sbr.rel (%p238) target = $region20
      $region19: #{convnet_embedder_forward.7} parent=11 // pred_region
        _
      $region20: #{convnet_embedder_forward.7} parent=11 // pred_fallthru
        _
    $region12: #{convnet_embedder_forward.7} parent=5 // pred_fallthru
      _
    %p241 = scmp.lt.s32.totalorder %s12, 4
    // Predicated region
    $region21: #{convnet_embedder_forward.7} parent=5 // pred_check
      %p242 = pneg %p241
    $region22: #{convnet_embedder_forward.7} parent=5 // pred_check_branch
      %244 = sbr.rel (%p242) target = $region24
    $region23: #{convnet_embedder_forward.7} parent=5 // pred_region
      // Predicated region
      $region25: #{convnet_embedder_forward.7} parent=23 // pred_check
        %p245 = pneg %p48
      $region26: #{convnet_embedder_forward.7} parent=23 // pred_check_branch
        %247 = sbr.rel (%p245) target = $region28
      $region27: #{convnet_embedder_forward.7} parent=23 // pred_region
        %s248 = smul.u32 %s20, 2
        %p249 = scmp.lt.s32.totalorder %s19, 1
        %s250 = scalar_select %p249, %s19, 1
        %p251 = scmp.lt.s32.totalorder %s248, 5
        %s252 = scalar_select %p251, %s248, 5
        %s253 = smul.addr %s250, 6
        %s254 = sadd.s32 %s252, %s253
        %s255 = smul.addr %s254, 8
        %s256 = scalar_lea.vmem %s0, %s255
        %s257 = smul.u32 %s20, 2
      $region28: #{convnet_embedder_forward.7} parent=23 // pred_fallthru
        _
      // Predicated region
      $region29: #{convnet_embedder_forward.7} parent=23 // pred_check
        %p258 = pneg %p80
      $region30: #{convnet_embedder_forward.7} parent=23 // pred_check_branch
        %260 = sbr.rel (%p258) target = $region32
      $region31: #{convnet_embedder_forward.7} parent=23 // pred_region
        %s261 = smul.u32 %s20, 2
        %s262 = sadd.s32 %s261, 1
        %p263 = scmp.lt.s32.totalorder %s19, 1
        %s264 = scalar_select %p263, %s19, 1
        %p265 = scmp.lt.s32.totalorder %s262, 5
        %s266 = scalar_select %p265, %s262, 5
        %s267 = smul.addr %s264, 6
        %s268 = sadd.s32 %s266, %s267
        %s269 = smul.addr %s268, 8
        %s270 = scalar_lea.vmem %s1, %s269
        %s271 = smul.u32 %s20, 2
        %s272 = sadd.s32 %s271, 1
      $region32: #{convnet_embedder_forward.7} parent=23 // pred_fallthru
        _
      // Predicated region
      $region33: #{convnet_embedder_forward.7} parent=23 // pred_check
        %p273 = pneg %p112
      $region34: #{convnet_embedder_forward.7} parent=23 // pred_check_branch
        %275 = sbr.rel (%p273) target = $region36
      $region35: #{convnet_embedder_forward.7} parent=23 // pred_region
        %s276 = smul.u32 %s20, 2
        %s277 = sadd.s32 %s276, 2
        %p278 = scmp.lt.s32.totalorder %s19, 1
        %s279 = scalar_select %p278, %s19, 1
        %p280 = scmp.lt.s32.totalorder %s277, 5
        %s281 = scalar_select %p280, %s277, 5
        %s282 = smul.addr %s279, 6
        %s283 = sadd.s32 %s281, %s282
        %s284 = smul.addr %s283, 8
        %s285 = scalar_lea.vmem %s2, %s284
        %s286 = smul.u32 %s20, 2
        %s287 = sadd.s32 %s286, 2
      $region36: #{convnet_embedder_forward.7} parent=23 // pred_fallthru
        _
      // Predicated region
      $region37: #{convnet_embedder_forward.7} parent=23 // pred_check
        %p288 = pneg %p144
      $region38: #{convnet_embedder_forward.7} parent=23 // pred_check_branch
        %290 = sbr.rel (%p288) target = $region40
      $region39: #{convnet_embedder_forward.7} parent=23 // pred_region
        %s291 = smul.u32 %s20, 2
        %s292 = sadd.s32 %s291, 3
        %p293 = scmp.lt.s32.totalorder %s19, 1
        %s294 = scalar_select %p293, %s19, 1
        %p295 = scmp.lt.s32.totalorder %s292, 5
        %s296 = scalar_select %p295, %s292, 5
        %s297 = smul.addr %s294, 6
        %s298 = sadd.s32 %s296, %s297
        %s299 = smul.addr %s298, 8
        %s300 = scalar_lea.vmem %s3, %s299
        %s301 = smul.u32 %s20, 2
        %s302 = sadd.s32 %s301, 3
      $region40: #{convnet_embedder_forward.7} parent=23 // pred_fallthru
        _
    $region24: #{convnet_embedder_forward.7} parent=5 // pred_fallthru
      _
    %p303 = scmp.le.s32.totalorder 1, %s12
    %p304 = scmp.lt.s32.totalorder %s12, 5
    %p305 = pnand %p303, %p304
    %p306 = pneg %p305
    // Predicated region
    $region41: #{convnet_embedder_forward.7} parent=5 // pred_check
      _
    $region42: #{convnet_embedder_forward.7} parent=5 // pred_check_branch
      %308 = sbr.rel (%p305) target = $region44
    $region43: #{convnet_embedder_forward.7} parent=5 // pred_region
      %s309 = ssub.s32 %s12, 1
      %s310 = smul.u32 %s22, 2
      %p311 = scmp.lt.s32.totalorder %s21, 1
      %s312 = scalar_select %p311, %s21, 1
      %p313 = scmp.lt.s32.totalorder %s310, 5
      %s314 = scalar_select %p313, %s310, 5
      %s315 = smul.addr %s312, 6
      %s316 = sadd.s32 %s314, %s315
      %s317 = smul.addr %s316, 8
      %s318 = scalar_lea.vmem %s0, %s317
      %p319 = pneg %p54
      %p320 = pneg %p51
      %s321 = smul.u32 %s22, 2
      %s322 = sadd.s32 %s321, 1
      %p323 = scmp.lt.s32.totalorder %s21, 1
      %s324 = scalar_select %p323, %s21, 1
      %p325 = scmp.lt.s32.totalorder %s322, 5
      %s326 = scalar_select %p325, %s322, 5
      %s327 = smul.addr %s324, 6
      %s328 = sadd.s32 %s326, %s327
      %s329 = smul.addr %s328, 8
      %s330 = scalar_lea.vmem %s1, %s329
      %p331 = pneg %p86
      %p332 = pneg %p83
      %s333 = smul.u32 %s22, 2
      %s334 = sadd.s32 %s333, 2
      %p335 = scmp.lt.s32.totalorder %s21, 1
      %s336 = scalar_select %p335, %s21, 1
      %p337 = scmp.lt.s32.totalorder %s334, 5
      %s338 = scalar_select %p337, %s334, 5
      %s339 = smul.addr %s336, 6
      %s340 = sadd.s32 %s338, %s339
      %s341 = smul.addr %s340, 8
      %s342 = scalar_lea.vmem %s2, %s341
      %p343 = pneg %p118
      %p344 = pneg %p115
      %s345 = smul.u32 %s22, 2
      %s346 = sadd.s32 %s345, 3
      %p347 = scmp.lt.s32.totalorder %s21, 1
      %s348 = scalar_select %p347, %s21, 1
      %p349 = scmp.lt.s32.totalorder %s346, 5
      %s350 = scalar_select %p349, %s346, 5
      %s351 = smul.addr %s348, 6
      %s352 = sadd.s32 %s350, %s351
      %s353 = smul.addr %s352, 8
      %s354 = scalar_lea.vmem %s3, %s353
      %p355 = pneg %p150
      %p356 = pneg %p147
      %p357 = pneg %p171
      %p358 = pneg %p168
      %p359 = pneg %p192
      %p360 = pneg %p189
      %p361 = pneg %p220
      %p362 = pneg %p217
      %p363 = scmp.lt.s32.totalorder %s21, 1
      %s364 = scalar_select %p363, %s21, 1
      %p365 = scmp.lt.s32.totalorder %s22, 1
      %s366 = scalar_select %p365, %s22, 1
      %s367 = smul.addr %s364, 2
      %s368 = sadd.s32 %s366, %s367
      %s369 = smul.addr %s368, 2
      %s370 = scalar_lea.vmem %s6, %s369
      %s371 = smul.u32 %s22, 2
      %p372 = scmp.lt.s32.totalorder %s21, 1
      %s373 = scalar_select %p372, %s21, 1
      %p374 = scmp.lt.s32.totalorder %s371, 5
      %s375 = scalar_select %p374, %s371, 5
      %s376 = smul.addr %s373, 6
      %s377 = sadd.s32 %s375, %s376
      %s378 = smul.addr %s377, 8
      %s379 = scalar_lea.vmem %s0, %s378
      %s380 = smul.u32 %s22, 2
      %s381 = smul.u32 %s22, 2
      %s382 = sadd.s32 %s381, 1
      %p383 = scmp.lt.s32.totalorder %s21, 1
      %s384 = scalar_select %p383, %s21, 1
      %p385 = scmp.lt.s32.totalorder %s382, 5
      %s386 = scalar_select %p385, %s382, 5
      %s387 = smul.addr %s384, 6
      %s388 = sadd.s32 %s386, %s387
      %s389 = smul.addr %s388, 8
      %s390 = scalar_lea.vmem %s1, %s389
      %s391 = smul.u32 %s22, 2
      %s392 = sadd.s32 %s391, 1
      %s393 = smul.u32 %s22, 2
      %s394 = sadd.s32 %s393, 2
      %p395 = scmp.lt.s32.totalorder %s21, 1
      %s396 = scalar_select %p395, %s21, 1
      %p397 = scmp.lt.s32.totalorder %s394, 5
      %s398 = scalar_select %p397, %s394, 5
      %s399 = smul.addr %s396, 6
      %s400 = sadd.s32 %s398, %s399
      %s401 = smul.addr %s400, 8
      %s402 = scalar_lea.vmem %s2, %s401
      %s403 = smul.u32 %s22, 2
      %s404 = sadd.s32 %s403, 2
      %s405 = smul.u32 %s22, 2
      %s406 = sadd.s32 %s405, 3
      %p407 = scmp.lt.s32.totalorder %s21, 1
      %s408 = scalar_select %p407, %s21, 1
      %p409 = scmp.lt.s32.totalorder %s406, 5
      %s410 = scalar_select %p409, %s406, 5
      %s411 = smul.addr %s408, 6
      %s412 = sadd.s32 %s410, %s411
      %s413 = smul.addr %s412, 8
      %s414 = scalar_lea.vmem %s3, %s413
      %s415 = smul.u32 %s22, 2
      %s416 = sadd.s32 %s415, 3
      %p417 = scmp.lt.s32.totalorder %s21, 1
      %s418 = scalar_select %p417, %s21, 1
      %p419 = scmp.lt.s32.totalorder %s22, 1
      %s420 = scalar_select %p419, %s22, 1
      %s421 = smul.addr %s418, 2
      %s422 = sadd.s32 %s420, %s421
      %s423 = smul.addr %s422, 2
      %s424 = scalar_lea.vmem %s6, %s423
      %v425 = vlaneseq
      %v426 = vshrl.u32 %v425, 7
      %v427 = vlaneseq
      %v428 = vand.u32 %v427, 127
      %v429 = vmul.u32 %v426, 2
      %vm430 = vcmp.eq.s32.totalorder %v428, %v429
      %v431 = vsel %vm430, 1, 0
      %v432 = vcvt.s32.f32 %v431
      %v433 = vadd.s32 %v429, 1
      %vm434 = vcmp.eq.s32.totalorder %v428, %v433
      %v435 = vsel %vm434, 1, 0
      %v436 = vcvt.s32.f32 %v435
      %v437 = vld [vmem:[%s379] sm:$0xf]
      %v438 = vld [vmem:[%s4] sm:$0xff]
      %v439 = vld [vmem:[%s4 + $0x8] sm:$0xff]
      %v440 = vld [vmem:[%s4 + $0x10] sm:$0xff]
      %v441 = vld [vmem:[%s4 + $0x18] sm:$0xff]
      %v442 = vld [vmem:[%s4 + $0x20] sm:$0xff]
      %v443 = vld [vmem:[%s4 + $0x28] sm:$0xff]
      %v444 = vld [vmem:[%s4 + $0x30] sm:$0xff]
      %v445 = vld [vmem:[%s4 + $0x38] sm:$0xff]
      %v446 = vld [vmem:[%s4 + $0x40] sm:$0xff]
      %v447 = vld [vmem:[%s4 + $0x48] sm:$0xff]
      %v448 = vld [vmem:[%s4 + $0x50] sm:$0xff]
      %v449 = vld [vmem:[%s4 + $0x58] sm:$0xff]
      %v450 = vld [vmem:[%s4 + $0x60] sm:$0xff]
      %v451 = vld [vmem:[%s4 + $0x68] sm:$0xff]
      %v452 = vld [vmem:[%s4 + $0x70] sm:$0xff]
      %v453 = vld [vmem:[%s4 + $0x78] sm:$0xff]
      %v454 = vld [vmem:[%s379 + $0x1] sm:$0xf]
      %s455 = scalar_lea.vmem %s4, 128
      %v456 = vld [vmem:[%s455] sm:$0xff]
      %v457 = vld [vmem:[%s455 + $0x8] sm:$0xff]
      %v458 = vld [vmem:[%s455 + $0x10] sm:$0xff]
      %v459 = vld [vmem:[%s455 + $0x18] sm:$0xff]
      %v460 = vld [vmem:[%s455 + $0x20] sm:$0xff]
      %v461 = vld [vmem:[%s455 + $0x28] sm:$0xff]
      %v462 = vld [vmem:[%s455 + $0x30] sm:$0xff]
      %v463 = vld [vmem:[%s455 + $0x38] sm:$0xff]
      %v464 = vld [vmem:[%s455 + $0x40] sm:$0xff]
      %v465 = vld [vmem:[%s455 + $0x48] sm:$0xff]
      %v466 = vld [vmem:[%s455 + $0x50] sm:$0xff]
      %v467 = vld [vmem:[%s455 + $0x58] sm:$0xff]
      %v468 = vld [vmem:[%s455 + $0x60] sm:$0xff]
      %v469 = vld [vmem:[%s455 + $0x68] sm:$0xff]
      %v470 = vld [vmem:[%s455 + $0x70] sm:$0xff]
      %v471 = vld [vmem:[%s455 + $0x78] sm:$0xff]
      %472 = vmatprep.subr.mxu0 0.0
      %473 = vmatpush1.msra.mxu0 %v456
      %474 = vmatprep.subr.mxu0 0.0
      %475 = vmatpush1.msra.mxu0 %v457
      %476 = vmatprep.subr.mxu0 0.0
      %477 = vmatpush1.msra.mxu0 %v458
      %478 = vmatprep.subr.mxu0 0.0
      %479 = vmatpush1.msra.mxu0 %v459
      %480 = vmatprep.subr.mxu0 0.0
      %481 = vmatpush1.msra.mxu0 %v460
      %482 = vmatprep.subr.mxu0 0.0
      %483 = vmatpush1.msra.mxu0 %v461
      %484 = vmatprep.subr.mxu0 0.0
      %485 = vmatpush1.msra.mxu0 %v462
      %486 = vmatprep.subr.mxu0 0.0
      %487 = vmatpush1.msra.mxu0 %v463
      %488 = vmatprep.subr.mxu0 0.0
      %489 = vmatpush1.msra.mxu0 %v464
      %490 = vmatprep.subr.mxu0 0.0
      %491 = vmatpush1.msra.mxu0 %v465
      %492 = vmatprep.subr.mxu0 0.0
      %493 = vmatpush1.msra.mxu0 %v466
      %494 = vmatprep.subr.mxu0 0.0
      %495 = vmatpush1.msra.mxu0 %v467
      %496 = vmatprep.subr.mxu0 0.0
      %497 = vmatpush1.msra.mxu0 %v468
      %498 = vmatprep.subr.mxu0 0.0
      %499 = vmatpush1.msra.mxu0 %v469
      %500 = vmatprep.subr.mxu0 0.0
      %501 = vmatpush1.msra.mxu0 %v470
      %502 = vmatprep.subr.mxu0 0.0
      %503 = vmatpush1.msra.mxu0 %v471
      %504 = vmatprep.subr.mxu0 0.0
      %505 = vmatpush1.msra.mxu0 0.0
      %506 = vmatprep.subr.mxu0 0.0
      %507 = vmatpush1.msra.mxu0 0.0
      %508 = vmatprep.subr.mxu0 0.0
      %509 = vmatpush1.msra.mxu0 0.0
      %510 = vmatprep.subr.mxu0 0.0
      %511 = vmatpush1.msra.mxu0 0.0
      %512 = vmatprep.subr.mxu0 0.0
      %513 = vmatpush1.msra.mxu0 0.0
      %514 = vmatprep.subr.mxu0 0.0
      %515 = vmatpush1.msra.mxu0 0.0
      %516 = vmatprep.subr.mxu0 0.0
      %517 = vmatpush1.msra.mxu0 0.0
      %518 = vmatprep.subr.mxu0 0.0
      %519 = vmatpush1.msra.mxu0 0.0
      %520 = vmatprep.subr.mxu0 0.0
      %521 = vmatpush1.msra.mxu0 0.0
      %522 = vmatprep.subr.mxu0 0.0
      %523 = vmatpush1.msra.mxu0 0.0
      %524 = vmatprep.subr.mxu0 0.0
      %525 = vmatpush1.msra.mxu0 0.0
      %526 = vmatprep.subr.mxu0 0.0
      %527 = vmatpush1.msra.mxu0 0.0
      %528 = vmatprep.subr.mxu0 0.0
      %529 = vmatpush1.msra.mxu0 0.0
      %530 = vmatprep.subr.mxu0 0.0
      %531 = vmatpush1.msra.mxu0 0.0
      %532 = vmatprep.subr.mxu0 0.0
      %533 = vmatpush1.msra.mxu0 0.0
      %534 = vmatprep.subr.mxu0 0.0
      %535 = vmatpush1.msra.mxu0 0.0
      %536 = vmatprep.mubr.f32.mxu0 0.0
      %537 = vmatmul.mubr.f32.gmra.mrb[0].mxu0 %v454
      %v538 = vpop.f32.mrb[0].mxu0
      %v539 = vadd.f32 0.0, %v538
      %v540 = vpop.f32.mrb[0].mxu0
      %541 = vdwg.mxu0
      %542 = vmatprep.subr.mxu0 0.0
      %543 = vmatpush1.msra.mxu0 %v438
      %544 = vmatprep.subr.mxu0 0.0
      %545 = vmatpush1.msra.mxu0 %v439
      %546 = vmatprep.subr.mxu0 0.0
      %547 = vmatpush1.msra.mxu0 %v440
      %548 = vmatprep.subr.mxu0 0.0
      %549 = vmatpush1.msra.mxu0 %v441
      %550 = vmatprep.subr.mxu0 0.0
      %551 = vmatpush1.msra.mxu0 %v442
      %552 = vmatprep.subr.mxu0 0.0
      %553 = vmatpush1.msra.mxu0 %v443
      %554 = vmatprep.subr.mxu0 0.0
      %555 = vmatpush1.msra.mxu0 %v444
      %556 = vmatprep.subr.mxu0 0.0
      %557 = vmatpush1.msra.mxu0 %v445
      %558 = vmatprep.subr.mxu0 0.0
      %559 = vmatpush1.msra.mxu0 %v446
      %560 = vmatprep.subr.mxu0 0.0
      %561 = vmatpush1.msra.mxu0 %v447
      %562 = vmatprep.subr.mxu0 0.0
      %563 = vmatpush1.msra.mxu0 %v448
      %564 = vmatprep.subr.mxu0 0.0
      %565 = vmatpush1.msra.mxu0 %v449
      %566 = vmatprep.subr.mxu0 0.0
      %567 = vmatpush1.msra.mxu0 %v450
      %568 = vmatprep.subr.mxu0 0.0
      %569 = vmatpush1.msra.mxu0 %v451
      %570 = vmatprep.subr.mxu0 0.0
      %571 = vmatpush1.msra.mxu0 %v452
      %572 = vmatprep.subr.mxu0 0.0
      %573 = vmatpush1.msra.mxu0 %v453
      %574 = vmatprep.subr.mxu0 0.0
      %575 = vmatpush1.msra.mxu0 0.0
      %576 = vmatprep.subr.mxu0 0.0
      %577 = vmatpush1.msra.mxu0 0.0
      %578 = vmatprep.subr.mxu0 0.0
      %579 = vmatpush1.msra.mxu0 0.0
      %580 = vmatprep.subr.mxu0 0.0
      %581 = vmatpush1.msra.mxu0 0.0
      %582 = vmatprep.subr.mxu0 0.0
      %583 = vmatpush1.msra.mxu0 0.0
      %584 = vmatprep.subr.mxu0 0.0
      %585 = vmatpush1.msra.mxu0 0.0
      %586 = vmatprep.subr.mxu0 0.0
      %587 = vmatpush1.msra.mxu0 0.0
      %588 = vmatprep.subr.mxu0 0.0
      %589 = vmatpush1.msra.mxu0 0.0
      %590 = vmatprep.subr.mxu0 0.0
      %591 = vmatpush1.msra.mxu0 0.0
      %592 = vmatprep.subr.mxu0 0.0
      %593 = vmatpush1.msra.mxu0 0.0
      %594 = vmatprep.subr.mxu0 0.0
      %595 = vmatpush1.msra.mxu0 0.0
      %596 = vmatprep.subr.mxu0 0.0
      %597 = vmatpush1.msra.mxu0 0.0
      %598 = vmatprep.subr.mxu0 0.0
      %599 = vmatpush1.msra.mxu0 0.0
      %600 = vmatprep.subr.mxu0 0.0
      %601 = vmatpush1.msra.mxu0 0.0
      %602 = vmatprep.subr.mxu0 0.0
      %603 = vmatpush1.msra.mxu0 0.0
      %604 = vmatprep.subr.mxu0 0.0
      %605 = vmatpush1.msra.mxu0 0.0
      %606 = vmatprep.mubr.f32.mxu0 0.0
      %607 = vmatmul.mubr.f32.gmra.mrb[0].mxu0 %v437
      %v608 = vpop.f32.mrb[0].mxu0
      %v609 = vadd.f32 %v539, %v608
      %v610 = vpop.f32.mrb[0].mxu0
      %611 = vdwg.mxu0
      %v612 = vld [vmem:[%s379 + $0x2] sm:$0xf]
      %s613 = scalar_lea.vmem %s4, 256
      %v614 = vld [vmem:[%s613] sm:$0xff]
      %v615 = vld [vmem:[%s613 + $0x8] sm:$0xff]
      %v616 = vld [vmem:[%s613 + $0x10] sm:$0xff]
      %v617 = vld [vmem:[%s613 + $0x18] sm:$0xff]
      %v618 = vld [vmem:[%s613 + $0x20] sm:$0xff]
      %v619 = vld [vmem:[%s613 + $0x28] sm:$0xff]
      %v620 = vld [vmem:[%s613 + $0x30] sm:$0xff]
      %v621 = vld [vmem:[%s613 + $0x38] sm:$0xff]
      %v622 = vld [vmem:[%s613 + $0x40] sm:$0xff]
      %v623 = vld [vmem:[%s613 + $0x48] sm:$0xff]
      %v624 = vld [vmem:[%s613 + $0x50] sm:$0xff]
      %v625 = vld [vmem:[%s613 + $0x58] sm:$0xff]
      %v626 = vld [vmem:[%s613 + $0x60] sm:$0xff]
      %v627 = vld [vmem:[%s613 + $0x68] sm:$0xff]
      %v628 = vld [vmem:[%s613 + $0x70] sm:$0xff]
      %v629 = vld [vmem:[%s613 + $0x78] sm:$0xff]
      %630 = vmatprep.subr.mxu0 0.0
      %631 = vmatpush1.msra.mxu0 %v614
      %632 = vmatprep.subr.mxu0 0.0
      %633 = vmatpush1.msra.mxu0 %v615
      %634 = vmatprep.subr.mxu0 0.0
      %635 = vmatpush1.msra.mxu0 %v616
      %636 = vmatprep.subr.mxu0 0.0
      %637 = vmatpush1.msra.mxu0 %v617
      %638 = vmatprep.subr.mxu0 0.0
      %639 = vmatpush1.msra.mxu0 %v618
      %640 = vmatprep.subr.mxu0 0.0
      %641 = vmatpush1.msra.mxu0 %v619
      %642 = vmatprep.subr.mxu0 0.0
      %643 = vmatpush1.msra.mxu0 %v620
      %644 = vmatprep.subr.mxu0 0.0
      %645 = vmatpush1.msra.mxu0 %v621
      %646 = vmatprep.subr.mxu0 0.0
      %647 = vmatpush1.msra.mxu0 %v622
      %648 = vmatprep.subr.mxu0 0.0
      %649 = vmatpush1.msra.mxu0 %v623
      %650 = vmatprep.subr.mxu0 0.0
      %651 = vmatpush1.msra.mxu0 %v624
      %652 = vmatprep.subr.mxu0 0.0
      %653 = vmatpush1.msra.mxu0 %v625
      %654 = vmatprep.subr.mxu0 0.0
      %655 = vmatpush1.msra.mxu0 %v626
      %656 = vmatprep.subr.mxu0 0.0
      %657 = vmatpush1.msra.mxu0 %v627
      %658 = vmatprep.subr.mxu0 0.0
      %659 = vmatpush1.msra.mxu0 %v628
      %660 = vmatprep.subr.mxu0 0.0
      %661 = vmatpush1.msra.mxu0 %v629
      %662 = vmatprep.subr.mxu0 0.0
      %663 = vmatpush1.msra.mxu0 0.0
      %664 = vmatprep.subr.mxu0 0.0
      %665 = vmatpush1.msra.mxu0 0.0
      %666 = vmatprep.subr.mxu0 0.0
      %667 = vmatpush1.msra.mxu0 0.0
      %668 = vmatprep.subr.mxu0 0.0
      %669 = vmatpush1.msra.mxu0 0.0
      %670 = vmatprep.subr.mxu0 0.0
      %671 = vmatpush1.msra.mxu0 0.0
      %672 = vmatprep.subr.mxu0 0.0
      %673 = vmatpush1.msra.mxu0 0.0
      %674 = vmatprep.subr.mxu0 0.0
      %675 = vmatpush1.msra.mxu0 0.0
      %676 = vmatprep.subr.mxu0 0.0
      %677 = vmatpush1.msra.mxu0 0.0
      %678 = vmatprep.subr.mxu0 0.0
      %679 = vmatpush1.msra.mxu0 0.0
      %680 = vmatprep.subr.mxu0 0.0
      %681 = vmatpush1.msra.mxu0 0.0
      %682 = vmatprep.subr.mxu0 0.0
      %683 = vmatpush1.msra.mxu0 0.0
      %684 = vmatprep.subr.mxu0 0.0
      %685 = vmatpush1.msra.mxu0 0.0
      %686 = vmatprep.subr.mxu0 0.0
      %687 = vmatpush1.msra.mxu0 0.0
      %688 = vmatprep.subr.mxu0 0.0
      %689 = vmatpush1.msra.mxu0 0.0
      %690 = vmatprep.subr.mxu0 0.0
      %691 = vmatpush1.msra.mxu0 0.0
      %692 = vmatprep.subr.mxu0 0.0
      %693 = vmatpush1.msra.mxu0 0.0
      %694 = vmatprep.mubr.f32.mxu0 0.0
      %695 = vmatmul.mubr.f32.gmra.mrb[0].mxu0 %v612
      %v696 = vpop.f32.mrb[0].mxu0
      %v697 = vadd.f32 0.0, %v696
      %v698 = vpop.f32.mrb[0].mxu0
      %699 = vdwg.mxu0
      %v700 = vadd.f32 %v609, %v697
      %v701 = vld [vmem:[%s390] sm:$0xf]
      %s702 = scalar_lea.vmem %s4, 384
      %v703 = vld [vmem:[%s702] sm:$0xff]
      %v704 = vld [vmem:[%s702 + $0x8] sm:$0xff]
      %v705 = vld [vmem:[%s702 + $0x10] sm:$0xff]
      %v706 = vld [vmem:[%s702 + $0x18] sm:$0xff]
      %v707 = vld [vmem:[%s702 + $0x20] sm:$0xff]
      %v708 = vld [vmem:[%s702 + $0x28] sm:$0xff]
      %v709 = vld [vmem:[%s702 + $0x30] sm:$0xff]
      %v710 = vld [vmem:[%s702 + $0x38] sm:$0xff]
      %v711 = vld [vmem:[%s702 + $0x40] sm:$0xff]
      %v712 = vld [vmem:[%s702 + $0x48] sm:$0xff]
      %v713 = vld [vmem:[%s702 + $0x50] sm:$0xff]
      %v714 = vld [vmem:[%s702 + $0x58] sm:$0xff]
      %v715 = vld [vmem:[%s702 + $0x60] sm:$0xff]
      %v716 = vld [vmem:[%s702 + $0x68] sm:$0xff]
      %v717 = vld [vmem:[%s702 + $0x70] sm:$0xff]
      %v718 = vld [vmem:[%s702 + $0x78] sm:$0xff]
      %719 = vmatprep.subr.mxu0 0.0
      %720 = vmatpush1.msra.mxu0 %v703
      %721 = vmatprep.subr.mxu0 0.0
      %722 = vmatpush1.msra.mxu0 %v704
      %723 = vmatprep.subr.mxu0 0.0
      %724 = vmatpush1.msra.mxu0 %v705
      %725 = vmatprep.subr.mxu0 0.0
      %726 = vmatpush1.msra.mxu0 %v706
      %727 = vmatprep.subr.mxu0 0.0
      %728 = vmatpush1.msra.mxu0 %v707
      %729 = vmatprep.subr.mxu0 0.0
      %730 = vmatpush1.msra.mxu0 %v708
      %731 = vmatprep.subr.mxu0 0.0
      %732 = vmatpush1.msra.mxu0 %v709
      %733 = vmatprep.subr.mxu0 0.0
      %734 = vmatpush1.msra.mxu0 %v710
      %735 = vmatprep.subr.mxu0 0.0
      %736 = vmatpush1.msra.mxu0 %v711
      %737 = vmatprep.subr.mxu0 0.0
      %738 = vmatpush1.msra.mxu0 %v712
      %739 = vmatprep.subr.mxu0 0.0
      %740 = vmatpush1.msra.mxu0 %v713
      %741 = vmatprep.subr.mxu0 0.0
      %742 = vmatpush1.msra.mxu0 %v714
      %743 = vmatprep.subr.mxu0 0.0
      %744 = vmatpush1.msra.mxu0 %v715
      %745 = vmatprep.subr.mxu0 0.0
      %746 = vmatpush1.msra.mxu0 %v716
      %747 = vmatprep.subr.mxu0 0.0
      %748 = vmatpush1.msra.mxu0 %v717
      %749 = vmatprep.subr.mxu0 0.0
      %750 = vmatpush1.msra.mxu0 %v718
      %751 = vmatprep.subr.mxu0 0.0
      %752 = vmatpush1.msra.mxu0 0.0
      %753 = vmatprep.subr.mxu0 0.0
      %754 = vmatpush1.msra.mxu0 0.0
      %755 = vmatprep.subr.mxu0 0.0
      %756 = vmatpush1.msra.mxu0 0.0
      %757 = vmatprep.subr.mxu0 0.0
      %758 = vmatpush1.msra.mxu0 0.0
      %759 = vmatprep.subr.mxu0 0.0
      %760 = vmatpush1.msra.mxu0 0.0
      %761 = vmatprep.subr.mxu0 0.0
      %762 = vmatpush1.msra.mxu0 0.0
      %763 = vmatprep.subr.mxu0 0.0
      %764 = vmatpush1.msra.mxu0 0.0
      %765 = vmatprep.subr.mxu0 0.0
      %766 = vmatpush1.msra.mxu0 0.0
      %767 = vmatprep.subr.mxu0 0.0
      %768 = vmatpush1.msra.mxu0 0.0
      %769 = vmatprep.subr.mxu0 0.0
      %770 = vmatpush1.msra.mxu0 0.0
      %771 = vmatprep.subr.mxu0 0.0
      %772 = vmatpush1.msra.mxu0 0.0
      %773 = vmatprep.subr.mxu0 0.0
      %774 = vmatpush1.msra.mxu0 0.0
      %775 = vmatprep.subr.mxu0 0.0
      %776 = vmatpush1.msra.mxu0 0.0
      %777 = vmatprep.subr.mxu0 0.0
      %778 = vmatpush1.msra.mxu0 0.0
      %779 = vmatprep.subr.mxu0 0.0
      %780 = vmatpush1.msra.mxu0 0.0
      %781 = vmatprep.subr.mxu0 0.0
      %782 = vmatpush1.msra.mxu0 0.0
      %783 = vmatprep.mubr.f32.mxu0 0.0
      %784 = vmatmul.mubr.f32.gmra.mrb[0].mxu0 %v701
      %v785 = vpop.f32.mrb[0].mxu0
      %v786 = vadd.f32 0.0, %v785
      %v787 = vpop.f32.mrb[0].mxu0
      %788 = vdwg.mxu0
      %v789 = vadd.f32 %v700, %v786
      %v790 = vld [vmem:[%s390 + $0x1] sm:$0xf]
      %s791 = scalar_lea.vmem %s4, 512
      %v792 = vld [vmem:[%s791] sm:$0xff]
      %v793 = vld [vmem:[%s791 + $0x8] sm:$0xff]
      %v794 = vld [vmem:[%s791 + $0x10] sm:$0xff]
      %v795 = vld [vmem:[%s791 + $0x18] sm:$0xff]
      %v796 = vld [vmem:[%s791 + $0x20] sm:$0xff]
      %v797 = vld [vmem:[%s791 + $0x28] sm:$0xff]
      %v798 = vld [vmem:[%s791 + $0x30] sm:$0xff]
      %v799 = vld [vmem:[%s791 + $0x38] sm:$0xff]
      %v800 = vld [vmem:[%s791 + $0x40] sm:$0xff]
      %v801 = vld [vmem:[%s791 + $0x48] sm:$0xff]
      %v802 = vld [vmem:[%s791 + $0x50] sm:$0xff]
      %v803 = vld [vmem:[%s791 + $0x58] sm:$0xff]
      %v804 = vld [vmem:[%s791 + $0x60] sm:$0xff]
      %v805 = vld [vmem:[%s791 + $0x68] sm:$0xff]
      %v806 = vld [vmem:[%s791 + $0x70] sm:$0xff]
      %v807 = vld [vmem:[%s791 + $0x78] sm:$0xff]
      %808 = vmatprep.subr.mxu0 0.0
      %809 = vmatpush1.msra.mxu0 %v792
      %810 = vmatprep.subr.mxu0 0.0
      %811 = vmatpush1.msra.mxu0 %v793
      %812 = vmatprep.subr.mxu0 0.0
      %813 = vmatpush1.msra.mxu0 %v794
      %814 = vmatprep.subr.mxu0 0.0
      %815 = vmatpush1.msra.mxu0 %v795
      %816 = vmatprep.subr.mxu0 0.0
      %817 = vmatpush1.msra.mxu0 %v796
      %818 = vmatprep.subr.mxu0 0.0
      %819 = vmatpush1.msra.mxu0 %v797
      %820 = vmatprep.subr.mxu0 0.0
      %821 = vmatpush1.msra.mxu0 %v798
      %822 = vmatprep.subr.mxu0 0.0
      %823 = vmatpush1.msra.mxu0 %v799
      %824 = vmatprep.subr.mxu0 0.0
      %825 = vmatpush1.msra.mxu0 %v800
      %826 = vmatprep.subr.mxu0 0.0
      %827 = vmatpush1.msra.mxu0 %v801
      %828 = vmatprep.subr.mxu0 0.0
      %829 = vmatpush1.msra.mxu0 %v802
      %830 = vmatprep.subr.mxu0 0.0
      %831 = vmatpush1.msra.mxu0 %v803
      %832 = vmatprep.subr.mxu0 0.0
      %833 = vmatpush1.msra.mxu0 %v804
      %834 = vmatprep.subr.mxu0 0.0
      %835 = vmatpush1.msra.mxu0 %v805
      %836 = vmatprep.subr.mxu0 0.0
      %837 = vmatpush1.msra.mxu0 %v806
      %838 = vmatprep.subr.mxu0 0.0
      %839 = vmatpush1.msra.mxu0 %v807
      %840 = vmatprep.subr.mxu0 0.0
      %841 = vmatpush1.msra.mxu0 0.0
      %842 = vmatprep.subr.mxu0 0.0
      %843 = vmatpush1.msra.mxu0 0.0
      %844 = vmatprep.subr.mxu0 0.0
      %845 = vmatpush1.msra.mxu0 0.0
      %846 = vmatprep.subr.mxu0 0.0
      %847 = vmatpush1.msra.mxu0 0.0
      %848 = vmatprep.subr.mxu0 0.0
      %849 = vmatpush1.msra.mxu0 0.0
      %850 = vmatprep.subr.mxu0 0.0
      %851 = vmatpush1.msra.mxu0 0.0
      %852 = vmatprep.subr.mxu0 0.0
      %853 = vmatpush1.msra.mxu0 0.0
      %854 = vmatprep.subr.mxu0 0.0
      %855 = vmatpush1.msra.mxu0 0.0
      %856 = vmatprep.subr.mxu0 0.0
      %857 = vmatpush1.msra.mxu0 0.0
      %858 = vmatprep.subr.mxu0 0.0
      %859 = vmatpush1.msra.mxu0 0.0
      %860 = vmatprep.subr.mxu0 0.0
      %861 = vmatpush1.msra.mxu0 0.0
      %862 = vmatprep.subr.mxu0 0.0
      %863 = vmatpush1.msra.mxu0 0.0
      %864 = vmatprep.subr.mxu0 0.0
      %865 = vmatpush1.msra.mxu0 0.0
      %866 = vmatprep.subr.mxu0 0.0
      %867 = vmatpush1.msra.mxu0 0.0
      %868 = vmatprep.subr.mxu0 0.0
      %869 = vmatpush1.msra.mxu0 0.0
      %870 = vmatprep.subr.mxu0 0.0
      %871 = vmatpush1.msra.mxu0 0.0
      %872 = vmatprep.mubr.f32.mxu0 0.0
      %873 = vmatmul.mubr.f32.gmra.mrb[0].mxu0 %v790
      %v874 = vpop.f32.mrb[0].mxu0
      %v875 = vadd.f32 0.0, %v874
      %v876 = vpop.f32.mrb[0].mxu0
      %877 = vdwg.mxu0
      %v878 = vadd.f32 %v789, %v875
      %v879 = vld [vmem:[%s390 + $0x2] sm:$0xf]
      %s880 = scalar_lea.vmem %s4, 640
      %v881 = vld [vmem:[%s880] sm:$0xff]
      %v882 = vld [vmem:[%s880 + $0x8] sm:$0xff]
      %v883 = vld [vmem:[%s880 + $0x10] sm:$0xff]
      %v884 = vld [vmem:[%s880 + $0x18] sm:$0xff]
      %v885 = vld [vmem:[%s880 + $0x20] sm:$0xff]
      %v886 = vld [vmem:[%s880 + $0x28] sm:$0xff]
      %v887 = vld [vmem:[%s880 + $0x30] sm:$0xff]
      %v888 = vld [vmem:[%s880 + $0x38] sm:$0xff]
      %v889 = vld [vmem:[%s880 + $0x40] sm:$0xff]
      %v890 = vld [vmem:[%s880 + $0x48] sm:$0xff]
      %v891 = vld [vmem:[%s880 + $0x50] sm:$0xff]
      %v892 = vld [vmem:[%s880 + $0x58] sm:$0xff]
      %v893 = vld [vmem:[%s880 + $0x60] sm:$0xff]
      %v894 = vld [vmem:[%s880 + $0x68] sm:$0xff]
      %v895 = vld [vmem:[%s880 + $0x70] sm:$0xff]
      %v896 = vld [vmem:[%s880 + $0x78] sm:$0xff]
      %897 = vmatprep.subr.mxu0 0.0
      %898 = vmatpush1.msra.mxu0 %v881
      %899 = vmatprep.subr.mxu0 0.0
      %900 = vmatpush1.msra.mxu0 %v882
      %901 = vmatprep.subr.mxu0 0.0
      %902 = vmatpush1.msra.mxu0 %v883
      %903 = vmatprep.subr.mxu0 0.0
      %904 = vmatpush1.msra.mxu0 %v884
      %905 = vmatprep.subr.mxu0 0.0
      %906 = vmatpush1.msra.mxu0 %v885
      %907 = vmatprep.subr.mxu0 0.0
      %908 = vmatpush1.msra.mxu0 %v886
      %909 = vmatprep.subr.mxu0 0.0
      %910 = vmatpush1.msra.mxu0 %v887
      %911 = vmatprep.subr.mxu0 0.0
      %912 = vmatpush1.msra.mxu0 %v888
      %913 = vmatprep.subr.mxu0 0.0
      %914 = vmatpush1.msra.mxu0 %v889
      %915 = vmatprep.subr.mxu0 0.0
      %916 = vmatpush1.msra.mxu0 %v890
      %917 = vmatprep.subr.mxu0 0.0
      %918 = vmatpush1.msra.mxu0 %v891
      %919 = vmatprep.subr.mxu0 0.0
      %920 = vmatpush1.msra.mxu0 %v892
      %921 = vmatprep.subr.mxu0 0.0
      %922 = vmatpush1.msra.mxu0 %v893
      %923 = vmatprep.subr.mxu0 0.0
      %924 = vmatpush1.msra.mxu0 %v894
      %925 = vmatprep.subr.mxu0 0.0
      %926 = vmatpush1.msra.mxu0 %v895
      %927 = vmatprep.subr.mxu0 0.0
      %928 = vmatpush1.msra.mxu0 %v896
      %929 = vmatprep.subr.mxu0 0.0
      %930 = vmatpush1.msra.mxu0 0.0
      %931 = vmatprep.subr.mxu0 0.0
      %932 = vmatpush1.msra.mxu0 0.0
      %933 = vmatprep.subr.mxu0 0.0
      %934 = vmatpush1.msra.mxu0 0.0
      %935 = vmatprep.subr.mxu0 0.0
      %936 = vmatpush1.msra.mxu0 0.0
      %937 = vmatprep.subr.mxu0 0.0
      %938 = vmatpush1.msra.mxu0 0.0
      %939 = vmatprep.subr.mxu0 0.0
      %940 = vmatpush1.msra.mxu0 0.0
      %941 = vmatprep.subr.mxu0 0.0
      %942 = vmatpush1.msra.mxu0 0.0
      %943 = vmatprep.subr.mxu0 0.0
      %944 = vmatpush1.msra.mxu0 0.0
      %945 = vmatprep.subr.mxu0 0.0
      %946 = vmatpush1.msra.mxu0 0.0
      %947 = vmatprep.subr.mxu0 0.0
      %948 = vmatpush1.msra.mxu0 0.0
      %949 = vmatprep.subr.mxu0 0.0
      %950 = vmatpush1.msra.mxu0 0.0
      %951 = vmatprep.subr.mxu0 0.0
      %952 = vmatpush1.msra.mxu0 0.0
      %953 = vmatprep.subr.mxu0 0.0
      %954 = vmatpush1.msra.mxu0 0.0
      %955 = vmatprep.subr.mxu0 0.0
      %956 = vmatpush1.msra.mxu0 0.0
      %957 = vmatprep.subr.mxu0 0.0
      %958 = vmatpush1.msra.mxu0 0.0
      %959 = vmatprep.subr.mxu0 0.0
      %960 = vmatpush1.msra.mxu0 0.0
      %961 = vmatprep.mubr.f32.mxu0 0.0
      %962 = vmatmul.mubr.f32.gmra.mrb[0].mxu0 %v879
      %v963 = vpop.f32.mrb[0].mxu0
      %v964 = vadd.f32 0.0, %v963
      %v965 = vpop.f32.mrb[0].mxu0
      %966 = vdwg.mxu0
      %v967 = vadd.f32 %v878, %v964
      %v968 = vld [vmem:[%s402] sm:$0xf]
      %s969 = scalar_lea.vmem %s4, 768
      %v970 = vld [vmem:[%s969] sm:$0xff]
      %v971 = vld [vmem:[%s969 + $0x8] sm:$0xff]
      %v972 = vld [vmem:[%s969 + $0x10] sm:$0xff]
      %v973 = vld [vmem:[%s969 + $0x18] sm:$0xff]
      %v974 = vld [vmem:[%s969 + $0x20] sm:$0xff]
      %v975 = vld [vmem:[%s969 + $0x28] sm:$0xff]
      %v976 = vld [vmem:[%s969 + $0x30] sm:$0xff]
      %v977 = vld [vmem:[%s969 + $0x38] sm:$0xff]
      %v978 = vld [vmem:[%s969 + $0x40] sm:$0xff]
      %v979 = vld [vmem:[%s969 + $0x48] sm:$0xff]
      %v980 = vld [vmem:[%s969 + $0x50] sm:$0xff]
      %v981 = vld [vmem:[%s969 + $0x58] sm:$0xff]
      %v982 = vld [vmem:[%s969 + $0x60] sm:$0xff]
      %v983 = vld [vmem:[%s969 + $0x68] sm:$0xff]
      %v984 = vld [vmem:[%s969 + $0x70] sm:$0xff]
      %v985 = vld [vmem:[%s969 + $0x78] sm:$0xff]
      %986 = vmatprep.subr.mxu0 0.0
      %987 = vmatpush1.msra.mxu0 %v970
      %988 = vmatprep.subr.mxu0 0.0
      %989 = vmatpush1.msra.mxu0 %v971
      %990 = vmatprep.subr.mxu0 0.0
      %991 = vmatpush1.msra.mxu0 %v972
      %992 = vmatprep.subr.mxu0 0.0
      %993 = vmatpush1.msra.mxu0 %v973
      %994 = vmatprep.subr.mxu0 0.0
      %995 = vmatpush1.msra.mxu0 %v974
      %996 = vmatprep.subr.mxu0 0.0
      %997 = vmatpush1.msra.mxu0 %v975
      %998 = vmatprep.subr.mxu0 0.0
      %999 = vmatpush1.msra.mxu0 %v976
      %1000 = vmatprep.subr.mxu0 0.0
      %1001 = vmatpush1.msra.mxu0 %v977
      %1002 = vmatprep.subr.mxu0 0.0
      %1003 = vmatpush1.msra.mxu0 %v978
      %1004 = vmatprep.subr.mxu0 0.0
      %1005 = vmatpush1.msra.mxu0 %v979
      %1006 = vmatprep.subr.mxu0 0.0
      %1007 = vmatpush1.msra.mxu0 %v980
      %1008 = vmatprep.subr.mxu0 0.0
      %1009 = vmatpush1.msra.mxu0 %v981
      %1010 = vmatprep.subr.mxu0 0.0
      %1011 = vmatpush1.msra.mxu0 %v982
      %1012 = vmatprep.subr.mxu0 0.0
      %1013 = vmatpush1.msra.mxu0 %v983
      %1014 = vmatprep.subr.mxu0 0.0
      %1015 = vmatpush1.msra.mxu0 %v984
      %1016 = vmatprep.subr.mxu0 0.0
      %1017 = vmatpush1.msra.mxu0 %v985
      %1018 = vmatprep.subr.mxu0 0.0
      %1019 = vmatpush1.msra.mxu0 0.0
      %1020 = vmatprep.subr.mxu0 0.0
      %1021 = vmatpush1.msra.mxu0 0.0
      %1022 = vmatprep.subr.mxu0 0.0
      %1023 = vmatpush1.msra.mxu0 0.0
      %1024 = vmatprep.subr.mxu0 0.0
      %1025 = vmatpush1.msra.mxu0 0.0
      %1026 = vmatprep.subr.mxu0 0.0
      %1027 = vmatpush1.msra.mxu0 0.0
      %1028 = vmatprep.subr.mxu0 0.0
      %1029 = vmatpush1.msra.mxu0 0.0
      %1030 = vmatprep.subr.mxu0 0.0
      %1031 = vmatpush1.msra.mxu0 0.0
      %1032 = vmatprep.subr.mxu0 0.0
      %1033 = vmatpush1.msra.mxu0 0.0
      %1034 = vmatprep.subr.mxu0 0.0
      %1035 = vmatpush1.msra.mxu0 0.0
      %1036 = vmatprep.subr.mxu0 0.0
      %1037 = vmatpush1.msra.mxu0 0.0
      %1038 = vmatprep.subr.mxu0 0.0
      %1039 = vmatpush1.msra.mxu0 0.0
      %1040 = vmatprep.subr.mxu0 0.0
      %1041 = vmatpush1.msra.mxu0 0.0
      %1042 = vmatprep.subr.mxu0 0.0
      %1043 = vmatpush1.msra.mxu0 0.0
      %1044 = vmatprep.subr.mxu0 0.0
      %1045 = vmatpush1.msra.mxu0 0.0
      %1046 = vmatprep.subr.mxu0 0.0
      %1047 = vmatpush1.msra.mxu0 0.0
      %1048 = vmatprep.subr.mxu0 0.0
      %1049 = vmatpush1.msra.mxu0 0.0
      %1050 = vmatprep.mubr.f32.mxu0 0.0
      %1051 = vmatmul.mubr.f32.gmra.mrb[0].mxu0 %v968
      %v1052 = vpop.f32.mrb[0].mxu0
      %v1053 = vadd.f32 0.0, %v1052
      %v1054 = vpop.f32.mrb[0].mxu0
      %1055 = vdwg.mxu0
      %v1056 = vadd.f32 %v967, %v1053
      %v1057 = vld [vmem:[%s402 + $0x1] sm:$0xf]
      %s1058 = scalar_lea.vmem %s4, 896
      %v1059 = vld [vmem:[%s1058] sm:$0xff]
      %v1060 = vld [vmem:[%s1058 + $0x8] sm:$0xff]
      %v1061 = vld [vmem:[%s1058 + $0x10] sm:$0xff]
      %v1062 = vld [vmem:[%s1058 + $0x18] sm:$0xff]
      %v1063 = vld [vmem:[%s1058 + $0x20] sm:$0xff]
      %v1064 = vld [vmem:[%s1058 + $0x28] sm:$0xff]
      %v1065 = vld [vmem:[%s1058 + $0x30] sm:$0xff]
      %v1066 = vld [vmem:[%s1058 + $0x38] sm:$0xff]
      %v1067 = vld [vmem:[%s1058 + $0x40] sm:$0xff]
      %v1068 = vld [vmem:[%s1058 + $0x48] sm:$0xff]
      %v1069 = vld [vmem:[%s1058 + $0x50] sm:$0xff]
      %v1070 = vld [vmem:[%s1058 + $0x58] sm:$0xff]
      %v1071 = vld [vmem:[%s1058 + $0x60] sm:$0xff]
      %v1072 = vld [vmem:[%s1058 + $0x68] sm:$0xff]
      %v1073 = vld [vmem:[%s1058 + $0x70] sm:$0xff]
      %v1074 = vld [vmem:[%s1058 + $0x78] sm:$0xff]
      %1075 = vmatprep.subr.mxu0 0.0
      %1076 = vmatpush1.msra.mxu0 %v1059
      %1077 = vmatprep.subr.mxu0 0.0
      %1078 = vmatpush1.msra.mxu0 %v1060
      %1079 = vmatprep.subr.mxu0 0.0
      %1080 = vmatpush1.msra.mxu0 %v1061
      %1081 = vmatprep.subr.mxu0 0.0
      %1082 = vmatpush1.msra.mxu0 %v1062
      %1083 = vmatprep.subr.mxu0 0.0
      %1084 = vmatpush1.msra.mxu0 %v1063
      %1085 = vmatprep.subr.mxu0 0.0
      %1086 = vmatpush1.msra.mxu0 %v1064
      %1087 = vmatprep.subr.mxu0 0.0
      %1088 = vmatpush1.msra.mxu0 %v1065
      %1089 = vmatprep.subr.mxu0 0.0
      %1090 = vmatpush1.msra.mxu0 %v1066
      %1091 = vmatprep.subr.mxu0 0.0
      %1092 = vmatpush1.msra.mxu0 %v1067
      %1093 = vmatprep.subr.mxu0 0.0
      %1094 = vmatpush1.msra.mxu0 %v1068
      %1095 = vmatprep.subr.mxu0 0.0
      %1096 = vmatpush1.msra.mxu0 %v1069
      %1097 = vmatprep.subr.mxu0 0.0
      %1098 = vmatpush1.msra.mxu0 %v1070
      %1099 = vmatprep.subr.mxu0 0.0
      %1100 = vmatpush1.msra.mxu0 %v1071
      %1101 = vmatprep.subr.mxu0 0.0
      %1102 = vmatpush1.msra.mxu0 %v1072
      %1103 = vmatprep.subr.mxu0 0.0
      %1104 = vmatpush1.msra.mxu0 %v1073
      %1105 = vmatprep.subr.mxu0 0.0
      %1106 = vmatpush1.msra.mxu0 %v1074
      %1107 = vmatprep.subr.mxu0 0.0
      %1108 = vmatpush1.msra.mxu0 0.0
      %1109 = vmatprep.subr.mxu0 0.0
      %1110 = vmatpush1.msra.mxu0 0.0
      %1111 = vmatprep.subr.mxu0 0.0
      %1112 = vmatpush1.msra.mxu0 0.0
      %1113 = vmatprep.subr.mxu0 0.0
      %1114 = vmatpush1.msra.mxu0 0.0
      %1115 = vmatprep.subr.mxu0 0.0
      %1116 = vmatpush1.msra.mxu0 0.0
      %1117 = vmatprep.subr.mxu0 0.0
      %1118 = vmatpush1.msra.mxu0 0.0
      %1119 = vmatprep.subr.mxu0 0.0
      %1120 = vmatpush1.msra.mxu0 0.0
      %1121 = vmatprep.subr.mxu0 0.0
      %1122 = vmatpush1.msra.mxu0 0.0
      %1123 = vmatprep.subr.mxu0 0.0
      %1124 = vmatpush1.msra.mxu0 0.0
      %1125 = vmatprep.subr.mxu0 0.0
      %1126 = vmatpush1.msra.mxu0 0.0
      %1127 = vmatprep.subr.mxu0 0.0
      %1128 = vmatpush1.msra.mxu0 0.0
      %1129 = vmatprep.subr.mxu0 0.0
      %1130 = vmatpush1.msra.mxu0 0.0
      %1131 = vmatprep.subr.mxu0 0.0
      %1132 = vmatpush1.msra.mxu0 0.0
      %1133 = vmatprep.subr.mxu0 0.0
      %1134 = vmatpush1.msra.mxu0 0.0
      %1135 = vmatprep.subr.mxu0 0.0
      %1136 = vmatpush1.msra.mxu0 0.0
      %1137 = vmatprep.subr.mxu0 0.0
      %1138 = vmatpush1.msra.mxu0 0.0
      %1139 = vmatprep.mubr.f32.mxu0 0.0
      %1140 = vmatmul.mubr.f32.gmra.mrb[0].mxu0 %v1057
      %v1141 = vpop.f32.mrb[0].mxu0
      %v1142 = vadd.f32 0.0, %v1141
      %v1143 = vpop.f32.mrb[0].mxu0
      %1144 = vdwg.mxu0
      %v1145 = vadd.f32 %v1056, %v1142
      %v1146 = vld [vmem:[%s402 + $0x2] sm:$0xf]
      %s1147 = scalar_lea.vmem %s4, 1024
      %v1148 = vld [vmem:[%s1147] sm:$0xff]
      %v1149 = vld [vmem:[%s1147 + $0x8] sm:$0xff]
      %v1150 = vld [vmem:[%s1147 + $0x10] sm:$0xff]
      %v1151 = vld [vmem:[%s1147 + $0x18] sm:$0xff]
      %v1152 = vld [vmem:[%s1147 + $0x20] sm:$0xff]
      %v1153 = vld [vmem:[%s1147 + $0x28] sm:$0xff]
      %v1154 = vld [vmem:[%s1147 + $0x30] sm:$0xff]
      %v1155 = vld [vmem:[%s1147 + $0x38] sm:$0xff]
      %v1156 = vld [vmem:[%s1147 + $0x40] sm:$0xff]
      %v1157 = vld [vmem:[%s1147 + $0x48] sm:$0xff]
      %v1158 = vld [vmem:[%s1147 + $0x50] sm:$0xff]
      %v1159 = vld [vmem:[%s1147 + $0x58] sm:$0xff]
      %v1160 = vld [vmem:[%s1147 + $0x60] sm:$0xff]
      %v1161 = vld [vmem:[%s1147 + $0x68] sm:$0xff]
      %v1162 = vld [vmem:[%s1147 + $0x70] sm:$0xff]
      %v1163 = vld [vmem:[%s1147 + $0x78] sm:$0xff]
      %1164 = vmatprep.subr.mxu0 0.0
      %1165 = vmatpush1.msra.mxu0 %v1148
      %1166 = vmatprep.subr.mxu0 0.0
      %1167 = vmatpush1.msra.mxu0 %v1149
      %1168 = vmatprep.subr.mxu0 0.0
      %1169 = vmatpush1.msra.mxu0 %v1150
      %1170 = vmatprep.subr.mxu0 0.0
      %1171 = vmatpush1.msra.mxu0 %v1151
      %1172 = vmatprep.subr.mxu0 0.0
      %1173 = vmatpush1.msra.mxu0 %v1152
      %1174 = vmatprep.subr.mxu0 0.0
      %1175 = vmatpush1.msra.mxu0 %v1153
      %1176 = vmatprep.subr.mxu0 0.0
      %1177 = vmatpush1.msra.mxu0 %v1154
      %1178 = vmatprep.subr.mxu0 0.0
      %1179 = vmatpush1.msra.mxu0 %v1155
      %1180 = vmatprep.subr.mxu0 0.0
      %1181 = vmatpush1.msra.mxu0 %v1156
      %1182 = vmatprep.subr.mxu0 0.0
      %1183 = vmatpush1.msra.mxu0 %v1157
      %1184 = vmatprep.subr.mxu0 0.0
      %1185 = vmatpush1.msra.mxu0 %v1158
      %1186 = vmatprep.subr.mxu0 0.0
      %1187 = vmatpush1.msra.mxu0 %v1159
      %1188 = vmatprep.subr.mxu0 0.0
      %1189 = vmatpush1.msra.mxu0 %v1160
      %1190 = vmatprep.subr.mxu0 0.0
      %1191 = vmatpush1.msra.mxu0 %v1161
      %1192 = vmatprep.subr.mxu0 0.0
      %1193 = vmatpush1.msra.mxu0 %v1162
      %1194 = vmatprep.subr.mxu0 0.0
      %1195 = vmatpush1.msra.mxu0 %v1163
      %1196 = vmatprep.subr.mxu0 0.0
      %1197 = vmatpush1.msra.mxu0 0.0
      %1198 = vmatprep.subr.mxu0 0.0
      %1199 = vmatpush1.msra.mxu0 0.0
      %1200 = vmatprep.subr.mxu0 0.0
      %1201 = vmatpush1.msra.mxu0 0.0
      %1202 = vmatprep.subr.mxu0 0.0
      %1203 = vmatpush1.msra.mxu0 0.0
      %1204 = vmatprep.subr.mxu0 0.0
      %1205 = vmatpush1.msra.mxu0 0.0
      %1206 = vmatprep.subr.mxu0 0.0
      %1207 = vmatpush1.msra.mxu0 0.0
      %1208 = vmatprep.subr.mxu0 0.0
      %1209 = vmatpush1.msra.mxu0 0.0
      %1210 = vmatprep.subr.mxu0 0.0
      %1211 = vmatpush1.msra.mxu0 0.0
      %1212 = vmatprep.subr.mxu0 0.0
      %1213 = vmatpush1.msra.mxu0 0.0
      %1214 = vmatprep.subr.mxu0 0.0
      %1215 = vmatpush1.msra.mxu0 0.0
      %1216 = vmatprep.subr.mxu0 0.0
      %1217 = vmatpush1.msra.mxu0 0.0
      %1218 = vmatprep.subr.mxu0 0.0
      %1219 = vmatpush1.msra.mxu0 0.0
      %1220 = vmatprep.subr.mxu0 0.0
      %1221 = vmatpush1.msra.mxu0 0.0
      %1222 = vmatprep.subr.mxu0 0.0
      %1223 = vmatpush1.msra.mxu0 0.0
      %1224 = vmatprep.subr.mxu0 0.0
      %1225 = vmatpush1.msra.mxu0 0.0
      %1226 = vmatprep.subr.mxu0 0.0
      %1227 = vmatpush1.msra.mxu0 0.0
      %1228 = vmatprep.mubr.f32.mxu0 0.0
      %1229 = vmatmul.mubr.f32.gmra.mrb[0].mxu0 %v1146
      %v1230 = vpop.f32.mrb[0].mxu0
      %v1231 = vadd.f32 0.0, %v1230
      %v1232 = vpop.f32.mrb[0].mxu0
      %1233 = vdwg.mxu0
      %v1234 = vadd.f32 %v1145, %v1231
      %v1235 = vld [vmem:[%s5] sm:$0x1]
      %v1237 = vlaneseq
      %v1238 = vshrl.u32 %v1237, 7
      %v1239 = vsub.s32 0, %v1238
      %v1240 = vrot.slane %v1235, %v1239
      %v1242 = vadd.f32 %v1234, %v1240
      %v1243 = vmax.f32 %v1242, 0.0
      %1244 = vmatprep.subr.mxu0 0.0
      %1245 = vmatpush1.msra.mxu0 %v456
      %1246 = vmatprep.subr.mxu0 0.0
      %1247 = vmatpush1.msra.mxu0 %v457
      %1248 = vmatprep.subr.mxu0 0.0
      %1249 = vmatpush1.msra.mxu0 %v458
      %1250 = vmatprep.subr.mxu0 0.0
      %1251 = vmatpush1.msra.mxu0 %v459
      %1252 = vmatprep.subr.mxu0 0.0
      %1253 = vmatpush1.msra.mxu0 %v460
      %1254 = vmatprep.subr.mxu0 0.0
      %1255 = vmatpush1.msra.mxu0 %v461
      %1256 = vmatprep.subr.mxu0 0.0
      %1257 = vmatpush1.msra.mxu0 %v462
      %1258 = vmatprep.subr.mxu0 0.0
      %1259 = vmatpush1.msra.mxu0 %v463
      %1260 = vmatprep.subr.mxu0 0.0
      %1261 = vmatpush1.msra.mxu0 %v464
      %1262 = vmatprep.subr.mxu0 0.0
      %1263 = vmatpush1.msra.mxu0 %v465
      %1264 = vmatprep.subr.mxu0 0.0
      %1265 = vmatpush1.msra.mxu0 %v466
      %1266 = vmatprep.subr.mxu0 0.0
      %1267 = vmatpush1.msra.mxu0 %v467
      %1268 = vmatprep.subr.mxu0 0.0
      %1269 = vmatpush1.msra.mxu0 %v468
      %1270 = vmatprep.subr.mxu0 0.0
      %1271 = vmatpush1.msra.mxu0 %v469
      %1272 = vmatprep.subr.mxu0 0.0
      %1273 = vmatpush1.msra.mxu0 %v470
      %1274 = vmatprep.subr.mxu0 0.0
      %1275 = vmatpush1.msra.mxu0 %v471
      %1276 = vmatprep.subr.mxu0 0.0
      %1277 = vmatpush1.msra.mxu0 0.0
      %1278 = vmatprep.subr.mxu0 0.0
      %1279 = vmatpush1.msra.mxu0 0.0
      %1280 = vmatprep.subr.mxu0 0.0
      %1281 = vmatpush1.msra.mxu0 0.0
      %1282 = vmatprep.subr.mxu0 0.0
      %1283 = vmatpush1.msra.mxu0 0.0
      %1284 = vmatprep.subr.mxu0 0.0
      %1285 = vmatpush1.msra.mxu0 0.0
      %1286 = vmatprep.subr.mxu0 0.0
      %1287 = vmatpush1.msra.mxu0 0.0
      %1288 = vmatprep.subr.mxu0 0.0
      %1289 = vmatpush1.msra.mxu0 0.0
      %1290 = vmatprep.subr.mxu0 0.0
      %1291 = vmatpush1.msra.mxu0 0.0
      %1292 = vmatprep.subr.mxu0 0.0
      %1293 = vmatpush1.msra.mxu0 0.0
      %1294 = vmatprep.subr.mxu0 0.0
      %1295 = vmatpush1.msra.mxu0 0.0
      %1296 = vmatprep.subr.mxu0 0.0
      %1297 = vmatpush1.msra.mxu0 0.0
      %1298 = vmatprep.subr.mxu0 0.0
      %1299 = vmatpush1.msra.mxu0 0.0
      %1300 = vmatprep.subr.mxu0 0.0
      %1301 = vmatpush1.msra.mxu0 0.0
      %1302 = vmatprep.subr.mxu0 0.0
      %1303 = vmatpush1.msra.mxu0 0.0
      %1304 = vmatprep.subr.mxu0 0.0
      %1305 = vmatpush1.msra.mxu0 0.0
      %1306 = vmatprep.subr.mxu0 0.0
      %1307 = vmatpush1.msra.mxu0 0.0
      %1308 = vmatprep.mubr.f32.mxu0 0.0
      %1309 = vmatmul.mubr.f32.gmra.mrb[0].mxu0 %v790
      %v1310 = vpop.f32.mrb[0].mxu0
      %v1311 = vadd.f32 0.0, %v1310
      %v1312 = vpop.f32.mrb[0].mxu0
      %1313 = vdwg.mxu0
      %1314 = vmatprep.subr.mxu0 0.0
      %1315 = vmatpush1.msra.mxu0 %v438
      %1316 = vmatprep.subr.mxu0 0.0
      %1317 = vmatpush1.msra.mxu0 %v439
      %1318 = vmatprep.subr.mxu0 0.0
      %1319 = vmatpush1.msra.mxu0 %v440
      %1320 = vmatprep.subr.mxu0 0.0
      %1321 = vmatpush1.msra.mxu0 %v441
      %1322 = vmatprep.subr.mxu0 0.0
      %1323 = vmatpush1.msra.mxu0 %v442
      %1324 = vmatprep.subr.mxu0 0.0
      %1325 = vmatpush1.msra.mxu0 %v443
      %1326 = vmatprep.subr.mxu0 0.0
      %1327 = vmatpush1.msra.mxu0 %v444
      %1328 = vmatprep.subr.mxu0 0.0
      %1329 = vmatpush1.msra.mxu0 %v445
      %1330 = vmatprep.subr.mxu0 0.0
      %1331 = vmatpush1.msra.mxu0 %v446
      %1332 = vmatprep.subr.mxu0 0.0
      %1333 = vmatpush1.msra.mxu0 %v447
      %1334 = vmatprep.subr.mxu0 0.0
      %1335 = vmatpush1.msra.mxu0 %v448
      %1336 = vmatprep.subr.mxu0 0.0
      %1337 = vmatpush1.msra.mxu0 %v449
      %1338 = vmatprep.subr.mxu0 0.0
      %1339 = vmatpush1.msra.mxu0 %v450
      %1340 = vmatprep.subr.mxu0 0.0
      %1341 = vmatpush1.msra.mxu0 %v451
      %1342 = vmatprep.subr.mxu0 0.0
      %1343 = vmatpush1.msra.mxu0 %v452
      %1344 = vmatprep.subr.mxu0 0.0
      %1345 = vmatpush1.msra.mxu0 %v453
      %1346 = vmatprep.subr.mxu0 0.0
      %1347 = vmatpush1.msra.mxu0 0.0
      %1348 = vmatprep.subr.mxu0 0.0
      %1349 = vmatpush1.msra.mxu0 0.0
      %1350 = vmatprep.subr.mxu0 0.0
      %1351 = vmatpush1.msra.mxu0 0.0
      %1352 = vmatprep.subr.mxu0 0.0
      %1353 = vmatpush1.msra.mxu0 0.0
      %1354 = vmatprep.subr.mxu0 0.0
      %1355 = vmatpush1.msra.mxu0 0.0
      %1356 = vmatprep.subr.mxu0 0.0
      %1357 = vmatpush1.msra.mxu0 0.0
      %1358 = vmatprep.subr.mxu0 0.0
      %1359 = vmatpush1.msra.mxu0 0.0
      %1360 = vmatprep.subr.mxu0 0.0
      %1361 = vmatpush1.msra.mxu0 0.0
      %1362 = vmatprep.subr.mxu0 0.0
      %1363 = vmatpush1.msra.mxu0 0.0
      %1364 = vmatprep.subr.mxu0 0.0
      %1365 = vmatpush1.msra.mxu0 0.0
      %1366 = vmatprep.subr.mxu0 0.0
      %1367 = vmatpush1.msra.mxu0 0.0
      %1368 = vmatprep.subr.mxu0 0.0
      %1369 = vmatpush1.msra.mxu0 0.0
      %1370 = vmatprep.subr.mxu0 0.0
      %1371 = vmatpush1.msra.mxu0 0.0
      %1372 = vmatprep.subr.mxu0 0.0
      %1373 = vmatpush1.msra.mxu0 0.0
      %1374 = vmatprep.subr.mxu0 0.0
      %1375 = vmatpush1.msra.mxu0 0.0
      %1376 = vmatprep.subr.mxu0 0.0
      %1377 = vmatpush1.msra.mxu0 0.0
      %1378 = vmatprep.mubr.f32.mxu0 0.0
      %1379 = vmatmul.mubr.f32.gmra.mrb[0].mxu0 %v701
      %v1380 = vpop.f32.mrb[0].mxu0
      %v1381 = vadd.f32 %v1311, %v1380
      %v1382 = vpop.f32.mrb[0].mxu0
      %1383 = vdwg.mxu0
      %1384 = vmatprep.subr.mxu0 0.0
      %1385 = vmatpush1.msra.mxu0 %v614
      %1386 = vmatprep.subr.mxu0 0.0
      %1387 = vmatpush1.msra.mxu0 %v615
      %1388 = vmatprep.subr.mxu0 0.0
      %1389 = vmatpush1.msra.mxu0 %v616
      %1390 = vmatprep.subr.mxu0 0.0
      %1391 = vmatpush1.msra.mxu0 %v617
      %1392 = vmatprep.subr.mxu0 0.0
      %1393 = vmatpush1.msra.mxu0 %v618
      %1394 = vmatprep.subr.mxu0 0.0
      %1395 = vmatpush1.msra.mxu0 %v619
      %1396 = vmatprep.subr.mxu0 0.0
      %1397 = vmatpush1.msra.mxu0 %v620
      %1398 = vmatprep.subr.mxu0 0.0
      %1399 = vmatpush1.msra.mxu0 %v621
      %1400 = vmatprep.subr.mxu0 0.0
      %1401 = vmatpush1.msra.mxu0 %v622
      %1402 = vmatprep.subr.mxu0 0.0
      %1403 = vmatpush1.msra.mxu0 %v623
      %1404 = vmatprep.subr.mxu0 0.0
      %1405 = vmatpush1.msra.mxu0 %v624
      %1406 = vmatprep.subr.mxu0 0.0
      %1407 = vmatpush1.msra.mxu0 %v625
      %1408 = vmatprep.subr.mxu0 0.0
      %1409 = vmatpush1.msra.mxu0 %v626
      %1410 = vmatprep.subr.mxu0 0.0
      %1411 = vmatpush1.msra.mxu0 %v627
      %1412 = vmatprep.subr.mxu0 0.0
      %1413 = vmatpush1.msra.mxu0 %v628
      %1414 = vmatprep.subr.mxu0 0.0
      %1415 = vmatpush1.msra.mxu0 %v629
      %1416 = vmatprep.subr.mxu0 0.0
      %1417 = vmatpush1.msra.mxu0 0.0
      %1418 = vmatprep.subr.mxu0 0.0
      %1419 = vmatpush1.msra.mxu0 0.0
      %1420 = vmatprep.subr.mxu0 0.0
      %1421 = vmatpush1.msra.mxu0 0.0
      %1422 = vmatprep.subr.mxu0 0.0
      %1423 = vmatpush1.msra.mxu0 0.0
      %1424 = vmatprep.subr.mxu0 0.0
      %1425 = vmatpush1.msra.mxu0 0.0
      %1426 = vmatprep.subr.mxu0 0.0
      %1427 = vmatpush1.msra.mxu0 0.0
      %1428 = vmatprep.subr.mxu0 0.0
      %1429 = vmatpush1.msra.mxu0 0.0
      %1430 = vmatprep.subr.mxu0 0.0
      %1431 = vmatpush1.msra.mxu0 0.0
      %1432 = vmatprep.subr.mxu0 0.0
      %1433 = vmatpush1.msra.mxu0 0.0
      %1434 = vmatprep.subr.mxu0 0.0
      %1435 = vmatpush1.msra.mxu0 0.0
      %1436 = vmatprep.subr.mxu0 0.0
      %1437 = vmatpush1.msra.mxu0 0.0
      %1438 = vmatprep.subr.mxu0 0.0
      %1439 = vmatpush1.msra.mxu0 0.0
      %1440 = vmatprep.subr.mxu0 0.0
      %1441 = vmatpush1.msra.mxu0 0.0
      %1442 = vmatprep.subr.mxu0 0.0
      %1443 = vmatpush1.msra.mxu0 0.0
      %1444 = vmatprep.subr.mxu0 0.0
      %1445 = vmatpush1.msra.mxu0 0.0
      %1446 = vmatprep.subr.mxu0 0.0
      %1447 = vmatpush1.msra.mxu0 0.0
      %1448 = vmatprep.mubr.f32.mxu0 0.0
      %1449 = vmatmul.mubr.f32.gmra.mrb[0].mxu0 %v879
      %v1450 = vpop.f32.mrb[0].mxu0
      %v1451 = vadd.f32 0.0, %v1450
      %v1452 = vpop.f32.mrb[0].mxu0
      %1453 = vdwg.mxu0
      %v1454 = vadd.f32 %v1381, %v1451
      %1455 = vmatprep.subr.mxu0 0.0
      %1456 = vmatpush1.msra.mxu0 %v703
      %1457 = vmatprep.subr.mxu0 0.0
      %1458 = vmatpush1.msra.mxu0 %v704
      %1459 = vmatprep.subr.mxu0 0.0
      %1460 = vmatpush1.msra.mxu0 %v705
      %1461 = vmatprep.subr.mxu0 0.0
      %1462 = vmatpush1.msra.mxu0 %v706
      %1463 = vmatprep.subr.mxu0 0.0
      %1464 = vmatpush1.msra.mxu0 %v707
      %1465 = vmatprep.subr.mxu0 0.0
      %1466 = vmatpush1.msra.mxu0 %v708
      %1467 = vmatprep.subr.mxu0 0.0
      %1468 = vmatpush1.msra.mxu0 %v709
      %1469 = vmatprep.subr.mxu0 0.0
      %1470 = vmatpush1.msra.mxu0 %v710
      %1471 = vmatprep.subr.mxu0 0.0
      %1472 = vmatpush1.msra.mxu0 %v711
      %1473 = vmatprep.subr.mxu0 0.0
      %1474 = vmatpush1.msra.mxu0 %v712
      %1475 = vmatprep.subr.mxu0 0.0
      %1476 = vmatpush1.msra.mxu0 %v713
      %1477 = vmatprep.subr.mxu0 0.0
      %1478 = vmatpush1.msra.mxu0 %v714
      %1479 = vmatprep.subr.mxu0 0.0
      %1480 = vmatpush1.msra.mxu0 %v715
      %1481 = vmatprep.subr.mxu0 0.0
      %1482 = vmatpush1.msra.mxu0 %v716
      %1483 = vmatprep.subr.mxu0 0.0
      %1484 = vmatpush1.msra.mxu0 %v717
      %1485 = vmatprep.subr.mxu0 0.0
      %1486 = vmatpush1.msra.mxu0 %v718
      %1487 = vmatprep.subr.mxu0 0.0
      %1488 = vmatpush1.msra.mxu0 0.0
      %1489 = vmatprep.subr.mxu0 0.0
      %1490 = vmatpush1.msra.mxu0 0.0
      %1491 = vmatprep.subr.mxu0 0.0
      %1492 = vmatpush1.msra.mxu0 0.0
      %1493 = vmatprep.subr.mxu0 0.0
      %1494 = vmatpush1.msra.mxu0 0.0
      %1495 = vmatprep.subr.mxu0 0.0
      %1496 = vmatpush1.msra.mxu0 0.0
      %1497 = vmatprep.subr.mxu0 0.0
      %1498 = vmatpush1.msra.mxu0 0.0
      %1499 = vmatprep.subr.mxu0 0.0
      %1500 = vmatpush1.msra.mxu0 0.0
      %1501 = vmatprep.subr.mxu0 0.0
      %1502 = vmatpush1.msra.mxu0 0.0
      %1503 = vmatprep.subr.mxu0 0.0
      %1504 = vmatpush1.msra.mxu0 0.0
      %1505 = vmatprep.subr.mxu0 0.0
      %1506 = vmatpush1.msra.mxu0 0.0
      %1507 = vmatprep.subr.mxu0 0.0
      %1508 = vmatpush1.msra.mxu0 0.0
      %1509 = vmatprep.subr.mxu0 0.0
      %1510 = vmatpush1.msra.mxu0 0.0
      %1511 = vmatprep.subr.mxu0 0.0
      %1512 = vmatpush1.msra.mxu0 0.0
      %1513 = vmatprep.subr.mxu0 0.0
      %1514 = vmatpush1.msra.mxu0 0.0
      %1515 = vmatprep.subr.mxu0 0.0
      %1516 = vmatpush1.msra.mxu0 0.0
      %1517 = vmatprep.subr.mxu0 0.0
      %1518 = vmatpush1.msra.mxu0 0.0
      %1519 = vmatprep.mubr.f32.mxu0 0.0
      %1520 = vmatmul.mubr.f32.gmra.mrb[0].mxu0 %v968
      %v1521 = vpop.f32.mrb[0].mxu0
      %v1522 = vadd.f32 0.0, %v1521
      %v1523 = vpop.f32.mrb[0].mxu0
      %1524 = vdwg.mxu0
      %v1525 = vadd.f32 %v1454, %v1522
      %1526 = vmatprep.subr.mxu0 0.0
      %1527 = vmatpush1.msra.mxu0 %v792
      %1528 = vmatprep.subr.mxu0 0.0
      %1529 = vmatpush1.msra.mxu0 %v793
      %1530 = vmatprep.subr.mxu0 0.0
      %1531 = vmatpush1.msra.mxu0 %v794
      %1532 = vmatprep.subr.mxu0 0.0
      %1533 = vmatpush1.msra.mxu0 %v795
      %1534 = vmatprep.subr.mxu0 0.0
      %1535 = vmatpush1.msra.mxu0 %v796
      %1536 = vmatprep.subr.mxu0 0.0
      %1537 = vmatpush1.msra.mxu0 %v797
      %1538 = vmatprep.subr.mxu0 0.0
      %1539 = vmatpush1.msra.mxu0 %v798
      %1540 = vmatprep.subr.mxu0 0.0
      %1541 = vmatpush1.msra.mxu0 %v799
      %1542 = vmatprep.subr.mxu0 0.0
      %1543 = vmatpush1.msra.mxu0 %v800
      %1544 = vmatprep.subr.mxu0 0.0
      %1545 = vmatpush1.msra.mxu0 %v801
      %1546 = vmatprep.subr.mxu0 0.0
      %1547 = vmatpush1.msra.mxu0 %v802
      %1548 = vmatprep.subr.mxu0 0.0
      %1549 = vmatpush1.msra.mxu0 %v803
      %1550 = vmatprep.subr.mxu0 0.0
      %1551 = vmatpush1.msra.mxu0 %v804
      %1552 = vmatprep.subr.mxu0 0.0
      %1553 = vmatpush1.msra.mxu0 %v805
      %1554 = vmatprep.subr.mxu0 0.0
      %1555 = vmatpush1.msra.mxu0 %v806
      %1556 = vmatprep.subr.mxu0 0.0
      %1557 = vmatpush1.msra.mxu0 %v807
      %1558 = vmatprep.subr.mxu0 0.0
      %1559 = vmatpush1.msra.mxu0 0.0
      %1560 = vmatprep.subr.mxu0 0.0
      %1561 = vmatpush1.msra.mxu0 0.0
      %1562 = vmatprep.subr.mxu0 0.0
      %1563 = vmatpush1.msra.mxu0 0.0
      %1564 = vmatprep.subr.mxu0 0.0
      %1565 = vmatpush1.msra.mxu0 0.0
      %1566 = vmatprep.subr.mxu0 0.0
      %1567 = vmatpush1.msra.mxu0 0.0
      %1568 = vmatprep.subr.mxu0 0.0
      %1569 = vmatpush1.msra.mxu0 0.0
      %1570 = vmatprep.subr.mxu0 0.0
      %1571 = vmatpush1.msra.mxu0 0.0
      %1572 = vmatprep.subr.mxu0 0.0
      %1573 = vmatpush1.msra.mxu0 0.0
      %1574 = vmatprep.subr.mxu0 0.0
      %1575 = vmatpush1.msra.mxu0 0.0
      %1576 = vmatprep.subr.mxu0 0.0
      %1577 = vmatpush1.msra.mxu0 0.0
      %1578 = vmatprep.subr.mxu0 0.0
      %1579 = vmatpush1.msra.mxu0 0.0
      %1580 = vmatprep.subr.mxu0 0.0
      %1581 = vmatpush1.msra.mxu0 0.0
      %1582 = vmatprep.subr.mxu0 0.0
      %1583 = vmatpush1.msra.mxu0 0.0
      %1584 = vmatprep.subr.mxu0 0.0
      %1585 = vmatpush1.msra.mxu0 0.0
      %1586 = vmatprep.subr.mxu0 0.0
      %1587 = vmatpush1.msra.mxu0 0.0
      %1588 = vmatprep.subr.mxu0 0.0
      %1589 = vmatpush1.msra.mxu0 0.0
      %1590 = vmatprep.mubr.f32.mxu0 0.0
      %1591 = vmatmul.mubr.f32.gmra.mrb[0].mxu0 %v1057
      %v1592 = vpop.f32.mrb[0].mxu0
      %v1593 = vadd.f32 0.0, %v1592
      %v1594 = vpop.f32.mrb[0].mxu0
      %1595 = vdwg.mxu0
      %v1596 = vadd.f32 %v1525, %v1593
      %1597 = vmatprep.subr.mxu0 0.0
      %1598 = vmatpush1.msra.mxu0 %v881
      %1599 = vmatprep.subr.mxu0 0.0
      %1600 = vmatpush1.msra.mxu0 %v882
      %1601 = vmatprep.subr.mxu0 0.0
      %1602 = vmatpush1.msra.mxu0 %v883
      %1603 = vmatprep.subr.mxu0 0.0
      %1604 = vmatpush1.msra.mxu0 %v884
      %1605 = vmatprep.subr.mxu0 0.0
      %1606 = vmatpush1.msra.mxu0 %v885
      %1607 = vmatprep.subr.mxu0 0.0
      %1608 = vmatpush1.msra.mxu0 %v886
      %1609 = vmatprep.subr.mxu0 0.0
      %1610 = vmatpush1.msra.mxu0 %v887
      %1611 = vmatprep.subr.mxu0 0.0
      %1612 = vmatpush1.msra.mxu0 %v888
      %1613 = vmatprep.subr.mxu0 0.0
      %1614 = vmatpush1.msra.mxu0 %v889
      %1615 = vmatprep.subr.mxu0 0.0
      %1616 = vmatpush1.msra.mxu0 %v890
      %1617 = vmatprep.subr.mxu0 0.0
      %1618 = vmatpush1.msra.mxu0 %v891
      %1619 = vmatprep.subr.mxu0 0.0
      %1620 = vmatpush1.msra.mxu0 %v892
      %1621 = vmatprep.subr.mxu0 0.0
      %1622 = vmatpush1.msra.mxu0 %v893
      %1623 = vmatprep.subr.mxu0 0.0
      %1624 = vmatpush1.msra.mxu0 %v894
      %1625 = vmatprep.subr.mxu0 0.0
      %1626 = vmatpush1.msra.mxu0 %v895
      %1627 = vmatprep.subr.mxu0 0.0
      %1628 = vmatpush1.msra.mxu0 %v896
      %1629 = vmatprep.subr.mxu0 0.0
      %1630 = vmatpush1.msra.mxu0 0.0
      %1631 = vmatprep.subr.mxu0 0.0
      %1632 = vmatpush1.msra.mxu0 0.0
      %1633 = vmatprep.subr.mxu0 0.0
      %1634 = vmatpush1.msra.mxu0 0.0
      %1635 = vmatprep.subr.mxu0 0.0
      %1636 = vmatpush1.msra.mxu0 0.0
      %1637 = vmatprep.subr.mxu0 0.0
      %1638 = vmatpush1.msra.mxu0 0.0
      %1639 = vmatprep.subr.mxu0 0.0
      %1640 = vmatpush1.msra.mxu0 0.0
      %1641 = vmatprep.subr.mxu0 0.0
      %1642 = vmatpush1.msra.mxu0 0.0
      %1643 = vmatprep.subr.mxu0 0.0
      %1644 = vmatpush1.msra.mxu0 0.0
      %1645 = vmatprep.subr.mxu0 0.0
      %1646 = vmatpush1.msra.mxu0 0.0
      %1647 = vmatprep.subr.mxu0 0.0
      %1648 = vmatpush1.msra.mxu0 0.0
      %1649 = vmatprep.subr.mxu0 0.0
      %1650 = vmatpush1.msra.mxu0 0.0
      %1651 = vmatprep.subr.mxu0 0.0
      %1652 = vmatpush1.msra.mxu0 0.0
      %1653 = vmatprep.subr.mxu0 0.0
      %1654 = vmatpush1.msra.mxu0 0.0
      %1655 = vmatprep.subr.mxu0 0.0
      %1656 = vmatpush1.msra.mxu0 0.0
      %1657 = vmatprep.subr.mxu0 0.0
      %1658 = vmatpush1.msra.mxu0 0.0
      %1659 = vmatprep.subr.mxu0 0.0
      %1660 = vmatpush1.msra.mxu0 0.0
      %1661 = vmatprep.mubr.f32.mxu0 0.0
      %1662 = vmatmul.mubr.f32.gmra.mrb[0].mxu0 %v1146
      %v1663 = vpop.f32.mrb[0].mxu0
      %v1664 = vadd.f32 0.0, %v1663
      %v1665 = vpop.f32.mrb[0].mxu0
      %1666 = vdwg.mxu0
      %v1667 = vadd.f32 %v1596, %v1664
      %v1668 = vld [vmem:[%s414] sm:$0xf]
      %1669 = vmatprep.subr.mxu0 0.0
      %1670 = vmatpush1.msra.mxu0 %v970
      %1671 = vmatprep.subr.mxu0 0.0
      %1672 = vmatpush1.msra.mxu0 %v971
      %1673 = vmatprep.subr.mxu0 0.0
      %1674 = vmatpush1.msra.mxu0 %v972
      %1675 = vmatprep.subr.mxu0 0.0
      %1676 = vmatpush1.msra.mxu0 %v973
      %1677 = vmatprep.subr.mxu0 0.0
      %1678 = vmatpush1.msra.mxu0 %v974
      %1679 = vmatprep.subr.mxu0 0.0
      %1680 = vmatpush1.msra.mxu0 %v975
      %1681 = vmatprep.subr.mxu0 0.0
      %1682 = vmatpush1.msra.mxu0 %v976
      %1683 = vmatprep.subr.mxu0 0.0
      %1684 = vmatpush1.msra.mxu0 %v977
      %1685 = vmatprep.subr.mxu0 0.0
      %1686 = vmatpush1.msra.mxu0 %v978
      %1687 = vmatprep.subr.mxu0 0.0
      %1688 = vmatpush1.msra.mxu0 %v979
      %1689 = vmatprep.subr.mxu0 0.0
      %1690 = vmatpush1.msra.mxu0 %v980
      %1691 = vmatprep.subr.mxu0 0.0
      %1692 = vmatpush1.msra.mxu0 %v981
      %1693 = vmatprep.subr.mxu0 0.0
      %1694 = vmatpush1.msra.mxu0 %v982
      %1695 = vmatprep.subr.mxu0 0.0
      %1696 = vmatpush1.msra.mxu0 %v983
      %1697 = vmatprep.subr.mxu0 0.0
      %1698 = vmatpush1.msra.mxu0 %v984
      %1699 = vmatprep.subr.mxu0 0.0
      %1700 = vmatpush1.msra.mxu0 %v985
      %1701 = vmatprep.subr.mxu0 0.0
      %1702 = vmatpush1.msra.mxu0 0.0
      %1703 = vmatprep.subr.mxu0 0.0
      %1704 = vmatpush1.msra.mxu0 0.0
      %1705 = vmatprep.subr.mxu0 0.0
      %1706 = vmatpush1.msra.mxu0 0.0
      %1707 = vmatprep.subr.mxu0 0.0
      %1708 = vmatpush1.msra.mxu0 0.0
      %1709 = vmatprep.subr.mxu0 0.0
      %1710 = vmatpush1.msra.mxu0 0.0
      %1711 = vmatprep.subr.mxu0 0.0
      %1712 = vmatpush1.msra.mxu0 0.0
      %1713 = vmatprep.subr.mxu0 0.0
      %1714 = vmatpush1.msra.mxu0 0.0
      %1715 = vmatprep.subr.mxu0 0.0
      %1716 = vmatpush1.msra.mxu0 0.0
      %1717 = vmatprep.subr.mxu0 0.0
      %1718 = vmatpush1.msra.mxu0 0.0
      %1719 = vmatprep.subr.mxu0 0.0
      %1720 = vmatpush1.msra.mxu0 0.0
      %1721 = vmatprep.subr.mxu0 0.0
      %1722 = vmatpush1.msra.mxu0 0.0
      %1723 = vmatprep.subr.mxu0 0.0
      %1724 = vmatpush1.msra.mxu0 0.0
      %1725 = vmatprep.subr.mxu0 0.0
      %1726 = vmatpush1.msra.mxu0 0.0
      %1727 = vmatprep.subr.mxu0 0.0
      %1728 = vmatpush1.msra.mxu0 0.0
      %1729 = vmatprep.subr.mxu0 0.0
      %1730 = vmatpush1.msra.mxu0 0.0
      %1731 = vmatprep.subr.mxu0 0.0
      %1732 = vmatpush1.msra.mxu0 0.0
      %1733 = vmatprep.mubr.f32.mxu0 0.0
      %1734 = vmatmul.mubr.f32.gmra.mrb[0].mxu0 %v1668
      %v1735 = vpop.f32.mrb[0].mxu0
      %v1736 = vadd.f32 0.0, %v1735
      %v1737 = vpop.f32.mrb[0].mxu0
      %1738 = vdwg.mxu0
      %v1739 = vadd.f32 %v1667, %v1736
      %v1740 = vld [vmem:[%s414 + $0x1] sm:$0xf]
      %1741 = vmatprep.subr.mxu0 0.0
      %1742 = vmatpush1.msra.mxu0 %v1059
      %1743 = vmatprep.subr.mxu0 0.0
      %1744 = vmatpush1.msra.mxu0 %v1060
      %1745 = vmatprep.subr.mxu0 0.0
      %1746 = vmatpush1.msra.mxu0 %v1061
      %1747 = vmatprep.subr.mxu0 0.0
      %1748 = vmatpush1.msra.mxu0 %v1062
      %1749 = vmatprep.subr.mxu0 0.0
      %1750 = vmatpush1.msra.mxu0 %v1063
      %1751 = vmatprep.subr.mxu0 0.0
      %1752 = vmatpush1.msra.mxu0 %v1064
      %1753 = vmatprep.subr.mxu0 0.0
      %1754 = vmatpush1.msra.mxu0 %v1065
      %1755 = vmatprep.subr.mxu0 0.0
      %1756 = vmatpush1.msra.mxu0 %v1066
      %1757 = vmatprep.subr.mxu0 0.0
      %1758 = vmatpush1.msra.mxu0 %v1067
      %1759 = vmatprep.subr.mxu0 0.0
      %1760 = vmatpush1.msra.mxu0 %v1068
      %1761 = vmatprep.subr.mxu0 0.0
      %1762 = vmatpush1.msra.mxu0 %v1069
      %1763 = vmatprep.subr.mxu0 0.0
      %1764 = vmatpush1.msra.mxu0 %v1070
      %1765 = vmatprep.subr.mxu0 0.0
      %1766 = vmatpush1.msra.mxu0 %v1071
      %1767 = vmatprep.subr.mxu0 0.0
      %1768 = vmatpush1.msra.mxu0 %v1072
      %1769 = vmatprep.subr.mxu0 0.0
      %1770 = vmatpush1.msra.mxu0 %v1073
      %1771 = vmatprep.subr.mxu0 0.0
      %1772 = vmatpush1.msra.mxu0 %v1074
      %1773 = vmatprep.subr.mxu0 0.0
      %1774 = vmatpush1.msra.mxu0 0.0
      %1775 = vmatprep.subr.mxu0 0.0
      %1776 = vmatpush1.msra.mxu0 0.0
      %1777 = vmatprep.subr.mxu0 0.0
      %1778 = vmatpush1.msra.mxu0 0.0
      %1779 = vmatprep.subr.mxu0 0.0
      %1780 = vmatpush1.msra.mxu0 0.0
      %1781 = vmatprep.subr.mxu0 0.0
      %1782 = vmatpush1.msra.mxu0 0.0
      %1783 = vmatprep.subr.mxu0 0.0
      %1784 = vmatpush1.msra.mxu0 0.0
      %1785 = vmatprep.subr.mxu0 0.0
      %1786 = vmatpush1.msra.mxu0 0.0
      %1787 = vmatprep.subr.mxu0 0.0
      %1788 = vmatpush1.msra.mxu0 0.0
      %1789 = vmatprep.subr.mxu0 0.0
      %1790 = vmatpush1.msra.mxu0 0.0
      %1791 = vmatprep.subr.mxu0 0.0
      %1792 = vmatpush1.msra.mxu0 0.0
      %1793 = vmatprep.subr.mxu0 0.0
      %1794 = vmatpush1.msra.mxu0 0.0
      %1795 = vmatprep.subr.mxu0 0.0
      %1796 = vmatpush1.msra.mxu0 0.0
      %1797 = vmatprep.subr.mxu0 0.0
      %1798 = vmatpush1.msra.mxu0 0.0
      %1799 = vmatprep.subr.mxu0 0.0
      %1800 = vmatpush1.msra.mxu0 0.0
      %1801 = vmatprep.subr.mxu0 0.0
      %1802 = vmatpush1.msra.mxu0 0.0
      %1803 = vmatprep.subr.mxu0 0.0
      %1804 = vmatpush1.msra.mxu0 0.0
      %1805 = vmatprep.mubr.f32.mxu0 0.0
      %1806 = vmatmul.mubr.f32.gmra.mrb[0].mxu0 %v1740
      %v1807 = vpop.f32.mrb[0].mxu0
      %v1808 = vadd.f32 0.0, %v1807
      %v1809 = vpop.f32.mrb[0].mxu0
      %1810 = vdwg.mxu0
      %v1811 = vadd.f32 %v1739, %v1808
      %v1812 = vld [vmem:[%s414 + $0x2] sm:$0xf]
      %1813 = vmatprep.subr.mxu0 0.0
      %1814 = vmatpush1.msra.mxu0 %v1148
      %1815 = vmatprep.subr.mxu0 0.0
      %1816 = vmatpush1.msra.mxu0 %v1149
      %1817 = vmatprep.subr.mxu0 0.0
      %1818 = vmatpush1.msra.mxu0 %v1150
      %1819 = vmatprep.subr.mxu0 0.0
      %1820 = vmatpush1.msra.mxu0 %v1151
      %1821 = vmatprep.subr.mxu0 0.0
      %1822 = vmatpush1.msra.mxu0 %v1152
      %1823 = vmatprep.subr.mxu0 0.0
      %1824 = vmatpush1.msra.mxu0 %v1153
      %1825 = vmatprep.subr.mxu0 0.0
      %1826 = vmatpush1.msra.mxu0 %v1154
      %1827 = vmatprep.subr.mxu0 0.0
      %1828 = vmatpush1.msra.mxu0 %v1155
      %1829 = vmatprep.subr.mxu0 0.0
      %1830 = vmatpush1.msra.mxu0 %v1156
      %1831 = vmatprep.subr.mxu0 0.0
      %1832 = vmatpush1.msra.mxu0 %v1157
      %1833 = vmatprep.subr.mxu0 0.0
      %1834 = vmatpush1.msra.mxu0 %v1158
      %1835 = vmatprep.subr.mxu0 0.0
      %1836 = vmatpush1.msra.mxu0 %v1159
      %1837 = vmatprep.subr.mxu0 0.0
      %1838 = vmatpush1.msra.mxu0 %v1160
      %1839 = vmatprep.subr.mxu0 0.0
      %1840 = vmatpush1.msra.mxu0 %v1161
      %1841 = vmatprep.subr.mxu0 0.0
      %1842 = vmatpush1.msra.mxu0 %v1162
      %1843 = vmatprep.subr.mxu0 0.0
      %1844 = vmatpush1.msra.mxu0 %v1163
      %1845 = vmatprep.subr.mxu0 0.0
      %1846 = vmatpush1.msra.mxu0 0.0
      %1847 = vmatprep.subr.mxu0 0.0
      %1848 = vmatpush1.msra.mxu0 0.0
      %1849 = vmatprep.subr.mxu0 0.0
      %1850 = vmatpush1.msra.mxu0 0.0
      %1851 = vmatprep.subr.mxu0 0.0
      %1852 = vmatpush1.msra.mxu0 0.0
      %1853 = vmatprep.subr.mxu0 0.0
      %1854 = vmatpush1.msra.mxu0 0.0
      %1855 = vmatprep.subr.mxu0 0.0
      %1856 = vmatpush1.msra.mxu0 0.0
      %1857 = vmatprep.subr.mxu0 0.0
      %1858 = vmatpush1.msra.mxu0 0.0
      %1859 = vmatprep.subr.mxu0 0.0
      %1860 = vmatpush1.msra.mxu0 0.0
      %1861 = vmatprep.subr.mxu0 0.0
      %1862 = vmatpush1.msra.mxu0 0.0
      %1863 = vmatprep.subr.mxu0 0.0
      %1864 = vmatpush1.msra.mxu0 0.0
      %1865 = vmatprep.subr.mxu0 0.0
      %1866 = vmatpush1.msra.mxu0 0.0
      %1867 = vmatprep.subr.mxu0 0.0
      %1868 = vmatpush1.msra.mxu0 0.0
      %1869 = vmatprep.subr.mxu0 0.0
      %1870 = vmatpush1.msra.mxu0 0.0
      %1871 = vmatprep.subr.mxu0 0.0
      %1872 = vmatpush1.msra.mxu0 0.0
      %1873 = vmatprep.subr.mxu0 0.0
      %1874 = vmatpush1.msra.mxu0 0.0
      %1875 = vmatprep.subr.mxu0 0.0
      %1876 = vmatpush1.msra.mxu0 0.0
      %1877 = vmatprep.mubr.f32.mxu0 0.0
      %1878 = vmatmul.mubr.f32.gmra.mrb[0].mxu0 %v1812
      %v1879 = vpop.f32.mrb[0].mxu0
      %v1880 = vadd.f32 0.0, %v1879
      %v1881 = vpop.f32.mrb[0].mxu0
      %1882 = vdwg.mxu0
      %v1883 = vadd.f32 %v1811, %v1880
      %v1884 = vadd.f32 %v1883, %v1240
      %v1885 = vmax.f32 %v1884, 0.0
      %v1886 = vmax.f32 %v1243, %v1885
      %vm1887 = vcmask 31744
      %v1889 = vsel %vm1887, %v432, 0
      %vm1891 = vcmask 1043456
      %v1893 = vsel %vm1891, %v1886, 0
      %1895 = vmatprep.subr.mxu0 0.0
      %1896 = vmatpush1.msra.mxu0 %v1893
      %1897 = vmatprep.subr.mxu0 0.0
      %1898 = vmatpush1.msra.mxu0 0.0
      %1899 = vmatprep.subr.mxu0 0.0
      %1900 = vmatpush1.msra.mxu0 0.0
      %1901 = vmatprep.subr.mxu0 0.0
      %1902 = vmatpush1.msra.mxu0 0.0
      %1903 = vmatprep.subr.mxu0 0.0
      %1904 = vmatpush1.msra.mxu0 0.0
      %1905 = vmatprep.subr.mxu0 0.0
      %1906 = vmatpush1.msra.mxu0 0.0
      %1907 = vmatprep.subr.mxu0 0.0
      %1908 = vmatpush1.msra.mxu0 0.0
      %1909 = vmatprep.subr.mxu0 0.0
      %1910 = vmatpush1.msra.mxu0 0.0
      %1911 = vmatprep.subr.mxu0 0.0
      %1912 = vmatpush1.msra.mxu0 0.0
      %1913 = vmatprep.subr.mxu0 0.0
      %1914 = vmatpush1.msra.mxu0 0.0
      %1915 = vmatprep.subr.mxu0 0.0
      %1916 = vmatpush1.msra.mxu0 0.0
      %1917 = vmatprep.subr.mxu0 0.0
      %1918 = vmatpush1.msra.mxu0 0.0
      %1919 = vmatprep.subr.mxu0 0.0
      %1920 = vmatpush1.msra.mxu0 0.0
      %1921 = vmatprep.subr.mxu0 0.0
      %1922 = vmatpush1.msra.mxu0 0.0
      %1923 = vmatprep.subr.mxu0 0.0
      %1924 = vmatpush1.msra.mxu0 0.0
      %1925 = vmatprep.subr.mxu0 0.0
      %1926 = vmatpush1.msra.mxu0 0.0
      %1927 = vmatprep.subr.mxu0 0.0
      %1928 = vmatpush1.msra.mxu0 0.0
      %1929 = vmatprep.subr.mxu0 0.0
      %1930 = vmatpush1.msra.mxu0 0.0
      %1931 = vmatprep.subr.mxu0 0.0
      %1932 = vmatpush1.msra.mxu0 0.0
      %1933 = vmatprep.subr.mxu0 0.0
      %1934 = vmatpush1.msra.mxu0 0.0
      %1935 = vmatprep.subr.mxu0 0.0
      %1936 = vmatpush1.msra.mxu0 0.0
      %1937 = vmatprep.subr.mxu0 0.0
      %1938 = vmatpush1.msra.mxu0 0.0
      %1939 = vmatprep.subr.mxu0 0.0
      %1940 = vmatpush1.msra.mxu0 0.0
      %1941 = vmatprep.subr.mxu0 0.0
      %1942 = vmatpush1.msra.mxu0 0.0
      %1943 = vmatprep.subr.mxu0 0.0
      %1944 = vmatpush1.msra.mxu0 0.0
      %1945 = vmatprep.subr.mxu0 0.0
      %1946 = vmatpush1.msra.mxu0 0.0
      %1947 = vmatprep.subr.mxu0 0.0
      %1948 = vmatpush1.msra.mxu0 0.0
      %1949 = vmatprep.subr.mxu0 0.0
      %1950 = vmatpush1.msra.mxu0 0.0
      %1951 = vmatprep.subr.mxu0 0.0
      %1952 = vmatpush1.msra.mxu0 0.0
      %1953 = vmatprep.subr.mxu0 0.0
      %1954 = vmatpush1.msra.mxu0 0.0
      %1955 = vmatprep.subr.mxu0 0.0
      %1956 = vmatpush1.msra.mxu0 0.0
      %1957 = vmatprep.subr.mxu0 0.0
      %1958 = vmatpush1.msra.mxu0 0.0
      %1959 = vmatprep.mubr.f32.mxu0 0.0
      %1960 = vmatmul.mubr.f32.gmra.mrb[0].mxu0 %v1889
      %v1961 = vpop.f32.mrb[0].mxu0
      %v1962 = vadd.f32 0.0, %v1961
      %v1963 = vpop.f32.mrb[0].mxu0
      %1964 = vdwg.mxu0
      %v1966 = vsel %vm1887, %v436, 0
      %1968 = vmatprep.subr.mxu0 0.0
      %1969 = vmatpush1.msra.mxu0 %v1893
      %1970 = vmatprep.subr.mxu0 0.0
      %1971 = vmatpush1.msra.mxu0 0.0
      %1972 = vmatprep.subr.mxu0 0.0
      %1973 = vmatpush1.msra.mxu0 0.0
      %1974 = vmatprep.subr.mxu0 0.0
      %1975 = vmatpush1.msra.mxu0 0.0
      %1976 = vmatprep.subr.mxu0 0.0
      %1977 = vmatpush1.msra.mxu0 0.0
      %1978 = vmatprep.subr.mxu0 0.0
      %1979 = vmatpush1.msra.mxu0 0.0
      %1980 = vmatprep.subr.mxu0 0.0
      %1981 = vmatpush1.msra.mxu0 0.0
      %1982 = vmatprep.subr.mxu0 0.0
      %1983 = vmatpush1.msra.mxu0 0.0
      %1984 = vmatprep.subr.mxu0 0.0
      %1985 = vmatpush1.msra.mxu0 0.0
      %1986 = vmatprep.subr.mxu0 0.0
      %1987 = vmatpush1.msra.mxu0 0.0
      %1988 = vmatprep.subr.mxu0 0.0
      %1989 = vmatpush1.msra.mxu0 0.0
      %1990 = vmatprep.subr.mxu0 0.0
      %1991 = vmatpush1.msra.mxu0 0.0
      %1992 = vmatprep.subr.mxu0 0.0
      %1993 = vmatpush1.msra.mxu0 0.0
      %1994 = vmatprep.subr.mxu0 0.0
      %1995 = vmatpush1.msra.mxu0 0.0
      %1996 = vmatprep.subr.mxu0 0.0
      %1997 = vmatpush1.msra.mxu0 0.0
      %1998 = vmatprep.subr.mxu0 0.0
      %1999 = vmatpush1.msra.mxu0 0.0
      %2000 = vmatprep.subr.mxu0 0.0
      %2001 = vmatpush1.msra.mxu0 0.0
      %2002 = vmatprep.subr.mxu0 0.0
      %2003 = vmatpush1.msra.mxu0 0.0
      %2004 = vmatprep.subr.mxu0 0.0
      %2005 = vmatpush1.msra.mxu0 0.0
      %2006 = vmatprep.subr.mxu0 0.0
      %2007 = vmatpush1.msra.mxu0 0.0
      %2008 = vmatprep.subr.mxu0 0.0
      %2009 = vmatpush1.msra.mxu0 0.0
      %2010 = vmatprep.subr.mxu0 0.0
      %2011 = vmatpush1.msra.mxu0 0.0
      %2012 = vmatprep.subr.mxu0 0.0
      %2013 = vmatpush1.msra.mxu0 0.0
      %2014 = vmatprep.subr.mxu0 0.0
      %2015 = vmatpush1.msra.mxu0 0.0
      %2016 = vmatprep.subr.mxu0 0.0
      %2017 = vmatpush1.msra.mxu0 0.0
      %2018 = vmatprep.subr.mxu0 0.0
      %2019 = vmatpush1.msra.mxu0 0.0
      %2020 = vmatprep.subr.mxu0 0.0
      %2021 = vmatpush1.msra.mxu0 0.0
      %2022 = vmatprep.subr.mxu0 0.0
      %2023 = vmatpush1.msra.mxu0 0.0
      %2024 = vmatprep.subr.mxu0 0.0
      %2025 = vmatpush1.msra.mxu0 0.0
      %2026 = vmatprep.subr.mxu0 0.0
      %2027 = vmatpush1.msra.mxu0 0.0
      %2028 = vmatprep.subr.mxu0 0.0
      %2029 = vmatpush1.msra.mxu0 0.0
      %2030 = vmatprep.subr.mxu0 0.0
      %2031 = vmatpush1.msra.mxu0 0.0
      %2032 = vmatprep.mubr.f32.mxu0 0.0
      %2033 = vmatmul.mubr.f32.gmra.mrb[0].mxu0 %v1966
      %v2034 = vpop.f32.mrb[0].mxu0
      %v2035 = vadd.f32 0.0, %v2034
      %v2036 = vpop.f32.mrb[0].mxu0
      %2037 = vdwg.mxu0
      %v2038 = vmax.f32 %v1962, %v2035
      %2039 = vst [vmem:[%s424] sm:$0x3] %v2038
      %p2040 = scmp.lt.s32.totalorder %s21, 1
      %s2041 = scalar_select %p2040, %s21, 1
      %p2042 = scmp.lt.s32.totalorder %s22, 1
      %s2043 = scalar_select %p2042, %s22, 1
      %s2044 = smul.addr %s2041, 2
      %s2045 = sadd.s32 %s2043, %s2044
      %s2046 = smul.addr %s2045, 2
      %s2047 = scalar_lea.vmem %s6, %s2046
      // Predicated region
      $region45: #{convnet_embedder_forward.7} parent=43 // pred_check
        %p2048 = pneg %p217
      $region46: #{convnet_embedder_forward.7} parent=43 // pred_check_branch
        %2050 = sbr.rel (%p2048) target = $region48
      $region47: #{convnet_embedder_forward.7} parent=43 // pred_region
        _
      $region48: #{convnet_embedder_forward.7} parent=43 // pred_fallthru
        _
    $region44: #{convnet_embedder_forward.7} parent=5 // pred_fallthru
      _
    %p2051 = scmp.le.s32.totalorder 2, %s12
    // Predicated region
    $region49: #{convnet_embedder_forward.7} parent=5 // pred_check
      %p2052 = pneg %p2051
    $region50: #{convnet_embedder_forward.7} parent=5 // pred_check_branch
      %2054 = sbr.rel (%p2052) target = $region52
    $region51: #{convnet_embedder_forward.7} parent=5 // pred_region
      %s2055 = ssub.s32 %s12, 2
      // Predicated region
      $region53: #{convnet_embedder_forward.7} parent=51 // pred_check
        %p2056 = pneg %p223
      $region54: #{convnet_embedder_forward.7} parent=51 // pred_check_branch
        %2058 = sbr.rel (%p2056) target = $region56
      $region55: #{convnet_embedder_forward.7} parent=51 // pred_region
        %p2059 = scmp.lt.s32.totalorder %s23, 1
        %s2060 = scalar_select %p2059, %s23, 1
        %p2061 = scmp.lt.s32.totalorder %s24, 1
        %s2062 = scalar_select %p2061, %s24, 1
        %s2063 = smul.addr %s2060, 2
        %s2064 = sadd.s32 %s2062, %s2063
        %s2065 = smul.addr %s2064, 2
        %s2066 = scalar_lea.vmem %s6, %s2065
      $region56: #{convnet_embedder_forward.7} parent=51 // pred_fallthru
        _
    $region52: #{convnet_embedder_forward.7} parent=5 // pred_fallthru
      _
  $region6: #{convnet_embedder_forward.7} parent=0 // loop_footer
    %s16 = sadd.s32 1, %s12
  $region7: #{convnet_embedder_forward.7} parent=0 // loop_footer_branch
    %11 = sbr.rel target = $region3
  $region8: #{convnet_embedder_forward.7} parent=0 // loop_exit
    _

// kernel: convnet_embedder_forward.5
$region0: #{convnet_embedder_forward.5}
  #allocation0 [shape = 'u32[]', space=smem, size = 0x4, offset = 0x4, fixed_abs, tag = 'smem constant byte address 0x4 - core index']
  #allocation1 [shape = 'u32[144,128]{1,0:T(1,128)}', space=vmem, size = 0x12000, scoped, tag = 'internal scratch']
  %s0 = inlined_call_operand.vmem [shape: f32[2,18,18,4], index: 0, kind: input, shape index: {}, may-alias: {0,1,2,3}]
  %s1 = inlined_call_operand.vmem [shape: f32[2,18,18,4], index: 1, kind: input, shape index: {}, may-alias: {0,1,2,3}]
  %s2 = inlined_call_operand.vmem [shape: f32[2,18,18,4], index: 2, kind: input, shape index: {}, may-alias: {0,1,2,3}]
  %s3 = inlined_call_operand.vmem [shape: f32[2,18,18,4], index: 3, kind: input, shape index: {}, may-alias: {0,1,2,3}]
  %s4 = inlined_call_operand.vmem [shape: f32[9,4,128], index: 4, kind: input, shape index: {}]
  %s5 = inlined_call_operand.vmem [shape: f32[1,128], index: 5, kind: input, shape index: {}]
  %s6 = inlined_call_operand.vmem [shape: f32[2,8,8,128], index: 6, kind: output, shape index: {}]
  %s7 = sld [smem:[#allocation0]]
  $region57: #{convnet_embedder_forward.5} parent=0
    _
  %s9 = ssub.s32 1, %s7
  %s10 = scalar_select 0, %s9, %s7
  loop: start=0, step=1, limit=18
  $region2: #{convnet_embedder_forward.5} parent=0 // loop_pre_header
    _
  $region3: #{convnet_embedder_forward.5} parent=0 // loop_header
    %s12 = sphi 0, %s16
    %p13 = scmp.ge.s32.totalorder %s12, 18
    %s19 = sphi 0, %s31
    %s20 = sphi 0, %s27
    %s21 = sphi 0, %s19
    %s22 = sphi 0, %s20
    %s23 = sphi 0, %s21
    %s24 = sphi 0, %s22
    %s38 = sphi 0, %s40
    %s41 = sphi 0, %s38
    %s42 = sphi 0, %s41
    %s58 = sphi 0, %s42
    %s70 = sphi 0, %s72
    %s73 = sphi 0, %s70
    %s74 = sphi 0, %s73
    %s90 = sphi 0, %s74
    %s102 = sphi 0, %s104
    %s105 = sphi 0, %s102
    %s106 = sphi 0, %s105
    %s122 = sphi 0, %s106
    %s134 = sphi 0, %s136
    %s137 = sphi 0, %s134
    %s138 = sphi 0, %s137
    %s154 = sphi 0, %s138
    %s158 = sphi 0, %s158
    %s160 = sphi 0, %s158
    %s161 = sphi 0, %s160
    %s175 = sphi 0, %s161
    %s179 = sphi 0, %s179
    %s181 = sphi 0, %s179
    %s182 = sphi 0, %s181
    %s196 = sphi 0, %s182
    %s204 = sphi 0, %s206
    %s207 = sphi 0, %s204
    %s208 = sphi 0, %s207
    %s224 = sphi 0, %s208
  $region4: #{convnet_embedder_forward.5} parent=0 // loop_header_branch
    %15 = sbr.rel (%p13) target = $region8
  $region5: #{convnet_embedder_forward.5} parent=0 // loop_body
    %s17 = ssub.s32 %s12, 1
    %s18 = ssub.s32 %s12, 2
    %s25 = sadd.s32 1, %s20
    %p26 = scmp.ge.s32.totalorder %s25, 8
    %s27 = scalar_select %p26, 0, %s25
    %s28 = sadd.s32 1, %s19
    %s29 = scalar_select %p26, %s28, %s19
    %p30 = scmp.ge.s32.totalorder %s29, 2
    %s31 = scalar_select %p30, 0, %s29
    %s32 = smul.u32 %s20, 2
    %s33 = smul.u32 %s27, 2
    %s34 = ssub.s32 %s19, %s31
    %s35 = ssub.s32 %s32, %s33
    %s36 = sor.u32 %s34, %s35
    %p37 = scmp.eq.s32.totalorder %s36, 0
    %s39 = sadd.s32 %s38, 1
    %s40 = scalar_select %p37, %s38, %s39
    %p43 = pneg %p37
    %p44 = scmp.eq.s32.totalorder %s12, 15
    %p45 = por %p43, %p44
    %p46 = scmp.ne.s32.totalorder %s38, %s41
    %p47 = scmp.eq.s32.totalorder %s12, 0
    %p48 = por %p46, %p47
    %p49 = scmp.ne.s32.totalorder %s38, %s41
    %p50 = scmp.eq.s32.totalorder %s17, 15
    %p51 = por %p49, %p50
    %p52 = scmp.ne.s32.totalorder %s41, %s42
    %p53 = scmp.eq.s32.totalorder %s17, 0
    %p54 = por %p52, %p53
    %p55 = scmp.ne.s32.totalorder %s41, %s42
    %p56 = scmp.eq.s32.totalorder %s18, 15
    %p57 = por %p55, %p56
    %p59 = scmp.ne.s32.totalorder %s42, %s58
    %p60 = scmp.eq.s32.totalorder %s18, 0
    %p61 = por %p59, %p60
    %s62 = smul.u32 %s20, 2
    %s63 = sadd.s32 %s62, 1
    %s64 = smul.u32 %s27, 2
    %s65 = sadd.s32 %s64, 1
    %s66 = ssub.s32 %s19, %s31
    %s67 = ssub.s32 %s63, %s65
    %s68 = sor.u32 %s66, %s67
    %p69 = scmp.eq.s32.totalorder %s68, 0
    %s71 = sadd.s32 %s70, 1
    %s72 = scalar_select %p69, %s70, %s71
    %p75 = pneg %p69
    %p76 = scmp.eq.s32.totalorder %s12, 15
    %p77 = por %p75, %p76
    %p78 = scmp.ne.s32.totalorder %s70, %s73
    %p79 = scmp.eq.s32.totalorder %s12, 0
    %p80 = por %p78, %p79
    %p81 = scmp.ne.s32.totalorder %s70, %s73
    %p82 = scmp.eq.s32.totalorder %s17, 15
    %p83 = por %p81, %p82
    %p84 = scmp.ne.s32.totalorder %s73, %s74
    %p85 = scmp.eq.s32.totalorder %s17, 0
    %p86 = por %p84, %p85
    %p87 = scmp.ne.s32.totalorder %s73, %s74
    %p88 = scmp.eq.s32.totalorder %s18, 15
    %p89 = por %p87, %p88
    %p91 = scmp.ne.s32.totalorder %s74, %s90
    %p92 = scmp.eq.s32.totalorder %s18, 0
    %p93 = por %p91, %p92
    %s94 = smul.u32 %s20, 2
    %s95 = sadd.s32 %s94, 2
    %s96 = smul.u32 %s27, 2
    %s97 = sadd.s32 %s96, 2
    %s98 = ssub.s32 %s19, %s31
    %s99 = ssub.s32 %s95, %s97
    %s100 = sor.u32 %s98, %s99
    %p101 = scmp.eq.s32.totalorder %s100, 0
    %s103 = sadd.s32 %s102, 1
    %s104 = scalar_select %p101, %s102, %s103
    %p107 = pneg %p101
    %p108 = scmp.eq.s32.totalorder %s12, 15
    %p109 = por %p107, %p108
    %p110 = scmp.ne.s32.totalorder %s102, %s105
    %p111 = scmp.eq.s32.totalorder %s12, 0
    %p112 = por %p110, %p111
    %p113 = scmp.ne.s32.totalorder %s102, %s105
    %p114 = scmp.eq.s32.totalorder %s17, 15
    %p115 = por %p113, %p114
    %p116 = scmp.ne.s32.totalorder %s105, %s106
    %p117 = scmp.eq.s32.totalorder %s17, 0
    %p118 = por %p116, %p117
    %p119 = scmp.ne.s32.totalorder %s105, %s106
    %p120 = scmp.eq.s32.totalorder %s18, 15
    %p121 = por %p119, %p120
    %p123 = scmp.ne.s32.totalorder %s106, %s122
    %p124 = scmp.eq.s32.totalorder %s18, 0
    %p125 = por %p123, %p124
    %s126 = smul.u32 %s20, 2
    %s127 = sadd.s32 %s126, 3
    %s128 = smul.u32 %s27, 2
    %s129 = sadd.s32 %s128, 3
    %s130 = ssub.s32 %s19, %s31
    %s131 = ssub.s32 %s127, %s129
    %s132 = sor.u32 %s130, %s131
    %p133 = scmp.eq.s32.totalorder %s132, 0
    %s135 = sadd.s32 %s134, 1
    %s136 = scalar_select %p133, %s134, %s135
    %p139 = pneg %p133
    %p140 = scmp.eq.s32.totalorder %s12, 15
    %p141 = por %p139, %p140
    %p142 = scmp.ne.s32.totalorder %s134, %s137
    %p143 = scmp.eq.s32.totalorder %s12, 0
    %p144 = por %p142, %p143
    %p145 = scmp.ne.s32.totalorder %s134, %s137
    %p146 = scmp.eq.s32.totalorder %s17, 15
    %p147 = por %p145, %p146
    %p148 = scmp.ne.s32.totalorder %s137, %s138
    %p149 = scmp.eq.s32.totalorder %s17, 0
    %p150 = por %p148, %p149
    %p151 = scmp.ne.s32.totalorder %s137, %s138
    %p152 = scmp.eq.s32.totalorder %s18, 15
    %p153 = por %p151, %p152
    %p155 = scmp.ne.s32.totalorder %s138, %s154
    %p156 = scmp.eq.s32.totalorder %s18, 0
    %p157 = por %p155, %p156
    %s159 = sadd.s32 %s158, 1
    %p162 = scmp.eq.s32.totalorder %s12, 15
    %p163 = scmp.ne.s32.totalorder %s158, %s160
    %p164 = scmp.eq.s32.totalorder %s12, 0
    %p165 = por %p163, %p164
    %p166 = scmp.ne.s32.totalorder %s158, %s160
    %p167 = scmp.eq.s32.totalorder %s17, 15
    %p168 = por %p166, %p167
    %p169 = scmp.ne.s32.totalorder %s160, %s161
    %p170 = scmp.eq.s32.totalorder %s17, 0
    %p171 = por %p169, %p170
    %p172 = scmp.ne.s32.totalorder %s160, %s161
    %p173 = scmp.eq.s32.totalorder %s18, 15
    %p174 = por %p172, %p173
    %p176 = scmp.ne.s32.totalorder %s161, %s175
    %p177 = scmp.eq.s32.totalorder %s18, 0
    %p178 = por %p176, %p177
    %s180 = sadd.s32 %s179, 1
    %p183 = scmp.eq.s32.totalorder %s12, 15
    %p184 = scmp.ne.s32.totalorder %s179, %s181
    %p185 = scmp.eq.s32.totalorder %s12, 0
    %p186 = por %p184, %p185
    %p187 = scmp.ne.s32.totalorder %s179, %s181
    %p188 = scmp.eq.s32.totalorder %s17, 15
    %p189 = por %p187, %p188
    %p190 = scmp.ne.s32.totalorder %s181, %s182
    %p191 = scmp.eq.s32.totalorder %s17, 0
    %p192 = por %p190, %p191
    %p193 = scmp.ne.s32.totalorder %s181, %s182
    %p194 = scmp.eq.s32.totalorder %s18, 15
    %p195 = por %p193, %p194
    %p197 = scmp.ne.s32.totalorder %s182, %s196
    %p198 = scmp.eq.s32.totalorder %s18, 0
    %p199 = por %p197, %p198
    %s200 = ssub.s32 %s19, %s31
    %s201 = ssub.s32 %s20, %s27
    %s202 = sor.u32 %s200, %s201
    %p203 = scmp.eq.s32.totalorder %s202, 0
    %s205 = sadd.s32 %s204, 1
    %s206 = scalar_select %p203, %s204, %s205
    %p209 = pneg %p203
    %p210 = scmp.eq.s32.totalorder %s12, 15
    %p211 = por %p209, %p210
    %p212 = scmp.ne.s32.totalorder %s204, %s207
    %p213 = scmp.eq.s32.totalorder %s12, 0
    %p214 = por %p212, %p213
    %p215 = scmp.ne.s32.totalorder %s204, %s207
    %p216 = scmp.eq.s32.totalorder %s17, 15
    %p217 = por %p215, %p216
    %p218 = scmp.ne.s32.totalorder %s207, %s208
    %p219 = scmp.eq.s32.totalorder %s17, 0
    %p220 = por %p218, %p219
    %p221 = scmp.ne.s32.totalorder %s207, %s208
    %p222 = scmp.eq.s32.totalorder %s18, 15
    %p223 = por %p221, %p222
    %p225 = scmp.ne.s32.totalorder %s208, %s224
    %p226 = scmp.eq.s32.totalorder %s18, 0
    %p227 = por %p225, %p226
    %p228 = scmp.le.s32.totalorder 1, %s12
    %p229 = scmp.lt.s32.totalorder %s12, 17
    %p230 = pnand %p228, %p229
    %p231 = pneg %p230
    // Predicated region
    $region9: #{convnet_embedder_forward.5} parent=5 // pred_check
      _
    $region10: #{convnet_embedder_forward.5} parent=5 // pred_check_branch
      %233 = sbr.rel (%p230) target = $region12
    $region11: #{convnet_embedder_forward.5} parent=5 // pred_region
      %s234 = ssub.s32 %s12, 1
      // Predicated region
      $region13: #{convnet_embedder_forward.5} parent=11 // pred_check
        %p235 = pneg %p171
      $region14: #{convnet_embedder_forward.5} parent=11 // pred_check_branch
        %237 = sbr.rel (%p235) target = $region16
      $region15: #{convnet_embedder_forward.5} parent=11 // pred_region
        _
      $region16: #{convnet_embedder_forward.5} parent=11 // pred_fallthru
        _
      // Predicated region
      $region17: #{convnet_embedder_forward.5} parent=11 // pred_check
        %p238 = pneg %p192
      $region18: #{convnet_embedder_forward.5} parent=11 // pred_check_branch
        %240 = sbr.rel (%p238) target = $region20
      $region19: #{convnet_embedder_forward.5} parent=11 // pred_region
        _
      $region20: #{convnet_embedder_forward.5} parent=11 // pred_fallthru
        _
    $region12: #{convnet_embedder_forward.5} parent=5 // pred_fallthru
      _
    %p241 = scmp.lt.s32.totalorder %s12, 16
    // Predicated region
    $region21: #{convnet_embedder_forward.5} parent=5 // pred_check
      %p242 = pneg %p241
    $region22: #{convnet_embedder_forward.5} parent=5 // pred_check_branch
      %244 = sbr.rel (%p242) target = $region24
    $region23: #{convnet_embedder_forward.5} parent=5 // pred_region
      // Predicated region
      $region25: #{convnet_embedder_forward.5} parent=23 // pred_check
        %p245 = pneg %p48
      $region26: #{convnet_embedder_forward.5} parent=23 // pred_check_branch
        %247 = sbr.rel (%p245) target = $region28
      $region27: #{convnet_embedder_forward.5} parent=23 // pred_region
        %s248 = smul.u32 %s20, 2
        %p249 = scmp.lt.s32.totalorder %s19, 1
        %s250 = scalar_select %p249, %s19, 1
        %p251 = scmp.lt.s32.totalorder %s248, 17
        %s252 = scalar_select %p251, %s248, 17
        %s253 = smul.addr %s252, 3
        %s254 = smul.addr %s250, 54
        %s255 = sadd.s32 %s253, %s254
        %s256 = smul.addr %s255, 8
        %s257 = scalar_lea.vmem %s0, %s256
        %s258 = smul.u32 %s20, 2
      $region28: #{convnet_embedder_forward.5} parent=23 // pred_fallthru
        _
      // Predicated region
      $region29: #{convnet_embedder_forward.5} parent=23 // pred_check
        %p259 = pneg %p80
      $region30: #{convnet_embedder_forward.5} parent=23 // pred_check_branch
        %261 = sbr.rel (%p259) target = $region32
      $region31: #{convnet_embedder_forward.5} parent=23 // pred_region
        %s262 = smul.u32 %s20, 2
        %s263 = sadd.s32 %s262, 1
        %p264 = scmp.lt.s32.totalorder %s19, 1
        %s265 = scalar_select %p264, %s19, 1
        %p266 = scmp.lt.s32.totalorder %s263, 17
        %s267 = scalar_select %p266, %s263, 17
        %s268 = smul.addr %s267, 3
        %s269 = smul.addr %s265, 54
        %s270 = sadd.s32 %s268, %s269
        %s271 = smul.addr %s270, 8
        %s272 = scalar_lea.vmem %s1, %s271
        %s273 = smul.u32 %s20, 2
        %s274 = sadd.s32 %s273, 1
      $region32: #{convnet_embedder_forward.5} parent=23 // pred_fallthru
        _
      // Predicated region
      $region33: #{convnet_embedder_forward.5} parent=23 // pred_check
        %p275 = pneg %p112
      $region34: #{convnet_embedder_forward.5} parent=23 // pred_check_branch
        %277 = sbr.rel (%p275) target = $region36
      $region35: #{convnet_embedder_forward.5} parent=23 // pred_region
        %s278 = smul.u32 %s20, 2
        %s279 = sadd.s32 %s278, 2
        %p280 = scmp.lt.s32.totalorder %s19, 1
        %s281 = scalar_select %p280, %s19, 1
        %p282 = scmp.lt.s32.totalorder %s279, 17
        %s283 = scalar_select %p282, %s279, 17
        %s284 = smul.addr %s283, 3
        %s285 = smul.addr %s281, 54
        %s286 = sadd.s32 %s284, %s285
        %s287 = smul.addr %s286, 8
        %s288 = scalar_lea.vmem %s2, %s287
        %s289 = smul.u32 %s20, 2
        %s290 = sadd.s32 %s289, 2
      $region36: #{convnet_embedder_forward.5} parent=23 // pred_fallthru
        _
      // Predicated region
      $region37: #{convnet_embedder_forward.5} parent=23 // pred_check
        %p291 = pneg %p144
      $region38: #{convnet_embedder_forward.5} parent=23 // pred_check_branch
        %293 = sbr.rel (%p291) target = $region40
      $region39: #{convnet_embedder_forward.5} parent=23 // pred_region
        %s294 = smul.u32 %s20, 2
        %s295 = sadd.s32 %s294, 3
        %p296 = scmp.lt.s32.totalorder %s19, 1
        %s297 = scalar_select %p296, %s19, 1
        %p298 = scmp.lt.s32.totalorder %s295, 17
        %s299 = scalar_select %p298, %s295, 17
        %s300 = smul.addr %s299, 3
        %s301 = smul.addr %s297, 54
        %s302 = sadd.s32 %s300, %s301
        %s303 = smul.addr %s302, 8
        %s304 = scalar_lea.vmem %s3, %s303
        %s305 = smul.u32 %s20, 2
        %s306 = sadd.s32 %s305, 3
      $region40: #{convnet_embedder_forward.5} parent=23 // pred_fallthru
        _
    $region24: #{convnet_embedder_forward.5} parent=5 // pred_fallthru
      _
    %p307 = scmp.le.s32.totalorder 1, %s12
    %p308 = scmp.lt.s32.totalorder %s12, 17
    %p309 = pnand %p307, %p308
    %p310 = pneg %p309
    // Predicated region
    $region41: #{convnet_embedder_forward.5} parent=5 // pred_check
      _
    $region42: #{convnet_embedder_forward.5} parent=5 // pred_check_branch
      %312 = sbr.rel (%p309) target = $region44
    $region43: #{convnet_embedder_forward.5} parent=5 // pred_region
      %s313 = ssub.s32 %s12, 1
      %s314 = smul.u32 %s22, 2
      %p315 = scmp.lt.s32.totalorder %s21, 1
      %s316 = scalar_select %p315, %s21, 1
      %p317 = scmp.lt.s32.totalorder %s314, 17
      %s318 = scalar_select %p317, %s314, 17
      %s319 = smul.addr %s318, 3
      %s320 = smul.addr %s316, 54
      %s321 = sadd.s32 %s319, %s320
      %s322 = smul.addr %s321, 8
      %s323 = scalar_lea.vmem %s0, %s322
      %p324 = pneg %p54
      %p325 = pneg %p51
      %s326 = smul.u32 %s22, 2
      %s327 = sadd.s32 %s326, 1
      %p328 = scmp.lt.s32.totalorder %s21, 1
      %s329 = scalar_select %p328, %s21, 1
      %p330 = scmp.lt.s32.totalorder %s327, 17
      %s331 = scalar_select %p330, %s327, 17
      %s332 = smul.addr %s331, 3
      %s333 = smul.addr %s329, 54
      %s334 = sadd.s32 %s332, %s333
      %s335 = smul.addr %s334, 8
      %s336 = scalar_lea.vmem %s1, %s335
      %p337 = pneg %p86
      %p338 = pneg %p83
      %s339 = smul.u32 %s22, 2
      %s340 = sadd.s32 %s339, 2
      %p341 = scmp.lt.s32.totalorder %s21, 1
      %s342 = scalar_select %p341, %s21, 1
      %p343 = scmp.lt.s32.totalorder %s340, 17
      %s344 = scalar_select %p343, %s340, 17
      %s345 = smul.addr %s344, 3
      %s346 = smul.addr %s342, 54
      %s347 = sadd.s32 %s345, %s346
      %s348 = smul.addr %s347, 8
      %s349 = scalar_lea.vmem %s2, %s348
      %p350 = pneg %p118
      %p351 = pneg %p115
      %s352 = smul.u32 %s22, 2
      %s353 = sadd.s32 %s352, 3
      %p354 = scmp.lt.s32.totalorder %s21, 1
      %s355 = scalar_select %p354, %s21, 1
      %p356 = scmp.lt.s32.totalorder %s353, 17
      %s357 = scalar_select %p356, %s353, 17
      %s358 = smul.addr %s357, 3
      %s359 = smul.addr %s355, 54
      %s360 = sadd.s32 %s358, %s359
      %s361 = smul.addr %s360, 8
      %s362 = scalar_lea.vmem %s3, %s361
      %p363 = pneg %p150
      %p364 = pneg %p147
      %p365 = pneg %p171
      %p366 = pneg %p168
      %p367 = pneg %p192
      %p368 = pneg %p189
      %p369 = pneg %p220
      %p370 = pneg %p217
      %p371 = scmp.lt.s32.totalorder %s21, 1
      %s372 = scalar_select %p371, %s21, 1
      %p373 = scmp.lt.s32.totalorder %s22, 7
      %s374 = scalar_select %p373, %s22, 7
      %s375 = smul.addr %s372, 8
      %s376 = sadd.s32 %s374, %s375
      %s377 = smul.addr %s376, 8
      %s378 = scalar_lea.vmem %s6, %s377
      %s379 = smul.u32 %s22, 2
      %p380 = scmp.lt.s32.totalorder %s21, 1
      %s381 = scalar_select %p380, %s21, 1
      %p382 = scmp.lt.s32.totalorder %s379, 17
      %s383 = scalar_select %p382, %s379, 17
      %s384 = smul.addr %s383, 3
      %s385 = smul.addr %s381, 54
      %s386 = sadd.s32 %s384, %s385
      %s387 = smul.addr %s386, 8
      %s388 = scalar_lea.vmem %s0, %s387
      %s389 = smul.u32 %s22, 2
      %s390 = smul.u32 %s22, 2
      %s391 = sadd.s32 %s390, 1
      %p392 = scmp.lt.s32.totalorder %s21, 1
      %s393 = scalar_select %p392, %s21, 1
      %p394 = scmp.lt.s32.totalorder %s391, 17
      %s395 = scalar_select %p394, %s391, 17
      %s396 = smul.addr %s395, 3
      %s397 = smul.addr %s393, 54
      %s398 = sadd.s32 %s396, %s397
      %s399 = smul.addr %s398, 8
      %s400 = scalar_lea.vmem %s1, %s399
      %s401 = smul.u32 %s22, 2
      %s402 = sadd.s32 %s401, 1
      %s403 = smul.u32 %s22, 2
      %s404 = sadd.s32 %s403, 2
      %p405 = scmp.lt.s32.totalorder %s21, 1
      %s406 = scalar_select %p405, %s21, 1
      %p407 = scmp.lt.s32.totalorder %s404, 17
      %s408 = scalar_select %p407, %s404, 17
      %s409 = smul.addr %s408, 3
      %s410 = smul.addr %s406, 54
      %s411 = sadd.s32 %s409, %s410
      %s412 = smul.addr %s411, 8
      %s413 = scalar_lea.vmem %s2, %s412
      %s414 = smul.u32 %s22, 2
      %s415 = sadd.s32 %s414, 2
      %s416 = smul.u32 %s22, 2
      %s417 = sadd.s32 %s416, 3
      %p418 = scmp.lt.s32.totalorder %s21, 1
      %s419 = scalar_select %p418, %s21, 1
      %p420 = scmp.lt.s32.totalorder %s417, 17
      %s421 = scalar_select %p420, %s417, 17
      %s422 = smul.addr %s421, 3
      %s423 = smul.addr %s419, 54
      %s424 = sadd.s32 %s422, %s423
      %s425 = smul.addr %s424, 8
      %s426 = scalar_lea.vmem %s3, %s425
      %s427 = smul.u32 %s22, 2
      %s428 = sadd.s32 %s427, 3
      %p429 = scmp.lt.s32.totalorder %s21, 1
      %s430 = scalar_select %p429, %s21, 1
      %p431 = scmp.lt.s32.totalorder %s22, 7
      %s432 = scalar_select %p431, %s22, 7
      %s433 = smul.addr %s430, 8
      %s434 = sadd.s32 %s432, %s433
      %s435 = smul.addr %s434, 8
      %s436 = scalar_lea.vmem %s6, %s435
      %v437 = vlaneseq
      %v438 = vshrl.u32 %v437, 7
      %v439 = vlaneseq
      %v440 = vand.u32 %v439, 127
      %v441 = vmul.u32 %v438, 2
      %vm442 = vcmp.eq.s32.totalorder %v440, %v441
      %v443 = vsel %vm442, 1, 0
      %v444 = vcvt.s32.f32 %v443
      %v445 = vadd.s32 %v441, 1
      %vm446 = vcmp.eq.s32.totalorder %v440, %v445
      %v447 = vsel %vm446, 1, 0
      %v448 = vcvt.s32.f32 %v447
      %v449 = vld [vmem:[%s388] sm:$0xff]
      %v450 = vld [vmem:[%s388 + $0x8] sm:$0xff]
      %v451 = vld [vmem:[%s4] sm:$0xf]
      %v452 = vld [vmem:[%s388 + $0x1] sm:$0xff]
      %v453 = vld [vmem:[%s388 + $0x9] sm:$0xff]
      %s454 = scalar_lea.vmem %s4, 4
      %v455 = vld [vmem:[%s454] sm:$0xf]
      %vm456 = vcmask 31744
      %v458 = vsel %vm456, %v452, 0
      %v461 = vsel %vm456, %v453, 0
      %vm463 = vcmask 1043456
      %v465 = vsel %vm463, %v455, 0
      %467 = vmatprep.subr.mxu0 0.0
      %468 = vmatpush1.msra.mxu0 %v465
      %469 = vmatprep.subr.mxu0 0.0
      %470 = vmatpush1.msra.mxu0 0.0
      %471 = vmatprep.subr.mxu0 0.0
      %472 = vmatpush1.msra.mxu0 0.0
      %473 = vmatprep.subr.mxu0 0.0
      %474 = vmatpush1.msra.mxu0 0.0
      %475 = vmatprep.subr.mxu0 0.0
      %476 = vmatpush1.msra.mxu0 0.0
      %477 = vmatprep.subr.mxu0 0.0
      %478 = vmatpush1.msra.mxu0 0.0
      %479 = vmatprep.subr.mxu0 0.0
      %480 = vmatpush1.msra.mxu0 0.0
      %481 = vmatprep.subr.mxu0 0.0
      %482 = vmatpush1.msra.mxu0 0.0
      %483 = vmatprep.subr.mxu0 0.0
      %484 = vmatpush1.msra.mxu0 0.0
      %485 = vmatprep.subr.mxu0 0.0
      %486 = vmatpush1.msra.mxu0 0.0
      %487 = vmatprep.subr.mxu0 0.0
      %488 = vmatpush1.msra.mxu0 0.0
      %489 = vmatprep.subr.mxu0 0.0
      %490 = vmatpush1.msra.mxu0 0.0
      %491 = vmatprep.subr.mxu0 0.0
      %492 = vmatpush1.msra.mxu0 0.0
      %493 = vmatprep.subr.mxu0 0.0
      %494 = vmatpush1.msra.mxu0 0.0
      %495 = vmatprep.subr.mxu0 0.0
      %496 = vmatpush1.msra.mxu0 0.0
      %497 = vmatprep.subr.mxu0 0.0
      %498 = vmatpush1.msra.mxu0 0.0
      %499 = vmatprep.subr.mxu0 0.0
      %500 = vmatpush1.msra.mxu0 0.0
      %501 = vmatprep.subr.mxu0 0.0
      %502 = vmatpush1.msra.mxu0 0.0
      %503 = vmatprep.subr.mxu0 0.0
      %504 = vmatpush1.msra.mxu0 0.0
      %505 = vmatprep.subr.mxu0 0.0
      %506 = vmatpush1.msra.mxu0 0.0
      %507 = vmatprep.subr.mxu0 0.0
      %508 = vmatpush1.msra.mxu0 0.0
      %509 = vmatprep.subr.mxu0 0.0
      %510 = vmatpush1.msra.mxu0 0.0
      %511 = vmatprep.subr.mxu0 0.0
      %512 = vmatpush1.msra.mxu0 0.0
      %513 = vmatprep.subr.mxu0 0.0
      %514 = vmatpush1.msra.mxu0 0.0
      %515 = vmatprep.subr.mxu0 0.0
      %516 = vmatpush1.msra.mxu0 0.0
      %517 = vmatprep.subr.mxu0 0.0
      %518 = vmatpush1.msra.mxu0 0.0
      %519 = vmatprep.subr.mxu0 0.0
      %520 = vmatpush1.msra.mxu0 0.0
      %521 = vmatprep.subr.mxu0 0.0
      %522 = vmatpush1.msra.mxu0 0.0
      %523 = vmatprep.subr.mxu0 0.0
      %524 = vmatpush1.msra.mxu0 0.0
      %525 = vmatprep.subr.mxu0 0.0
      %526 = vmatpush1.msra.mxu0 0.0
      %527 = vmatprep.subr.mxu0 0.0
      %528 = vmatpush1.msra.mxu0 0.0
      %529 = vmatprep.subr.mxu0 0.0
      %530 = vmatpush1.msra.mxu0 0.0
      %531 = vmatprep.mubr.f32.mxu0 0.0
      %532 = vmatmul.mubr.f32.gmra.mrb[0].mxu0 %v458
      %v533 = vpop.f32.mrb[0].mxu0
      %v534 = vadd.f32 0.0, %v533
      %v535 = vpop.f32.mrb[0].mxu0
      %536 = vmatprep.mubr.f32.mxu0 0.0
      %537 = vmatmul.mubr.f32.gmra.mrb[0].mxu0 %v461
      %v538 = vpop.f32.mrb[0].mxu0
      %v539 = vadd.f32 0.0, %v538
      %v540 = vpop.f32.mrb[0].mxu0
      %541 = vdwg.mxu0
      %v543 = vsel %vm456, %v449, 0
      %v546 = vsel %vm456, %v450, 0
      %v549 = vsel %vm463, %v451, 0
      %551 = vmatprep.subr.mxu0 0.0
      %552 = vmatpush1.msra.mxu0 %v549
      %553 = vmatprep.subr.mxu0 0.0
      %554 = vmatpush1.msra.mxu0 0.0
      %555 = vmatprep.subr.mxu0 0.0
      %556 = vmatpush1.msra.mxu0 0.0
      %557 = vmatprep.subr.mxu0 0.0
      %558 = vmatpush1.msra.mxu0 0.0
      %559 = vmatprep.subr.mxu0 0.0
      %560 = vmatpush1.msra.mxu0 0.0
      %561 = vmatprep.subr.mxu0 0.0
      %562 = vmatpush1.msra.mxu0 0.0
      %563 = vmatprep.subr.mxu0 0.0
      %564 = vmatpush1.msra.mxu0 0.0
      %565 = vmatprep.subr.mxu0 0.0
      %566 = vmatpush1.msra.mxu0 0.0
      %567 = vmatprep.subr.mxu0 0.0
      %568 = vmatpush1.msra.mxu0 0.0
      %569 = vmatprep.subr.mxu0 0.0
      %570 = vmatpush1.msra.mxu0 0.0
      %571 = vmatprep.subr.mxu0 0.0
      %572 = vmatpush1.msra.mxu0 0.0
      %573 = vmatprep.subr.mxu0 0.0
      %574 = vmatpush1.msra.mxu0 0.0
      %575 = vmatprep.subr.mxu0 0.0
      %576 = vmatpush1.msra.mxu0 0.0
      %577 = vmatprep.subr.mxu0 0.0
      %578 = vmatpush1.msra.mxu0 0.0
      %579 = vmatprep.subr.mxu0 0.0
      %580 = vmatpush1.msra.mxu0 0.0
      %581 = vmatprep.subr.mxu0 0.0
      %582 = vmatpush1.msra.mxu0 0.0
      %583 = vmatprep.subr.mxu0 0.0
      %584 = vmatpush1.msra.mxu0 0.0
      %585 = vmatprep.subr.mxu0 0.0
      %586 = vmatpush1.msra.mxu0 0.0
      %587 = vmatprep.subr.mxu0 0.0
      %588 = vmatpush1.msra.mxu0 0.0
      %589 = vmatprep.subr.mxu0 0.0
      %590 = vmatpush1.msra.mxu0 0.0
      %591 = vmatprep.subr.mxu0 0.0
      %592 = vmatpush1.msra.mxu0 0.0
      %593 = vmatprep.subr.mxu0 0.0
      %594 = vmatpush1.msra.mxu0 0.0
      %595 = vmatprep.subr.mxu0 0.0
      %596 = vmatpush1.msra.mxu0 0.0
      %597 = vmatprep.subr.mxu0 0.0
      %598 = vmatpush1.msra.mxu0 0.0
      %599 = vmatprep.subr.mxu0 0.0
      %600 = vmatpush1.msra.mxu0 0.0
      %601 = vmatprep.subr.mxu0 0.0
      %602 = vmatpush1.msra.mxu0 0.0
      %603 = vmatprep.subr.mxu0 0.0
      %604 = vmatpush1.msra.mxu0 0.0
      %605 = vmatprep.subr.mxu0 0.0
      %606 = vmatpush1.msra.mxu0 0.0
      %607 = vmatprep.subr.mxu0 0.0
      %608 = vmatpush1.msra.mxu0 0.0
      %609 = vmatprep.subr.mxu0 0.0
      %610 = vmatpush1.msra.mxu0 0.0
      %611 = vmatprep.subr.mxu0 0.0
      %612 = vmatpush1.msra.mxu0 0.0
      %613 = vmatprep.subr.mxu0 0.0
      %614 = vmatpush1.msra.mxu0 0.0
      %615 = vmatprep.mubr.f32.mxu0 0.0
      %616 = vmatmul.mubr.f32.gmra.mrb[0].mxu0 %v543
      %v617 = vpop.f32.mrb[0].mxu0
      %v618 = vadd.f32 %v534, %v617
      %v619 = vpop.f32.mrb[0].mxu0
      %620 = vmatprep.mubr.f32.mxu0 0.0
      %621 = vmatmul.mubr.f32.gmra.mrb[0].mxu0 %v546
      %v622 = vpop.f32.mrb[0].mxu0
      %v623 = vadd.f32 %v539, %v622
      %v624 = vpop.f32.mrb[0].mxu0
      %625 = vdwg.mxu0
      %v626 = vld [vmem:[%s388 + $0x2] sm:$0xff]
      %v627 = vld [vmem:[%s388 + $0xa] sm:$0xff]
      %s628 = scalar_lea.vmem %s4, 8
      %v629 = vld [vmem:[%s628] sm:$0xf]
      %v631 = vsel %vm456, %v626, 0
      %v634 = vsel %vm456, %v627, 0
      %v637 = vsel %vm463, %v629, 0
      %639 = vmatprep.subr.mxu0 0.0
      %640 = vmatpush1.msra.mxu0 %v637
      %641 = vmatprep.subr.mxu0 0.0
      %642 = vmatpush1.msra.mxu0 0.0
      %643 = vmatprep.subr.mxu0 0.0
      %644 = vmatpush1.msra.mxu0 0.0
      %645 = vmatprep.subr.mxu0 0.0
      %646 = vmatpush1.msra.mxu0 0.0
      %647 = vmatprep.subr.mxu0 0.0
      %648 = vmatpush1.msra.mxu0 0.0
      %649 = vmatprep.subr.mxu0 0.0
      %650 = vmatpush1.msra.mxu0 0.0
      %651 = vmatprep.subr.mxu0 0.0
      %652 = vmatpush1.msra.mxu0 0.0
      %653 = vmatprep.subr.mxu0 0.0
      %654 = vmatpush1.msra.mxu0 0.0
      %655 = vmatprep.subr.mxu0 0.0
      %656 = vmatpush1.msra.mxu0 0.0
      %657 = vmatprep.subr.mxu0 0.0
      %658 = vmatpush1.msra.mxu0 0.0
      %659 = vmatprep.subr.mxu0 0.0
      %660 = vmatpush1.msra.mxu0 0.0
      %661 = vmatprep.subr.mxu0 0.0
      %662 = vmatpush1.msra.mxu0 0.0
      %663 = vmatprep.subr.mxu0 0.0
      %664 = vmatpush1.msra.mxu0 0.0
      %665 = vmatprep.subr.mxu0 0.0
      %666 = vmatpush1.msra.mxu0 0.0
      %667 = vmatprep.subr.mxu0 0.0
      %668 = vmatpush1.msra.mxu0 0.0
      %669 = vmatprep.subr.mxu0 0.0
      %670 = vmatpush1.msra.mxu0 0.0
      %671 = vmatprep.subr.mxu0 0.0
      %672 = vmatpush1.msra.mxu0 0.0
      %673 = vmatprep.subr.mxu0 0.0
      %674 = vmatpush1.msra.mxu0 0.0
      %675 = vmatprep.subr.mxu0 0.0
      %676 = vmatpush1.msra.mxu0 0.0
      %677 = vmatprep.subr.mxu0 0.0
      %678 = vmatpush1.msra.mxu0 0.0
      %679 = vmatprep.subr.mxu0 0.0
      %680 = vmatpush1.msra.mxu0 0.0
      %681 = vmatprep.subr.mxu0 0.0
      %682 = vmatpush1.msra.mxu0 0.0
      %683 = vmatprep.subr.mxu0 0.0
      %684 = vmatpush1.msra.mxu0 0.0
      %685 = vmatprep.subr.mxu0 0.0
      %686 = vmatpush1.msra.mxu0 0.0
      %687 = vmatprep.subr.mxu0 0.0
      %688 = vmatpush1.msra.mxu0 0.0
      %689 = vmatprep.subr.mxu0 0.0
      %690 = vmatpush1.msra.mxu0 0.0
      %691 = vmatprep.subr.mxu0 0.0
      %692 = vmatpush1.msra.mxu0 0.0
      %693 = vmatprep.subr.mxu0 0.0
      %694 = vmatpush1.msra.mxu0 0.0
      %695 = vmatprep.subr.mxu0 0.0
      %696 = vmatpush1.msra.mxu0 0.0
      %697 = vmatprep.subr.mxu0 0.0
      %698 = vmatpush1.msra.mxu0 0.0
      %699 = vmatprep.subr.mxu0 0.0
      %700 = vmatpush1.msra.mxu0 0.0
      %701 = vmatprep.subr.mxu0 0.0
      %702 = vmatpush1.msra.mxu0 0.0
      %703 = vmatprep.mubr.f32.mxu0 0.0
      %704 = vmatmul.mubr.f32.gmra.mrb[0].mxu0 %v631
      %v705 = vpop.f32.mrb[0].mxu0
      %v706 = vadd.f32 0.0, %v705
      %v707 = vpop.f32.mrb[0].mxu0
      %708 = vmatprep.mubr.f32.mxu0 0.0
      %709 = vmatmul.mubr.f32.gmra.mrb[0].mxu0 %v634
      %v710 = vpop.f32.mrb[0].mxu0
      %v711 = vadd.f32 0.0, %v710
      %v712 = vpop.f32.mrb[0].mxu0
      %713 = vdwg.mxu0
      %v714 = vadd.f32 %v618, %v706
      %v715 = vadd.f32 %v623, %v711
      %v716 = vld [vmem:[%s400] sm:$0xff]
      %v717 = vld [vmem:[%s400 + $0x8] sm:$0xff]
      %s718 = scalar_lea.vmem %s4, 12
      %v719 = vld [vmem:[%s718] sm:$0xf]
      %v721 = vsel %vm456, %v716, 0
      %v724 = vsel %vm456, %v717, 0
      %v727 = vsel %vm463, %v719, 0
      %729 = vmatprep.subr.mxu0 0.0
      %730 = vmatpush1.msra.mxu0 %v727
      %731 = vmatprep.subr.mxu0 0.0
      %732 = vmatpush1.msra.mxu0 0.0
      %733 = vmatprep.subr.mxu0 0.0
      %734 = vmatpush1.msra.mxu0 0.0
      %735 = vmatprep.subr.mxu0 0.0
      %736 = vmatpush1.msra.mxu0 0.0
      %737 = vmatprep.subr.mxu0 0.0
      %738 = vmatpush1.msra.mxu0 0.0
      %739 = vmatprep.subr.mxu0 0.0
      %740 = vmatpush1.msra.mxu0 0.0
      %741 = vmatprep.subr.mxu0 0.0
      %742 = vmatpush1.msra.mxu0 0.0
      %743 = vmatprep.subr.mxu0 0.0
      %744 = vmatpush1.msra.mxu0 0.0
      %745 = vmatprep.subr.mxu0 0.0
      %746 = vmatpush1.msra.mxu0 0.0
      %747 = vmatprep.subr.mxu0 0.0
      %748 = vmatpush1.msra.mxu0 0.0
      %749 = vmatprep.subr.mxu0 0.0
      %750 = vmatpush1.msra.mxu0 0.0
      %751 = vmatprep.subr.mxu0 0.0
      %752 = vmatpush1.msra.mxu0 0.0
      %753 = vmatprep.subr.mxu0 0.0
      %754 = vmatpush1.msra.mxu0 0.0
      %755 = vmatprep.subr.mxu0 0.0
      %756 = vmatpush1.msra.mxu0 0.0
      %757 = vmatprep.subr.mxu0 0.0
      %758 = vmatpush1.msra.mxu0 0.0
      %759 = vmatprep.subr.mxu0 0.0
      %760 = vmatpush1.msra.mxu0 0.0
      %761 = vmatprep.subr.mxu0 0.0
      %762 = vmatpush1.msra.mxu0 0.0
      %763 = vmatprep.subr.mxu0 0.0
      %764 = vmatpush1.msra.mxu0 0.0
      %765 = vmatprep.subr.mxu0 0.0
      %766 = vmatpush1.msra.mxu0 0.0
      %767 = vmatprep.subr.mxu0 0.0
      %768 = vmatpush1.msra.mxu0 0.0
      %769 = vmatprep.subr.mxu0 0.0
      %770 = vmatpush1.msra.mxu0 0.0
      %771 = vmatprep.subr.mxu0 0.0
      %772 = vmatpush1.msra.mxu0 0.0
      %773 = vmatprep.subr.mxu0 0.0
      %774 = vmatpush1.msra.mxu0 0.0
      %775 = vmatprep.subr.mxu0 0.0
      %776 = vmatpush1.msra.mxu0 0.0
      %777 = vmatprep.subr.mxu0 0.0
      %778 = vmatpush1.msra.mxu0 0.0
      %779 = vmatprep.subr.mxu0 0.0
      %780 = vmatpush1.msra.mxu0 0.0
      %781 = vmatprep.subr.mxu0 0.0
      %782 = vmatpush1.msra.mxu0 0.0
      %783 = vmatprep.subr.mxu0 0.0
      %784 = vmatpush1.msra.mxu0 0.0
      %785 = vmatprep.subr.mxu0 0.0
      %786 = vmatpush1.msra.mxu0 0.0
      %787 = vmatprep.subr.mxu0 0.0
      %788 = vmatpush1.msra.mxu0 0.0
      %789 = vmatprep.subr.mxu0 0.0
      %790 = vmatpush1.msra.mxu0 0.0
      %791 = vmatprep.subr.mxu0 0.0
      %792 = vmatpush1.msra.mxu0 0.0
      %793 = vmatprep.mubr.f32.mxu0 0.0
      %794 = vmatmul.mubr.f32.gmra.mrb[0].mxu0 %v721
      %v795 = vpop.f32.mrb[0].mxu0
      %v796 = vadd.f32 0.0, %v795
      %v797 = vpop.f32.mrb[0].mxu0
      %798 = vmatprep.mubr.f32.mxu0 0.0
      %799 = vmatmul.mubr.f32.gmra.mrb[0].mxu0 %v724
      %v800 = vpop.f32.mrb[0].mxu0
      %v801 = vadd.f32 0.0, %v800
      %v802 = vpop.f32.mrb[0].mxu0
      %803 = vdwg.mxu0
      %v804 = vadd.f32 %v714, %v796
      %v805 = vadd.f32 %v715, %v801
      %v806 = vld [vmem:[%s400 + $0x1] sm:$0xff]
      %v807 = vld [vmem:[%s400 + $0x9] sm:$0xff]
      %s808 = scalar_lea.vmem %s4, 16
      %v809 = vld [vmem:[%s808] sm:$0xf]
      %v811 = vsel %vm456, %v806, 0
      %v814 = vsel %vm456, %v807, 0
      %v817 = vsel %vm463, %v809, 0
      %819 = vmatprep.subr.mxu0 0.0
      %820 = vmatpush1.msra.mxu0 %v817
      %821 = vmatprep.subr.mxu0 0.0
      %822 = vmatpush1.msra.mxu0 0.0
      %823 = vmatprep.subr.mxu0 0.0
      %824 = vmatpush1.msra.mxu0 0.0
      %825 = vmatprep.subr.mxu0 0.0
      %826 = vmatpush1.msra.mxu0 0.0
      %827 = vmatprep.subr.mxu0 0.0
      %828 = vmatpush1.msra.mxu0 0.0
      %829 = vmatprep.subr.mxu0 0.0
      %830 = vmatpush1.msra.mxu0 0.0
      %831 = vmatprep.subr.mxu0 0.0
      %832 = vmatpush1.msra.mxu0 0.0
      %833 = vmatprep.subr.mxu0 0.0
      %834 = vmatpush1.msra.mxu0 0.0
      %835 = vmatprep.subr.mxu0 0.0
      %836 = vmatpush1.msra.mxu0 0.0
      %837 = vmatprep.subr.mxu0 0.0
      %838 = vmatpush1.msra.mxu0 0.0
      %839 = vmatprep.subr.mxu0 0.0
      %840 = vmatpush1.msra.mxu0 0.0
      %841 = vmatprep.subr.mxu0 0.0
      %842 = vmatpush1.msra.mxu0 0.0
      %843 = vmatprep.subr.mxu0 0.0
      %844 = vmatpush1.msra.mxu0 0.0
      %845 = vmatprep.subr.mxu0 0.0
      %846 = vmatpush1.msra.mxu0 0.0
      %847 = vmatprep.subr.mxu0 0.0
      %848 = vmatpush1.msra.mxu0 0.0
      %849 = vmatprep.subr.mxu0 0.0
      %850 = vmatpush1.msra.mxu0 0.0
      %851 = vmatprep.subr.mxu0 0.0
      %852 = vmatpush1.msra.mxu0 0.0
      %853 = vmatprep.subr.mxu0 0.0
      %854 = vmatpush1.msra.mxu0 0.0
      %855 = vmatprep.subr.mxu0 0.0
      %856 = vmatpush1.msra.mxu0 0.0
      %857 = vmatprep.subr.mxu0 0.0
      %858 = vmatpush1.msra.mxu0 0.0
      %859 = vmatprep.subr.mxu0 0.0
      %860 = vmatpush1.msra.mxu0 0.0
      %861 = vmatprep.subr.mxu0 0.0
      %862 = vmatpush1.msra.mxu0 0.0
      %863 = vmatprep.subr.mxu0 0.0
      %864 = vmatpush1.msra.mxu0 0.0
      %865 = vmatprep.subr.mxu0 0.0
      %866 = vmatpush1.msra.mxu0 0.0
      %867 = vmatprep.subr.mxu0 0.0
      %868 = vmatpush1.msra.mxu0 0.0
      %869 = vmatprep.subr.mxu0 0.0
      %870 = vmatpush1.msra.mxu0 0.0
      %871 = vmatprep.subr.mxu0 0.0
      %872 = vmatpush1.msra.mxu0 0.0
      %873 = vmatprep.subr.mxu0 0.0
      %874 = vmatpush1.msra.mxu0 0.0
      %875 = vmatprep.subr.mxu0 0.0
      %876 = vmatpush1.msra.mxu0 0.0
      %877 = vmatprep.subr.mxu0 0.0
      %878 = vmatpush1.msra.mxu0 0.0
      %879 = vmatprep.subr.mxu0 0.0
      %880 = vmatpush1.msra.mxu0 0.0
      %881 = vmatprep.subr.mxu0 0.0
      %882 = vmatpush1.msra.mxu0 0.0
      %883 = vmatprep.mubr.f32.mxu0 0.0
      %884 = vmatmul.mubr.f32.gmra.mrb[0].mxu0 %v811
      %v885 = vpop.f32.mrb[0].mxu0
      %v886 = vadd.f32 0.0, %v885
      %v887 = vpop.f32.mrb[0].mxu0
      %888 = vmatprep.mubr.f32.mxu0 0.0
      %889 = vmatmul.mubr.f32.gmra.mrb[0].mxu0 %v814
      %v890 = vpop.f32.mrb[0].mxu0
      %v891 = vadd.f32 0.0, %v890
      %v892 = vpop.f32.mrb[0].mxu0
      %893 = vdwg.mxu0
      %v894 = vadd.f32 %v804, %v886
      %v895 = vadd.f32 %v805, %v891
      %v896 = vld [vmem:[%s400 + $0x2] sm:$0xff]
      %v897 = vld [vmem:[%s400 + $0xa] sm:$0xff]
      %s898 = scalar_lea.vmem %s4, 20
      %v899 = vld [vmem:[%s898] sm:$0xf]
      %v901 = vsel %vm456, %v896, 0
      %v904 = vsel %vm456, %v897, 0
      %v907 = vsel %vm463, %v899, 0
      %909 = vmatprep.subr.mxu0 0.0
      %910 = vmatpush1.msra.mxu0 %v907
      %911 = vmatprep.subr.mxu0 0.0
      %912 = vmatpush1.msra.mxu0 0.0
      %913 = vmatprep.subr.mxu0 0.0
      %914 = vmatpush1.msra.mxu0 0.0
      %915 = vmatprep.subr.mxu0 0.0
      %916 = vmatpush1.msra.mxu0 0.0
      %917 = vmatprep.subr.mxu0 0.0
      %918 = vmatpush1.msra.mxu0 0.0
      %919 = vmatprep.subr.mxu0 0.0
      %920 = vmatpush1.msra.mxu0 0.0
      %921 = vmatprep.subr.mxu0 0.0
      %922 = vmatpush1.msra.mxu0 0.0
      %923 = vmatprep.subr.mxu0 0.0
      %924 = vmatpush1.msra.mxu0 0.0
      %925 = vmatprep.subr.mxu0 0.0
      %926 = vmatpush1.msra.mxu0 0.0
      %927 = vmatprep.subr.mxu0 0.0
      %928 = vmatpush1.msra.mxu0 0.0
      %929 = vmatprep.subr.mxu0 0.0
      %930 = vmatpush1.msra.mxu0 0.0
      %931 = vmatprep.subr.mxu0 0.0
      %932 = vmatpush1.msra.mxu0 0.0
      %933 = vmatprep.subr.mxu0 0.0
      %934 = vmatpush1.msra.mxu0 0.0
      %935 = vmatprep.subr.mxu0 0.0
      %936 = vmatpush1.msra.mxu0 0.0
      %937 = vmatprep.subr.mxu0 0.0
      %938 = vmatpush1.msra.mxu0 0.0
      %939 = vmatprep.subr.mxu0 0.0
      %940 = vmatpush1.msra.mxu0 0.0
      %941 = vmatprep.subr.mxu0 0.0
      %942 = vmatpush1.msra.mxu0 0.0
      %943 = vmatprep.subr.mxu0 0.0
      %944 = vmatpush1.msra.mxu0 0.0
      %945 = vmatprep.subr.mxu0 0.0
      %946 = vmatpush1.msra.mxu0 0.0
      %947 = vmatprep.subr.mxu0 0.0
      %948 = vmatpush1.msra.mxu0 0.0
      %949 = vmatprep.subr.mxu0 0.0
      %950 = vmatpush1.msra.mxu0 0.0
      %951 = vmatprep.subr.mxu0 0.0
      %952 = vmatpush1.msra.mxu0 0.0
      %953 = vmatprep.subr.mxu0 0.0
      %954 = vmatpush1.msra.mxu0 0.0
      %955 = vmatprep.subr.mxu0 0.0
      %956 = vmatpush1.msra.mxu0 0.0
      %957 = vmatprep.subr.mxu0 0.0
      %958 = vmatpush1.msra.mxu0 0.0
      %959 = vmatprep.subr.mxu0 0.0
      %960 = vmatpush1.msra.mxu0 0.0
      %961 = vmatprep.subr.mxu0 0.0
      %962 = vmatpush1.msra.mxu0 0.0
      %963 = vmatprep.subr.mxu0 0.0
      %964 = vmatpush1.msra.mxu0 0.0
      %965 = vmatprep.subr.mxu0 0.0
      %966 = vmatpush1.msra.mxu0 0.0
      %967 = vmatprep.subr.mxu0 0.0
      %968 = vmatpush1.msra.mxu0 0.0
      %969 = vmatprep.subr.mxu0 0.0
      %970 = vmatpush1.msra.mxu0 0.0
      %971 = vmatprep.subr.mxu0 0.0
      %972 = vmatpush1.msra.mxu0 0.0
      %973 = vmatprep.mubr.f32.mxu0 0.0
      %974 = vmatmul.mubr.f32.gmra.mrb[0].mxu0 %v901
      %v975 = vpop.f32.mrb[0].mxu0
      %v976 = vadd.f32 0.0, %v975
      %v977 = vpop.f32.mrb[0].mxu0
      %978 = vmatprep.mubr.f32.mxu0 0.0
      %979 = vmatmul.mubr.f32.gmra.mrb[0].mxu0 %v904
      %v980 = vpop.f32.mrb[0].mxu0
      %v981 = vadd.f32 0.0, %v980
      %v982 = vpop.f32.mrb[0].mxu0
      %983 = vdwg.mxu0
      %v984 = vadd.f32 %v894, %v976
      %v985 = vadd.f32 %v895, %v981
      %v986 = vld [vmem:[%s413] sm:$0xff]
      %v987 = vld [vmem:[%s413 + $0x8] sm:$0xff]
      %s988 = scalar_lea.vmem %s4, 24
      %v989 = vld [vmem:[%s988] sm:$0xf]
      %v991 = vsel %vm456, %v986, 0
      %v994 = vsel %vm456, %v987, 0
      %v997 = vsel %vm463, %v989, 0
      %999 = vmatprep.subr.mxu0 0.0
      %1000 = vmatpush1.msra.mxu0 %v997
      %1001 = vmatprep.subr.mxu0 0.0
      %1002 = vmatpush1.msra.mxu0 0.0
      %1003 = vmatprep.subr.mxu0 0.0
      %1004 = vmatpush1.msra.mxu0 0.0
      %1005 = vmatprep.subr.mxu0 0.0
      %1006 = vmatpush1.msra.mxu0 0.0
      %1007 = vmatprep.subr.mxu0 0.0
      %1008 = vmatpush1.msra.mxu0 0.0
      %1009 = vmatprep.subr.mxu0 0.0
      %1010 = vmatpush1.msra.mxu0 0.0
      %1011 = vmatprep.subr.mxu0 0.0
      %1012 = vmatpush1.msra.mxu0 0.0
      %1013 = vmatprep.subr.mxu0 0.0
      %1014 = vmatpush1.msra.mxu0 0.0
      %1015 = vmatprep.subr.mxu0 0.0
      %1016 = vmatpush1.msra.mxu0 0.0
      %1017 = vmatprep.subr.mxu0 0.0
      %1018 = vmatpush1.msra.mxu0 0.0
      %1019 = vmatprep.subr.mxu0 0.0
      %1020 = vmatpush1.msra.mxu0 0.0
      %1021 = vmatprep.subr.mxu0 0.0
      %1022 = vmatpush1.msra.mxu0 0.0
      %1023 = vmatprep.subr.mxu0 0.0
      %1024 = vmatpush1.msra.mxu0 0.0
      %1025 = vmatprep.subr.mxu0 0.0
      %1026 = vmatpush1.msra.mxu0 0.0
      %1027 = vmatprep.subr.mxu0 0.0
      %1028 = vmatpush1.msra.mxu0 0.0
      %1029 = vmatprep.subr.mxu0 0.0
      %1030 = vmatpush1.msra.mxu0 0.0
      %1031 = vmatprep.subr.mxu0 0.0
      %1032 = vmatpush1.msra.mxu0 0.0
      %1033 = vmatprep.subr.mxu0 0.0
      %1034 = vmatpush1.msra.mxu0 0.0
      %1035 = vmatprep.subr.mxu0 0.0
      %1036 = vmatpush1.msra.mxu0 0.0
      %1037 = vmatprep.subr.mxu0 0.0
      %1038 = vmatpush1.msra.mxu0 0.0
      %1039 = vmatprep.subr.mxu0 0.0
      %1040 = vmatpush1.msra.mxu0 0.0
      %1041 = vmatprep.subr.mxu0 0.0
      %1042 = vmatpush1.msra.mxu0 0.0
      %1043 = vmatprep.subr.mxu0 0.0
      %1044 = vmatpush1.msra.mxu0 0.0
      %1045 = vmatprep.subr.mxu0 0.0
      %1046 = vmatpush1.msra.mxu0 0.0
      %1047 = vmatprep.subr.mxu0 0.0
      %1048 = vmatpush1.msra.mxu0 0.0
      %1049 = vmatprep.subr.mxu0 0.0
      %1050 = vmatpush1.msra.mxu0 0.0
      %1051 = vmatprep.subr.mxu0 0.0
      %1052 = vmatpush1.msra.mxu0 0.0
      %1053 = vmatprep.subr.mxu0 0.0
      %1054 = vmatpush1.msra.mxu0 0.0
      %1055 = vmatprep.subr.mxu0 0.0
      %1056 = vmatpush1.msra.mxu0 0.0
      %1057 = vmatprep.subr.mxu0 0.0
      %1058 = vmatpush1.msra.mxu0 0.0
      %1059 = vmatprep.subr.mxu0 0.0
      %1060 = vmatpush1.msra.mxu0 0.0
      %1061 = vmatprep.subr.mxu0 0.0
      %1062 = vmatpush1.msra.mxu0 0.0
      %1063 = vmatprep.mubr.f32.mxu0 0.0
      %1064 = vmatmul.mubr.f32.gmra.mrb[0].mxu0 %v991
      %v1065 = vpop.f32.mrb[0].mxu0
      %v1066 = vadd.f32 0.0, %v1065
      %v1067 = vpop.f32.mrb[0].mxu0
      %1068 = vmatprep.mubr.f32.mxu0 0.0
      %1069 = vmatmul.mubr.f32.gmra.mrb[0].mxu0 %v994
      %v1070 = vpop.f32.mrb[0].mxu0
      %v1071 = vadd.f32 0.0, %v1070
      %v1072 = vpop.f32.mrb[0].mxu0
      %1073 = vdwg.mxu0
      %v1074 = vadd.f32 %v984, %v1066
      %v1075 = vadd.f32 %v985, %v1071
      %v1076 = vld [vmem:[%s413 + $0x1] sm:$0xff]
      %v1077 = vld [vmem:[%s413 + $0x9] sm:$0xff]
      %s1078 = scalar_lea.vmem %s4, 28
      %v1079 = vld [vmem:[%s1078] sm:$0xf]
      %v1081 = vsel %vm456, %v1076, 0
      %v1084 = vsel %vm456, %v1077, 0
      %v1087 = vsel %vm463, %v1079, 0
      %1089 = vmatprep.subr.mxu0 0.0
      %1090 = vmatpush1.msra.mxu0 %v1087
      %1091 = vmatprep.subr.mxu0 0.0
      %1092 = vmatpush1.msra.mxu0 0.0
      %1093 = vmatprep.subr.mxu0 0.0
      %1094 = vmatpush1.msra.mxu0 0.0
      %1095 = vmatprep.subr.mxu0 0.0
      %1096 = vmatpush1.msra.mxu0 0.0
      %1097 = vmatprep.subr.mxu0 0.0
      %1098 = vmatpush1.msra.mxu0 0.0
      %1099 = vmatprep.subr.mxu0 0.0
      %1100 = vmatpush1.msra.mxu0 0.0
      %1101 = vmatprep.subr.mxu0 0.0
      %1102 = vmatpush1.msra.mxu0 0.0
      %1103 = vmatprep.subr.mxu0 0.0
      %1104 = vmatpush1.msra.mxu0 0.0
      %1105 = vmatprep.subr.mxu0 0.0
      %1106 = vmatpush1.msra.mxu0 0.0
      %1107 = vmatprep.subr.mxu0 0.0
      %1108 = vmatpush1.msra.mxu0 0.0
      %1109 = vmatprep.subr.mxu0 0.0
      %1110 = vmatpush1.msra.mxu0 0.0
      %1111 = vmatprep.subr.mxu0 0.0
      %1112 = vmatpush1.msra.mxu0 0.0
      %1113 = vmatprep.subr.mxu0 0.0
      %1114 = vmatpush1.msra.mxu0 0.0
      %1115 = vmatprep.subr.mxu0 0.0
      %1116 = vmatpush1.msra.mxu0 0.0
      %1117 = vmatprep.subr.mxu0 0.0
      %1118 = vmatpush1.msra.mxu0 0.0
      %1119 = vmatprep.subr.mxu0 0.0
      %1120 = vmatpush1.msra.mxu0 0.0
      %1121 = vmatprep.subr.mxu0 0.0
      %1122 = vmatpush1.msra.mxu0 0.0
      %1123 = vmatprep.subr.mxu0 0.0
      %1124 = vmatpush1.msra.mxu0 0.0
      %1125 = vmatprep.subr.mxu0 0.0
      %1126 = vmatpush1.msra.mxu0 0.0
      %1127 = vmatprep.subr.mxu0 0.0
      %1128 = vmatpush1.msra.mxu0 0.0
      %1129 = vmatprep.subr.mxu0 0.0
      %1130 = vmatpush1.msra.mxu0 0.0
      %1131 = vmatprep.subr.mxu0 0.0
      %1132 = vmatpush1.msra.mxu0 0.0
      %1133 = vmatprep.subr.mxu0 0.0
      %1134 = vmatpush1.msra.mxu0 0.0
      %1135 = vmatprep.subr.mxu0 0.0
      %1136 = vmatpush1.msra.mxu0 0.0
      %1137 = vmatprep.subr.mxu0 0.0
      %1138 = vmatpush1.msra.mxu0 0.0
      %1139 = vmatprep.subr.mxu0 0.0
      %1140 = vmatpush1.msra.mxu0 0.0
      %1141 = vmatprep.subr.mxu0 0.0
      %1142 = vmatpush1.msra.mxu0 0.0
      %1143 = vmatprep.subr.mxu0 0.0
      %1144 = vmatpush1.msra.mxu0 0.0
      %1145 = vmatprep.subr.mxu0 0.0
      %1146 = vmatpush1.msra.mxu0 0.0
      %1147 = vmatprep.subr.mxu0 0.0
      %1148 = vmatpush1.msra.mxu0 0.0
      %1149 = vmatprep.subr.mxu0 0.0
      %1150 = vmatpush1.msra.mxu0 0.0
      %1151 = vmatprep.subr.mxu0 0.0
      %1152 = vmatpush1.msra.mxu0 0.0
      %1153 = vmatprep.mubr.f32.mxu0 0.0
      %1154 = vmatmul.mubr.f32.gmra.mrb[0].mxu0 %v1081
      %v1155 = vpop.f32.mrb[0].mxu0
      %v1156 = vadd.f32 0.0, %v1155
      %v1157 = vpop.f32.mrb[0].mxu0
      %1158 = vmatprep.mubr.f32.mxu0 0.0
      %1159 = vmatmul.mubr.f32.gmra.mrb[0].mxu0 %v1084
      %v1160 = vpop.f32.mrb[0].mxu0
      %v1161 = vadd.f32 0.0, %v1160
      %v1162 = vpop.f32.mrb[0].mxu0
      %1163 = vdwg.mxu0
      %v1164 = vadd.f32 %v1074, %v1156
      %v1165 = vadd.f32 %v1075, %v1161
      %v1166 = vld [vmem:[%s413 + $0x2] sm:$0xff]
      %v1167 = vld [vmem:[%s413 + $0xa] sm:$0xff]
      %s1168 = scalar_lea.vmem %s4, 32
      %v1169 = vld [vmem:[%s1168] sm:$0xf]
      %v1171 = vsel %vm456, %v1166, 0
      %v1174 = vsel %vm456, %v1167, 0
      %v1177 = vsel %vm463, %v1169, 0
      %1179 = vmatprep.subr.mxu0 0.0
      %1180 = vmatpush1.msra.mxu0 %v1177
      %1181 = vmatprep.subr.mxu0 0.0
      %1182 = vmatpush1.msra.mxu0 0.0
      %1183 = vmatprep.subr.mxu0 0.0
      %1184 = vmatpush1.msra.mxu0 0.0
      %1185 = vmatprep.subr.mxu0 0.0
      %1186 = vmatpush1.msra.mxu0 0.0
      %1187 = vmatprep.subr.mxu0 0.0
      %1188 = vmatpush1.msra.mxu0 0.0
      %1189 = vmatprep.subr.mxu0 0.0
      %1190 = vmatpush1.msra.mxu0 0.0
      %1191 = vmatprep.subr.mxu0 0.0
      %1192 = vmatpush1.msra.mxu0 0.0
      %1193 = vmatprep.subr.mxu0 0.0
      %1194 = vmatpush1.msra.mxu0 0.0
      %1195 = vmatprep.subr.mxu0 0.0
      %1196 = vmatpush1.msra.mxu0 0.0
      %1197 = vmatprep.subr.mxu0 0.0
      %1198 = vmatpush1.msra.mxu0 0.0
      %1199 = vmatprep.subr.mxu0 0.0
      %1200 = vmatpush1.msra.mxu0 0.0
      %1201 = vmatprep.subr.mxu0 0.0
      %1202 = vmatpush1.msra.mxu0 0.0
      %1203 = vmatprep.subr.mxu0 0.0
      %1204 = vmatpush1.msra.mxu0 0.0
      %1205 = vmatprep.subr.mxu0 0.0
      %1206 = vmatpush1.msra.mxu0 0.0
      %1207 = vmatprep.subr.mxu0 0.0
      %1208 = vmatpush1.msra.mxu0 0.0
      %1209 = vmatprep.subr.mxu0 0.0
      %1210 = vmatpush1.msra.mxu0 0.0
      %1211 = vmatprep.subr.mxu0 0.0
      %1212 = vmatpush1.msra.mxu0 0.0
      %1213 = vmatprep.subr.mxu0 0.0
      %1214 = vmatpush1.msra.mxu0 0.0
      %1215 = vmatprep.subr.mxu0 0.0
      %1216 = vmatpush1.msra.mxu0 0.0
      %1217 = vmatprep.subr.mxu0 0.0
      %1218 = vmatpush1.msra.mxu0 0.0
      %1219 = vmatprep.subr.mxu0 0.0
      %1220 = vmatpush1.msra.mxu0 0.0
      %1221 = vmatprep.subr.mxu0 0.0
      %1222 = vmatpush1.msra.mxu0 0.0
      %1223 = vmatprep.subr.mxu0 0.0
      %1224 = vmatpush1.msra.mxu0 0.0
      %1225 = vmatprep.subr.mxu0 0.0
      %1226 = vmatpush1.msra.mxu0 0.0
      %1227 = vmatprep.subr.mxu0 0.0
      %1228 = vmatpush1.msra.mxu0 0.0
      %1229 = vmatprep.subr.mxu0 0.0
      %1230 = vmatpush1.msra.mxu0 0.0
      %1231 = vmatprep.subr.mxu0 0.0
      %1232 = vmatpush1.msra.mxu0 0.0
      %1233 = vmatprep.subr.mxu0 0.0
      %1234 = vmatpush1.msra.mxu0 0.0
      %1235 = vmatprep.subr.mxu0 0.0
      %1236 = vmatpush1.msra.mxu0 0.0
      %1237 = vmatprep.subr.mxu0 0.0
      %1238 = vmatpush1.msra.mxu0 0.0
      %1239 = vmatprep.subr.mxu0 0.0
      %1240 = vmatpush1.msra.mxu0 0.0
      %1241 = vmatprep.subr.mxu0 0.0
      %1242 = vmatpush1.msra.mxu0 0.0
      %1243 = vmatprep.mubr.f32.mxu0 0.0
      %1244 = vmatmul.mubr.f32.gmra.mrb[0].mxu0 %v1171
      %v1245 = vpop.f32.mrb[0].mxu0
      %v1246 = vadd.f32 0.0, %v1245
      %v1247 = vpop.f32.mrb[0].mxu0
      %1248 = vmatprep.mubr.f32.mxu0 0.0
      %1249 = vmatmul.mubr.f32.gmra.mrb[0].mxu0 %v1174
      %v1250 = vpop.f32.mrb[0].mxu0
      %v1251 = vadd.f32 0.0, %v1250
      %v1252 = vpop.f32.mrb[0].mxu0
      %1253 = vdwg.mxu0
      %v1254 = vadd.f32 %v1164, %v1246
      %v1255 = vadd.f32 %v1165, %v1251
      %v1256 = vld [vmem:[%s5] sm:$0x1]
      %v1258 = vlaneseq
      %v1259 = vshrl.u32 %v1258, 7
      %v1260 = vsub.s32 0, %v1259
      %v1261 = vrot.slane %v1256, %v1260
      %v1263 = vadd.f32 %v1254, %v1261
      %v1264 = vadd.f32 %v1255, %v1261
      %v1265 = vmax.f32 %v1263, 0.0
      %v1266 = vmax.f32 %v1264, 0.0
      %1267 = vmatprep.subr.mxu0 0.0
      %1268 = vmatpush1.msra.mxu0 %v465
      %1269 = vmatprep.subr.mxu0 0.0
      %1270 = vmatpush1.msra.mxu0 0.0
      %1271 = vmatprep.subr.mxu0 0.0
      %1272 = vmatpush1.msra.mxu0 0.0
      %1273 = vmatprep.subr.mxu0 0.0
      %1274 = vmatpush1.msra.mxu0 0.0
      %1275 = vmatprep.subr.mxu0 0.0
      %1276 = vmatpush1.msra.mxu0 0.0
      %1277 = vmatprep.subr.mxu0 0.0
      %1278 = vmatpush1.msra.mxu0 0.0
      %1279 = vmatprep.subr.mxu0 0.0
      %1280 = vmatpush1.msra.mxu0 0.0
      %1281 = vmatprep.subr.mxu0 0.0
      %1282 = vmatpush1.msra.mxu0 0.0
      %1283 = vmatprep.subr.mxu0 0.0
      %1284 = vmatpush1.msra.mxu0 0.0
      %1285 = vmatprep.subr.mxu0 0.0
      %1286 = vmatpush1.msra.mxu0 0.0
      %1287 = vmatprep.subr.mxu0 0.0
      %1288 = vmatpush1.msra.mxu0 0.0
      %1289 = vmatprep.subr.mxu0 0.0
      %1290 = vmatpush1.msra.mxu0 0.0
      %1291 = vmatprep.subr.mxu0 0.0
      %1292 = vmatpush1.msra.mxu0 0.0
      %1293 = vmatprep.subr.mxu0 0.0
      %1294 = vmatpush1.msra.mxu0 0.0
      %1295 = vmatprep.subr.mxu0 0.0
      %1296 = vmatpush1.msra.mxu0 0.0
      %1297 = vmatprep.subr.mxu0 0.0
      %1298 = vmatpush1.msra.mxu0 0.0
      %1299 = vmatprep.subr.mxu0 0.0
      %1300 = vmatpush1.msra.mxu0 0.0
      %1301 = vmatprep.subr.mxu0 0.0
      %1302 = vmatpush1.msra.mxu0 0.0
      %1303 = vmatprep.subr.mxu0 0.0
      %1304 = vmatpush1.msra.mxu0 0.0
      %1305 = vmatprep.subr.mxu0 0.0
      %1306 = vmatpush1.msra.mxu0 0.0
      %1307 = vmatprep.subr.mxu0 0.0
      %1308 = vmatpush1.msra.mxu0 0.0
      %1309 = vmatprep.subr.mxu0 0.0
      %1310 = vmatpush1.msra.mxu0 0.0
      %1311 = vmatprep.subr.mxu0 0.0
      %1312 = vmatpush1.msra.mxu0 0.0
      %1313 = vmatprep.subr.mxu0 0.0
      %1314 = vmatpush1.msra.mxu0 0.0
      %1315 = vmatprep.subr.mxu0 0.0
      %1316 = vmatpush1.msra.mxu0 0.0
      %1317 = vmatprep.subr.mxu0 0.0
      %1318 = vmatpush1.msra.mxu0 0.0
      %1319 = vmatprep.subr.mxu0 0.0
      %1320 = vmatpush1.msra.mxu0 0.0
      %1321 = vmatprep.subr.mxu0 0.0
      %1322 = vmatpush1.msra.mxu0 0.0
      %1323 = vmatprep.subr.mxu0 0.0
      %1324 = vmatpush1.msra.mxu0 0.0
      %1325 = vmatprep.subr.mxu0 0.0
      %1326 = vmatpush1.msra.mxu0 0.0
      %1327 = vmatprep.subr.mxu0 0.0
      %1328 = vmatpush1.msra.mxu0 0.0
      %1329 = vmatprep.subr.mxu0 0.0
      %1330 = vmatpush1.msra.mxu0 0.0
      %1331 = vmatprep.mubr.f32.mxu0 0.0
      %1332 = vmatmul.mubr.f32.gmra.mrb[0].mxu0 %v811
      %v1333 = vpop.f32.mrb[0].mxu0
      %v1334 = vadd.f32 0.0, %v1333
      %v1335 = vpop.f32.mrb[0].mxu0
      %1336 = vmatprep.mubr.f32.mxu0 0.0
      %1337 = vmatmul.mubr.f32.gmra.mrb[0].mxu0 %v814
      %v1338 = vpop.f32.mrb[0].mxu0
      %v1339 = vadd.f32 0.0, %v1338
      %v1340 = vpop.f32.mrb[0].mxu0
      %1341 = vdwg.mxu0
      %1342 = vmatprep.subr.mxu0 0.0
      %1343 = vmatpush1.msra.mxu0 %v549
      %1344 = vmatprep.subr.mxu0 0.0
      %1345 = vmatpush1.msra.mxu0 0.0
      %1346 = vmatprep.subr.mxu0 0.0
      %1347 = vmatpush1.msra.mxu0 0.0
      %1348 = vmatprep.subr.mxu0 0.0
      %1349 = vmatpush1.msra.mxu0 0.0
      %1350 = vmatprep.subr.mxu0 0.0
      %1351 = vmatpush1.msra.mxu0 0.0
      %1352 = vmatprep.subr.mxu0 0.0
      %1353 = vmatpush1.msra.mxu0 0.0
      %1354 = vmatprep.subr.mxu0 0.0
      %1355 = vmatpush1.msra.mxu0 0.0
      %1356 = vmatprep.subr.mxu0 0.0
      %1357 = vmatpush1.msra.mxu0 0.0
      %1358 = vmatprep.subr.mxu0 0.0
      %1359 = vmatpush1.msra.mxu0 0.0
      %1360 = vmatprep.subr.mxu0 0.0
      %1361 = vmatpush1.msra.mxu0 0.0
      %1362 = vmatprep.subr.mxu0 0.0
      %1363 = vmatpush1.msra.mxu0 0.0
      %1364 = vmatprep.subr.mxu0 0.0
      %1365 = vmatpush1.msra.mxu0 0.0
      %1366 = vmatprep.subr.mxu0 0.0
      %1367 = vmatpush1.msra.mxu0 0.0
      %1368 = vmatprep.subr.mxu0 0.0
      %1369 = vmatpush1.msra.mxu0 0.0
      %1370 = vmatprep.subr.mxu0 0.0
      %1371 = vmatpush1.msra.mxu0 0.0
      %1372 = vmatprep.subr.mxu0 0.0
      %1373 = vmatpush1.msra.mxu0 0.0
      %1374 = vmatprep.subr.mxu0 0.0
      %1375 = vmatpush1.msra.mxu0 0.0
      %1376 = vmatprep.subr.mxu0 0.0
      %1377 = vmatpush1.msra.mxu0 0.0
      %1378 = vmatprep.subr.mxu0 0.0
      %1379 = vmatpush1.msra.mxu0 0.0
      %1380 = vmatprep.subr.mxu0 0.0
      %1381 = vmatpush1.msra.mxu0 0.0
      %1382 = vmatprep.subr.mxu0 0.0
      %1383 = vmatpush1.msra.mxu0 0.0
      %1384 = vmatprep.subr.mxu0 0.0
      %1385 = vmatpush1.msra.mxu0 0.0
      %1386 = vmatprep.subr.mxu0 0.0
      %1387 = vmatpush1.msra.mxu0 0.0
      %1388 = vmatprep.subr.mxu0 0.0
      %1389 = vmatpush1.msra.mxu0 0.0
      %1390 = vmatprep.subr.mxu0 0.0
      %1391 = vmatpush1.msra.mxu0 0.0
      %1392 = vmatprep.subr.mxu0 0.0
      %1393 = vmatpush1.msra.mxu0 0.0
      %1394 = vmatprep.subr.mxu0 0.0
      %1395 = vmatpush1.msra.mxu0 0.0
      %1396 = vmatprep.subr.mxu0 0.0
      %1397 = vmatpush1.msra.mxu0 0.0
      %1398 = vmatprep.subr.mxu0 0.0
      %1399 = vmatpush1.msra.mxu0 0.0
      %1400 = vmatprep.subr.mxu0 0.0
      %1401 = vmatpush1.msra.mxu0 0.0
      %1402 = vmatprep.subr.mxu0 0.0
      %1403 = vmatpush1.msra.mxu0 0.0
      %1404 = vmatprep.subr.mxu0 0.0
      %1405 = vmatpush1.msra.mxu0 0.0
      %1406 = vmatprep.mubr.f32.mxu0 0.0
      %1407 = vmatmul.mubr.f32.gmra.mrb[0].mxu0 %v721
      %v1408 = vpop.f32.mrb[0].mxu0
      %v1409 = vadd.f32 %v1334, %v1408
      %v1410 = vpop.f32.mrb[0].mxu0
      %1411 = vmatprep.mubr.f32.mxu0 0.0
      %1412 = vmatmul.mubr.f32.gmra.mrb[0].mxu0 %v724
      %v1413 = vpop.f32.mrb[0].mxu0
      %v1414 = vadd.f32 %v1339, %v1413
      %v1415 = vpop.f32.mrb[0].mxu0
      %1416 = vdwg.mxu0
      %1417 = vmatprep.subr.mxu0 0.0
      %1418 = vmatpush1.msra.mxu0 %v637
      %1419 = vmatprep.subr.mxu0 0.0
      %1420 = vmatpush1.msra.mxu0 0.0
      %1421 = vmatprep.subr.mxu0 0.0
      %1422 = vmatpush1.msra.mxu0 0.0
      %1423 = vmatprep.subr.mxu0 0.0
      %1424 = vmatpush1.msra.mxu0 0.0
      %1425 = vmatprep.subr.mxu0 0.0
      %1426 = vmatpush1.msra.mxu0 0.0
      %1427 = vmatprep.subr.mxu0 0.0
      %1428 = vmatpush1.msra.mxu0 0.0
      %1429 = vmatprep.subr.mxu0 0.0
      %1430 = vmatpush1.msra.mxu0 0.0
      %1431 = vmatprep.subr.mxu0 0.0
      %1432 = vmatpush1.msra.mxu0 0.0
      %1433 = vmatprep.subr.mxu0 0.0
      %1434 = vmatpush1.msra.mxu0 0.0
      %1435 = vmatprep.subr.mxu0 0.0
      %1436 = vmatpush1.msra.mxu0 0.0
      %1437 = vmatprep.subr.mxu0 0.0
      %1438 = vmatpush1.msra.mxu0 0.0
      %1439 = vmatprep.subr.mxu0 0.0
      %1440 = vmatpush1.msra.mxu0 0.0
      %1441 = vmatprep.subr.mxu0 0.0
      %1442 = vmatpush1.msra.mxu0 0.0
      %1443 = vmatprep.subr.mxu0 0.0
      %1444 = vmatpush1.msra.mxu0 0.0
      %1445 = vmatprep.subr.mxu0 0.0
      %1446 = vmatpush1.msra.mxu0 0.0
      %1447 = vmatprep.subr.mxu0 0.0
      %1448 = vmatpush1.msra.mxu0 0.0
      %1449 = vmatprep.subr.mxu0 0.0
      %1450 = vmatpush1.msra.mxu0 0.0
      %1451 = vmatprep.subr.mxu0 0.0
      %1452 = vmatpush1.msra.mxu0 0.0
      %1453 = vmatprep.subr.mxu0 0.0
      %1454 = vmatpush1.msra.mxu0 0.0
      %1455 = vmatprep.subr.mxu0 0.0
      %1456 = vmatpush1.msra.mxu0 0.0
      %1457 = vmatprep.subr.mxu0 0.0
      %1458 = vmatpush1.msra.mxu0 0.0
      %1459 = vmatprep.subr.mxu0 0.0
      %1460 = vmatpush1.msra.mxu0 0.0
      %1461 = vmatprep.subr.mxu0 0.0
      %1462 = vmatpush1.msra.mxu0 0.0
      %1463 = vmatprep.subr.mxu0 0.0
      %1464 = vmatpush1.msra.mxu0 0.0
      %1465 = vmatprep.subr.mxu0 0.0
      %1466 = vmatpush1.msra.mxu0 0.0
      %1467 = vmatprep.subr.mxu0 0.0
      %1468 = vmatpush1.msra.mxu0 0.0
      %1469 = vmatprep.subr.mxu0 0.0
      %1470 = vmatpush1.msra.mxu0 0.0
      %1471 = vmatprep.subr.mxu0 0.0
      %1472 = vmatpush1.msra.mxu0 0.0
      %1473 = vmatprep.subr.mxu0 0.0
      %1474 = vmatpush1.msra.mxu0 0.0
      %1475 = vmatprep.subr.mxu0 0.0
      %1476 = vmatpush1.msra.mxu0 0.0
      %1477 = vmatprep.subr.mxu0 0.0
      %1478 = vmatpush1.msra.mxu0 0.0
      %1479 = vmatprep.subr.mxu0 0.0
      %1480 = vmatpush1.msra.mxu0 0.0
      %1481 = vmatprep.mubr.f32.mxu0 0.0
      %1482 = vmatmul.mubr.f32.gmra.mrb[0].mxu0 %v901
      %v1483 = vpop.f32.mrb[0].mxu0
      %v1484 = vadd.f32 0.0, %v1483
      %v1485 = vpop.f32.mrb[0].mxu0
      %1486 = vmatprep.mubr.f32.mxu0 0.0
      %1487 = vmatmul.mubr.f32.gmra.mrb[0].mxu0 %v904
      %v1488 = vpop.f32.mrb[0].mxu0
      %v1489 = vadd.f32 0.0, %v1488
      %v1490 = vpop.f32.mrb[0].mxu0
      %1491 = vdwg.mxu0
      %v1492 = vadd.f32 %v1409, %v1484
      %v1493 = vadd.f32 %v1414, %v1489
      %1494 = vmatprep.subr.mxu0 0.0
      %1495 = vmatpush1.msra.mxu0 %v727
      %1496 = vmatprep.subr.mxu0 0.0
      %1497 = vmatpush1.msra.mxu0 0.0
      %1498 = vmatprep.subr.mxu0 0.0
      %1499 = vmatpush1.msra.mxu0 0.0
      %1500 = vmatprep.subr.mxu0 0.0
      %1501 = vmatpush1.msra.mxu0 0.0
      %1502 = vmatprep.subr.mxu0 0.0
      %1503 = vmatpush1.msra.mxu0 0.0
      %1504 = vmatprep.subr.mxu0 0.0
      %1505 = vmatpush1.msra.mxu0 0.0
      %1506 = vmatprep.subr.mxu0 0.0
      %1507 = vmatpush1.msra.mxu0 0.0
      %1508 = vmatprep.subr.mxu0 0.0
      %1509 = vmatpush1.msra.mxu0 0.0
      %1510 = vmatprep.subr.mxu0 0.0
      %1511 = vmatpush1.msra.mxu0 0.0
      %1512 = vmatprep.subr.mxu0 0.0
      %1513 = vmatpush1.msra.mxu0 0.0
      %1514 = vmatprep.subr.mxu0 0.0
      %1515 = vmatpush1.msra.mxu0 0.0
      %1516 = vmatprep.subr.mxu0 0.0
      %1517 = vmatpush1.msra.mxu0 0.0
      %1518 = vmatprep.subr.mxu0 0.0
      %1519 = vmatpush1.msra.mxu0 0.0
      %1520 = vmatprep.subr.mxu0 0.0
      %1521 = vmatpush1.msra.mxu0 0.0
      %1522 = vmatprep.subr.mxu0 0.0
      %1523 = vmatpush1.msra.mxu0 0.0
      %1524 = vmatprep.subr.mxu0 0.0
      %1525 = vmatpush1.msra.mxu0 0.0
      %1526 = vmatprep.subr.mxu0 0.0
      %1527 = vmatpush1.msra.mxu0 0.0
      %1528 = vmatprep.subr.mxu0 0.0
      %1529 = vmatpush1.msra.mxu0 0.0
      %1530 = vmatprep.subr.mxu0 0.0
      %1531 = vmatpush1.msra.mxu0 0.0
      %1532 = vmatprep.subr.mxu0 0.0
      %1533 = vmatpush1.msra.mxu0 0.0
      %1534 = vmatprep.subr.mxu0 0.0
      %1535 = vmatpush1.msra.mxu0 0.0
      %1536 = vmatprep.subr.mxu0 0.0
      %1537 = vmatpush1.msra.mxu0 0.0
      %1538 = vmatprep.subr.mxu0 0.0
      %1539 = vmatpush1.msra.mxu0 0.0
      %1540 = vmatprep.subr.mxu0 0.0
      %1541 = vmatpush1.msra.mxu0 0.0
      %1542 = vmatprep.subr.mxu0 0.0
      %1543 = vmatpush1.msra.mxu0 0.0
      %1544 = vmatprep.subr.mxu0 0.0
      %1545 = vmatpush1.msra.mxu0 0.0
      %1546 = vmatprep.subr.mxu0 0.0
      %1547 = vmatpush1.msra.mxu0 0.0
      %1548 = vmatprep.subr.mxu0 0.0
      %1549 = vmatpush1.msra.mxu0 0.0
      %1550 = vmatprep.subr.mxu0 0.0
      %1551 = vmatpush1.msra.mxu0 0.0
      %1552 = vmatprep.subr.mxu0 0.0
      %1553 = vmatpush1.msra.mxu0 0.0
      %1554 = vmatprep.subr.mxu0 0.0
      %1555 = vmatpush1.msra.mxu0 0.0
      %1556 = vmatprep.subr.mxu0 0.0
      %1557 = vmatpush1.msra.mxu0 0.0
      %1558 = vmatprep.mubr.f32.mxu0 0.0
      %1559 = vmatmul.mubr.f32.gmra.mrb[0].mxu0 %v991
      %v1560 = vpop.f32.mrb[0].mxu0
      %v1561 = vadd.f32 0.0, %v1560
      %v1562 = vpop.f32.mrb[0].mxu0
      %1563 = vmatprep.mubr.f32.mxu0 0.0
      %1564 = vmatmul.mubr.f32.gmra.mrb[0].mxu0 %v994
      %v1565 = vpop.f32.mrb[0].mxu0
      %v1566 = vadd.f32 0.0, %v1565
      %v1567 = vpop.f32.mrb[0].mxu0
      %1568 = vdwg.mxu0
      %v1569 = vadd.f32 %v1492, %v1561
      %v1570 = vadd.f32 %v1493, %v1566
      %1571 = vmatprep.subr.mxu0 0.0
      %1572 = vmatpush1.msra.mxu0 %v817
      %1573 = vmatprep.subr.mxu0 0.0
      %1574 = vmatpush1.msra.mxu0 0.0
      %1575 = vmatprep.subr.mxu0 0.0
      %1576 = vmatpush1.msra.mxu0 0.0
      %1577 = vmatprep.subr.mxu0 0.0
      %1578 = vmatpush1.msra.mxu0 0.0
      %1579 = vmatprep.subr.mxu0 0.0
      %1580 = vmatpush1.msra.mxu0 0.0
      %1581 = vmatprep.subr.mxu0 0.0
      %1582 = vmatpush1.msra.mxu0 0.0
      %1583 = vmatprep.subr.mxu0 0.0
      %1584 = vmatpush1.msra.mxu0 0.0
      %1585 = vmatprep.subr.mxu0 0.0
      %1586 = vmatpush1.msra.mxu0 0.0
      %1587 = vmatprep.subr.mxu0 0.0
      %1588 = vmatpush1.msra.mxu0 0.0
      %1589 = vmatprep.subr.mxu0 0.0
      %1590 = vmatpush1.msra.mxu0 0.0
      %1591 = vmatprep.subr.mxu0 0.0
      %1592 = vmatpush1.msra.mxu0 0.0
      %1593 = vmatprep.subr.mxu0 0.0
      %1594 = vmatpush1.msra.mxu0 0.0
      %1595 = vmatprep.subr.mxu0 0.0
      %1596 = vmatpush1.msra.mxu0 0.0
      %1597 = vmatprep.subr.mxu0 0.0
      %1598 = vmatpush1.msra.mxu0 0.0
      %1599 = vmatprep.subr.mxu0 0.0
      %1600 = vmatpush1.msra.mxu0 0.0
      %1601 = vmatprep.subr.mxu0 0.0
      %1602 = vmatpush1.msra.mxu0 0.0
      %1603 = vmatprep.subr.mxu0 0.0
      %1604 = vmatpush1.msra.mxu0 0.0
      %1605 = vmatprep.subr.mxu0 0.0
      %1606 = vmatpush1.msra.mxu0 0.0
      %1607 = vmatprep.subr.mxu0 0.0
      %1608 = vmatpush1.msra.mxu0 0.0
      %1609 = vmatprep.subr.mxu0 0.0
      %1610 = vmatpush1.msra.mxu0 0.0
      %1611 = vmatprep.subr.mxu0 0.0
      %1612 = vmatpush1.msra.mxu0 0.0
      %1613 = vmatprep.subr.mxu0 0.0
      %1614 = vmatpush1.msra.mxu0 0.0
      %1615 = vmatprep.subr.mxu0 0.0
      %1616 = vmatpush1.msra.mxu0 0.0
      %1617 = vmatprep.subr.mxu0 0.0
      %1618 = vmatpush1.msra.mxu0 0.0
      %1619 = vmatprep.subr.mxu0 0.0
      %1620 = vmatpush1.msra.mxu0 0.0
      %1621 = vmatprep.subr.mxu0 0.0
      %1622 = vmatpush1.msra.mxu0 0.0
      %1623 = vmatprep.subr.mxu0 0.0
      %1624 = vmatpush1.msra.mxu0 0.0
      %1625 = vmatprep.subr.mxu0 0.0
      %1626 = vmatpush1.msra.mxu0 0.0
      %1627 = vmatprep.subr.mxu0 0.0
      %1628 = vmatpush1.msra.mxu0 0.0
      %1629 = vmatprep.subr.mxu0 0.0
      %1630 = vmatpush1.msra.mxu0 0.0
      %1631 = vmatprep.subr.mxu0 0.0
      %1632 = vmatpush1.msra.mxu0 0.0
      %1633 = vmatprep.subr.mxu0 0.0
      %1634 = vmatpush1.msra.mxu0 0.0
      %1635 = vmatprep.mubr.f32.mxu0 0.0
      %1636 = vmatmul.mubr.f32.gmra.mrb[0].mxu0 %v1081
      %v1637 = vpop.f32.mrb[0].mxu0
      %v1638 = vadd.f32 0.0, %v1637
      %v1639 = vpop.f32.mrb[0].mxu0
      %1640 = vmatprep.mubr.f32.mxu0 0.0
      %1641 = vmatmul.mubr.f32.gmra.mrb[0].mxu0 %v1084
      %v1642 = vpop.f32.mrb[0].mxu0
      %v1643 = vadd.f32 0.0, %v1642
      %v1644 = vpop.f32.mrb[0].mxu0
      %1645 = vdwg.mxu0
      %v1646 = vadd.f32 %v1569, %v1638
      %v1647 = vadd.f32 %v1570, %v1643
      %1648 = vmatprep.subr.mxu0 0.0
      %1649 = vmatpush1.msra.mxu0 %v907
      %1650 = vmatprep.subr.mxu0 0.0
      %1651 = vmatpush1.msra.mxu0 0.0
      %1652 = vmatprep.subr.mxu0 0.0
      %1653 = vmatpush1.msra.mxu0 0.0
      %1654 = vmatprep.subr.mxu0 0.0
      %1655 = vmatpush1.msra.mxu0 0.0
      %1656 = vmatprep.subr.mxu0 0.0
      %1657 = vmatpush1.msra.mxu0 0.0
      %1658 = vmatprep.subr.mxu0 0.0
      %1659 = vmatpush1.msra.mxu0 0.0
      %1660 = vmatprep.subr.mxu0 0.0
      %1661 = vmatpush1.msra.mxu0 0.0
      %1662 = vmatprep.subr.mxu0 0.0
      %1663 = vmatpush1.msra.mxu0 0.0
      %1664 = vmatprep.subr.mxu0 0.0
      %1665 = vmatpush1.msra.mxu0 0.0
      %1666 = vmatprep.subr.mxu0 0.0
      %1667 = vmatpush1.msra.mxu0 0.0
      %1668 = vmatprep.subr.mxu0 0.0
      %1669 = vmatpush1.msra.mxu0 0.0
      %1670 = vmatprep.subr.mxu0 0.0
      %1671 = vmatpush1.msra.mxu0 0.0
      %1672 = vmatprep.subr.mxu0 0.0
      %1673 = vmatpush1.msra.mxu0 0.0
      %1674 = vmatprep.subr.mxu0 0.0
      %1675 = vmatpush1.msra.mxu0 0.0
      %1676 = vmatprep.subr.mxu0 0.0
      %1677 = vmatpush1.msra.mxu0 0.0
      %1678 = vmatprep.subr.mxu0 0.0
      %1679 = vmatpush1.msra.mxu0 0.0
      %1680 = vmatprep.subr.mxu0 0.0
      %1681 = vmatpush1.msra.mxu0 0.0
      %1682 = vmatprep.subr.mxu0 0.0
      %1683 = vmatpush1.msra.mxu0 0.0
      %1684 = vmatprep.subr.mxu0 0.0
      %1685 = vmatpush1.msra.mxu0 0.0
      %1686 = vmatprep.subr.mxu0 0.0
      %1687 = vmatpush1.msra.mxu0 0.0
      %1688 = vmatprep.subr.mxu0 0.0
      %1689 = vmatpush1.msra.mxu0 0.0
      %1690 = vmatprep.subr.mxu0 0.0
      %1691 = vmatpush1.msra.mxu0 0.0
      %1692 = vmatprep.subr.mxu0 0.0
      %1693 = vmatpush1.msra.mxu0 0.0
      %1694 = vmatprep.subr.mxu0 0.0
      %1695 = vmatpush1.msra.mxu0 0.0
      %1696 = vmatprep.subr.mxu0 0.0
      %1697 = vmatpush1.msra.mxu0 0.0
      %1698 = vmatprep.subr.mxu0 0.0
      %1699 = vmatpush1.msra.mxu0 0.0
      %1700 = vmatprep.subr.mxu0 0.0
      %1701 = vmatpush1.msra.mxu0 0.0
      %1702 = vmatprep.subr.mxu0 0.0
      %1703 = vmatpush1.msra.mxu0 0.0
      %1704 = vmatprep.subr.mxu0 0.0
      %1705 = vmatpush1.msra.mxu0 0.0
      %1706 = vmatprep.subr.mxu0 0.0
      %1707 = vmatpush1.msra.mxu0 0.0
      %1708 = vmatprep.subr.mxu0 0.0
      %1709 = vmatpush1.msra.mxu0 0.0
      %1710 = vmatprep.subr.mxu0 0.0
      %1711 = vmatpush1.msra.mxu0 0.0
      %1712 = vmatprep.mubr.f32.mxu0 0.0
      %1713 = vmatmul.mubr.f32.gmra.mrb[0].mxu0 %v1171
      %v1714 = vpop.f32.mrb[0].mxu0
      %v1715 = vadd.f32 0.0, %v1714
      %v1716 = vpop.f32.mrb[0].mxu0
      %1717 = vmatprep.mubr.f32.mxu0 0.0
      %1718 = vmatmul.mubr.f32.gmra.mrb[0].mxu0 %v1174
      %v1719 = vpop.f32.mrb[0].mxu0
      %v1720 = vadd.f32 0.0, %v1719
      %v1721 = vpop.f32.mrb[0].mxu0
      %1722 = vdwg.mxu0
      %v1723 = vadd.f32 %v1646, %v1715
      %v1724 = vadd.f32 %v1647, %v1720
      %v1725 = vld [vmem:[%s426] sm:$0xff]
      %v1726 = vld [vmem:[%s426 + $0x8] sm:$0xff]
      %v1728 = vsel %vm456, %v1725, 0
      %v1731 = vsel %vm456, %v1726, 0
      %1733 = vmatprep.subr.mxu0 0.0
      %1734 = vmatpush1.msra.mxu0 %v997
      %1735 = vmatprep.subr.mxu0 0.0
      %1736 = vmatpush1.msra.mxu0 0.0
      %1737 = vmatprep.subr.mxu0 0.0
      %1738 = vmatpush1.msra.mxu0 0.0
      %1739 = vmatprep.subr.mxu0 0.0
      %1740 = vmatpush1.msra.mxu0 0.0
      %1741 = vmatprep.subr.mxu0 0.0
      %1742 = vmatpush1.msra.mxu0 0.0
      %1743 = vmatprep.subr.mxu0 0.0
      %1744 = vmatpush1.msra.mxu0 0.0
      %1745 = vmatprep.subr.mxu0 0.0
      %1746 = vmatpush1.msra.mxu0 0.0
      %1747 = vmatprep.subr.mxu0 0.0
      %1748 = vmatpush1.msra.mxu0 0.0
      %1749 = vmatprep.subr.mxu0 0.0
      %1750 = vmatpush1.msra.mxu0 0.0
      %1751 = vmatprep.subr.mxu0 0.0
      %1752 = vmatpush1.msra.mxu0 0.0
      %1753 = vmatprep.subr.mxu0 0.0
      %1754 = vmatpush1.msra.mxu0 0.0
      %1755 = vmatprep.subr.mxu0 0.0
      %1756 = vmatpush1.msra.mxu0 0.0
      %1757 = vmatprep.subr.mxu0 0.0
      %1758 = vmatpush1.msra.mxu0 0.0
      %1759 = vmatprep.subr.mxu0 0.0
      %1760 = vmatpush1.msra.mxu0 0.0
      %1761 = vmatprep.subr.mxu0 0.0
      %1762 = vmatpush1.msra.mxu0 0.0
      %1763 = vmatprep.subr.mxu0 0.0
      %1764 = vmatpush1.msra.mxu0 0.0
      %1765 = vmatprep.subr.mxu0 0.0
      %1766 = vmatpush1.msra.mxu0 0.0
      %1767 = vmatprep.subr.mxu0 0.0
      %1768 = vmatpush1.msra.mxu0 0.0
      %1769 = vmatprep.subr.mxu0 0.0
      %1770 = vmatpush1.msra.mxu0 0.0
      %1771 = vmatprep.subr.mxu0 0.0
      %1772 = vmatpush1.msra.mxu0 0.0
      %1773 = vmatprep.subr.mxu0 0.0
      %1774 = vmatpush1.msra.mxu0 0.0
      %1775 = vmatprep.subr.mxu0 0.0
      %1776 = vmatpush1.msra.mxu0 0.0
      %1777 = vmatprep.subr.mxu0 0.0
      %1778 = vmatpush1.msra.mxu0 0.0
      %1779 = vmatprep.subr.mxu0 0.0
      %1780 = vmatpush1.msra.mxu0 0.0
      %1781 = vmatprep.subr.mxu0 0.0
      %1782 = vmatpush1.msra.mxu0 0.0
      %1783 = vmatprep.subr.mxu0 0.0
      %1784 = vmatpush1.msra.mxu0 0.0
      %1785 = vmatprep.subr.mxu0 0.0
      %1786 = vmatpush1.msra.mxu0 0.0
      %1787 = vmatprep.subr.mxu0 0.0
      %1788 = vmatpush1.msra.mxu0 0.0
      %1789 = vmatprep.subr.mxu0 0.0
      %1790 = vmatpush1.msra.mxu0 0.0
      %1791 = vmatprep.subr.mxu0 0.0
      %1792 = vmatpush1.msra.mxu0 0.0
      %1793 = vmatprep.subr.mxu0 0.0
      %1794 = vmatpush1.msra.mxu0 0.0
      %1795 = vmatprep.subr.mxu0 0.0
      %1796 = vmatpush1.msra.mxu0 0.0
      %1797 = vmatprep.mubr.f32.mxu0 0.0
      %1798 = vmatmul.mubr.f32.gmra.mrb[0].mxu0 %v1728
      %v1799 = vpop.f32.mrb[0].mxu0
      %v1800 = vadd.f32 0.0, %v1799
      %v1801 = vpop.f32.mrb[0].mxu0
      %1802 = vmatprep.mubr.f32.mxu0 0.0
      %1803 = vmatmul.mubr.f32.gmra.mrb[0].mxu0 %v1731
      %v1804 = vpop.f32.mrb[0].mxu0
      %v1805 = vadd.f32 0.0, %v1804
      %v1806 = vpop.f32.mrb[0].mxu0
      %1807 = vdwg.mxu0
      %v1808 = vadd.f32 %v1723, %v1800
      %v1809 = vadd.f32 %v1724, %v1805
      %v1810 = vld [vmem:[%s426 + $0x1] sm:$0xff]
      %v1811 = vld [vmem:[%s426 + $0x9] sm:$0xff]
      %v1813 = vsel %vm456, %v1810, 0
      %v1816 = vsel %vm456, %v1811, 0
      %1818 = vmatprep.subr.mxu0 0.0
      %1819 = vmatpush1.msra.mxu0 %v1087
      %1820 = vmatprep.subr.mxu0 0.0
      %1821 = vmatpush1.msra.mxu0 0.0
      %1822 = vmatprep.subr.mxu0 0.0
      %1823 = vmatpush1.msra.mxu0 0.0
      %1824 = vmatprep.subr.mxu0 0.0
      %1825 = vmatpush1.msra.mxu0 0.0
      %1826 = vmatprep.subr.mxu0 0.0
      %1827 = vmatpush1.msra.mxu0 0.0
      %1828 = vmatprep.subr.mxu0 0.0
      %1829 = vmatpush1.msra.mxu0 0.0
      %1830 = vmatprep.subr.mxu0 0.0
      %1831 = vmatpush1.msra.mxu0 0.0
      %1832 = vmatprep.subr.mxu0 0.0
      %1833 = vmatpush1.msra.mxu0 0.0
      %1834 = vmatprep.subr.mxu0 0.0
      %1835 = vmatpush1.msra.mxu0 0.0
      %1836 = vmatprep.subr.mxu0 0.0
      %1837 = vmatpush1.msra.mxu0 0.0
      %1838 = vmatprep.subr.mxu0 0.0
      %1839 = vmatpush1.msra.mxu0 0.0
      %1840 = vmatprep.subr.mxu0 0.0
      %1841 = vmatpush1.msra.mxu0 0.0
      %1842 = vmatprep.subr.mxu0 0.0
      %1843 = vmatpush1.msra.mxu0 0.0
      %1844 = vmatprep.subr.mxu0 0.0
      %1845 = vmatpush1.msra.mxu0 0.0
      %1846 = vmatprep.subr.mxu0 0.0
      %1847 = vmatpush1.msra.mxu0 0.0
      %1848 = vmatprep.subr.mxu0 0.0
      %1849 = vmatpush1.msra.mxu0 0.0
      %1850 = vmatprep.subr.mxu0 0.0
      %1851 = vmatpush1.msra.mxu0 0.0
      %1852 = vmatprep.subr.mxu0 0.0
      %1853 = vmatpush1.msra.mxu0 0.0
      %1854 = vmatprep.subr.mxu0 0.0
      %1855 = vmatpush1.msra.mxu0 0.0
      %1856 = vmatprep.subr.mxu0 0.0
      %1857 = vmatpush1.msra.mxu0 0.0
      %1858 = vmatprep.subr.mxu0 0.0
      %1859 = vmatpush1.msra.mxu0 0.0
      %1860 = vmatprep.subr.mxu0 0.0
      %1861 = vmatpush1.msra.mxu0 0.0
      %1862 = vmatprep.subr.mxu0 0.0
      %1863 = vmatpush1.msra.mxu0 0.0
      %1864 = vmatprep.subr.mxu0 0.0
      %1865 = vmatpush1.msra.mxu0 0.0
      %1866 = vmatprep.subr.mxu0 0.0
      %1867 = vmatpush1.msra.mxu0 0.0
      %1868 = vmatprep.subr.mxu0 0.0
      %1869 = vmatpush1.msra.mxu0 0.0
      %1870 = vmatprep.subr.mxu0 0.0
      %1871 = vmatpush1.msra.mxu0 0.0
      %1872 = vmatprep.subr.mxu0 0.0
      %1873 = vmatpush1.msra.mxu0 0.0
      %1874 = vmatprep.subr.mxu0 0.0
      %1875 = vmatpush1.msra.mxu0 0.0
      %1876 = vmatprep.subr.mxu0 0.0
      %1877 = vmatpush1.msra.mxu0 0.0
      %1878 = vmatprep.subr.mxu0 0.0
      %1879 = vmatpush1.msra.mxu0 0.0
      %1880 = vmatprep.subr.mxu0 0.0
      %1881 = vmatpush1.msra.mxu0 0.0
      %1882 = vmatprep.mubr.f32.mxu0 0.0
      %1883 = vmatmul.mubr.f32.gmra.mrb[0].mxu0 %v1813
      %v1884 = vpop.f32.mrb[0].mxu0
      %v1885 = vadd.f32 0.0, %v1884
      %v1886 = vpop.f32.mrb[0].mxu0
      %1887 = vmatprep.mubr.f32.mxu0 0.0
      %1888 = vmatmul.mubr.f32.gmra.mrb[0].mxu0 %v1816
      %v1889 = vpop.f32.mrb[0].mxu0
      %v1890 = vadd.f32 0.0, %v1889
      %v1891 = vpop.f32.mrb[0].mxu0
      %1892 = vdwg.mxu0
      %v1893 = vadd.f32 %v1808, %v1885
      %v1894 = vadd.f32 %v1809, %v1890
      %v1895 = vld [vmem:[%s426 + $0x2] sm:$0xff]
      %v1896 = vld [vmem:[%s426 + $0xa] sm:$0xff]
      %v1898 = vsel %vm456, %v1895, 0
      %v1901 = vsel %vm456, %v1896, 0
      %1903 = vmatprep.subr.mxu0 0.0
      %1904 = vmatpush1.msra.mxu0 %v1177
      %1905 = vmatprep.subr.mxu0 0.0
      %1906 = vmatpush1.msra.mxu0 0.0
      %1907 = vmatprep.subr.mxu0 0.0
      %1908 = vmatpush1.msra.mxu0 0.0
      %1909 = vmatprep.subr.mxu0 0.0
      %1910 = vmatpush1.msra.mxu0 0.0
      %1911 = vmatprep.subr.mxu0 0.0
      %1912 = vmatpush1.msra.mxu0 0.0
      %1913 = vmatprep.subr.mxu0 0.0
      %1914 = vmatpush1.msra.mxu0 0.0
      %1915 = vmatprep.subr.mxu0 0.0
      %1916 = vmatpush1.msra.mxu0 0.0
      %1917 = vmatprep.subr.mxu0 0.0
      %1918 = vmatpush1.msra.mxu0 0.0
      %1919 = vmatprep.subr.mxu0 0.0
      %1920 = vmatpush1.msra.mxu0 0.0
      %1921 = vmatprep.subr.mxu0 0.0
      %1922 = vmatpush1.msra.mxu0 0.0
      %1923 = vmatprep.subr.mxu0 0.0
      %1924 = vmatpush1.msra.mxu0 0.0
      %1925 = vmatprep.subr.mxu0 0.0
      %1926 = vmatpush1.msra.mxu0 0.0
      %1927 = vmatprep.subr.mxu0 0.0
      %1928 = vmatpush1.msra.mxu0 0.0
      %1929 = vmatprep.subr.mxu0 0.0
      %1930 = vmatpush1.msra.mxu0 0.0
      %1931 = vmatprep.subr.mxu0 0.0
      %1932 = vmatpush1.msra.mxu0 0.0
      %1933 = vmatprep.subr.mxu0 0.0
      %1934 = vmatpush1.msra.mxu0 0.0
      %1935 = vmatprep.subr.mxu0 0.0
      %1936 = vmatpush1.msra.mxu0 0.0
      %1937 = vmatprep.subr.mxu0 0.0
      %1938 = vmatpush1.msra.mxu0 0.0
      %1939 = vmatprep.subr.mxu0 0.0
      %1940 = vmatpush1.msra.mxu0 0.0
      %1941 = vmatprep.subr.mxu0 0.0
      %1942 = vmatpush1.msra.mxu0 0.0
      %1943 = vmatprep.subr.mxu0 0.0
      %1944 = vmatpush1.msra.mxu0 0.0
      %1945 = vmatprep.subr.mxu0 0.0
      %1946 = vmatpush1.msra.mxu0 0.0
      %1947 = vmatprep.subr.mxu0 0.0
      %1948 = vmatpush1.msra.mxu0 0.0
      %1949 = vmatprep.subr.mxu0 0.0
      %1950 = vmatpush1.msra.mxu0 0.0
      %1951 = vmatprep.subr.mxu0 0.0
      %1952 = vmatpush1.msra.mxu0 0.0
      %1953 = vmatprep.subr.mxu0 0.0
      %1954 = vmatpush1.msra.mxu0 0.0
      %1955 = vmatprep.subr.mxu0 0.0
      %1956 = vmatpush1.msra.mxu0 0.0
      %1957 = vmatprep.subr.mxu0 0.0
      %1958 = vmatpush1.msra.mxu0 0.0
      %1959 = vmatprep.subr.mxu0 0.0
      %1960 = vmatpush1.msra.mxu0 0.0
      %1961 = vmatprep.subr.mxu0 0.0
      %1962 = vmatpush1.msra.mxu0 0.0
      %1963 = vmatprep.subr.mxu0 0.0
      %1964 = vmatpush1.msra.mxu0 0.0
      %1965 = vmatprep.subr.mxu0 0.0
      %1966 = vmatpush1.msra.mxu0 0.0
      %1967 = vmatprep.mubr.f32.mxu0 0.0
      %1968 = vmatmul.mubr.f32.gmra.mrb[0].mxu0 %v1898
      %v1969 = vpop.f32.mrb[0].mxu0
      %v1970 = vadd.f32 0.0, %v1969
      %v1971 = vpop.f32.mrb[0].mxu0
      %1972 = vmatprep.mubr.f32.mxu0 0.0
      %1973 = vmatmul.mubr.f32.gmra.mrb[0].mxu0 %v1901
      %v1974 = vpop.f32.mrb[0].mxu0
      %v1975 = vadd.f32 0.0, %v1974
      %v1976 = vpop.f32.mrb[0].mxu0
      %1977 = vdwg.mxu0
      %v1978 = vadd.f32 %v1893, %v1970
      %v1979 = vadd.f32 %v1894, %v1975
      %v1980 = vadd.f32 %v1978, %v1261
      %v1981 = vadd.f32 %v1979, %v1261
      %v1982 = vmax.f32 %v1980, 0.0
      %v1983 = vmax.f32 %v1981, 0.0
      %v1984 = vmax.f32 %v1265, %v1982
      %v1985 = vmax.f32 %v1266, %v1983
      %vm1986 = vcmask 130048
      %v1988 = vsel %vm1986, %v444, 0
      %1990 = vmatprep.subr.mxu0 0.0
      %1991 = vmatpush1.msra.mxu0 %v1984
      %1992 = vmatprep.subr.mxu0 0.0
      %1993 = vmatpush1.msra.mxu0 %v1985
      %1994 = vmatprep.subr.mxu0 0.0
      %1995 = vmatpush1.msra.mxu0 0.0
      %1996 = vmatprep.subr.mxu0 0.0
      %1997 = vmatpush1.msra.mxu0 0.0
      %1998 = vmatprep.subr.mxu0 0.0
      %1999 = vmatpush1.msra.mxu0 0.0
      %2000 = vmatprep.subr.mxu0 0.0
      %2001 = vmatpush1.msra.mxu0 0.0
      %2002 = vmatprep.subr.mxu0 0.0
      %2003 = vmatpush1.msra.mxu0 0.0
      %2004 = vmatprep.subr.mxu0 0.0
      %2005 = vmatpush1.msra.mxu0 0.0
      %2006 = vmatprep.subr.mxu0 0.0
      %2007 = vmatpush1.msra.mxu0 0.0
      %2008 = vmatprep.subr.mxu0 0.0
      %2009 = vmatpush1.msra.mxu0 0.0
      %2010 = vmatprep.subr.mxu0 0.0
      %2011 = vmatpush1.msra.mxu0 0.0
      %2012 = vmatprep.subr.mxu0 0.0
      %2013 = vmatpush1.msra.mxu0 0.0
      %2014 = vmatprep.subr.mxu0 0.0
      %2015 = vmatpush1.msra.mxu0 0.0
      %2016 = vmatprep.subr.mxu0 0.0
      %2017 = vmatpush1.msra.mxu0 0.0
      %2018 = vmatprep.subr.mxu0 0.0
      %2019 = vmatpush1.msra.mxu0 0.0
      %2020 = vmatprep.subr.mxu0 0.0
      %2021 = vmatpush1.msra.mxu0 0.0
      %2022 = vmatprep.subr.mxu0 0.0
      %2023 = vmatpush1.msra.mxu0 0.0
      %2024 = vmatprep.subr.mxu0 0.0
      %2025 = vmatpush1.msra.mxu0 0.0
      %2026 = vmatprep.subr.mxu0 0.0
      %2027 = vmatpush1.msra.mxu0 0.0
      %2028 = vmatprep.subr.mxu0 0.0
      %2029 = vmatpush1.msra.mxu0 0.0
      %2030 = vmatprep.subr.mxu0 0.0
      %2031 = vmatpush1.msra.mxu0 0.0
      %2032 = vmatprep.subr.mxu0 0.0
      %2033 = vmatpush1.msra.mxu0 0.0
      %2034 = vmatprep.subr.mxu0 0.0
      %2035 = vmatpush1.msra.mxu0 0.0
      %2036 = vmatprep.subr.mxu0 0.0
      %2037 = vmatpush1.msra.mxu0 0.0
      %2038 = vmatprep.subr.mxu0 0.0
      %2039 = vmatpush1.msra.mxu0 0.0
      %2040 = vmatprep.subr.mxu0 0.0
      %2041 = vmatpush1.msra.mxu0 0.0
      %2042 = vmatprep.subr.mxu0 0.0
      %2043 = vmatpush1.msra.mxu0 0.0
      %2044 = vmatprep.subr.mxu0 0.0
      %2045 = vmatpush1.msra.mxu0 0.0
      %2046 = vmatprep.subr.mxu0 0.0
      %2047 = vmatpush1.msra.mxu0 0.0
      %2048 = vmatprep.subr.mxu0 0.0
      %2049 = vmatpush1.msra.mxu0 0.0
      %2050 = vmatprep.subr.mxu0 0.0
      %2051 = vmatpush1.msra.mxu0 0.0
      %2052 = vmatprep.subr.mxu0 0.0
      %2053 = vmatpush1.msra.mxu0 0.0
      %2054 = vmatprep.mubr.f32.mxu0 0.0
      %2055 = vmatmul.mubr.f32.gmra.mrb[0].mxu0 %v1988
      %v2056 = vpop.f32.mrb[0].mxu0
      %v2057 = vadd.f32 0.0, %v2056
      %v2058 = vpop.f32.mrb[0].mxu0
      %2059 = vdwg.mxu0
      %v2061 = vsel %vm1986, %v448, 0
      %2063 = vmatprep.subr.mxu0 0.0
      %2064 = vmatpush1.msra.mxu0 %v1984
      %2065 = vmatprep.subr.mxu0 0.0
      %2066 = vmatpush1.msra.mxu0 %v1985
      %2067 = vmatprep.subr.mxu0 0.0
      %2068 = vmatpush1.msra.mxu0 0.0
      %2069 = vmatprep.subr.mxu0 0.0
      %2070 = vmatpush1.msra.mxu0 0.0
      %2071 = vmatprep.subr.mxu0 0.0
      %2072 = vmatpush1.msra.mxu0 0.0
      %2073 = vmatprep.subr.mxu0 0.0
      %2074 = vmatpush1.msra.mxu0 0.0
      %2075 = vmatprep.subr.mxu0 0.0
      %2076 = vmatpush1.msra.mxu0 0.0
      %2077 = vmatprep.subr.mxu0 0.0
      %2078 = vmatpush1.msra.mxu0 0.0
      %2079 = vmatprep.subr.mxu0 0.0
      %2080 = vmatpush1.msra.mxu0 0.0
      %2081 = vmatprep.subr.mxu0 0.0
      %2082 = vmatpush1.msra.mxu0 0.0
      %2083 = vmatprep.subr.mxu0 0.0
      %2084 = vmatpush1.msra.mxu0 0.0
      %2085 = vmatprep.subr.mxu0 0.0
      %2086 = vmatpush1.msra.mxu0 0.0
      %2087 = vmatprep.subr.mxu0 0.0
      %2088 = vmatpush1.msra.mxu0 0.0
      %2089 = vmatprep.subr.mxu0 0.0
      %2090 = vmatpush1.msra.mxu0 0.0
      %2091 = vmatprep.subr.mxu0 0.0
      %2092 = vmatpush1.msra.mxu0 0.0
      %2093 = vmatprep.subr.mxu0 0.0
      %2094 = vmatpush1.msra.mxu0 0.0
      %2095 = vmatprep.subr.mxu0 0.0
      %2096 = vmatpush1.msra.mxu0 0.0
      %2097 = vmatprep.subr.mxu0 0.0
      %2098 = vmatpush1.msra.mxu0 0.0
      %2099 = vmatprep.subr.mxu0 0.0
      %2100 = vmatpush1.msra.mxu0 0.0
      %2101 = vmatprep.subr.mxu0 0.0
      %2102 = vmatpush1.msra.mxu0 0.0
      %2103 = vmatprep.subr.mxu0 0.0
      %2104 = vmatpush1.msra.mxu0 0.0
      %2105 = vmatprep.subr.mxu0 0.0
      %2106 = vmatpush1.msra.mxu0 0.0
      %2107 = vmatprep.subr.mxu0 0.0
      %2108 = vmatpush1.msra.mxu0 0.0
      %2109 = vmatprep.subr.mxu0 0.0
      %2110 = vmatpush1.msra.mxu0 0.0
      %2111 = vmatprep.subr.mxu0 0.0
      %2112 = vmatpush1.msra.mxu0 0.0
      %2113 = vmatprep.subr.mxu0 0.0
      %2114 = vmatpush1.msra.mxu0 0.0
      %2115 = vmatprep.subr.mxu0 0.0
      %2116 = vmatpush1.msra.mxu0 0.0
      %2117 = vmatprep.subr.mxu0 0.0
      %2118 = vmatpush1.msra.mxu0 0.0
      %2119 = vmatprep.subr.mxu0 0.0
      %2120 = vmatpush1.msra.mxu0 0.0
      %2121 = vmatprep.subr.mxu0 0.0
      %2122 = vmatpush1.msra.mxu0 0.0
      %2123 = vmatprep.subr.mxu0 0.0
      %2124 = vmatpush1.msra.mxu0 0.0
      %2125 = vmatprep.subr.mxu0 0.0
      %2126 = vmatpush1.msra.mxu0 0.0
      %2127 = vmatprep.mubr.f32.mxu0 0.0
      %2128 = vmatmul.mubr.f32.gmra.mrb[0].mxu0 %v2061
      %v2129 = vpop.f32.mrb[0].mxu0
      %v2130 = vadd.f32 0.0, %v2129
      %v2131 = vpop.f32.mrb[0].mxu0
      %2132 = vdwg.mxu0
      %v2133 = vmax.f32 %v2057, %v2130
      %2134 = vst [vmem:[%s436] sm:$0xff] %v2133
      %p2135 = scmp.lt.s32.totalorder %s21, 1
      %s2136 = scalar_select %p2135, %s21, 1
      %p2137 = scmp.lt.s32.totalorder %s22, 7
      %s2138 = scalar_select %p2137, %s22, 7
      %s2139 = smul.addr %s2136, 8
      %s2140 = sadd.s32 %s2138, %s2139
      %s2141 = smul.addr %s2140, 8
      %s2142 = scalar_lea.vmem %s6, %s2141
      // Predicated region
      $region45: #{convnet_embedder_forward.5} parent=43 // pred_check
        %p2143 = pneg %p217
      $region46: #{convnet_embedder_forward.5} parent=43 // pred_check_branch
        %2145 = sbr.rel (%p2143) target = $region48
      $region47: #{convnet_embedder_forward.5} parent=43 // pred_region
        _
      $region48: #{convnet_embedder_forward.5} parent=43 // pred_fallthru
        _
    $region44: #{convnet_embedder_forward.5} parent=5 // pred_fallthru
      _
    %p2146 = scmp.le.s32.totalorder 2, %s12
    // Predicated region
    $region49: #{convnet_embedder_forward.5} parent=5 // pred_check
      %p2147 = pneg %p2146
    $region50: #{convnet_embedder_forward.5} parent=5 // pred_check_branch
      %2149 = sbr.rel (%p2147) target = $region52
    $region51: #{convnet_embedder_forward.5} parent=5 // pred_region
      %s2150 = ssub.s32 %s12, 2
      // Predicated region
      $region53: #{convnet_embedder_forward.5} parent=51 // pred_check
        %p2151 = pneg %p223
      $region54: #{convnet_embedder_forward.5} parent=51 // pred_check_branch
        %2153 = sbr.rel (%p2151) target = $region56
      $region55: #{convnet_embedder_forward.5} parent=51 // pred_region
        %p2154 = scmp.lt.s32.totalorder %s23, 1
        %s2155 = scalar_select %p2154, %s23, 1
        %p2156 = scmp.lt.s32.totalorder %s24, 7
        %s2157 = scalar_select %p2156, %s24, 7
        %s2158 = smul.addr %s2155, 8
        %s2159 = sadd.s32 %s2157, %s2158
        %s2160 = smul.addr %s2159, 8
        %s2161 = scalar_lea.vmem %s6, %s2160
      $region56: #{convnet_embedder_forward.5} parent=51 // pred_fallthru
        _
    $region52: #{convnet_embedder_forward.5} parent=5 // pred_fallthru
      _
  $region6: #{convnet_embedder_forward.5} parent=0 // loop_footer
    %s16 = sadd.s32 1, %s12
  $region7: #{convnet_embedder_forward.5} parent=0 // loop_footer_branch
    %11 = sbr.rel target = $region3
  $region8: #{convnet_embedder_forward.5} parent=0 // loop_exit
    _

// kernel: convnet_embedder_forward.9
$region0: #{convnet_embedder_forward.9}
  #allocation0 [shape = 'u32[]', space=smem, size = 0x4, offset = 0x4, fixed_abs, tag = 'smem constant byte address 0x4 - core index']
  #allocation1 [shape = 'u32[144,128]{1,0:T(1,128)}', space=vmem, size = 0x12000, scoped, tag = 'internal scratch']
  #allocation2 [shape = 'f32[2,64]{1,0:T(2,128)}', space=vmem, size = 0x400, scoped, tag = 'scratch operand']
  %s0 = inlined_call_operand.vmem [shape: f32[2,256], index: 0, kind: input, shape index: {}]
  %s1 = inlined_call_operand.vmem [shape: f32[256,64], index: 1, kind: input, shape index: {}]
  %s2 = inlined_call_operand.vmem [shape: f32[1,64], index: 2, kind: input, shape index: {}]
  %s3 = inlined_call_operand.hbm [shape: f32[2,64], index: 3, kind: output, shape index: {}]
  %s4 = sld [smem:[#allocation0]]
  $region30: #{convnet_embedder_forward.9} parent=0
    _
  %s6 = ssub.s32 1, %s4
  %s7 = scalar_select 0, %s6, %s4
  $region1: #{convnet_embedder_forward.9} parent=0
    #allocation3 [shape = 'u8[1024]{0}', space=vmem, size = 0x400, scoped, tag = 'output window, operand 0, single buffered']
    #allocation4 [shape = 's32[1]{0}', space=sflag, size = 0x4, scoped, tag = 'scoped memory for convnet_embedder_forward.9']
    %8 = vsyncpa [#allocation4], 0
    // Predicated region
    $region2: #{convnet_embedder_forward.9} parent=1 // pred_check
      _
    $region3: #{convnet_embedder_forward.9} parent=1 // pred_check_branch
      %10 = sbr.rel (0) target = $region5
    $region4: #{convnet_embedder_forward.9} parent=1 // pred_region
      _
    $region5: #{convnet_embedder_forward.9} parent=1 // pred_fallthru
      _
    // Predicated region
    $region6: #{convnet_embedder_forward.9} parent=1 // pred_check
      _
    $region7: #{convnet_embedder_forward.9} parent=1 // pred_check_branch
      %12 = sbr.rel (0) target = $region9
    $region8: #{convnet_embedder_forward.9} parent=1 // pred_region
      _
    $region9: #{convnet_embedder_forward.9} parent=1 // pred_fallthru
      _
    // Predicated region
    $region10: #{convnet_embedder_forward.9} parent=1 // pred_check
      _
    $region11: #{convnet_embedder_forward.9} parent=1 // pred_check_branch
      %14 = sbr.rel (0) target = $region13
    $region12: #{convnet_embedder_forward.9} parent=1 // pred_region
      _
    $region13: #{convnet_embedder_forward.9} parent=1 // pred_fallthru
      _
    %p15 = scmp.eq.s32.totalorder 0, 0
    // Predicated region
    $region14: #{convnet_embedder_forward.9} parent=1 // pred_check
      %p16 = pneg %p15
    $region15: #{convnet_embedder_forward.9} parent=1 // pred_check_branch
      %18 = sbr.rel (%p16) target = $region17
    $region16: #{convnet_embedder_forward.9} parent=1 // pred_region
      %vm19 = vcmask 517120
      %20 = vst.msk [vmem:[#allocation2] sm:$0x3] %vm19, 0.0
    $region17: #{convnet_embedder_forward.9} parent=1 // pred_fallthru
      _
    %v21 = vld [vmem:[#allocation2] sm:$0x3]
    %v22 = vld [vmem:[%s0] sm:$0xf]
    %v23 = vld [vmem:[%s1] sm:$0xff]
    %v24 = vld [vmem:[%s1 + $0x8] sm:$0xff]
    %v25 = vld [vmem:[%s1 + $0x10] sm:$0xff]
    %v26 = vld [vmem:[%s1 + $0x18] sm:$0xff]
    %v27 = vld [vmem:[%s1 + $0x20] sm:$0xff]
    %v28 = vld [vmem:[%s1 + $0x28] sm:$0xff]
    %v29 = vld [vmem:[%s1 + $0x30] sm:$0xff]
    %v30 = vld [vmem:[%s1 + $0x38] sm:$0xff]
    %v31 = vld [vmem:[%s1 + $0x40] sm:$0xff]
    %v32 = vld [vmem:[%s1 + $0x48] sm:$0xff]
    %v33 = vld [vmem:[%s1 + $0x50] sm:$0xff]
    %v34 = vld [vmem:[%s1 + $0x58] sm:$0xff]
    %v35 = vld [vmem:[%s1 + $0x60] sm:$0xff]
    %v36 = vld [vmem:[%s1 + $0x68] sm:$0xff]
    %v37 = vld [vmem:[%s1 + $0x70] sm:$0xff]
    %v38 = vld [vmem:[%s1 + $0x78] sm:$0xff]
    %v39 = vld [vmem:[%s1 + $0x80] sm:$0xff]
    %v40 = vld [vmem:[%s1 + $0x88] sm:$0xff]
    %v41 = vld [vmem:[%s1 + $0x90] sm:$0xff]
    %v42 = vld [vmem:[%s1 + $0x98] sm:$0xff]
    %v43 = vld [vmem:[%s1 + $0xa0] sm:$0xff]
    %v44 = vld [vmem:[%s1 + $0xa8] sm:$0xff]
    %v45 = vld [vmem:[%s1 + $0xb0] sm:$0xff]
    %v46 = vld [vmem:[%s1 + $0xb8] sm:$0xff]
    %v47 = vld [vmem:[%s1 + $0xc0] sm:$0xff]
    %v48 = vld [vmem:[%s1 + $0xc8] sm:$0xff]
    %v49 = vld [vmem:[%s1 + $0xd0] sm:$0xff]
    %v50 = vld [vmem:[%s1 + $0xd8] sm:$0xff]
    %v51 = vld [vmem:[%s1 + $0xe0] sm:$0xff]
    %v52 = vld [vmem:[%s1 + $0xe8] sm:$0xff]
    %v53 = vld [vmem:[%s1 + $0xf0] sm:$0xff]
    %v54 = vld [vmem:[%s1 + $0xf8] sm:$0xff]
    %v57 = vunpack.c.l.s4 1983009808
    %v58 = vunpack.c.0.s8 %v57
    %v59 = vlaneseq
    %v60 = vshrl.u32 %v59, 7
    %v61 = vsub.s32 %v58, %v60
    %v62 = vrot.slane %v22, %v61
    %v63 = vcombine.high %v62, %v62
    %66 = vmatprep.subr.mxu0 0.0
    %67 = vmatpush1.msra.mxu0 %v23
    %68 = vmatprep.subr.mxu0 0.0
    %69 = vmatpush1.msra.mxu0 %v24
    %70 = vmatprep.subr.mxu0 0.0
    %71 = vmatpush1.msra.mxu0 %v25
    %72 = vmatprep.subr.mxu0 0.0
    %73 = vmatpush1.msra.mxu0 %v26
    %74 = vmatprep.subr.mxu0 0.0
    %75 = vmatpush1.msra.mxu0 %v27
    %76 = vmatprep.subr.mxu0 0.0
    %77 = vmatpush1.msra.mxu0 %v28
    %78 = vmatprep.subr.mxu0 0.0
    %79 = vmatpush1.msra.mxu0 %v29
    %80 = vmatprep.subr.mxu0 0.0
    %81 = vmatpush1.msra.mxu0 %v30
    %82 = vmatprep.subr.mxu0 0.0
    %83 = vmatpush1.msra.mxu0 %v31
    %84 = vmatprep.subr.mxu0 0.0
    %85 = vmatpush1.msra.mxu0 %v32
    %86 = vmatprep.subr.mxu0 0.0
    %87 = vmatpush1.msra.mxu0 %v33
    %88 = vmatprep.subr.mxu0 0.0
    %89 = vmatpush1.msra.mxu0 %v34
    %90 = vmatprep.subr.mxu0 0.0
    %91 = vmatpush1.msra.mxu0 %v35
    %92 = vmatprep.subr.mxu0 0.0
    %93 = vmatpush1.msra.mxu0 %v36
    %94 = vmatprep.subr.mxu0 0.0
    %95 = vmatpush1.msra.mxu0 %v37
    %96 = vmatprep.subr.mxu0 0.0
    %97 = vmatpush1.msra.mxu0 %v38
    %98 = vmatprep.subr.mxu0 0.0
    %99 = vmatpush1.msra.mxu0 %v39
    %100 = vmatprep.subr.mxu0 0.0
    %101 = vmatpush1.msra.mxu0 %v40
    %102 = vmatprep.subr.mxu0 0.0
    %103 = vmatpush1.msra.mxu0 %v41
    %104 = vmatprep.subr.mxu0 0.0
    %105 = vmatpush1.msra.mxu0 %v42
    %106 = vmatprep.subr.mxu0 0.0
    %107 = vmatpush1.msra.mxu0 %v43
    %108 = vmatprep.subr.mxu0 0.0
    %109 = vmatpush1.msra.mxu0 %v44
    %110 = vmatprep.subr.mxu0 0.0
    %111 = vmatpush1.msra.mxu0 %v45
    %112 = vmatprep.subr.mxu0 0.0
    %113 = vmatpush1.msra.mxu0 %v46
    %114 = vmatprep.subr.mxu0 0.0
    %115 = vmatpush1.msra.mxu0 %v47
    %116 = vmatprep.subr.mxu0 0.0
    %117 = vmatpush1.msra.mxu0 %v48
    %118 = vmatprep.subr.mxu0 0.0
    %119 = vmatpush1.msra.mxu0 %v49
    %120 = vmatprep.subr.mxu0 0.0
    %121 = vmatpush1.msra.mxu0 %v50
    %122 = vmatprep.subr.mxu0 0.0
    %123 = vmatpush1.msra.mxu0 %v51
    %124 = vmatprep.subr.mxu0 0.0
    %125 = vmatpush1.msra.mxu0 %v52
    %126 = vmatprep.subr.mxu0 0.0
    %127 = vmatpush1.msra.mxu0 %v53
    %128 = vmatprep.subr.mxu0 0.0
    %129 = vmatpush1.msra.mxu0 %v54
    %130 = vmatprep.mubr.f32.mxu0 %v63
    %131 = vmatmul.mubr.f32.gmra.mrb[0].mxu0 %v62
    %v132 = vpop.f32.mrb[0].mxu0
    %v133 = vadd.f32 0.0, %v132
    %v134 = vpop.f32.mrb[0].mxu0
    %135 = vdwg.mxu0
    %v136 = vadd.f32 %v21, %v133
    %vm137 = vcmask 517120
    %138 = vst.msk [vmem:[#allocation2] sm:$0x3] %vm137, %v136
    // Predicated region
    $region18: #{convnet_embedder_forward.9} parent=1 // pred_check
      %p139 = pneg %p15
    $region19: #{convnet_embedder_forward.9} parent=1 // pred_check_branch
      %141 = sbr.rel (%p139) target = $region21
    $region20: #{convnet_embedder_forward.9} parent=1 // pred_region
      %v142 = vld [vmem:[#allocation2] sm:$0x3]
      %v143 = vld [vmem:[%s2] sm:$0x1]
      %v145 = vlaneseq
      %v146 = vshrl.u32 %v145, 7
      %v147 = vsub.s32 0, %v146
      %v148 = vrot.slane %v143, %v147
      %v150 = vadd.f32 %v142, %v148
      %v151 = vmul.f32 %v150, %v150
      %v152 = vsel %vm137, %v151, 0.0
      %153 = vadd.xlane.f32.xlu0 %v152
      %v154 = vpop.xlane.xlu0 %153
      %v155 = vmax.f32 %v154, 1e-24
      %v156 = vrsqrt.pop %v155
      %v157 = vmul.f32 %v150, %v156
      %158 = vst.msk [vmem:[#allocation3] sm:$0x3] %vm137, %v157
    $region21: #{convnet_embedder_forward.9} parent=1 // pred_fallthru
      _
    // Predicated region
    $region22: #{convnet_embedder_forward.9} parent=1 // pred_check
      _
    $region23: #{convnet_embedder_forward.9} parent=1 // pred_check_branch
      %160 = sbr.rel (0) target = $region25
    $region24: #{convnet_embedder_forward.9} parent=1 // pred_region
      %s162 = ssub.s32 32, 32
      %163 = vsyncadd [#allocation4], %s162
      %s165 = sshll.u32 [#allocation3], 4
      %s166 = int_to_ptr.vmem [resolvable:$true] %s165
      %168 = dma.vmem_to_hbm [thread:$0]  %s166, 32, %s3, [#allocation4]
    $region25: #{convnet_embedder_forward.9} parent=1 // pred_fallthru
      _
    // Predicated region
    $region26: #{convnet_embedder_forward.9} parent=1 // pred_check
      _
    $region27: #{convnet_embedder_forward.9} parent=1 // pred_check_branch
      %170 = sbr.rel (0) target = $region29
    $region28: #{convnet_embedder_forward.9} parent=1 // pred_region
      %171 = dma.done [#allocation4], 32
    $region29: #{convnet_embedder_forward.9} parent=1 // pred_fallthru
      _
    %172 = vsyncpa [#allocation4], 1

</llo_original>
